<compile_context>
chip_gen: v5e
topology: v5e:2x2
jax: 0.10.0
libtpu: 0.0.40
codegen_flags: <defaults>
</compile_context>

<pallas_src>
import functools

import jax
import jax.numpy as jnp
from jax.experimental import pallas as pl
from jax.experimental.pallas import tpu as pltpu

ADAPTER_DIM = 8
HIDDEN = 768
HW = 14
N_PATCH = HW * HW              # 196 patch tokens per modality
N_TOK = 1 + 3 * N_PATCH        # 589 tokens
CIN = 3 * ADAPTER_DIM          # 24 conv input channels
PAD_W = 16                     # padded-image row width (14 cols + 2 zero cols)
BASE = 24                      # leading zero rows in the flat buffer (mult. of 8)
TAP0 = BASE - PAD_W - 1        # = 7: tap (dh,dw) reads rows TAP0 + dh*16 + dw + p
CONV_ROWS = HW * PAD_W         # 224 rows of the shifted-window matmuls
PAD_ROWS = 272                 # flat buffer rows (>= TAP0 + 2*16 + 2 + 224 = 265)


def _quick_gelu(x):
    # x * sigmoid(1.702 * x)
    return x * (1.0 / (1.0 + jnp.exp(-1.702 * x)))


def _fused_kernel(x_ref, wd_ref, bd_ref, wc_ref, wu_ref, bu_ref, o_ref, pad_ref):
    D = ADAPTER_DIM

    # ---- (1) adapter_down + QuickGELU: (589,768) @ (768,8) ----
    xd = jnp.dot(x_ref[0], wd_ref[...], preferred_element_type=jnp.float32)
    xd = _quick_gelu(xd + bd_ref[...])                               # (589, 8)

    # ---- (2) 3-modality NHWC image -> width-16 rows (cols 14,15 zero) ->
    #          ONE aligned store into the zeroed flat buffer at offset 24.
    #          Pixel (h, w) lives at flat row BASE + h*16 + w. ----
    nhwc = jnp.concatenate(
        [xd[1:1 + N_PATCH, :],
         xd[1 + N_PATCH:1 + 2 * N_PATCH, :],
         xd[1 + 2 * N_PATCH:, :]], axis=-1)                          # (196, 24)
    img16 = jnp.concatenate(
        [nhwc.reshape(HW, HW, CIN), jnp.zeros((HW, 2, CIN), jnp.float32)],
        axis=1)                                                      # (14, 16, 24)
    pad_ref[...] = jnp.zeros_like(pad_ref)         # keep per-step (megacore-safe)
    pad_ref[BASE:BASE + CONV_ROWS, :] = img16.reshape(CONV_ROWS, CIN)

    # ---- (3) 3x3 conv as 9 shifted-window matmuls.  For output pixel (h, w)
    #          at flat row p = h*16 + w, tap (dh, dw) reads flat row
    #          TAP0 + dh*16 + dw + p; halo reads land on zero rows/cols.
    #          Rows with w >= 14 are junk and discarded in step (4). ----
    conv = jnp.zeros((CONV_ROWS, D), jnp.float32)
    for t in range(9):
        dh, dw = t // 3, t % 3
        start = TAP0 + dh * PAD_W + dw
        conv = conv + jnp.dot(pad_ref[start:start + CONV_ROWS, :],
                              wc_ref[t * CIN:(t + 1) * CIN, :],
                              preferred_element_type=jnp.float32)    # (224, 8)

    # ---- (4) drop the junk columns (value-level gather) and build
    #          cat = [cls, conv, conv, conv] while the data is still 8 lanes ----
    conv196 = conv.reshape(HW, PAD_W, D)[:, :HW, :].reshape(N_PATCH, D)
    cat = jnp.concatenate([xd[0:1, :], conv196, conv196, conv196], axis=0)

    # TODO(synk): nn.Dropout(0.1) is an identity in eval mode; not implemented.
    # ---- (5) QuickGELU + adapter_up on all 589 rows, single aligned store ----
    y = jnp.dot(_quick_gelu(cat), wu_ref[...], preferred_element_type=jnp.float32)
    o_ref[0] = y + bu_ref[...]


def convpass_forward(x, params, theta=0.0):
    B, N, C = x.shape
    assert (N, C) == (N_TOK, HIDDEN), (N, C)
    D = ADAPTER_DIM

    # Conv2d_cd: conv3x3(x, W) - theta * conv1x1(x, sum_hw W) is equivalent to
    # a 3x3 conv with theta folded into the center tap.
    w_eff = params["w_conv"]                                         # (3,3,24,8)
    if abs(theta) >= 1e-8:
        kernel_diff = params["w_conv"].sum(axis=(0, 1))              # (24, 8)
        w_eff = w_eff.at[1, 1].add(-theta * kernel_diff)
    w_conv_flat = w_eff.reshape(9 * CIN, D)                          # (216, 8)

    return pl.pallas_call(
        _fused_kernel,
        out_shape=jax.ShapeDtypeStruct((B, N_TOK, HIDDEN), jnp.float32),
        grid=(B,),
        in_specs=[
            pl.BlockSpec((1, N_TOK, HIDDEN), lambda b: (b, 0, 0)),   # x
            pl.BlockSpec((HIDDEN, D), lambda b: (0, 0)),             # w_down
            pl.BlockSpec((1, D), lambda b: (0, 0)),                  # b_down
            pl.BlockSpec((9 * CIN, D), lambda b: (0, 0)),            # conv weight
            pl.BlockSpec((D, HIDDEN), lambda b: (0, 0)),             # w_up
            pl.BlockSpec((1, HIDDEN), lambda b: (0, 0)),             # b_up
        ],
        out_specs=pl.BlockSpec((1, N_TOK, HIDDEN), lambda b: (b, 0, 0)),
        scratch_shapes=[
            pltpu.VMEM((PAD_ROWS, CIN), jnp.float32),   # flat zero-padded image
        ],
        compiler_params=pltpu.CompilerParams(dimension_semantics=("parallel",)),
    )(
        x,
        params["w_down"],
        params["b_down"].reshape(1, D),
        w_conv_flat,
        params["w_up"],
        params["b_up"].reshape(1, HIDDEN),
    )


# ---------------- Pure-JAX reference (for correctness check) ----------------
def reference_forward(x, params, theta=0.0):
    B, N, C = x.shape
    D = ADAPTER_DIM
    h = jnp.einsum("bnc,cd->bnd", x, params["w_down"]) + params["b_down"]
    h = _quick_gelu(h)
    x_cls = h[:, :1]
    p = h[:, 1:].reshape(B, 3, HW, HW, D)
    x_nhwc = jnp.concatenate([p[:, 0], p[:, 1], p[:, 2]], axis=-1)
    w_eff = params["w_conv"]
    if abs(theta) >= 1e-8:
        kernel_diff = params["w_conv"].sum(axis=(0, 1))
        w_eff = w_eff.at[1, 1].add(-theta * kernel_diff)
    conv = jax.lax.conv_general_dilated(
        x_nhwc, w_eff, window_strides=(1, 1), padding=((1, 1), (1, 1)),
        dimension_numbers=("NHWC", "HWIO", "NHWC"),
    ).reshape(B, HW * HW, D)
    cat = jnp.concatenate([x_cls, conv, conv, conv], axis=1)
    cat = _quick_gelu(cat)
    return jnp.einsum("bnd,dc->bnc", cat, params["w_up"]) + params["b_up"]


if __name__ == "__main__":
    key = jax.random.PRNGKey(0)
    ks = jax.random.split(key, 6)
    B = 2

    # Shapes fixed by the module: N = 1 + 3*14*14 = 589 tokens, hidden = 768.
    x = jax.random.normal(ks[0], (B, N_TOK, HIDDEN), jnp.float32)

    # Deterministic synthetic parameters (shapes from the module's __init__).
    # Note: the real module zero-inits adapter_up; small random values are used
    # so the kernel is exercised non-trivially.
    params = {
        "w_down": 0.02 * jax.random.normal(ks[1], (HIDDEN, ADAPTER_DIM), jnp.float32),
        "b_down": 0.02 * jax.random.normal(ks[2], (ADAPTER_DIM,), jnp.float32),
        "w_conv": 0.10 * jax.random.normal(
            ks[3], (3, 3, CIN, ADAPTER_DIM), jnp.float32),
        "w_up": 0.02 * jax.random.normal(ks[4], (ADAPTER_DIM, HIDDEN), jnp.float32),
        "b_up": 0.02 * jax.random.normal(ks[5], (HIDDEN,), jnp.float32),
    }

    # f32 end-to-end so the 1e-4 tolerance holds on every TPU generation.
    for theta in (0.0, 0.7):
        fwd = jax.jit(functools.partial(convpass_forward, theta=theta))
        out = jax.block_until_ready(fwd(x, params))
        ref = reference_forward(x, params, theta=theta)
        assert out.shape == (B, N_TOK, HIDDEN), out.shape
        max_err = float(jnp.max(jnp.abs(out - ref)))
        assert jnp.allclose(out, ref, atol=1e-4, rtol=1e-4), (theta, max_err)

    print("KERNEL_OK")
</pallas_src>

<mosaic_0001>
module attributes {stable_mosaic.version = 11 : i64} {
  func.func @_fused_kernel(%arg0: i32, %arg1: memref<1x589x768xf32, #tpu.memory_space<vmem>>, %arg2: memref<768x8xf32, #tpu.memory_space<vmem>>, %arg3: memref<1x8xf32, #tpu.memory_space<vmem>>, %arg4: memref<216x8xf32, #tpu.memory_space<vmem>>, %arg5: memref<8x768xf32, #tpu.memory_space<vmem>>, %arg6: memref<1x768xf32, #tpu.memory_space<vmem>>, %arg7: memref<1x589x768xf32, #tpu.memory_space<vmem>>, %arg8: memref<272x24xf32, #tpu.memory_space<vmem>>) attributes {dimension_semantics = [#tpu.dimension_semantics<parallel>], iteration_bounds = array<i64: 2>, scalar_prefetch = 0 : i64, scratch_operands = 1 : i64, tpu.core_type = #tpu.core_type<tc>, window_params = [{transform_indices = @transform_0, window_bounds = array<i64: 1, 589, 768>}, {pipeline_mode = #tpu.pipeline_mode<synchronous>, transform_indices = @transform_1, window_bounds = array<i64: 768, 8>}, {pipeline_mode = #tpu.pipeline_mode<synchronous>, transform_indices = @transform_2, window_bounds = array<i64: 1, 8>}, {pipeline_mode = #tpu.pipeline_mode<synchronous>, transform_indices = @transform_3, window_bounds = array<i64: 216, 8>}, {pipeline_mode = #tpu.pipeline_mode<synchronous>, transform_indices = @transform_4, window_bounds = array<i64: 8, 768>}, {pipeline_mode = #tpu.pipeline_mode<synchronous>, transform_indices = @transform_5, window_bounds = array<i64: 1, 768>}, {transform_indices = @transform_6, window_bounds = array<i64: 1, 589, 768>}]} {
    %c0 = arith.constant 0 : index
    %c0_0 = arith.constant 0 : index
    %c0_1 = arith.constant 0 : index
    %0 = vector.load %arg1[%c0, %c0_0, %c0_1] : memref<1x589x768xf32, #tpu.memory_space<vmem>>, vector<1x589x768xf32>
    %1 = vector.shape_cast %0 : vector<1x589x768xf32> to vector<589x768xf32>
    %c0_2 = arith.constant 0 : index
    %c0_3 = arith.constant 0 : index
    %2 = vector.load %arg2[%c0_2, %c0_3] : memref<768x8xf32, #tpu.memory_space<vmem>>, vector<768x8xf32>
    %cst = arith.constant dense<0.000000e+00> : vector<589x8xf32>
    %3 = tpu.matmul %1, %2, %cst {dimension_numbers = #tpu.dot_dimension_numbers<[1], [0], [0], [1], [0, 0, 1, 1], [], []>} : vector<589x768xf32>, vector<768x8xf32>, vector<589x8xf32> -> vector<589x8xf32>
    %c0_4 = arith.constant 0 : index
    %c0_5 = arith.constant 0 : index
    %4 = vector.load %arg3[%c0_4, %c0_5] : memref<1x8xf32, #tpu.memory_space<vmem>>, vector<1x8xf32>
    %5 = vector.broadcast %4 : vector<1x8xf32> to vector<589x8xf32>
    %6 = arith.addf %3, %5 : vector<589x8xf32>
    %cst_6 = arith.constant -1.702000e+00 : f32
    %7 = vector.broadcast %cst_6 : f32 to vector<589x8xf32>
    %8 = arith.mulf %7, %6 : vector<589x8xf32>
    %9 = math.exp %8 : vector<589x8xf32>
    %cst_7 = arith.constant 1.000000e+00 : f32
    %10 = vector.broadcast %cst_7 : f32 to vector<589x8xf32>
    %11 = arith.addf %10, %9 : vector<589x8xf32>
    %cst_8 = arith.constant 1.000000e+00 : f32
    %12 = vector.broadcast %cst_8 : f32 to vector<589x8xf32>
    %13 = arith.divf %12, %11 : vector<589x8xf32>
    %14 = arith.mulf %6, %13 : vector<589x8xf32>
    %15 = vector.extract_strided_slice %14 {offsets = [1, 0], sizes = [196, 8], strides = [1, 1]} : vector<589x8xf32> to vector<196x8xf32>
    %16 = vector.extract_strided_slice %14 {offsets = [197, 0], sizes = [196, 8], strides = [1, 1]} : vector<589x8xf32> to vector<196x8xf32>
    %17 = vector.extract_strided_slice %14 {offsets = [393, 0], sizes = [196, 8], strides = [1, 1]} : vector<589x8xf32> to vector<196x8xf32>
    %18 = tpu.concatenate %15, %16, %17 in 1 : vector<196x8xf32>, vector<196x8xf32>, vector<196x8xf32> -> vector<196x24xf32>
    %19 = vector.shape_cast %18 : vector<196x24xf32> to vector<14x14x24xf32>
    %cst_9 = arith.constant 0.000000e+00 : f32
    %20 = vector.broadcast %cst_9 : f32 to vector<14x2x24xf32>
    %21 = tpu.concatenate %19, %20 in 1 : vector<14x14x24xf32>, vector<14x2x24xf32> -> vector<14x16x24xf32>
    %cst_10 = arith.constant 0.000000e+00 : f32
    %22 = vector.broadcast %cst_10 : f32 to vector<272x24xf32>
    %c0_11 = arith.constant 0 : index
    %c0_12 = arith.constant 0 : index
    %23 = vector.load %arg8[%c0_11, %c0_12] : memref<272x24xf32, #tpu.memory_space<vmem>>, vector<272x24xf32>
    tpu.vector_store %arg8[%c0_11, %c0_12], %22 {strides = array<i32>} : memref<272x24xf32, #tpu.memory_space<vmem>>, vector<272x24xf32>,
    %24 = vector.shape_cast %21 : vector<14x16x24xf32> to vector<224x24xf32>
    %c24 = arith.constant 24 : index
    %c0_13 = arith.constant 0 : index
    %25 = vector.load %arg8[%c24, %c0_13] : memref<272x24xf32, #tpu.memory_space<vmem>>, vector<224x24xf32>
    tpu.vector_store %arg8[%c24, %c0_13], %24 {strides = array<i32>} : memref<272x24xf32, #tpu.memory_space<vmem>>, vector<224x24xf32>,
    %cst_14 = arith.constant 0.000000e+00 : f32
    %26 = vector.broadcast %cst_14 : f32 to vector<224x8xf32>
    %c7 = arith.constant 7 : index
    %c0_15 = arith.constant 0 : index
    %27 = vector.load %arg8[%c7, %c0_15] : memref<272x24xf32, #tpu.memory_space<vmem>>, vector<224x24xf32>
    %c0_16 = arith.constant 0 : index
    %c0_17 = arith.constant 0 : index
    %28 = vector.load %arg4[%c0_16, %c0_17] : memref<216x8xf32, #tpu.memory_space<vmem>>, vector<24x8xf32>
    %cst_18 = arith.constant dense<0.000000e+00> : vector<224x8xf32>
    %29 = tpu.matmul %27, %28, %cst_18 {dimension_numbers = #tpu.dot_dimension_numbers<[1], [0], [0], [1], [0, 0, 1, 1], [], []>} : vector<224x24xf32>, vector<24x8xf32>, vector<224x8xf32> -> vector<224x8xf32>
    %30 = arith.addf %26, %29 : vector<224x8xf32>
    %c8 = arith.constant 8 : index
    %c0_19 = arith.constant 0 : index
    %31 = vector.load %arg8[%c8, %c0_19] : memref<272x24xf32, #tpu.memory_space<vmem>>, vector<224x24xf32>
    %c24_20 = arith.constant 24 : index
    %c0_21 = arith.constant 0 : index
    %32 = vector.load %arg4[%c24_20, %c0_21] : memref<216x8xf32, #tpu.memory_space<vmem>>, vector<24x8xf32>
    %cst_22 = arith.constant dense<0.000000e+00> : vector<224x8xf32>
    %33 = tpu.matmul %31, %32, %cst_22 {dimension_numbers = #tpu.dot_dimension_numbers<[1], [0], [0], [1], [0, 0, 1, 1], [], []>} : vector<224x24xf32>, vector<24x8xf32>, vector<224x8xf32> -> vector<224x8xf32>
    %34 = arith.addf %30, %33 : vector<224x8xf32>
    %c9 = arith.constant 9 : index
    %c0_23 = arith.constant 0 : index
    %35 = vector.load %arg8[%c9, %c0_23] : memref<272x24xf32, #tpu.memory_space<vmem>>, vector<224x24xf32>
    %c48 = arith.constant 48 : index
    %c0_24 = arith.constant 0 : index
    %36 = vector.load %arg4[%c48, %c0_24] : memref<216x8xf32, #tpu.memory_space<vmem>>, vector<24x8xf32>
    %cst_25 = arith.constant dense<0.000000e+00> : vector<224x8xf32>
    %37 = tpu.matmul %35, %36, %cst_25 {dimension_numbers = #tpu.dot_dimension_numbers<[1], [0], [0], [1], [0, 0, 1, 1], [], []>} : vector<224x24xf32>, vector<24x8xf32>, vector<224x8xf32> -> vector<224x8xf32>
    %38 = arith.addf %34, %37 : vector<224x8xf32>
    %c23 = arith.constant 23 : index
    %c0_26 = arith.constant 0 : index
    %39 = vector.load %arg8[%c23, %c0_26] : memref<272x24xf32, #tpu.memory_space<vmem>>, vector<224x24xf32>
    %c72 = arith.constant 72 : index
    %c0_27 = arith.constant 0 : index
    %40 = vector.load %arg4[%c72, %c0_27] : memref<216x8xf32, #tpu.memory_space<vmem>>, vector<24x8xf32>
    %cst_28 = arith.constant dense<0.000000e+00> : vector<224x8xf32>
    %41 = tpu.matmul %39, %40, %cst_28 {dimension_numbers = #tpu.dot_dimension_numbers<[1], [0], [0], [1], [0, 0, 1, 1], [], []>} : vector<224x24xf32>, vector<24x8xf32>, vector<224x8xf32> -> vector<224x8xf32>
    %42 = arith.addf %38, %41 : vector<224x8xf32>
    %c24_29 = arith.constant 24 : index
    %c0_30 = arith.constant 0 : index
    %43 = vector.load %arg8[%c24_29, %c0_30] : memref<272x24xf32, #tpu.memory_space<vmem>>, vector<224x24xf32>
    %c96 = arith.constant 96 : index
    %c0_31 = arith.constant 0 : index
    %44 = vector.load %arg4[%c96, %c0_31] : memref<216x8xf32, #tpu.memory_space<vmem>>, vector<24x8xf32>
    %cst_32 = arith.constant dense<0.000000e+00> : vector<224x8xf32>
    %45 = tpu.matmul %43, %44, %cst_32 {dimension_numbers = #tpu.dot_dimension_numbers<[1], [0], [0], [1], [0, 0, 1, 1], [], []>} : vector<224x24xf32>, vector<24x8xf32>, vector<224x8xf32> -> vector<224x8xf32>
    %46 = arith.addf %42, %45 : vector<224x8xf32>
    %c25 = arith.constant 25 : index
    %c0_33 = arith.constant 0 : index
    %47 = vector.load %arg8[%c25, %c0_33] : memref<272x24xf32, #tpu.memory_space<vmem>>, vector<224x24xf32>
    %c120 = arith.constant 120 : index
    %c0_34 = arith.constant 0 : index
    %48 = vector.load %arg4[%c120, %c0_34] : memref<216x8xf32, #tpu.memory_space<vmem>>, vector<24x8xf32>
    %cst_35 = arith.constant dense<0.000000e+00> : vector<224x8xf32>
    %49 = tpu.matmul %47, %48, %cst_35 {dimension_numbers = #tpu.dot_dimension_numbers<[1], [0], [0], [1], [0, 0, 1, 1], [], []>} : vector<224x24xf32>, vector<24x8xf32>, vector<224x8xf32> -> vector<224x8xf32>
    %50 = arith.addf %46, %49 : vector<224x8xf32>
    %c39 = arith.constant 39 : index
    %c0_36 = arith.constant 0 : index
    %51 = vector.load %arg8[%c39, %c0_36] : memref<272x24xf32, #tpu.memory_space<vmem>>, vector<224x24xf32>
    %c144 = arith.constant 144 : index
    %c0_37 = arith.constant 0 : index
    %52 = vector.load %arg4[%c144, %c0_37] : memref<216x8xf32, #tpu.memory_space<vmem>>, vector<24x8xf32>
    %cst_38 = arith.constant dense<0.000000e+00> : vector<224x8xf32>
    %53 = tpu.matmul %51, %52, %cst_38 {dimension_numbers = #tpu.dot_dimension_numbers<[1], [0], [0], [1], [0, 0, 1, 1], [], []>} : vector<224x24xf32>, vector<24x8xf32>, vector<224x8xf32> -> vector<224x8xf32>
    %54 = arith.addf %50, %53 : vector<224x8xf32>
    %c40 = arith.constant 40 : index
    %c0_39 = arith.constant 0 : index
    %55 = vector.load %arg8[%c40, %c0_39] : memref<272x24xf32, #tpu.memory_space<vmem>>, vector<224x24xf32>
    %c168 = arith.constant 168 : index
    %c0_40 = arith.constant 0 : index
    %56 = vector.load %arg4[%c168, %c0_40] : memref<216x8xf32, #tpu.memory_space<vmem>>, vector<24x8xf32>
    %cst_41 = arith.constant dense<0.000000e+00> : vector<224x8xf32>
    %57 = tpu.matmul %55, %56, %cst_41 {dimension_numbers = #tpu.dot_dimension_numbers<[1], [0], [0], [1], [0, 0, 1, 1], [], []>} : vector<224x24xf32>, vector<24x8xf32>, vector<224x8xf32> -> vector<224x8xf32>
    %58 = arith.addf %54, %57 : vector<224x8xf32>
    %c41 = arith.constant 41 : index
    %c0_42 = arith.constant 0 : index
    %59 = vector.load %arg8[%c41, %c0_42] : memref<272x24xf32, #tpu.memory_space<vmem>>, vector<224x24xf32>
    %c192 = arith.constant 192 : index
    %c0_43 = arith.constant 0 : index
    %60 = vector.load %arg4[%c192, %c0_43] : memref<216x8xf32, #tpu.memory_space<vmem>>, vector<24x8xf32>
    %cst_44 = arith.constant dense<0.000000e+00> : vector<224x8xf32>
    %61 = tpu.matmul %59, %60, %cst_44 {dimension_numbers = #tpu.dot_dimension_numbers<[1], [0], [0], [1], [0, 0, 1, 1], [], []>} : vector<224x24xf32>, vector<24x8xf32>, vector<224x8xf32> -> vector<224x8xf32>
    %62 = arith.addf %58, %61 : vector<224x8xf32>
    %63 = vector.shape_cast %62 : vector<224x8xf32> to vector<14x16x8xf32>
    %64 = vector.extract_strided_slice %63 {offsets = [0, 0, 0], sizes = [14, 14, 8], strides = [1, 1, 1]} : vector<14x16x8xf32> to vector<14x14x8xf32>
    %65 = vector.shape_cast %64 : vector<14x14x8xf32> to vector<196x8xf32>
    %66 = vector.extract_strided_slice %14 {offsets = [0, 0], sizes = [1, 8], strides = [1, 1]} : vector<589x8xf32> to vector<1x8xf32>
    %67 = tpu.concatenate %66, %65, %65, %65 in 0 : vector<1x8xf32>, vector<196x8xf32>, vector<196x8xf32>, vector<196x8xf32> -> vector<589x8xf32>
    %cst_45 = arith.constant -1.702000e+00 : f32
    %68 = vector.broadcast %cst_45 : f32 to vector<589x8xf32>
    %69 = arith.mulf %68, %67 : vector<589x8xf32>
    %70 = math.exp %69 : vector<589x8xf32>
    %cst_46 = arith.constant 1.000000e+00 : f32
    %71 = vector.broadcast %cst_46 : f32 to vector<589x8xf32>
    %72 = arith.addf %71, %70 : vector<589x8xf32>
    %cst_47 = arith.constant 1.000000e+00 : f32
    %73 = vector.broadcast %cst_47 : f32 to vector<589x8xf32>
    %74 = arith.divf %73, %72 : vector<589x8xf32>
    %75 = arith.mulf %67, %74 : vector<589x8xf32>
    %c0_48 = arith.constant 0 : index
    %c0_49 = arith.constant 0 : index
    %76 = vector.load %arg5[%c0_48, %c0_49] : memref<8x768xf32, #tpu.memory_space<vmem>>, vector<8x768xf32>
    %cst_50 = arith.constant dense<0.000000e+00> : vector<589x768xf32>
    %77 = tpu.matmul %75, %76, %cst_50 {dimension_numbers = #tpu.dot_dimension_numbers<[1], [0], [0], [1], [0, 0, 1, 1], [], []>} : vector<589x8xf32>, vector<8x768xf32>, vector<589x768xf32> -> vector<589x768xf32>
    %c0_51 = arith.constant 0 : index
    %c0_52 = arith.constant 0 : index
    %78 = vector.load %arg6[%c0_51, %c0_52] : memref<1x768xf32, #tpu.memory_space<vmem>>, vector<1x768xf32>
    %79 = vector.broadcast %78 : vector<1x768xf32> to vector<589x768xf32>
    %80 = arith.addf %77, %79 : vector<589x768xf32>
    %c0_53 = arith.constant 0 : index
    %c0_54 = arith.constant 0 : index
    %c0_55 = arith.constant 0 : index
    %81 = vector.load %arg7[%c0_53, %c0_54, %c0_55] : memref<1x589x768xf32, #tpu.memory_space<vmem>>, vector<1x589x768xf32>
    %82 = vector.shape_cast %81 : vector<1x589x768xf32> to vector<589x768xf32>
    %83 = vector.shape_cast %80 : vector<589x768xf32> to vector<1x589x768xf32>
    tpu.vector_store %arg7[%c0_53, %c0_54, %c0_55], %83 {strides = array<i32>} : memref<1x589x768xf32, #tpu.memory_space<vmem>>, vector<1x589x768xf32>,
    return
  }
  func.func @transform_0(%arg0: i32) -> (i32, i32, i32) {
    %c0_i32 = arith.constant 0 : i32
    %c0_i32_0 = arith.constant 0 : i32
    %c0_i32_1 = arith.constant 0 : i32
    return %arg0, %c0_i32, %c0_i32_0 : i32, i32, i32
  }
  func.func @transform_1(%arg0: i32) -> (i32, i32) {
    %c0_i32 = arith.constant 0 : i32
    %c0_i32_0 = arith.constant 0 : i32
    %c0_i32_1 = arith.constant 0 : i32
    return %c0_i32, %c0_i32_0 : i32, i32
  }
  func.func @transform_2(%arg0: i32) -> (i32, i32) {
    %c0_i32 = arith.constant 0 : i32
    %c0_i32_0 = arith.constant 0 : i32
    %c0_i32_1 = arith.constant 0 : i32
    return %c0_i32, %c0_i32_0 : i32, i32
  }
  func.func @transform_3(%arg0: i32) -> (i32, i32) {
    %c0_i32 = arith.constant 0 : i32
    %c0_i32_0 = arith.constant 0 : i32
    %c0_i32_1 = arith.constant 0 : i32
    return %c0_i32, %c0_i32_0 : i32, i32
  }
  func.func @transform_4(%arg0: i32) -> (i32, i32) {
    %c0_i32 = arith.constant 0 : i32
    %c0_i32_0 = arith.constant 0 : i32
    %c0_i32_1 = arith.constant 0 : i32
    return %c0_i32, %c0_i32_0 : i32, i32
  }
  func.func @transform_5(%arg0: i32) -> (i32, i32) {
    %c0_i32 = arith.constant 0 : i32
    %c0_i32_0 = arith.constant 0 : i32
    %c0_i32_1 = arith.constant 0 : i32
    return %c0_i32, %c0_i32_0 : i32, i32
  }
  func.func @transform_6(%arg0: i32) -> (i32, i32, i32) {
    %c0_i32 = arith.constant 0 : i32
    %c0_i32_0 = arith.constant 0 : i32
    %c0_i32_1 = arith.constant 0 : i32
    return %arg0, %c0_i32, %c0_i32_0 : i32, i32, i32
  }
}

</mosaic_0001>

<llo_original>
// kernel: convpass_forward.1
$region0: #{convpass_forward.1}
  #allocation0 [shape = 'u32[]', space=smem, size = 0x4, offset = 0x4, fixed_abs, tag = 'smem constant byte address 0x4 - core index']
  #allocation1 [shape = 'u32[72,128]{1,0:T(1,128)}', space=vmem, size = 0x9000, scoped, tag = 'internal scratch']
  #allocation2 [shape = 'f32[272,24]{1,0:T(8,128)}', space=vmem, size = 0x22000, scoped, tag = 'scratch operand']
  %s0 = inlined_call_operand.vmem [shape: f32[2,589,768], index: 0, kind: input, shape index: {}]
  %s1 = inlined_call_operand.vmem [shape: f32[768,8], index: 1, kind: input, shape index: {}]
  %s2 = inlined_call_operand.vmem [shape: f32[1,8], index: 2, kind: input, shape index: {}]
  %s3 = inlined_call_operand.vmem [shape: f32[216,8], index: 3, kind: input, shape index: {}]
  %s4 = inlined_call_operand.vmem [shape: f32[8,768], index: 4, kind: input, shape index: {}]
  %s5 = inlined_call_operand.vmem [shape: f32[1,768], index: 5, kind: input, shape index: {}]
  %s6 = inlined_call_operand.vmem [shape: f32[2,589,768], index: 6, kind: output, shape index: {}]
  %s7 = sld [smem:[#allocation0]]
  $region57: #{convpass_forward.1} parent=0
    _
  %s9 = ssub.s32 1, %s7
  %s10 = scalar_select 0, %s9, %s7
  loop: start=0, step=1, limit=4
  $region2: #{convpass_forward.1} parent=0 // loop_pre_header
    _
  $region3: #{convpass_forward.1} parent=0 // loop_header
    %s12 = sphi 0, %s16
    %p13 = scmp.ge.s32.totalorder %s12, 4
    %s22 = sphi 0, %s24
    %s25 = sphi 0, %s22
    %s26 = sphi 0, %s25
    %s42 = sphi 0, %s26
    %s46 = sphi 0, %s46
    %s48 = sphi 0, %s46
    %s49 = sphi 0, %s48
    %s63 = sphi 0, %s49
    %s67 = sphi 0, %s67
    %s69 = sphi 0, %s67
    %s70 = sphi 0, %s69
    %s84 = sphi 0, %s70
    %s88 = sphi 0, %s88
    %s90 = sphi 0, %s88
    %s91 = sphi 0, %s90
    %s105 = sphi 0, %s91
    %s109 = sphi 0, %s109
    %s111 = sphi 0, %s109
    %s112 = sphi 0, %s111
    %s126 = sphi 0, %s112
    %s130 = sphi 0, %s130
    %s132 = sphi 0, %s130
    %s133 = sphi 0, %s132
    %s147 = sphi 0, %s133
    %s153 = sphi 0, %s155
    %s156 = sphi 0, %s153
    %s157 = sphi 0, %s156
    %s173 = sphi 0, %s157
  $region4: #{convpass_forward.1} parent=0 // loop_header_branch
    %15 = sbr.rel (%p13) target = $region8
  $region5: #{convpass_forward.1} parent=0 // loop_body
    %s17 = ssub.s32 %s12, 1
    %s18 = ssub.s32 %s12, 2
    %s19 = sadd.s32 %s12, 1
    %s20 = ssub.s32 %s12, %s19
    %p21 = scmp.eq.s32.totalorder %s20, 0
    %s23 = sadd.s32 %s22, 1
    %s24 = scalar_select %p21, %s22, %s23
    %p27 = pneg %p21
    %p28 = scmp.eq.s32.totalorder %s12, 1
    %p29 = por %p27, %p28
    %p30 = scmp.ne.s32.totalorder %s22, %s25
    %p31 = scmp.eq.s32.totalorder %s12, 0
    %p32 = por %p30, %p31
    %p33 = scmp.ne.s32.totalorder %s22, %s25
    %p34 = scmp.eq.s32.totalorder %s17, 1
    %p35 = por %p33, %p34
    %p36 = scmp.ne.s32.totalorder %s25, %s26
    %p37 = scmp.eq.s32.totalorder %s17, 0
    %p38 = por %p36, %p37
    %p39 = scmp.ne.s32.totalorder %s25, %s26
    %p40 = scmp.eq.s32.totalorder %s18, 1
    %p41 = por %p39, %p40
    %p43 = scmp.ne.s32.totalorder %s26, %s42
    %p44 = scmp.eq.s32.totalorder %s18, 0
    %p45 = por %p43, %p44
    %s47 = sadd.s32 %s46, 1
    %p50 = scmp.eq.s32.totalorder %s12, 1
    %p51 = scmp.ne.s32.totalorder %s46, %s48
    %p52 = scmp.eq.s32.totalorder %s12, 0
    %p53 = por %p51, %p52
    %p54 = scmp.ne.s32.totalorder %s46, %s48
    %p55 = scmp.eq.s32.totalorder %s17, 1
    %p56 = por %p54, %p55
    %p57 = scmp.ne.s32.totalorder %s48, %s49
    %p58 = scmp.eq.s32.totalorder %s17, 0
    %p59 = por %p57, %p58
    %p60 = scmp.ne.s32.totalorder %s48, %s49
    %p61 = scmp.eq.s32.totalorder %s18, 1
    %p62 = por %p60, %p61
    %p64 = scmp.ne.s32.totalorder %s49, %s63
    %p65 = scmp.eq.s32.totalorder %s18, 0
    %p66 = por %p64, %p65
    %s68 = sadd.s32 %s67, 1
    %p71 = scmp.eq.s32.totalorder %s12, 1
    %p72 = scmp.ne.s32.totalorder %s67, %s69
    %p73 = scmp.eq.s32.totalorder %s12, 0
    %p74 = por %p72, %p73
    %p75 = scmp.ne.s32.totalorder %s67, %s69
    %p76 = scmp.eq.s32.totalorder %s17, 1
    %p77 = por %p75, %p76
    %p78 = scmp.ne.s32.totalorder %s69, %s70
    %p79 = scmp.eq.s32.totalorder %s17, 0
    %p80 = por %p78, %p79
    %p81 = scmp.ne.s32.totalorder %s69, %s70
    %p82 = scmp.eq.s32.totalorder %s18, 1
    %p83 = por %p81, %p82
    %p85 = scmp.ne.s32.totalorder %s70, %s84
    %p86 = scmp.eq.s32.totalorder %s18, 0
    %p87 = por %p85, %p86
    %s89 = sadd.s32 %s88, 1
    %p92 = scmp.eq.s32.totalorder %s12, 1
    %p93 = scmp.ne.s32.totalorder %s88, %s90
    %p94 = scmp.eq.s32.totalorder %s12, 0
    %p95 = por %p93, %p94
    %p96 = scmp.ne.s32.totalorder %s88, %s90
    %p97 = scmp.eq.s32.totalorder %s17, 1
    %p98 = por %p96, %p97
    %p99 = scmp.ne.s32.totalorder %s90, %s91
    %p100 = scmp.eq.s32.totalorder %s17, 0
    %p101 = por %p99, %p100
    %p102 = scmp.ne.s32.totalorder %s90, %s91
    %p103 = scmp.eq.s32.totalorder %s18, 1
    %p104 = por %p102, %p103
    %p106 = scmp.ne.s32.totalorder %s91, %s105
    %p107 = scmp.eq.s32.totalorder %s18, 0
    %p108 = por %p106, %p107
    %s110 = sadd.s32 %s109, 1
    %p113 = scmp.eq.s32.totalorder %s12, 1
    %p114 = scmp.ne.s32.totalorder %s109, %s111
    %p115 = scmp.eq.s32.totalorder %s12, 0
    %p116 = por %p114, %p115
    %p117 = scmp.ne.s32.totalorder %s109, %s111
    %p118 = scmp.eq.s32.totalorder %s17, 1
    %p119 = por %p117, %p118
    %p120 = scmp.ne.s32.totalorder %s111, %s112
    %p121 = scmp.eq.s32.totalorder %s17, 0
    %p122 = por %p120, %p121
    %p123 = scmp.ne.s32.totalorder %s111, %s112
    %p124 = scmp.eq.s32.totalorder %s18, 1
    %p125 = por %p123, %p124
    %p127 = scmp.ne.s32.totalorder %s112, %s126
    %p128 = scmp.eq.s32.totalorder %s18, 0
    %p129 = por %p127, %p128
    %s131 = sadd.s32 %s130, 1
    %p134 = scmp.eq.s32.totalorder %s12, 1
    %p135 = scmp.ne.s32.totalorder %s130, %s132
    %p136 = scmp.eq.s32.totalorder %s12, 0
    %p137 = por %p135, %p136
    %p138 = scmp.ne.s32.totalorder %s130, %s132
    %p139 = scmp.eq.s32.totalorder %s17, 1
    %p140 = por %p138, %p139
    %p141 = scmp.ne.s32.totalorder %s132, %s133
    %p142 = scmp.eq.s32.totalorder %s17, 0
    %p143 = por %p141, %p142
    %p144 = scmp.ne.s32.totalorder %s132, %s133
    %p145 = scmp.eq.s32.totalorder %s18, 1
    %p146 = por %p144, %p145
    %p148 = scmp.ne.s32.totalorder %s133, %s147
    %p149 = scmp.eq.s32.totalorder %s18, 0
    %p150 = por %p148, %p149
    %s151 = ssub.s32 %s12, %s19
    %p152 = scmp.eq.s32.totalorder %s151, 0
    %s154 = sadd.s32 %s153, 1
    %s155 = scalar_select %p152, %s153, %s154
    %p158 = pneg %p152
    %p159 = scmp.eq.s32.totalorder %s12, 1
    %p160 = por %p158, %p159
    %p161 = scmp.ne.s32.totalorder %s153, %s156
    %p162 = scmp.eq.s32.totalorder %s12, 0
    %p163 = por %p161, %p162
    %p164 = scmp.ne.s32.totalorder %s153, %s156
    %p165 = scmp.eq.s32.totalorder %s17, 1
    %p166 = por %p164, %p165
    %p167 = scmp.ne.s32.totalorder %s156, %s157
    %p168 = scmp.eq.s32.totalorder %s17, 0
    %p169 = por %p167, %p168
    %p170 = scmp.ne.s32.totalorder %s156, %s157
    %p171 = scmp.eq.s32.totalorder %s18, 1
    %p172 = por %p170, %p171
    %p174 = scmp.ne.s32.totalorder %s157, %s173
    %p175 = scmp.eq.s32.totalorder %s18, 0
    %p176 = por %p174, %p175
    %p177 = scmp.le.s32.totalorder 1, %s12
    %p178 = scmp.lt.s32.totalorder %s12, 3
    %p179 = pnand %p177, %p178
    %p180 = pneg %p179
    // Predicated region
    $region9: #{convpass_forward.1} parent=5 // pred_check
      _
    $region10: #{convpass_forward.1} parent=5 // pred_check_branch
      %182 = sbr.rel (%p179) target = $region12
    $region11: #{convpass_forward.1} parent=5 // pred_region
      %s183 = ssub.s32 %s12, 1
      // Predicated region
      $region13: #{convpass_forward.1} parent=11 // pred_check
        %p184 = pneg %p59
      $region14: #{convpass_forward.1} parent=11 // pred_check_branch
        %186 = sbr.rel (%p184) target = $region16
      $region15: #{convpass_forward.1} parent=11 // pred_region
        _
      $region16: #{convpass_forward.1} parent=11 // pred_fallthru
        _
      // Predicated region
      $region17: #{convpass_forward.1} parent=11 // pred_check
        %p187 = pneg %p80
      $region18: #{convpass_forward.1} parent=11 // pred_check_branch
        %189 = sbr.rel (%p187) target = $region20
      $region19: #{convpass_forward.1} parent=11 // pred_region
        _
      $region20: #{convpass_forward.1} parent=11 // pred_fallthru
        _
      // Predicated region
      $region21: #{convpass_forward.1} parent=11 // pred_check
        %p190 = pneg %p101
      $region22: #{convpass_forward.1} parent=11 // pred_check_branch
        %192 = sbr.rel (%p190) target = $region24
      $region23: #{convpass_forward.1} parent=11 // pred_region
        _
      $region24: #{convpass_forward.1} parent=11 // pred_fallthru
        _
      // Predicated region
      $region25: #{convpass_forward.1} parent=11 // pred_check
        %p193 = pneg %p122
      $region26: #{convpass_forward.1} parent=11 // pred_check_branch
        %195 = sbr.rel (%p193) target = $region28
      $region27: #{convpass_forward.1} parent=11 // pred_region
        _
      $region28: #{convpass_forward.1} parent=11 // pred_fallthru
        _
      // Predicated region
      $region29: #{convpass_forward.1} parent=11 // pred_check
        %p196 = pneg %p143
      $region30: #{convpass_forward.1} parent=11 // pred_check_branch
        %198 = sbr.rel (%p196) target = $region32
      $region31: #{convpass_forward.1} parent=11 // pred_region
        _
      $region32: #{convpass_forward.1} parent=11 // pred_fallthru
        _
    $region12: #{convpass_forward.1} parent=5 // pred_fallthru
      _
    %p199 = scmp.lt.s32.totalorder %s12, 2
    // Predicated region
    $region33: #{convpass_forward.1} parent=5 // pred_check
      %p200 = pneg %p199
    $region34: #{convpass_forward.1} parent=5 // pred_check_branch
      %202 = sbr.rel (%p200) target = $region36
    $region35: #{convpass_forward.1} parent=5 // pred_region
      // Predicated region
      $region37: #{convpass_forward.1} parent=35 // pred_check
        %p203 = pneg %p32
      $region38: #{convpass_forward.1} parent=35 // pred_check_branch
        %205 = sbr.rel (%p203) target = $region40
      $region39: #{convpass_forward.1} parent=35 // pred_region
        %p206 = scmp.lt.s32.totalorder %s12, 1
        %s207 = scalar_select %p206, %s12, 1
        %s208 = smul.addr %s207, 444
        %s209 = smul.addr %s208, 8
        %s210 = scalar_lea.vmem %s0, %s209
      $region40: #{convpass_forward.1} parent=35 // pred_fallthru
        _
    $region36: #{convpass_forward.1} parent=5 // pred_fallthru
      _
    %p211 = scmp.le.s32.totalorder 1, %s12
    %p212 = scmp.lt.s32.totalorder %s12, 3
    %p213 = pnand %p211, %p212
    %p214 = pneg %p213
    // Predicated region
    $region41: #{convpass_forward.1} parent=5 // pred_check
      _
    $region42: #{convpass_forward.1} parent=5 // pred_check_branch
      %216 = sbr.rel (%p213) target = $region44
    $region43: #{convpass_forward.1} parent=5 // pred_region
      %s217 = ssub.s32 %s12, 1
      %p218 = scmp.lt.s32.totalorder %s17, 1
      %s219 = scalar_select %p218, %s17, 1
      %s220 = smul.addr %s219, 444
      %s221 = smul.addr %s220, 8
      %s222 = scalar_lea.vmem %s0, %s221
      %p223 = pneg %p38
      %p224 = pneg %p35
      %p225 = pneg %p59
      %p226 = pneg %p56
      %p227 = pneg %p80
      %p228 = pneg %p77
      %p229 = pneg %p101
      %p230 = pneg %p98
      %p231 = pneg %p122
      %p232 = pneg %p119
      %p233 = pneg %p143
      %p234 = pneg %p140
      %p235 = pneg %p169
      %p236 = pneg %p166
      %p237 = scmp.lt.s32.totalorder %s17, 1
      %s238 = scalar_select %p237, %s17, 1
      %s239 = smul.addr %s238, 444
      %s240 = smul.addr %s239, 8
      %s241 = scalar_lea.vmem %s6, %s240
      %p242 = scmp.lt.s32.totalorder %s17, 1
      %s243 = scalar_select %p242, %s17, 1
      %s244 = smul.addr %s243, 444
      %s245 = smul.addr %s244, 8
      %s246 = scalar_lea.vmem %s0, %s245
      %p247 = scmp.lt.s32.totalorder %s17, 1
      %s248 = scalar_select %p247, %s17, 1
      %s249 = smul.addr %s248, 444
      %s250 = smul.addr %s249, 8
      %s251 = scalar_lea.vmem %s6, %s250
      %v252 = vld [vmem:[%s246] sm:$0xff]
      %v253 = vld [vmem:[%s246 + $0x8] sm:$0xff]
      %v254 = vld [vmem:[%s246 + $0x10] sm:$0xff]
      %v255 = vld [vmem:[%s246 + $0x18] sm:$0xff]
      %v256 = vld [vmem:[%s246 + $0x20] sm:$0xff]
      %v257 = vld [vmem:[%s246 + $0x28] sm:$0xff]
      %v258 = vld [vmem:[%s246 + $0x30] sm:$0xff]
      %v259 = vld [vmem:[%s246 + $0x38] sm:$0xff]
      %v260 = vld [vmem:[%s246 + $0x40] sm:$0xff]
      %v261 = vld [vmem:[%s246 + $0x48] sm:$0xff]
      %v262 = vld [vmem:[%s246 + $0x50] sm:$0xff]
      %v263 = vld [vmem:[%s246 + $0x58] sm:$0xff]
      %v264 = vld [vmem:[%s246 + $0x60] sm:$0xff]
      %v265 = vld [vmem:[%s246 + $0x68] sm:$0xff]
      %v266 = vld [vmem:[%s246 + $0x70] sm:$0xff]
      %v267 = vld [vmem:[%s246 + $0x78] sm:$0xff]
      %v268 = vld [vmem:[%s246 + $0x80] sm:$0xff]
      %v269 = vld [vmem:[%s246 + $0x88] sm:$0xff]
      %v270 = vld [vmem:[%s246 + $0x90] sm:$0xff]
      %v271 = vld [vmem:[%s246 + $0x98] sm:$0xff]
      %v272 = vld [vmem:[%s246 + $0xa0] sm:$0xff]
      %v273 = vld [vmem:[%s246 + $0xa8] sm:$0xff]
      %v274 = vld [vmem:[%s246 + $0xb0] sm:$0xff]
      %v275 = vld [vmem:[%s246 + $0xb8] sm:$0xff]
      %v276 = vld [vmem:[%s246 + $0xc0] sm:$0xff]
      %v277 = vld [vmem:[%s246 + $0xc8] sm:$0xff]
      %v278 = vld [vmem:[%s246 + $0xd0] sm:$0xff]
      %v279 = vld [vmem:[%s246 + $0xd8] sm:$0xff]
      %v280 = vld [vmem:[%s246 + $0xe0] sm:$0xff]
      %v281 = vld [vmem:[%s246 + $0xe8] sm:$0xff]
      %v282 = vld [vmem:[%s246 + $0xf0] sm:$0xff]
      %v283 = vld [vmem:[%s246 + $0xf8] sm:$0xff]
      %v284 = vld [vmem:[%s246 + $0x100] sm:$0xff]
      %v285 = vld [vmem:[%s246 + $0x108] sm:$0xff]
      %v286 = vld [vmem:[%s246 + $0x110] sm:$0xff]
      %v287 = vld [vmem:[%s246 + $0x118] sm:$0xff]
      %v288 = vld [vmem:[%s246 + $0x120] sm:$0xff]
      %v289 = vld [vmem:[%s246 + $0x128] sm:$0xff]
      %v290 = vld [vmem:[%s246 + $0x130] sm:$0xff]
      %v291 = vld [vmem:[%s246 + $0x138] sm:$0xff]
      %v292 = vld [vmem:[%s246 + $0x140] sm:$0xff]
      %v293 = vld [vmem:[%s246 + $0x148] sm:$0xff]
      %v294 = vld [vmem:[%s246 + $0x150] sm:$0xff]
      %v295 = vld [vmem:[%s246 + $0x158] sm:$0xff]
      %v296 = vld [vmem:[%s246 + $0x160] sm:$0xff]
      %v297 = vld [vmem:[%s246 + $0x168] sm:$0xff]
      %v298 = vld [vmem:[%s246 + $0x170] sm:$0xff]
      %v299 = vld [vmem:[%s246 + $0x178] sm:$0xff]
      %v300 = vld [vmem:[%s246 + $0x180] sm:$0xff]
      %v301 = vld [vmem:[%s246 + $0x188] sm:$0xff]
      %v302 = vld [vmem:[%s246 + $0x190] sm:$0xff]
      %v303 = vld [vmem:[%s246 + $0x198] sm:$0xff]
      %v304 = vld [vmem:[%s246 + $0x1a0] sm:$0xff]
      %v305 = vld [vmem:[%s246 + $0x1a8] sm:$0xff]
      %v306 = vld [vmem:[%s246 + $0x1b0] sm:$0xff]
      %v307 = vld [vmem:[%s246 + $0x1b8] sm:$0xff]
      %v308 = vld [vmem:[%s246 + $0x1c0] sm:$0xff]
      %v309 = vld [vmem:[%s246 + $0x1c8] sm:$0xff]
      %v310 = vld [vmem:[%s246 + $0x1d0] sm:$0xff]
      %v311 = vld [vmem:[%s246 + $0x1d8] sm:$0xff]
      %v312 = vld [vmem:[%s246 + $0x1e0] sm:$0xff]
      %v313 = vld [vmem:[%s246 + $0x1e8] sm:$0xff]
      %v314 = vld [vmem:[%s246 + $0x1f0] sm:$0xff]
      %v315 = vld [vmem:[%s246 + $0x1f8] sm:$0xff]
      %v316 = vld [vmem:[%s246 + $0x200] sm:$0xff]
      %v317 = vld [vmem:[%s246 + $0x208] sm:$0xff]
      %v318 = vld [vmem:[%s246 + $0x210] sm:$0xff]
      %v319 = vld [vmem:[%s246 + $0x218] sm:$0xff]
      %v320 = vld [vmem:[%s246 + $0x220] sm:$0xff]
      %v321 = vld [vmem:[%s246 + $0x228] sm:$0xff]
      %v322 = vld [vmem:[%s246 + $0x230] sm:$0xff]
      %v323 = vld [vmem:[%s246 + $0x238] sm:$0xff]
      %v324 = vld [vmem:[%s246 + $0x240] sm:$0xff]
      %v325 = vld [vmem:[%s246 + $0x248] sm:$0xff]
      %v326 = vld [vmem:[%s246 + $0x250] sm:$0xff]
      %v327 = vld [vmem:[%s246 + $0x258] sm:$0xff]
      %v328 = vld [vmem:[%s246 + $0x260] sm:$0xff]
      %v329 = vld [vmem:[%s246 + $0x268] sm:$0xff]
      %v330 = vld [vmem:[%s246 + $0x270] sm:$0xff]
      %v331 = vld [vmem:[%s246 + $0x278] sm:$0xff]
      %v332 = vld [vmem:[%s246 + $0x280] sm:$0xff]
      %v333 = vld [vmem:[%s246 + $0x288] sm:$0xff]
      %v334 = vld [vmem:[%s246 + $0x290] sm:$0xff]
      %v335 = vld [vmem:[%s246 + $0x298] sm:$0xff]
      %v336 = vld [vmem:[%s246 + $0x2a0] sm:$0xff]
      %v337 = vld [vmem:[%s246 + $0x2a8] sm:$0xff]
      %v338 = vld [vmem:[%s246 + $0x2b0] sm:$0xff]
      %v339 = vld [vmem:[%s246 + $0x2b8] sm:$0xff]
      %v340 = vld [vmem:[%s246 + $0x2c0] sm:$0xff]
      %v341 = vld [vmem:[%s246 + $0x2c8] sm:$0xff]
      %v342 = vld [vmem:[%s246 + $0x2d0] sm:$0xff]
      %v343 = vld [vmem:[%s246 + $0x2d8] sm:$0xff]
      %v344 = vld [vmem:[%s246 + $0x2e0] sm:$0xff]
      %v345 = vld [vmem:[%s246 + $0x2e8] sm:$0xff]
      %v346 = vld [vmem:[%s246 + $0x2f0] sm:$0xff]
      %v347 = vld [vmem:[%s246 + $0x2f8] sm:$0xff]
      %v348 = vld [vmem:[%s246 + $0x300] sm:$0xff]
      %v349 = vld [vmem:[%s246 + $0x308] sm:$0xff]
      %v350 = vld [vmem:[%s246 + $0x310] sm:$0xff]
      %v351 = vld [vmem:[%s246 + $0x318] sm:$0xff]
      %v352 = vld [vmem:[%s246 + $0x320] sm:$0xff]
      %v353 = vld [vmem:[%s246 + $0x328] sm:$0xff]
      %v354 = vld [vmem:[%s246 + $0x330] sm:$0xff]
      %v355 = vld [vmem:[%s246 + $0x338] sm:$0xff]
      %v356 = vld [vmem:[%s246 + $0x340] sm:$0xff]
      %v357 = vld [vmem:[%s246 + $0x348] sm:$0xff]
      %v358 = vld [vmem:[%s246 + $0x350] sm:$0xff]
      %v359 = vld [vmem:[%s246 + $0x358] sm:$0xff]
      %v360 = vld [vmem:[%s246 + $0x360] sm:$0xff]
      %v361 = vld [vmem:[%s246 + $0x368] sm:$0xff]
      %v362 = vld [vmem:[%s246 + $0x370] sm:$0xff]
      %v363 = vld [vmem:[%s246 + $0x378] sm:$0xff]
      %v364 = vld [vmem:[%s246 + $0x380] sm:$0xff]
      %v365 = vld [vmem:[%s246 + $0x388] sm:$0xff]
      %v366 = vld [vmem:[%s246 + $0x390] sm:$0xff]
      %v367 = vld [vmem:[%s246 + $0x398] sm:$0xff]
      %v368 = vld [vmem:[%s246 + $0x3a0] sm:$0xff]
      %v369 = vld [vmem:[%s246 + $0x3a8] sm:$0xff]
      %v370 = vld [vmem:[%s246 + $0x3b0] sm:$0xff]
      %v371 = vld [vmem:[%s246 + $0x3b8] sm:$0xff]
      %v372 = vld [vmem:[%s246 + $0x3c0] sm:$0xff]
      %v373 = vld [vmem:[%s246 + $0x3c8] sm:$0xff]
      %v374 = vld [vmem:[%s246 + $0x3d0] sm:$0xff]
      %v375 = vld [vmem:[%s246 + $0x3d8] sm:$0xff]
      %v376 = vld [vmem:[%s246 + $0x3e0] sm:$0xff]
      %v377 = vld [vmem:[%s246 + $0x3e8] sm:$0xff]
      %v378 = vld [vmem:[%s246 + $0x3f0] sm:$0xff]
      %v379 = vld [vmem:[%s246 + $0x3f8] sm:$0xff]
      %v380 = vld [vmem:[%s246 + $0x400] sm:$0xff]
      %v381 = vld [vmem:[%s246 + $0x408] sm:$0xff]
      %v382 = vld [vmem:[%s246 + $0x410] sm:$0xff]
      %v383 = vld [vmem:[%s246 + $0x418] sm:$0xff]
      %v384 = vld [vmem:[%s246 + $0x420] sm:$0xff]
      %v385 = vld [vmem:[%s246 + $0x428] sm:$0xff]
      %v386 = vld [vmem:[%s246 + $0x430] sm:$0xff]
      %v387 = vld [vmem:[%s246 + $0x438] sm:$0xff]
      %v388 = vld [vmem:[%s246 + $0x440] sm:$0xff]
      %v389 = vld [vmem:[%s246 + $0x448] sm:$0xff]
      %v390 = vld [vmem:[%s246 + $0x450] sm:$0xff]
      %v391 = vld [vmem:[%s246 + $0x458] sm:$0xff]
      %v392 = vld [vmem:[%s246 + $0x460] sm:$0xff]
      %v393 = vld [vmem:[%s246 + $0x468] sm:$0xff]
      %v394 = vld [vmem:[%s246 + $0x470] sm:$0xff]
      %v395 = vld [vmem:[%s246 + $0x478] sm:$0xff]
      %v396 = vld [vmem:[%s246 + $0x480] sm:$0xff]
      %v397 = vld [vmem:[%s246 + $0x488] sm:$0xff]
      %v398 = vld [vmem:[%s246 + $0x490] sm:$0xff]
      %v399 = vld [vmem:[%s246 + $0x498] sm:$0xff]
      %v400 = vld [vmem:[%s246 + $0x4a0] sm:$0xff]
      %v401 = vld [vmem:[%s246 + $0x4a8] sm:$0xff]
      %v402 = vld [vmem:[%s246 + $0x4b0] sm:$0xff]
      %v403 = vld [vmem:[%s246 + $0x4b8] sm:$0xff]
      %v404 = vld [vmem:[%s246 + $0x4c0] sm:$0xff]
      %v405 = vld [vmem:[%s246 + $0x4c8] sm:$0xff]
      %v406 = vld [vmem:[%s246 + $0x4d0] sm:$0xff]
      %v407 = vld [vmem:[%s246 + $0x4d8] sm:$0xff]
      %v408 = vld [vmem:[%s246 + $0x4e0] sm:$0xff]
      %v409 = vld [vmem:[%s246 + $0x4e8] sm:$0xff]
      %v410 = vld [vmem:[%s246 + $0x4f0] sm:$0xff]
      %v411 = vld [vmem:[%s246 + $0x4f8] sm:$0xff]
      %v412 = vld [vmem:[%s246 + $0x500] sm:$0xff]
      %v413 = vld [vmem:[%s246 + $0x508] sm:$0xff]
      %v414 = vld [vmem:[%s246 + $0x510] sm:$0xff]
      %v415 = vld [vmem:[%s246 + $0x518] sm:$0xff]
      %v416 = vld [vmem:[%s246 + $0x520] sm:$0xff]
      %v417 = vld [vmem:[%s246 + $0x528] sm:$0xff]
      %v418 = vld [vmem:[%s246 + $0x530] sm:$0xff]
      %v419 = vld [vmem:[%s246 + $0x538] sm:$0xff]
      %v420 = vld [vmem:[%s246 + $0x540] sm:$0xff]
      %v421 = vld [vmem:[%s246 + $0x548] sm:$0xff]
      %v422 = vld [vmem:[%s246 + $0x550] sm:$0xff]
      %v423 = vld [vmem:[%s246 + $0x558] sm:$0xff]
      %v424 = vld [vmem:[%s246 + $0x560] sm:$0xff]
      %v425 = vld [vmem:[%s246 + $0x568] sm:$0xff]
      %v426 = vld [vmem:[%s246 + $0x570] sm:$0xff]
      %v427 = vld [vmem:[%s246 + $0x578] sm:$0xff]
      %v428 = vld [vmem:[%s246 + $0x580] sm:$0xff]
      %v429 = vld [vmem:[%s246 + $0x588] sm:$0xff]
      %v430 = vld [vmem:[%s246 + $0x590] sm:$0xff]
      %v431 = vld [vmem:[%s246 + $0x598] sm:$0xff]
      %v432 = vld [vmem:[%s246 + $0x5a0] sm:$0xff]
      %v433 = vld [vmem:[%s246 + $0x5a8] sm:$0xff]
      %v434 = vld [vmem:[%s246 + $0x5b0] sm:$0xff]
      %v435 = vld [vmem:[%s246 + $0x5b8] sm:$0xff]
      %v436 = vld [vmem:[%s246 + $0x5c0] sm:$0xff]
      %v437 = vld [vmem:[%s246 + $0x5c8] sm:$0xff]
      %v438 = vld [vmem:[%s246 + $0x5d0] sm:$0xff]
      %v439 = vld [vmem:[%s246 + $0x5d8] sm:$0xff]
      %v440 = vld [vmem:[%s246 + $0x5e0] sm:$0xff]
      %v441 = vld [vmem:[%s246 + $0x5e8] sm:$0xff]
      %v442 = vld [vmem:[%s246 + $0x5f0] sm:$0xff]
      %v443 = vld [vmem:[%s246 + $0x5f8] sm:$0xff]
      %v444 = vld [vmem:[%s246 + $0x600] sm:$0xff]
      %v445 = vld [vmem:[%s246 + $0x608] sm:$0xff]
      %v446 = vld [vmem:[%s246 + $0x610] sm:$0xff]
      %v447 = vld [vmem:[%s246 + $0x618] sm:$0xff]
      %v448 = vld [vmem:[%s246 + $0x620] sm:$0xff]
      %v449 = vld [vmem:[%s246 + $0x628] sm:$0xff]
      %v450 = vld [vmem:[%s246 + $0x630] sm:$0xff]
      %v451 = vld [vmem:[%s246 + $0x638] sm:$0xff]
      %v452 = vld [vmem:[%s246 + $0x640] sm:$0xff]
      %v453 = vld [vmem:[%s246 + $0x648] sm:$0xff]
      %v454 = vld [vmem:[%s246 + $0x650] sm:$0xff]
      %v455 = vld [vmem:[%s246 + $0x658] sm:$0xff]
      %v456 = vld [vmem:[%s246 + $0x660] sm:$0xff]
      %v457 = vld [vmem:[%s246 + $0x668] sm:$0xff]
      %v458 = vld [vmem:[%s246 + $0x670] sm:$0xff]
      %v459 = vld [vmem:[%s246 + $0x678] sm:$0xff]
      %v460 = vld [vmem:[%s246 + $0x680] sm:$0xff]
      %v461 = vld [vmem:[%s246 + $0x688] sm:$0xff]
      %v462 = vld [vmem:[%s246 + $0x690] sm:$0xff]
      %v463 = vld [vmem:[%s246 + $0x698] sm:$0xff]
      %v464 = vld [vmem:[%s246 + $0x6a0] sm:$0xff]
      %v465 = vld [vmem:[%s246 + $0x6a8] sm:$0xff]
      %v466 = vld [vmem:[%s246 + $0x6b0] sm:$0xff]
      %v467 = vld [vmem:[%s246 + $0x6b8] sm:$0xff]
      %v468 = vld [vmem:[%s246 + $0x6c0] sm:$0xff]
      %v469 = vld [vmem:[%s246 + $0x6c8] sm:$0xff]
      %v470 = vld [vmem:[%s246 + $0x6d0] sm:$0xff]
      %v471 = vld [vmem:[%s246 + $0x6d8] sm:$0xff]
      %v472 = vld [vmem:[%s246 + $0x6e0] sm:$0xff]
      %v473 = vld [vmem:[%s246 + $0x6e8] sm:$0xff]
      %v474 = vld [vmem:[%s246 + $0x6f0] sm:$0xff]
      %v475 = vld [vmem:[%s246 + $0x6f8] sm:$0xff]
      %v476 = vld [vmem:[%s246 + $0x700] sm:$0xff]
      %v477 = vld [vmem:[%s246 + $0x708] sm:$0xff]
      %v478 = vld [vmem:[%s246 + $0x710] sm:$0xff]
      %v479 = vld [vmem:[%s246 + $0x718] sm:$0xff]
      %v480 = vld [vmem:[%s246 + $0x720] sm:$0xff]
      %v481 = vld [vmem:[%s246 + $0x728] sm:$0xff]
      %v482 = vld [vmem:[%s246 + $0x730] sm:$0xff]
      %v483 = vld [vmem:[%s246 + $0x738] sm:$0xff]
      %v484 = vld [vmem:[%s246 + $0x740] sm:$0xff]
      %v485 = vld [vmem:[%s246 + $0x748] sm:$0xff]
      %v486 = vld [vmem:[%s246 + $0x750] sm:$0xff]
      %v487 = vld [vmem:[%s246 + $0x758] sm:$0xff]
      %v488 = vld [vmem:[%s246 + $0x760] sm:$0xff]
      %v489 = vld [vmem:[%s246 + $0x768] sm:$0xff]
      %v490 = vld [vmem:[%s246 + $0x770] sm:$0xff]
      %v491 = vld [vmem:[%s246 + $0x778] sm:$0xff]
      %v492 = vld [vmem:[%s246 + $0x780] sm:$0xff]
      %v493 = vld [vmem:[%s246 + $0x788] sm:$0xff]
      %v494 = vld [vmem:[%s246 + $0x790] sm:$0xff]
      %v495 = vld [vmem:[%s246 + $0x798] sm:$0xff]
      %v496 = vld [vmem:[%s246 + $0x7a0] sm:$0xff]
      %v497 = vld [vmem:[%s246 + $0x7a8] sm:$0xff]
      %v498 = vld [vmem:[%s246 + $0x7b0] sm:$0xff]
      %v499 = vld [vmem:[%s246 + $0x7b8] sm:$0xff]
      %v500 = vld [vmem:[%s246 + $0x7c0] sm:$0xff]
      %v501 = vld [vmem:[%s246 + $0x7c8] sm:$0xff]
      %v502 = vld [vmem:[%s246 + $0x7d0] sm:$0xff]
      %v503 = vld [vmem:[%s246 + $0x7d8] sm:$0xff]
      %v504 = vld [vmem:[%s246 + $0x7e0] sm:$0xff]
      %v505 = vld [vmem:[%s246 + $0x7e8] sm:$0xff]
      %v506 = vld [vmem:[%s246 + $0x7f0] sm:$0xff]
      %v507 = vld [vmem:[%s246 + $0x7f8] sm:$0xff]
      %v508 = vld [vmem:[%s246 + $0x800] sm:$0xff]
      %v509 = vld [vmem:[%s246 + $0x808] sm:$0xff]
      %v510 = vld [vmem:[%s246 + $0x810] sm:$0xff]
      %v511 = vld [vmem:[%s246 + $0x818] sm:$0xff]
      %v512 = vld [vmem:[%s246 + $0x820] sm:$0xff]
      %v513 = vld [vmem:[%s246 + $0x828] sm:$0xff]
      %v514 = vld [vmem:[%s246 + $0x830] sm:$0xff]
      %v515 = vld [vmem:[%s246 + $0x838] sm:$0xff]
      %v516 = vld [vmem:[%s246 + $0x840] sm:$0xff]
      %v517 = vld [vmem:[%s246 + $0x848] sm:$0xff]
      %v518 = vld [vmem:[%s246 + $0x850] sm:$0xff]
      %v519 = vld [vmem:[%s246 + $0x858] sm:$0xff]
      %v520 = vld [vmem:[%s246 + $0x860] sm:$0xff]
      %v521 = vld [vmem:[%s246 + $0x868] sm:$0xff]
      %v522 = vld [vmem:[%s246 + $0x870] sm:$0xff]
      %v523 = vld [vmem:[%s246 + $0x878] sm:$0xff]
      %v524 = vld [vmem:[%s246 + $0x880] sm:$0xff]
      %v525 = vld [vmem:[%s246 + $0x888] sm:$0xff]
      %v526 = vld [vmem:[%s246 + $0x890] sm:$0xff]
      %v527 = vld [vmem:[%s246 + $0x898] sm:$0xff]
      %v528 = vld [vmem:[%s246 + $0x8a0] sm:$0xff]
      %v529 = vld [vmem:[%s246 + $0x8a8] sm:$0xff]
      %v530 = vld [vmem:[%s246 + $0x8b0] sm:$0xff]
      %v531 = vld [vmem:[%s246 + $0x8b8] sm:$0xff]
      %v532 = vld [vmem:[%s246 + $0x8c0] sm:$0xff]
      %v533 = vld [vmem:[%s246 + $0x8c8] sm:$0xff]
      %v534 = vld [vmem:[%s246 + $0x8d0] sm:$0xff]
      %v535 = vld [vmem:[%s246 + $0x8d8] sm:$0xff]
      %v536 = vld [vmem:[%s246 + $0x8e0] sm:$0xff]
      %v537 = vld [vmem:[%s246 + $0x8e8] sm:$0xff]
      %v538 = vld [vmem:[%s246 + $0x8f0] sm:$0xff]
      %v539 = vld [vmem:[%s246 + $0x8f8] sm:$0xff]
      %v540 = vld [vmem:[%s246 + $0x900] sm:$0xff]
      %v541 = vld [vmem:[%s246 + $0x908] sm:$0xff]
      %v542 = vld [vmem:[%s246 + $0x910] sm:$0xff]
      %v543 = vld [vmem:[%s246 + $0x918] sm:$0xff]
      %v544 = vld [vmem:[%s246 + $0x920] sm:$0xff]
      %v545 = vld [vmem:[%s246 + $0x928] sm:$0xff]
      %v546 = vld [vmem:[%s246 + $0x930] sm:$0xff]
      %v547 = vld [vmem:[%s246 + $0x938] sm:$0xff]
      %v548 = vld [vmem:[%s246 + $0x940] sm:$0xff]
      %v549 = vld [vmem:[%s246 + $0x948] sm:$0xff]
      %v550 = vld [vmem:[%s246 + $0x950] sm:$0xff]
      %v551 = vld [vmem:[%s246 + $0x958] sm:$0xff]
      %v552 = vld [vmem:[%s246 + $0x960] sm:$0xff]
      %v553 = vld [vmem:[%s246 + $0x968] sm:$0xff]
      %v554 = vld [vmem:[%s246 + $0x970] sm:$0xff]
      %v555 = vld [vmem:[%s246 + $0x978] sm:$0xff]
      %v556 = vld [vmem:[%s246 + $0x980] sm:$0xff]
      %v557 = vld [vmem:[%s246 + $0x988] sm:$0xff]
      %v558 = vld [vmem:[%s246 + $0x990] sm:$0xff]
      %v559 = vld [vmem:[%s246 + $0x998] sm:$0xff]
      %v560 = vld [vmem:[%s246 + $0x9a0] sm:$0xff]
      %v561 = vld [vmem:[%s246 + $0x9a8] sm:$0xff]
      %v562 = vld [vmem:[%s246 + $0x9b0] sm:$0xff]
      %v563 = vld [vmem:[%s246 + $0x9b8] sm:$0xff]
      %v564 = vld [vmem:[%s246 + $0x9c0] sm:$0xff]
      %v565 = vld [vmem:[%s246 + $0x9c8] sm:$0xff]
      %v566 = vld [vmem:[%s246 + $0x9d0] sm:$0xff]
      %v567 = vld [vmem:[%s246 + $0x9d8] sm:$0xff]
      %v568 = vld [vmem:[%s246 + $0x9e0] sm:$0xff]
      %v569 = vld [vmem:[%s246 + $0x9e8] sm:$0xff]
      %v570 = vld [vmem:[%s246 + $0x9f0] sm:$0xff]
      %v571 = vld [vmem:[%s246 + $0x9f8] sm:$0xff]
      %v572 = vld [vmem:[%s246 + $0xa00] sm:$0xff]
      %v573 = vld [vmem:[%s246 + $0xa08] sm:$0xff]
      %v574 = vld [vmem:[%s246 + $0xa10] sm:$0xff]
      %v575 = vld [vmem:[%s246 + $0xa18] sm:$0xff]
      %v576 = vld [vmem:[%s246 + $0xa20] sm:$0xff]
      %v577 = vld [vmem:[%s246 + $0xa28] sm:$0xff]
      %v578 = vld [vmem:[%s246 + $0xa30] sm:$0xff]
      %v579 = vld [vmem:[%s246 + $0xa38] sm:$0xff]
      %v580 = vld [vmem:[%s246 + $0xa40] sm:$0xff]
      %v581 = vld [vmem:[%s246 + $0xa48] sm:$0xff]
      %v582 = vld [vmem:[%s246 + $0xa50] sm:$0xff]
      %v583 = vld [vmem:[%s246 + $0xa58] sm:$0xff]
      %v584 = vld [vmem:[%s246 + $0xa60] sm:$0xff]
      %v585 = vld [vmem:[%s246 + $0xa68] sm:$0xff]
      %v586 = vld [vmem:[%s246 + $0xa70] sm:$0xff]
      %v587 = vld [vmem:[%s246 + $0xa78] sm:$0xff]
      %v588 = vld [vmem:[%s246 + $0xa80] sm:$0xff]
      %v589 = vld [vmem:[%s246 + $0xa88] sm:$0xff]
      %v590 = vld [vmem:[%s246 + $0xa90] sm:$0xff]
      %v591 = vld [vmem:[%s246 + $0xa98] sm:$0xff]
      %v592 = vld [vmem:[%s246 + $0xaa0] sm:$0xff]
      %v593 = vld [vmem:[%s246 + $0xaa8] sm:$0xff]
      %v594 = vld [vmem:[%s246 + $0xab0] sm:$0xff]
      %v595 = vld [vmem:[%s246 + $0xab8] sm:$0xff]
      %v596 = vld [vmem:[%s246 + $0xac0] sm:$0xff]
      %v597 = vld [vmem:[%s246 + $0xac8] sm:$0xff]
      %v598 = vld [vmem:[%s246 + $0xad0] sm:$0xff]
      %v599 = vld [vmem:[%s246 + $0xad8] sm:$0xff]
      %v600 = vld [vmem:[%s246 + $0xae0] sm:$0xff]
      %v601 = vld [vmem:[%s246 + $0xae8] sm:$0xff]
      %v602 = vld [vmem:[%s246 + $0xaf0] sm:$0xff]
      %v603 = vld [vmem:[%s246 + $0xaf8] sm:$0xff]
      %v604 = vld [vmem:[%s246 + $0xb00] sm:$0xff]
      %v605 = vld [vmem:[%s246 + $0xb08] sm:$0xff]
      %v606 = vld [vmem:[%s246 + $0xb10] sm:$0xff]
      %v607 = vld [vmem:[%s246 + $0xb18] sm:$0xff]
      %v608 = vld [vmem:[%s246 + $0xb20] sm:$0xff]
      %v609 = vld [vmem:[%s246 + $0xb28] sm:$0xff]
      %v610 = vld [vmem:[%s246 + $0xb30] sm:$0xff]
      %v611 = vld [vmem:[%s246 + $0xb38] sm:$0xff]
      %v612 = vld [vmem:[%s246 + $0xb40] sm:$0xff]
      %v613 = vld [vmem:[%s246 + $0xb48] sm:$0xff]
      %v614 = vld [vmem:[%s246 + $0xb50] sm:$0xff]
      %v615 = vld [vmem:[%s246 + $0xb58] sm:$0xff]
      %v616 = vld [vmem:[%s246 + $0xb60] sm:$0xff]
      %v617 = vld [vmem:[%s246 + $0xb68] sm:$0xff]
      %v618 = vld [vmem:[%s246 + $0xb70] sm:$0xff]
      %v619 = vld [vmem:[%s246 + $0xb78] sm:$0xff]
      %v620 = vld [vmem:[%s246 + $0xb80] sm:$0xff]
      %v621 = vld [vmem:[%s246 + $0xb88] sm:$0xff]
      %v622 = vld [vmem:[%s246 + $0xb90] sm:$0xff]
      %v623 = vld [vmem:[%s246 + $0xb98] sm:$0xff]
      %v624 = vld [vmem:[%s246 + $0xba0] sm:$0xff]
      %v625 = vld [vmem:[%s246 + $0xba8] sm:$0xff]
      %v626 = vld [vmem:[%s246 + $0xbb0] sm:$0xff]
      %v627 = vld [vmem:[%s246 + $0xbb8] sm:$0xff]
      %v628 = vld [vmem:[%s246 + $0xbc0] sm:$0xff]
      %v629 = vld [vmem:[%s246 + $0xbc8] sm:$0xff]
      %v630 = vld [vmem:[%s246 + $0xbd0] sm:$0xff]
      %v631 = vld [vmem:[%s246 + $0xbd8] sm:$0xff]
      %v632 = vld [vmem:[%s246 + $0xbe0] sm:$0xff]
      %v633 = vld [vmem:[%s246 + $0xbe8] sm:$0xff]
      %v634 = vld [vmem:[%s246 + $0xbf0] sm:$0xff]
      %v635 = vld [vmem:[%s246 + $0xbf8] sm:$0xff]
      %v636 = vld [vmem:[%s246 + $0xc00] sm:$0xff]
      %v637 = vld [vmem:[%s246 + $0xc08] sm:$0xff]
      %v638 = vld [vmem:[%s246 + $0xc10] sm:$0xff]
      %v639 = vld [vmem:[%s246 + $0xc18] sm:$0xff]
      %v640 = vld [vmem:[%s246 + $0xc20] sm:$0xff]
      %v641 = vld [vmem:[%s246 + $0xc28] sm:$0xff]
      %v642 = vld [vmem:[%s246 + $0xc30] sm:$0xff]
      %v643 = vld [vmem:[%s246 + $0xc38] sm:$0xff]
      %v644 = vld [vmem:[%s246 + $0xc40] sm:$0xff]
      %v645 = vld [vmem:[%s246 + $0xc48] sm:$0xff]
      %v646 = vld [vmem:[%s246 + $0xc50] sm:$0xff]
      %v647 = vld [vmem:[%s246 + $0xc58] sm:$0xff]
      %v648 = vld [vmem:[%s246 + $0xc60] sm:$0xff]
      %v649 = vld [vmem:[%s246 + $0xc68] sm:$0xff]
      %v650 = vld [vmem:[%s246 + $0xc70] sm:$0xff]
      %v651 = vld [vmem:[%s246 + $0xc78] sm:$0xff]
      %v652 = vld [vmem:[%s246 + $0xc80] sm:$0xff]
      %v653 = vld [vmem:[%s246 + $0xc88] sm:$0xff]
      %v654 = vld [vmem:[%s246 + $0xc90] sm:$0xff]
      %v655 = vld [vmem:[%s246 + $0xc98] sm:$0xff]
      %v656 = vld [vmem:[%s246 + $0xca0] sm:$0xff]
      %v657 = vld [vmem:[%s246 + $0xca8] sm:$0xff]
      %v658 = vld [vmem:[%s246 + $0xcb0] sm:$0xff]
      %v659 = vld [vmem:[%s246 + $0xcb8] sm:$0xff]
      %v660 = vld [vmem:[%s246 + $0xcc0] sm:$0xff]
      %v661 = vld [vmem:[%s246 + $0xcc8] sm:$0xff]
      %v662 = vld [vmem:[%s246 + $0xcd0] sm:$0xff]
      %v663 = vld [vmem:[%s246 + $0xcd8] sm:$0xff]
      %v664 = vld [vmem:[%s246 + $0xce0] sm:$0xff]
      %v665 = vld [vmem:[%s246 + $0xce8] sm:$0xff]
      %v666 = vld [vmem:[%s246 + $0xcf0] sm:$0xff]
      %v667 = vld [vmem:[%s246 + $0xcf8] sm:$0xff]
      %v668 = vld [vmem:[%s246 + $0xd00] sm:$0xff]
      %v669 = vld [vmem:[%s246 + $0xd08] sm:$0xff]
      %v670 = vld [vmem:[%s246 + $0xd10] sm:$0xff]
      %v671 = vld [vmem:[%s246 + $0xd18] sm:$0xff]
      %v672 = vld [vmem:[%s246 + $0xd20] sm:$0xff]
      %v673 = vld [vmem:[%s246 + $0xd28] sm:$0xff]
      %v674 = vld [vmem:[%s246 + $0xd30] sm:$0xff]
      %v675 = vld [vmem:[%s246 + $0xd38] sm:$0xff]
      %v676 = vld [vmem:[%s246 + $0xd40] sm:$0xff]
      %v677 = vld [vmem:[%s246 + $0xd48] sm:$0xff]
      %v678 = vld [vmem:[%s246 + $0xd50] sm:$0xff]
      %v679 = vld [vmem:[%s246 + $0xd58] sm:$0xff]
      %v680 = vld [vmem:[%s246 + $0xd60] sm:$0xff]
      %v681 = vld [vmem:[%s246 + $0xd68] sm:$0xff]
      %v682 = vld [vmem:[%s246 + $0xd70] sm:$0xff]
      %v683 = vld [vmem:[%s246 + $0xd78] sm:$0xff]
      %v684 = vld [vmem:[%s246 + $0xd80] sm:$0xff]
      %v685 = vld [vmem:[%s246 + $0xd88] sm:$0xff]
      %v686 = vld [vmem:[%s246 + $0xd90] sm:$0xff]
      %v687 = vld [vmem:[%s246 + $0xd98] sm:$0xff]
      %v688 = vld [vmem:[%s246 + $0xda0] sm:$0xff]
      %v689 = vld [vmem:[%s246 + $0xda8] sm:$0xff]
      %v690 = vld [vmem:[%s246 + $0xdb0] sm:$0x1f]
      %v691 = vld [vmem:[%s246 + $0xdb8] sm:$0x1f]
      %v692 = vld [vmem:[%s246 + $0xdc0] sm:$0x1f]
      %v693 = vld [vmem:[%s246 + $0xdc8] sm:$0x1f]
      %v694 = vld [vmem:[%s246 + $0xdd0] sm:$0x1f]
      %v695 = vld [vmem:[%s246 + $0xdd8] sm:$0x1f]
      %v696 = vld [vmem:[%s1] sm:$0xff]
      %v697 = vld [vmem:[%s1 + $0x8] sm:$0xff]
      %v698 = vld [vmem:[%s1 + $0x10] sm:$0xff]
      %v699 = vld [vmem:[%s1 + $0x18] sm:$0xff]
      %v700 = vld [vmem:[%s1 + $0x20] sm:$0xff]
      %v701 = vld [vmem:[%s1 + $0x28] sm:$0xff]
      %v702 = vld [vmem:[%s1 + $0x30] sm:$0xff]
      %v703 = vld [vmem:[%s1 + $0x38] sm:$0xff]
      %v704 = vld [vmem:[%s1 + $0x40] sm:$0xff]
      %v705 = vld [vmem:[%s1 + $0x48] sm:$0xff]
      %v706 = vld [vmem:[%s1 + $0x50] sm:$0xff]
      %v707 = vld [vmem:[%s1 + $0x58] sm:$0xff]
      %v708 = vld [vmem:[%s1 + $0x60] sm:$0xff]
      %v709 = vld [vmem:[%s1 + $0x68] sm:$0xff]
      %v710 = vld [vmem:[%s1 + $0x70] sm:$0xff]
      %v711 = vld [vmem:[%s1 + $0x78] sm:$0xff]
      %v712 = vld [vmem:[%s1 + $0x80] sm:$0xff]
      %v713 = vld [vmem:[%s1 + $0x88] sm:$0xff]
      %v714 = vld [vmem:[%s1 + $0x90] sm:$0xff]
      %v715 = vld [vmem:[%s1 + $0x98] sm:$0xff]
      %v716 = vld [vmem:[%s1 + $0xa0] sm:$0xff]
      %v717 = vld [vmem:[%s1 + $0xa8] sm:$0xff]
      %v718 = vld [vmem:[%s1 + $0xb0] sm:$0xff]
      %v719 = vld [vmem:[%s1 + $0xb8] sm:$0xff]
      %v720 = vld [vmem:[%s1 + $0xc0] sm:$0xff]
      %v721 = vld [vmem:[%s1 + $0xc8] sm:$0xff]
      %v722 = vld [vmem:[%s1 + $0xd0] sm:$0xff]
      %v723 = vld [vmem:[%s1 + $0xd8] sm:$0xff]
      %v724 = vld [vmem:[%s1 + $0xe0] sm:$0xff]
      %v725 = vld [vmem:[%s1 + $0xe8] sm:$0xff]
      %v726 = vld [vmem:[%s1 + $0xf0] sm:$0xff]
      %v727 = vld [vmem:[%s1 + $0xf8] sm:$0xff]
      %v728 = vld [vmem:[%s1 + $0x100] sm:$0xff]
      %v729 = vld [vmem:[%s1 + $0x108] sm:$0xff]
      %v730 = vld [vmem:[%s1 + $0x110] sm:$0xff]
      %v731 = vld [vmem:[%s1 + $0x118] sm:$0xff]
      %v732 = vld [vmem:[%s1 + $0x120] sm:$0xff]
      %v733 = vld [vmem:[%s1 + $0x128] sm:$0xff]
      %v734 = vld [vmem:[%s1 + $0x130] sm:$0xff]
      %v735 = vld [vmem:[%s1 + $0x138] sm:$0xff]
      %v736 = vld [vmem:[%s1 + $0x140] sm:$0xff]
      %v737 = vld [vmem:[%s1 + $0x148] sm:$0xff]
      %v738 = vld [vmem:[%s1 + $0x150] sm:$0xff]
      %v739 = vld [vmem:[%s1 + $0x158] sm:$0xff]
      %v740 = vld [vmem:[%s1 + $0x160] sm:$0xff]
      %v741 = vld [vmem:[%s1 + $0x168] sm:$0xff]
      %v742 = vld [vmem:[%s1 + $0x170] sm:$0xff]
      %v743 = vld [vmem:[%s1 + $0x178] sm:$0xff]
      %v744 = vld [vmem:[%s1 + $0x180] sm:$0xff]
      %v745 = vld [vmem:[%s1 + $0x188] sm:$0xff]
      %v746 = vld [vmem:[%s1 + $0x190] sm:$0xff]
      %v747 = vld [vmem:[%s1 + $0x198] sm:$0xff]
      %v748 = vld [vmem:[%s1 + $0x1a0] sm:$0xff]
      %v749 = vld [vmem:[%s1 + $0x1a8] sm:$0xff]
      %v750 = vld [vmem:[%s1 + $0x1b0] sm:$0xff]
      %v751 = vld [vmem:[%s1 + $0x1b8] sm:$0xff]
      %v752 = vld [vmem:[%s1 + $0x1c0] sm:$0xff]
      %v753 = vld [vmem:[%s1 + $0x1c8] sm:$0xff]
      %v754 = vld [vmem:[%s1 + $0x1d0] sm:$0xff]
      %v755 = vld [vmem:[%s1 + $0x1d8] sm:$0xff]
      %v756 = vld [vmem:[%s1 + $0x1e0] sm:$0xff]
      %v757 = vld [vmem:[%s1 + $0x1e8] sm:$0xff]
      %v758 = vld [vmem:[%s1 + $0x1f0] sm:$0xff]
      %v759 = vld [vmem:[%s1 + $0x1f8] sm:$0xff]
      %v760 = vld [vmem:[%s1 + $0x200] sm:$0xff]
      %v761 = vld [vmem:[%s1 + $0x208] sm:$0xff]
      %v762 = vld [vmem:[%s1 + $0x210] sm:$0xff]
      %v763 = vld [vmem:[%s1 + $0x218] sm:$0xff]
      %v764 = vld [vmem:[%s1 + $0x220] sm:$0xff]
      %v765 = vld [vmem:[%s1 + $0x228] sm:$0xff]
      %v766 = vld [vmem:[%s1 + $0x230] sm:$0xff]
      %v767 = vld [vmem:[%s1 + $0x238] sm:$0xff]
      %v768 = vld [vmem:[%s1 + $0x240] sm:$0xff]
      %v769 = vld [vmem:[%s1 + $0x248] sm:$0xff]
      %v770 = vld [vmem:[%s1 + $0x250] sm:$0xff]
      %v771 = vld [vmem:[%s1 + $0x258] sm:$0xff]
      %v772 = vld [vmem:[%s1 + $0x260] sm:$0xff]
      %v773 = vld [vmem:[%s1 + $0x268] sm:$0xff]
      %v774 = vld [vmem:[%s1 + $0x270] sm:$0xff]
      %v775 = vld [vmem:[%s1 + $0x278] sm:$0xff]
      %v776 = vld [vmem:[%s1 + $0x280] sm:$0xff]
      %v777 = vld [vmem:[%s1 + $0x288] sm:$0xff]
      %v778 = vld [vmem:[%s1 + $0x290] sm:$0xff]
      %v779 = vld [vmem:[%s1 + $0x298] sm:$0xff]
      %v780 = vld [vmem:[%s1 + $0x2a0] sm:$0xff]
      %v781 = vld [vmem:[%s1 + $0x2a8] sm:$0xff]
      %v782 = vld [vmem:[%s1 + $0x2b0] sm:$0xff]
      %v783 = vld [vmem:[%s1 + $0x2b8] sm:$0xff]
      %v784 = vld [vmem:[%s1 + $0x2c0] sm:$0xff]
      %v785 = vld [vmem:[%s1 + $0x2c8] sm:$0xff]
      %v786 = vld [vmem:[%s1 + $0x2d0] sm:$0xff]
      %v787 = vld [vmem:[%s1 + $0x2d8] sm:$0xff]
      %v788 = vld [vmem:[%s1 + $0x2e0] sm:$0xff]
      %v789 = vld [vmem:[%s1 + $0x2e8] sm:$0xff]
      %v790 = vld [vmem:[%s1 + $0x2f0] sm:$0xff]
      %v791 = vld [vmem:[%s1 + $0x2f8] sm:$0xff]
      %v792 = vld [vmem:[%s2] sm:$0x1]
      %v794 = vperm.slane %v792, 0
      %796 = vmatpush.msra.mxu0 %v711
      %797 = vmatpush.msra.mxu0 %v710
      %798 = vmatpush.msra.mxu0 %v709
      %799 = vmatpush.msra.mxu0 %v708
      %800 = vmatpush.msra.mxu0 %v707
      %801 = vmatpush.msra.mxu0 %v706
      %802 = vmatpush.msra.mxu0 %v705
      %803 = vmatpush.msra.mxu0 %v704
      %804 = vmatpush.msra.mxu0 %v703
      %805 = vmatpush.msra.mxu0 %v702
      %806 = vmatpush.msra.mxu0 %v701
      %807 = vmatpush.msra.mxu0 %v700
      %808 = vmatpush.msra.mxu0 %v699
      %809 = vmatpush.msra.mxu0 %v698
      %810 = vmatpush.msra.mxu0 %v697
      %811 = vmatpush.msra.mxu0 %v696
      %812 = vmatmul.f32.gmra.mxu0 %v252
      %v813 = vpop.f32.mrf.mxu0
      %v814 = vadd.f32 %v794, %v813
      %815 = vmatmul.f32.gmra.mxu0 %v258
      %v816 = vpop.f32.mrf.mxu0
      %v817 = vadd.f32 %v794, %v816
      %818 = vmatmul.f32.gmra.mxu0 %v264
      %v819 = vpop.f32.mrf.mxu0
      %v820 = vadd.f32 %v794, %v819
      %821 = vmatmul.f32.gmra.mxu0 %v270
      %v822 = vpop.f32.mrf.mxu0
      %v823 = vadd.f32 %v794, %v822
      %824 = vmatmul.f32.gmra.mxu0 %v276
      %v825 = vpop.f32.mrf.mxu0
      %v826 = vadd.f32 %v794, %v825
      %827 = vmatmul.f32.gmra.mxu0 %v282
      %v828 = vpop.f32.mrf.mxu0
      %v829 = vadd.f32 %v794, %v828
      %830 = vmatmul.f32.gmra.mxu0 %v288
      %v831 = vpop.f32.mrf.mxu0
      %v832 = vadd.f32 %v794, %v831
      %833 = vmatmul.f32.gmra.mxu0 %v294
      %v834 = vpop.f32.mrf.mxu0
      %v835 = vadd.f32 %v794, %v834
      %836 = vmatmul.f32.gmra.mxu0 %v300
      %v837 = vpop.f32.mrf.mxu0
      %v838 = vadd.f32 %v794, %v837
      %839 = vmatmul.f32.gmra.mxu0 %v306
      %v840 = vpop.f32.mrf.mxu0
      %v841 = vadd.f32 %v794, %v840
      %842 = vmatmul.f32.gmra.mxu0 %v312
      %v843 = vpop.f32.mrf.mxu0
      %v844 = vadd.f32 %v794, %v843
      %845 = vmatmul.f32.gmra.mxu0 %v318
      %v846 = vpop.f32.mrf.mxu0
      %v847 = vadd.f32 %v794, %v846
      %848 = vmatmul.f32.gmra.mxu0 %v324
      %v849 = vpop.f32.mrf.mxu0
      %v850 = vadd.f32 %v794, %v849
      %851 = vmatmul.f32.gmra.mxu0 %v330
      %v852 = vpop.f32.mrf.mxu0
      %v853 = vadd.f32 %v794, %v852
      %854 = vmatmul.f32.gmra.mxu0 %v336
      %v855 = vpop.f32.mrf.mxu0
      %v856 = vadd.f32 %v794, %v855
      %857 = vmatmul.f32.gmra.mxu0 %v342
      %v858 = vpop.f32.mrf.mxu0
      %v859 = vadd.f32 %v794, %v858
      %860 = vmatmul.f32.gmra.mxu0 %v348
      %v861 = vpop.f32.mrf.mxu0
      %v862 = vadd.f32 %v794, %v861
      %863 = vmatmul.f32.gmra.mxu0 %v354
      %v864 = vpop.f32.mrf.mxu0
      %v865 = vadd.f32 %v794, %v864
      %866 = vmatmul.f32.gmra.mxu0 %v360
      %v867 = vpop.f32.mrf.mxu0
      %v868 = vadd.f32 %v794, %v867
      %869 = vmatmul.f32.gmra.mxu0 %v366
      %v870 = vpop.f32.mrf.mxu0
      %v871 = vadd.f32 %v794, %v870
      %872 = vmatmul.f32.gmra.mxu0 %v372
      %v873 = vpop.f32.mrf.mxu0
      %v874 = vadd.f32 %v794, %v873
      %875 = vmatmul.f32.gmra.mxu0 %v378
      %v876 = vpop.f32.mrf.mxu0
      %v877 = vadd.f32 %v794, %v876
      %878 = vmatmul.f32.gmra.mxu0 %v384
      %v879 = vpop.f32.mrf.mxu0
      %v880 = vadd.f32 %v794, %v879
      %881 = vmatmul.f32.gmra.mxu0 %v390
      %v882 = vpop.f32.mrf.mxu0
      %v883 = vadd.f32 %v794, %v882
      %884 = vmatmul.f32.gmra.mxu0 %v396
      %v885 = vpop.f32.mrf.mxu0
      %v886 = vadd.f32 %v794, %v885
      %887 = vmatmul.f32.gmra.mxu0 %v402
      %v888 = vpop.f32.mrf.mxu0
      %v889 = vadd.f32 %v794, %v888
      %890 = vmatmul.f32.gmra.mxu0 %v408
      %v891 = vpop.f32.mrf.mxu0
      %v892 = vadd.f32 %v794, %v891
      %893 = vmatmul.f32.gmra.mxu0 %v414
      %v894 = vpop.f32.mrf.mxu0
      %v895 = vadd.f32 %v794, %v894
      %896 = vmatmul.f32.gmra.mxu0 %v420
      %v897 = vpop.f32.mrf.mxu0
      %v898 = vadd.f32 %v794, %v897
      %899 = vmatmul.f32.gmra.mxu0 %v426
      %v900 = vpop.f32.mrf.mxu0
      %v901 = vadd.f32 %v794, %v900
      %902 = vmatmul.f32.gmra.mxu0 %v432
      %v903 = vpop.f32.mrf.mxu0
      %v904 = vadd.f32 %v794, %v903
      %905 = vmatmul.f32.gmra.mxu0 %v438
      %v906 = vpop.f32.mrf.mxu0
      %v907 = vadd.f32 %v794, %v906
      %908 = vmatmul.f32.gmra.mxu0 %v444
      %v909 = vpop.f32.mrf.mxu0
      %v910 = vadd.f32 %v794, %v909
      %911 = vmatmul.f32.gmra.mxu0 %v450
      %v912 = vpop.f32.mrf.mxu0
      %v913 = vadd.f32 %v794, %v912
      %914 = vmatmul.f32.gmra.mxu0 %v456
      %v915 = vpop.f32.mrf.mxu0
      %v916 = vadd.f32 %v794, %v915
      %917 = vmatmul.f32.gmra.mxu0 %v462
      %v918 = vpop.f32.mrf.mxu0
      %v919 = vadd.f32 %v794, %v918
      %920 = vmatmul.f32.gmra.mxu0 %v468
      %v921 = vpop.f32.mrf.mxu0
      %v922 = vadd.f32 %v794, %v921
      %923 = vmatmul.f32.gmra.mxu0 %v474
      %v924 = vpop.f32.mrf.mxu0
      %v925 = vadd.f32 %v794, %v924
      %926 = vmatmul.f32.gmra.mxu0 %v480
      %v927 = vpop.f32.mrf.mxu0
      %v928 = vadd.f32 %v794, %v927
      %929 = vmatmul.f32.gmra.mxu0 %v486
      %v930 = vpop.f32.mrf.mxu0
      %v931 = vadd.f32 %v794, %v930
      %932 = vmatmul.f32.gmra.mxu0 %v492
      %v933 = vpop.f32.mrf.mxu0
      %v934 = vadd.f32 %v794, %v933
      %935 = vmatmul.f32.gmra.mxu0 %v498
      %v936 = vpop.f32.mrf.mxu0
      %v937 = vadd.f32 %v794, %v936
      %938 = vmatmul.f32.gmra.mxu0 %v504
      %v939 = vpop.f32.mrf.mxu0
      %v940 = vadd.f32 %v794, %v939
      %941 = vmatmul.f32.gmra.mxu0 %v510
      %v942 = vpop.f32.mrf.mxu0
      %v943 = vadd.f32 %v794, %v942
      %944 = vmatmul.f32.gmra.mxu0 %v516
      %v945 = vpop.f32.mrf.mxu0
      %v946 = vadd.f32 %v794, %v945
      %947 = vmatmul.f32.gmra.mxu0 %v522
      %v948 = vpop.f32.mrf.mxu0
      %v949 = vadd.f32 %v794, %v948
      %950 = vmatmul.f32.gmra.mxu0 %v528
      %v951 = vpop.f32.mrf.mxu0
      %v952 = vadd.f32 %v794, %v951
      %953 = vmatmul.f32.gmra.mxu0 %v534
      %v954 = vpop.f32.mrf.mxu0
      %v955 = vadd.f32 %v794, %v954
      %956 = vmatmul.f32.gmra.mxu0 %v540
      %v957 = vpop.f32.mrf.mxu0
      %v958 = vadd.f32 %v794, %v957
      %959 = vmatmul.f32.gmra.mxu0 %v546
      %v960 = vpop.f32.mrf.mxu0
      %v961 = vadd.f32 %v794, %v960
      %962 = vmatmul.f32.gmra.mxu0 %v552
      %v963 = vpop.f32.mrf.mxu0
      %v964 = vadd.f32 %v794, %v963
      %965 = vmatmul.f32.gmra.mxu0 %v558
      %v966 = vpop.f32.mrf.mxu0
      %v967 = vadd.f32 %v794, %v966
      %968 = vmatmul.f32.gmra.mxu0 %v564
      %v969 = vpop.f32.mrf.mxu0
      %v970 = vadd.f32 %v794, %v969
      %971 = vmatmul.f32.gmra.mxu0 %v570
      %v972 = vpop.f32.mrf.mxu0
      %v973 = vadd.f32 %v794, %v972
      %974 = vmatmul.f32.gmra.mxu0 %v576
      %v975 = vpop.f32.mrf.mxu0
      %v976 = vadd.f32 %v794, %v975
      %977 = vmatmul.f32.gmra.mxu0 %v582
      %v978 = vpop.f32.mrf.mxu0
      %v979 = vadd.f32 %v794, %v978
      %980 = vmatmul.f32.gmra.mxu0 %v588
      %v981 = vpop.f32.mrf.mxu0
      %v982 = vadd.f32 %v794, %v981
      %983 = vmatmul.f32.gmra.mxu0 %v594
      %v984 = vpop.f32.mrf.mxu0
      %v985 = vadd.f32 %v794, %v984
      %986 = vmatmul.f32.gmra.mxu0 %v600
      %v987 = vpop.f32.mrf.mxu0
      %v988 = vadd.f32 %v794, %v987
      %989 = vmatmul.f32.gmra.mxu0 %v606
      %v990 = vpop.f32.mrf.mxu0
      %v991 = vadd.f32 %v794, %v990
      %992 = vmatmul.f32.gmra.mxu0 %v612
      %v993 = vpop.f32.mrf.mxu0
      %v994 = vadd.f32 %v794, %v993
      %995 = vmatmul.f32.gmra.mxu0 %v618
      %v996 = vpop.f32.mrf.mxu0
      %v997 = vadd.f32 %v794, %v996
      %998 = vmatmul.f32.gmra.mxu0 %v624
      %v999 = vpop.f32.mrf.mxu0
      %v1000 = vadd.f32 %v794, %v999
      %1001 = vmatmul.f32.gmra.mxu0 %v630
      %v1002 = vpop.f32.mrf.mxu0
      %v1003 = vadd.f32 %v794, %v1002
      %1004 = vmatmul.f32.gmra.mxu0 %v636
      %v1005 = vpop.f32.mrf.mxu0
      %v1006 = vadd.f32 %v794, %v1005
      %1007 = vmatmul.f32.gmra.mxu0 %v642
      %v1008 = vpop.f32.mrf.mxu0
      %v1009 = vadd.f32 %v794, %v1008
      %1010 = vmatmul.f32.gmra.mxu0 %v648
      %v1011 = vpop.f32.mrf.mxu0
      %v1012 = vadd.f32 %v794, %v1011
      %1013 = vmatmul.f32.gmra.mxu0 %v654
      %v1014 = vpop.f32.mrf.mxu0
      %v1015 = vadd.f32 %v794, %v1014
      %1016 = vmatmul.f32.gmra.mxu0 %v660
      %v1017 = vpop.f32.mrf.mxu0
      %v1018 = vadd.f32 %v794, %v1017
      %1019 = vmatmul.f32.gmra.mxu0 %v666
      %v1020 = vpop.f32.mrf.mxu0
      %v1021 = vadd.f32 %v794, %v1020
      %1022 = vmatmul.f32.gmra.mxu0 %v672
      %v1023 = vpop.f32.mrf.mxu0
      %v1024 = vadd.f32 %v794, %v1023
      %1025 = vmatmul.f32.gmra.mxu0 %v678
      %v1026 = vpop.f32.mrf.mxu0
      %v1027 = vadd.f32 %v794, %v1026
      %1028 = vmatmul.f32.gmra.mxu0 %v684
      %v1029 = vpop.f32.mrf.mxu0
      %v1030 = vadd.f32 %v794, %v1029
      %1031 = vmatmul.f32.gmra.mxu0 %v690
      %v1032 = vpop.f32.mrf.mxu0
      %v1033 = vadd.f32 %v794, %v1032
      %1034 = vdwg.mxu0
      %1035 = vmatpush.msra.mxu0 %v727
      %1036 = vmatpush.msra.mxu0 %v726
      %1037 = vmatpush.msra.mxu0 %v725
      %1038 = vmatpush.msra.mxu0 %v724
      %1039 = vmatpush.msra.mxu0 %v723
      %1040 = vmatpush.msra.mxu0 %v722
      %1041 = vmatpush.msra.mxu0 %v721
      %1042 = vmatpush.msra.mxu0 %v720
      %1043 = vmatpush.msra.mxu0 %v719
      %1044 = vmatpush.msra.mxu0 %v718
      %1045 = vmatpush.msra.mxu0 %v717
      %1046 = vmatpush.msra.mxu0 %v716
      %1047 = vmatpush.msra.mxu0 %v715
      %1048 = vmatpush.msra.mxu0 %v714
      %1049 = vmatpush.msra.mxu0 %v713
      %1050 = vmatpush.msra.mxu0 %v712
      %1051 = vmatmul.f32.gmra.mxu0 %v253
      %v1052 = vpop.f32.mrf.mxu0
      %v1053 = vadd.f32 %v814, %v1052
      %1054 = vmatmul.f32.gmra.mxu0 %v259
      %v1055 = vpop.f32.mrf.mxu0
      %v1056 = vadd.f32 %v817, %v1055
      %1057 = vmatmul.f32.gmra.mxu0 %v265
      %v1058 = vpop.f32.mrf.mxu0
      %v1059 = vadd.f32 %v820, %v1058
      %1060 = vmatmul.f32.gmra.mxu0 %v271
      %v1061 = vpop.f32.mrf.mxu0
      %v1062 = vadd.f32 %v823, %v1061
      %1063 = vmatmul.f32.gmra.mxu0 %v277
      %v1064 = vpop.f32.mrf.mxu0
      %v1065 = vadd.f32 %v826, %v1064
      %1066 = vmatmul.f32.gmra.mxu0 %v283
      %v1067 = vpop.f32.mrf.mxu0
      %v1068 = vadd.f32 %v829, %v1067
      %1069 = vmatmul.f32.gmra.mxu0 %v289
      %v1070 = vpop.f32.mrf.mxu0
      %v1071 = vadd.f32 %v832, %v1070
      %1072 = vmatmul.f32.gmra.mxu0 %v295
      %v1073 = vpop.f32.mrf.mxu0
      %v1074 = vadd.f32 %v835, %v1073
      %1075 = vmatmul.f32.gmra.mxu0 %v301
      %v1076 = vpop.f32.mrf.mxu0
      %v1077 = vadd.f32 %v838, %v1076
      %1078 = vmatmul.f32.gmra.mxu0 %v307
      %v1079 = vpop.f32.mrf.mxu0
      %v1080 = vadd.f32 %v841, %v1079
      %1081 = vmatmul.f32.gmra.mxu0 %v313
      %v1082 = vpop.f32.mrf.mxu0
      %v1083 = vadd.f32 %v844, %v1082
      %1084 = vmatmul.f32.gmra.mxu0 %v319
      %v1085 = vpop.f32.mrf.mxu0
      %v1086 = vadd.f32 %v847, %v1085
      %1087 = vmatmul.f32.gmra.mxu0 %v325
      %v1088 = vpop.f32.mrf.mxu0
      %v1089 = vadd.f32 %v850, %v1088
      %1090 = vmatmul.f32.gmra.mxu0 %v331
      %v1091 = vpop.f32.mrf.mxu0
      %v1092 = vadd.f32 %v853, %v1091
      %1093 = vmatmul.f32.gmra.mxu0 %v337
      %v1094 = vpop.f32.mrf.mxu0
      %v1095 = vadd.f32 %v856, %v1094
      %1096 = vmatmul.f32.gmra.mxu0 %v343
      %v1097 = vpop.f32.mrf.mxu0
      %v1098 = vadd.f32 %v859, %v1097
      %1099 = vmatmul.f32.gmra.mxu0 %v349
      %v1100 = vpop.f32.mrf.mxu0
      %v1101 = vadd.f32 %v862, %v1100
      %1102 = vmatmul.f32.gmra.mxu0 %v355
      %v1103 = vpop.f32.mrf.mxu0
      %v1104 = vadd.f32 %v865, %v1103
      %1105 = vmatmul.f32.gmra.mxu0 %v361
      %v1106 = vpop.f32.mrf.mxu0
      %v1107 = vadd.f32 %v868, %v1106
      %1108 = vmatmul.f32.gmra.mxu0 %v367
      %v1109 = vpop.f32.mrf.mxu0
      %v1110 = vadd.f32 %v871, %v1109
      %1111 = vmatmul.f32.gmra.mxu0 %v373
      %v1112 = vpop.f32.mrf.mxu0
      %v1113 = vadd.f32 %v874, %v1112
      %1114 = vmatmul.f32.gmra.mxu0 %v379
      %v1115 = vpop.f32.mrf.mxu0
      %v1116 = vadd.f32 %v877, %v1115
      %1117 = vmatmul.f32.gmra.mxu0 %v385
      %v1118 = vpop.f32.mrf.mxu0
      %v1119 = vadd.f32 %v880, %v1118
      %1120 = vmatmul.f32.gmra.mxu0 %v391
      %v1121 = vpop.f32.mrf.mxu0
      %v1122 = vadd.f32 %v883, %v1121
      %1123 = vmatmul.f32.gmra.mxu0 %v397
      %v1124 = vpop.f32.mrf.mxu0
      %v1125 = vadd.f32 %v886, %v1124
      %1126 = vmatmul.f32.gmra.mxu0 %v403
      %v1127 = vpop.f32.mrf.mxu0
      %v1128 = vadd.f32 %v889, %v1127
      %1129 = vmatmul.f32.gmra.mxu0 %v409
      %v1130 = vpop.f32.mrf.mxu0
      %v1131 = vadd.f32 %v892, %v1130
      %1132 = vmatmul.f32.gmra.mxu0 %v415
      %v1133 = vpop.f32.mrf.mxu0
      %v1134 = vadd.f32 %v895, %v1133
      %1135 = vmatmul.f32.gmra.mxu0 %v421
      %v1136 = vpop.f32.mrf.mxu0
      %v1137 = vadd.f32 %v898, %v1136
      %1138 = vmatmul.f32.gmra.mxu0 %v427
      %v1139 = vpop.f32.mrf.mxu0
      %v1140 = vadd.f32 %v901, %v1139
      %1141 = vmatmul.f32.gmra.mxu0 %v433
      %v1142 = vpop.f32.mrf.mxu0
      %v1143 = vadd.f32 %v904, %v1142
      %1144 = vmatmul.f32.gmra.mxu0 %v439
      %v1145 = vpop.f32.mrf.mxu0
      %v1146 = vadd.f32 %v907, %v1145
      %1147 = vmatmul.f32.gmra.mxu0 %v445
      %v1148 = vpop.f32.mrf.mxu0
      %v1149 = vadd.f32 %v910, %v1148
      %1150 = vmatmul.f32.gmra.mxu0 %v451
      %v1151 = vpop.f32.mrf.mxu0
      %v1152 = vadd.f32 %v913, %v1151
      %1153 = vmatmul.f32.gmra.mxu0 %v457
      %v1154 = vpop.f32.mrf.mxu0
      %v1155 = vadd.f32 %v916, %v1154
      %1156 = vmatmul.f32.gmra.mxu0 %v463
      %v1157 = vpop.f32.mrf.mxu0
      %v1158 = vadd.f32 %v919, %v1157
      %1159 = vmatmul.f32.gmra.mxu0 %v469
      %v1160 = vpop.f32.mrf.mxu0
      %v1161 = vadd.f32 %v922, %v1160
      %1162 = vmatmul.f32.gmra.mxu0 %v475
      %v1163 = vpop.f32.mrf.mxu0
      %v1164 = vadd.f32 %v925, %v1163
      %1165 = vmatmul.f32.gmra.mxu0 %v481
      %v1166 = vpop.f32.mrf.mxu0
      %v1167 = vadd.f32 %v928, %v1166
      %1168 = vmatmul.f32.gmra.mxu0 %v487
      %v1169 = vpop.f32.mrf.mxu0
      %v1170 = vadd.f32 %v931, %v1169
      %1171 = vmatmul.f32.gmra.mxu0 %v493
      %v1172 = vpop.f32.mrf.mxu0
      %v1173 = vadd.f32 %v934, %v1172
      %1174 = vmatmul.f32.gmra.mxu0 %v499
      %v1175 = vpop.f32.mrf.mxu0
      %v1176 = vadd.f32 %v937, %v1175
      %1177 = vmatmul.f32.gmra.mxu0 %v505
      %v1178 = vpop.f32.mrf.mxu0
      %v1179 = vadd.f32 %v940, %v1178
      %1180 = vmatmul.f32.gmra.mxu0 %v511
      %v1181 = vpop.f32.mrf.mxu0
      %v1182 = vadd.f32 %v943, %v1181
      %1183 = vmatmul.f32.gmra.mxu0 %v517
      %v1184 = vpop.f32.mrf.mxu0
      %v1185 = vadd.f32 %v946, %v1184
      %1186 = vmatmul.f32.gmra.mxu0 %v523
      %v1187 = vpop.f32.mrf.mxu0
      %v1188 = vadd.f32 %v949, %v1187
      %1189 = vmatmul.f32.gmra.mxu0 %v529
      %v1190 = vpop.f32.mrf.mxu0
      %v1191 = vadd.f32 %v952, %v1190
      %1192 = vmatmul.f32.gmra.mxu0 %v535
      %v1193 = vpop.f32.mrf.mxu0
      %v1194 = vadd.f32 %v955, %v1193
      %1195 = vmatmul.f32.gmra.mxu0 %v541
      %v1196 = vpop.f32.mrf.mxu0
      %v1197 = vadd.f32 %v958, %v1196
      %1198 = vmatmul.f32.gmra.mxu0 %v547
      %v1199 = vpop.f32.mrf.mxu0
      %v1200 = vadd.f32 %v961, %v1199
      %1201 = vmatmul.f32.gmra.mxu0 %v553
      %v1202 = vpop.f32.mrf.mxu0
      %v1203 = vadd.f32 %v964, %v1202
      %1204 = vmatmul.f32.gmra.mxu0 %v559
      %v1205 = vpop.f32.mrf.mxu0
      %v1206 = vadd.f32 %v967, %v1205
      %1207 = vmatmul.f32.gmra.mxu0 %v565
      %v1208 = vpop.f32.mrf.mxu0
      %v1209 = vadd.f32 %v970, %v1208
      %1210 = vmatmul.f32.gmra.mxu0 %v571
      %v1211 = vpop.f32.mrf.mxu0
      %v1212 = vadd.f32 %v973, %v1211
      %1213 = vmatmul.f32.gmra.mxu0 %v577
      %v1214 = vpop.f32.mrf.mxu0
      %v1215 = vadd.f32 %v976, %v1214
      %1216 = vmatmul.f32.gmra.mxu0 %v583
      %v1217 = vpop.f32.mrf.mxu0
      %v1218 = vadd.f32 %v979, %v1217
      %1219 = vmatmul.f32.gmra.mxu0 %v589
      %v1220 = vpop.f32.mrf.mxu0
      %v1221 = vadd.f32 %v982, %v1220
      %1222 = vmatmul.f32.gmra.mxu0 %v595
      %v1223 = vpop.f32.mrf.mxu0
      %v1224 = vadd.f32 %v985, %v1223
      %1225 = vmatmul.f32.gmra.mxu0 %v601
      %v1226 = vpop.f32.mrf.mxu0
      %v1227 = vadd.f32 %v988, %v1226
      %1228 = vmatmul.f32.gmra.mxu0 %v607
      %v1229 = vpop.f32.mrf.mxu0
      %v1230 = vadd.f32 %v991, %v1229
      %1231 = vmatmul.f32.gmra.mxu0 %v613
      %v1232 = vpop.f32.mrf.mxu0
      %v1233 = vadd.f32 %v994, %v1232
      %1234 = vmatmul.f32.gmra.mxu0 %v619
      %v1235 = vpop.f32.mrf.mxu0
      %v1236 = vadd.f32 %v997, %v1235
      %1237 = vmatmul.f32.gmra.mxu0 %v625
      %v1238 = vpop.f32.mrf.mxu0
      %v1239 = vadd.f32 %v1000, %v1238
      %1240 = vmatmul.f32.gmra.mxu0 %v631
      %v1241 = vpop.f32.mrf.mxu0
      %v1242 = vadd.f32 %v1003, %v1241
      %1243 = vmatmul.f32.gmra.mxu0 %v637
      %v1244 = vpop.f32.mrf.mxu0
      %v1245 = vadd.f32 %v1006, %v1244
      %1246 = vmatmul.f32.gmra.mxu0 %v643
      %v1247 = vpop.f32.mrf.mxu0
      %v1248 = vadd.f32 %v1009, %v1247
      %1249 = vmatmul.f32.gmra.mxu0 %v649
      %v1250 = vpop.f32.mrf.mxu0
      %v1251 = vadd.f32 %v1012, %v1250
      %1252 = vmatmul.f32.gmra.mxu0 %v655
      %v1253 = vpop.f32.mrf.mxu0
      %v1254 = vadd.f32 %v1015, %v1253
      %1255 = vmatmul.f32.gmra.mxu0 %v661
      %v1256 = vpop.f32.mrf.mxu0
      %v1257 = vadd.f32 %v1018, %v1256
      %1258 = vmatmul.f32.gmra.mxu0 %v667
      %v1259 = vpop.f32.mrf.mxu0
      %v1260 = vadd.f32 %v1021, %v1259
      %1261 = vmatmul.f32.gmra.mxu0 %v673
      %v1262 = vpop.f32.mrf.mxu0
      %v1263 = vadd.f32 %v1024, %v1262
      %1264 = vmatmul.f32.gmra.mxu0 %v679
      %v1265 = vpop.f32.mrf.mxu0
      %v1266 = vadd.f32 %v1027, %v1265
      %1267 = vmatmul.f32.gmra.mxu0 %v685
      %v1268 = vpop.f32.mrf.mxu0
      %v1269 = vadd.f32 %v1030, %v1268
      %1270 = vmatmul.f32.gmra.mxu0 %v691
      %v1271 = vpop.f32.mrf.mxu0
      %v1272 = vadd.f32 %v1033, %v1271
      %1273 = vdwg.mxu0
      %1274 = vmatpush.msra.mxu0 %v743
      %1275 = vmatpush.msra.mxu0 %v742
      %1276 = vmatpush.msra.mxu0 %v741
      %1277 = vmatpush.msra.mxu0 %v740
      %1278 = vmatpush.msra.mxu0 %v739
      %1279 = vmatpush.msra.mxu0 %v738
      %1280 = vmatpush.msra.mxu0 %v737
      %1281 = vmatpush.msra.mxu0 %v736
      %1282 = vmatpush.msra.mxu0 %v735
      %1283 = vmatpush.msra.mxu0 %v734
      %1284 = vmatpush.msra.mxu0 %v733
      %1285 = vmatpush.msra.mxu0 %v732
      %1286 = vmatpush.msra.mxu0 %v731
      %1287 = vmatpush.msra.mxu0 %v730
      %1288 = vmatpush.msra.mxu0 %v729
      %1289 = vmatpush.msra.mxu0 %v728
      %1290 = vmatmul.f32.gmra.mxu0 %v254
      %v1291 = vpop.f32.mrf.mxu0
      %v1292 = vadd.f32 %v1053, %v1291
      %1293 = vmatmul.f32.gmra.mxu0 %v260
      %v1294 = vpop.f32.mrf.mxu0
      %v1295 = vadd.f32 %v1056, %v1294
      %1296 = vmatmul.f32.gmra.mxu0 %v266
      %v1297 = vpop.f32.mrf.mxu0
      %v1298 = vadd.f32 %v1059, %v1297
      %1299 = vmatmul.f32.gmra.mxu0 %v272
      %v1300 = vpop.f32.mrf.mxu0
      %v1301 = vadd.f32 %v1062, %v1300
      %1302 = vmatmul.f32.gmra.mxu0 %v278
      %v1303 = vpop.f32.mrf.mxu0
      %v1304 = vadd.f32 %v1065, %v1303
      %1305 = vmatmul.f32.gmra.mxu0 %v284
      %v1306 = vpop.f32.mrf.mxu0
      %v1307 = vadd.f32 %v1068, %v1306
      %1308 = vmatmul.f32.gmra.mxu0 %v290
      %v1309 = vpop.f32.mrf.mxu0
      %v1310 = vadd.f32 %v1071, %v1309
      %1311 = vmatmul.f32.gmra.mxu0 %v296
      %v1312 = vpop.f32.mrf.mxu0
      %v1313 = vadd.f32 %v1074, %v1312
      %1314 = vmatmul.f32.gmra.mxu0 %v302
      %v1315 = vpop.f32.mrf.mxu0
      %v1316 = vadd.f32 %v1077, %v1315
      %1317 = vmatmul.f32.gmra.mxu0 %v308
      %v1318 = vpop.f32.mrf.mxu0
      %v1319 = vadd.f32 %v1080, %v1318
      %1320 = vmatmul.f32.gmra.mxu0 %v314
      %v1321 = vpop.f32.mrf.mxu0
      %v1322 = vadd.f32 %v1083, %v1321
      %1323 = vmatmul.f32.gmra.mxu0 %v320
      %v1324 = vpop.f32.mrf.mxu0
      %v1325 = vadd.f32 %v1086, %v1324
      %1326 = vmatmul.f32.gmra.mxu0 %v326
      %v1327 = vpop.f32.mrf.mxu0
      %v1328 = vadd.f32 %v1089, %v1327
      %1329 = vmatmul.f32.gmra.mxu0 %v332
      %v1330 = vpop.f32.mrf.mxu0
      %v1331 = vadd.f32 %v1092, %v1330
      %1332 = vmatmul.f32.gmra.mxu0 %v338
      %v1333 = vpop.f32.mrf.mxu0
      %v1334 = vadd.f32 %v1095, %v1333
      %1335 = vmatmul.f32.gmra.mxu0 %v344
      %v1336 = vpop.f32.mrf.mxu0
      %v1337 = vadd.f32 %v1098, %v1336
      %1338 = vmatmul.f32.gmra.mxu0 %v350
      %v1339 = vpop.f32.mrf.mxu0
      %v1340 = vadd.f32 %v1101, %v1339
      %1341 = vmatmul.f32.gmra.mxu0 %v356
      %v1342 = vpop.f32.mrf.mxu0
      %v1343 = vadd.f32 %v1104, %v1342
      %1344 = vmatmul.f32.gmra.mxu0 %v362
      %v1345 = vpop.f32.mrf.mxu0
      %v1346 = vadd.f32 %v1107, %v1345
      %1347 = vmatmul.f32.gmra.mxu0 %v368
      %v1348 = vpop.f32.mrf.mxu0
      %v1349 = vadd.f32 %v1110, %v1348
      %1350 = vmatmul.f32.gmra.mxu0 %v374
      %v1351 = vpop.f32.mrf.mxu0
      %v1352 = vadd.f32 %v1113, %v1351
      %1353 = vmatmul.f32.gmra.mxu0 %v380
      %v1354 = vpop.f32.mrf.mxu0
      %v1355 = vadd.f32 %v1116, %v1354
      %1356 = vmatmul.f32.gmra.mxu0 %v386
      %v1357 = vpop.f32.mrf.mxu0
      %v1358 = vadd.f32 %v1119, %v1357
      %1359 = vmatmul.f32.gmra.mxu0 %v392
      %v1360 = vpop.f32.mrf.mxu0
      %v1361 = vadd.f32 %v1122, %v1360
      %1362 = vmatmul.f32.gmra.mxu0 %v398
      %v1363 = vpop.f32.mrf.mxu0
      %v1364 = vadd.f32 %v1125, %v1363
      %1365 = vmatmul.f32.gmra.mxu0 %v404
      %v1366 = vpop.f32.mrf.mxu0
      %v1367 = vadd.f32 %v1128, %v1366
      %1368 = vmatmul.f32.gmra.mxu0 %v410
      %v1369 = vpop.f32.mrf.mxu0
      %v1370 = vadd.f32 %v1131, %v1369
      %1371 = vmatmul.f32.gmra.mxu0 %v416
      %v1372 = vpop.f32.mrf.mxu0
      %v1373 = vadd.f32 %v1134, %v1372
      %1374 = vmatmul.f32.gmra.mxu0 %v422
      %v1375 = vpop.f32.mrf.mxu0
      %v1376 = vadd.f32 %v1137, %v1375
      %1377 = vmatmul.f32.gmra.mxu0 %v428
      %v1378 = vpop.f32.mrf.mxu0
      %v1379 = vadd.f32 %v1140, %v1378
      %1380 = vmatmul.f32.gmra.mxu0 %v434
      %v1381 = vpop.f32.mrf.mxu0
      %v1382 = vadd.f32 %v1143, %v1381
      %1383 = vmatmul.f32.gmra.mxu0 %v440
      %v1384 = vpop.f32.mrf.mxu0
      %v1385 = vadd.f32 %v1146, %v1384
      %1386 = vmatmul.f32.gmra.mxu0 %v446
      %v1387 = vpop.f32.mrf.mxu0
      %v1388 = vadd.f32 %v1149, %v1387
      %1389 = vmatmul.f32.gmra.mxu0 %v452
      %v1390 = vpop.f32.mrf.mxu0
      %v1391 = vadd.f32 %v1152, %v1390
      %1392 = vmatmul.f32.gmra.mxu0 %v458
      %v1393 = vpop.f32.mrf.mxu0
      %v1394 = vadd.f32 %v1155, %v1393
      %1395 = vmatmul.f32.gmra.mxu0 %v464
      %v1396 = vpop.f32.mrf.mxu0
      %v1397 = vadd.f32 %v1158, %v1396
      %1398 = vmatmul.f32.gmra.mxu0 %v470
      %v1399 = vpop.f32.mrf.mxu0
      %v1400 = vadd.f32 %v1161, %v1399
      %1401 = vmatmul.f32.gmra.mxu0 %v476
      %v1402 = vpop.f32.mrf.mxu0
      %v1403 = vadd.f32 %v1164, %v1402
      %1404 = vmatmul.f32.gmra.mxu0 %v482
      %v1405 = vpop.f32.mrf.mxu0
      %v1406 = vadd.f32 %v1167, %v1405
      %1407 = vmatmul.f32.gmra.mxu0 %v488
      %v1408 = vpop.f32.mrf.mxu0
      %v1409 = vadd.f32 %v1170, %v1408
      %1410 = vmatmul.f32.gmra.mxu0 %v494
      %v1411 = vpop.f32.mrf.mxu0
      %v1412 = vadd.f32 %v1173, %v1411
      %1413 = vmatmul.f32.gmra.mxu0 %v500
      %v1414 = vpop.f32.mrf.mxu0
      %v1415 = vadd.f32 %v1176, %v1414
      %1416 = vmatmul.f32.gmra.mxu0 %v506
      %v1417 = vpop.f32.mrf.mxu0
      %v1418 = vadd.f32 %v1179, %v1417
      %1419 = vmatmul.f32.gmra.mxu0 %v512
      %v1420 = vpop.f32.mrf.mxu0
      %v1421 = vadd.f32 %v1182, %v1420
      %1422 = vmatmul.f32.gmra.mxu0 %v518
      %v1423 = vpop.f32.mrf.mxu0
      %v1424 = vadd.f32 %v1185, %v1423
      %1425 = vmatmul.f32.gmra.mxu0 %v524
      %v1426 = vpop.f32.mrf.mxu0
      %v1427 = vadd.f32 %v1188, %v1426
      %1428 = vmatmul.f32.gmra.mxu0 %v530
      %v1429 = vpop.f32.mrf.mxu0
      %v1430 = vadd.f32 %v1191, %v1429
      %1431 = vmatmul.f32.gmra.mxu0 %v536
      %v1432 = vpop.f32.mrf.mxu0
      %v1433 = vadd.f32 %v1194, %v1432
      %1434 = vmatmul.f32.gmra.mxu0 %v542
      %v1435 = vpop.f32.mrf.mxu0
      %v1436 = vadd.f32 %v1197, %v1435
      %1437 = vmatmul.f32.gmra.mxu0 %v548
      %v1438 = vpop.f32.mrf.mxu0
      %v1439 = vadd.f32 %v1200, %v1438
      %1440 = vmatmul.f32.gmra.mxu0 %v554
      %v1441 = vpop.f32.mrf.mxu0
      %v1442 = vadd.f32 %v1203, %v1441
      %1443 = vmatmul.f32.gmra.mxu0 %v560
      %v1444 = vpop.f32.mrf.mxu0
      %v1445 = vadd.f32 %v1206, %v1444
      %1446 = vmatmul.f32.gmra.mxu0 %v566
      %v1447 = vpop.f32.mrf.mxu0
      %v1448 = vadd.f32 %v1209, %v1447
      %1449 = vmatmul.f32.gmra.mxu0 %v572
      %v1450 = vpop.f32.mrf.mxu0
      %v1451 = vadd.f32 %v1212, %v1450
      %1452 = vmatmul.f32.gmra.mxu0 %v578
      %v1453 = vpop.f32.mrf.mxu0
      %v1454 = vadd.f32 %v1215, %v1453
      %1455 = vmatmul.f32.gmra.mxu0 %v584
      %v1456 = vpop.f32.mrf.mxu0
      %v1457 = vadd.f32 %v1218, %v1456
      %1458 = vmatmul.f32.gmra.mxu0 %v590
      %v1459 = vpop.f32.mrf.mxu0
      %v1460 = vadd.f32 %v1221, %v1459
      %1461 = vmatmul.f32.gmra.mxu0 %v596
      %v1462 = vpop.f32.mrf.mxu0
      %v1463 = vadd.f32 %v1224, %v1462
      %1464 = vmatmul.f32.gmra.mxu0 %v602
      %v1465 = vpop.f32.mrf.mxu0
      %v1466 = vadd.f32 %v1227, %v1465
      %1467 = vmatmul.f32.gmra.mxu0 %v608
      %v1468 = vpop.f32.mrf.mxu0
      %v1469 = vadd.f32 %v1230, %v1468
      %1470 = vmatmul.f32.gmra.mxu0 %v614
      %v1471 = vpop.f32.mrf.mxu0
      %v1472 = vadd.f32 %v1233, %v1471
      %1473 = vmatmul.f32.gmra.mxu0 %v620
      %v1474 = vpop.f32.mrf.mxu0
      %v1475 = vadd.f32 %v1236, %v1474
      %1476 = vmatmul.f32.gmra.mxu0 %v626
      %v1477 = vpop.f32.mrf.mxu0
      %v1478 = vadd.f32 %v1239, %v1477
      %1479 = vmatmul.f32.gmra.mxu0 %v632
      %v1480 = vpop.f32.mrf.mxu0
      %v1481 = vadd.f32 %v1242, %v1480
      %1482 = vmatmul.f32.gmra.mxu0 %v638
      %v1483 = vpop.f32.mrf.mxu0
      %v1484 = vadd.f32 %v1245, %v1483
      %1485 = vmatmul.f32.gmra.mxu0 %v644
      %v1486 = vpop.f32.mrf.mxu0
      %v1487 = vadd.f32 %v1248, %v1486
      %1488 = vmatmul.f32.gmra.mxu0 %v650
      %v1489 = vpop.f32.mrf.mxu0
      %v1490 = vadd.f32 %v1251, %v1489
      %1491 = vmatmul.f32.gmra.mxu0 %v656
      %v1492 = vpop.f32.mrf.mxu0
      %v1493 = vadd.f32 %v1254, %v1492
      %1494 = vmatmul.f32.gmra.mxu0 %v662
      %v1495 = vpop.f32.mrf.mxu0
      %v1496 = vadd.f32 %v1257, %v1495
      %1497 = vmatmul.f32.gmra.mxu0 %v668
      %v1498 = vpop.f32.mrf.mxu0
      %v1499 = vadd.f32 %v1260, %v1498
      %1500 = vmatmul.f32.gmra.mxu0 %v674
      %v1501 = vpop.f32.mrf.mxu0
      %v1502 = vadd.f32 %v1263, %v1501
      %1503 = vmatmul.f32.gmra.mxu0 %v680
      %v1504 = vpop.f32.mrf.mxu0
      %v1505 = vadd.f32 %v1266, %v1504
      %1506 = vmatmul.f32.gmra.mxu0 %v686
      %v1507 = vpop.f32.mrf.mxu0
      %v1508 = vadd.f32 %v1269, %v1507
      %1509 = vmatmul.f32.gmra.mxu0 %v692
      %v1510 = vpop.f32.mrf.mxu0
      %v1511 = vadd.f32 %v1272, %v1510
      %1512 = vdwg.mxu0
      %1513 = vmatpush.msra.mxu0 %v759
      %1514 = vmatpush.msra.mxu0 %v758
      %1515 = vmatpush.msra.mxu0 %v757
      %1516 = vmatpush.msra.mxu0 %v756
      %1517 = vmatpush.msra.mxu0 %v755
      %1518 = vmatpush.msra.mxu0 %v754
      %1519 = vmatpush.msra.mxu0 %v753
      %1520 = vmatpush.msra.mxu0 %v752
      %1521 = vmatpush.msra.mxu0 %v751
      %1522 = vmatpush.msra.mxu0 %v750
      %1523 = vmatpush.msra.mxu0 %v749
      %1524 = vmatpush.msra.mxu0 %v748
      %1525 = vmatpush.msra.mxu0 %v747
      %1526 = vmatpush.msra.mxu0 %v746
      %1527 = vmatpush.msra.mxu0 %v745
      %1528 = vmatpush.msra.mxu0 %v744
      %1529 = vmatmul.f32.gmra.mxu0 %v255
      %v1530 = vpop.f32.mrf.mxu0
      %v1531 = vadd.f32 %v1292, %v1530
      %1532 = vmatmul.f32.gmra.mxu0 %v261
      %v1533 = vpop.f32.mrf.mxu0
      %v1534 = vadd.f32 %v1295, %v1533
      %1535 = vmatmul.f32.gmra.mxu0 %v267
      %v1536 = vpop.f32.mrf.mxu0
      %v1537 = vadd.f32 %v1298, %v1536
      %1538 = vmatmul.f32.gmra.mxu0 %v273
      %v1539 = vpop.f32.mrf.mxu0
      %v1540 = vadd.f32 %v1301, %v1539
      %1541 = vmatmul.f32.gmra.mxu0 %v279
      %v1542 = vpop.f32.mrf.mxu0
      %v1543 = vadd.f32 %v1304, %v1542
      %1544 = vmatmul.f32.gmra.mxu0 %v285
      %v1545 = vpop.f32.mrf.mxu0
      %v1546 = vadd.f32 %v1307, %v1545
      %1547 = vmatmul.f32.gmra.mxu0 %v291
      %v1548 = vpop.f32.mrf.mxu0
      %v1549 = vadd.f32 %v1310, %v1548
      %1550 = vmatmul.f32.gmra.mxu0 %v297
      %v1551 = vpop.f32.mrf.mxu0
      %v1552 = vadd.f32 %v1313, %v1551
      %1553 = vmatmul.f32.gmra.mxu0 %v303
      %v1554 = vpop.f32.mrf.mxu0
      %v1555 = vadd.f32 %v1316, %v1554
      %1556 = vmatmul.f32.gmra.mxu0 %v309
      %v1557 = vpop.f32.mrf.mxu0
      %v1558 = vadd.f32 %v1319, %v1557
      %1559 = vmatmul.f32.gmra.mxu0 %v315
      %v1560 = vpop.f32.mrf.mxu0
      %v1561 = vadd.f32 %v1322, %v1560
      %1562 = vmatmul.f32.gmra.mxu0 %v321
      %v1563 = vpop.f32.mrf.mxu0
      %v1564 = vadd.f32 %v1325, %v1563
      %1565 = vmatmul.f32.gmra.mxu0 %v327
      %v1566 = vpop.f32.mrf.mxu0
      %v1567 = vadd.f32 %v1328, %v1566
      %1568 = vmatmul.f32.gmra.mxu0 %v333
      %v1569 = vpop.f32.mrf.mxu0
      %v1570 = vadd.f32 %v1331, %v1569
      %1571 = vmatmul.f32.gmra.mxu0 %v339
      %v1572 = vpop.f32.mrf.mxu0
      %v1573 = vadd.f32 %v1334, %v1572
      %1574 = vmatmul.f32.gmra.mxu0 %v345
      %v1575 = vpop.f32.mrf.mxu0
      %v1576 = vadd.f32 %v1337, %v1575
      %1577 = vmatmul.f32.gmra.mxu0 %v351
      %v1578 = vpop.f32.mrf.mxu0
      %v1579 = vadd.f32 %v1340, %v1578
      %1580 = vmatmul.f32.gmra.mxu0 %v357
      %v1581 = vpop.f32.mrf.mxu0
      %v1582 = vadd.f32 %v1343, %v1581
      %1583 = vmatmul.f32.gmra.mxu0 %v363
      %v1584 = vpop.f32.mrf.mxu0
      %v1585 = vadd.f32 %v1346, %v1584
      %1586 = vmatmul.f32.gmra.mxu0 %v369
      %v1587 = vpop.f32.mrf.mxu0
      %v1588 = vadd.f32 %v1349, %v1587
      %1589 = vmatmul.f32.gmra.mxu0 %v375
      %v1590 = vpop.f32.mrf.mxu0
      %v1591 = vadd.f32 %v1352, %v1590
      %1592 = vmatmul.f32.gmra.mxu0 %v381
      %v1593 = vpop.f32.mrf.mxu0
      %v1594 = vadd.f32 %v1355, %v1593
      %1595 = vmatmul.f32.gmra.mxu0 %v387
      %v1596 = vpop.f32.mrf.mxu0
      %v1597 = vadd.f32 %v1358, %v1596
      %1598 = vmatmul.f32.gmra.mxu0 %v393
      %v1599 = vpop.f32.mrf.mxu0
      %v1600 = vadd.f32 %v1361, %v1599
      %1601 = vmatmul.f32.gmra.mxu0 %v399
      %v1602 = vpop.f32.mrf.mxu0
      %v1603 = vadd.f32 %v1364, %v1602
      %1604 = vmatmul.f32.gmra.mxu0 %v405
      %v1605 = vpop.f32.mrf.mxu0
      %v1606 = vadd.f32 %v1367, %v1605
      %1607 = vmatmul.f32.gmra.mxu0 %v411
      %v1608 = vpop.f32.mrf.mxu0
      %v1609 = vadd.f32 %v1370, %v1608
      %1610 = vmatmul.f32.gmra.mxu0 %v417
      %v1611 = vpop.f32.mrf.mxu0
      %v1612 = vadd.f32 %v1373, %v1611
      %1613 = vmatmul.f32.gmra.mxu0 %v423
      %v1614 = vpop.f32.mrf.mxu0
      %v1615 = vadd.f32 %v1376, %v1614
      %1616 = vmatmul.f32.gmra.mxu0 %v429
      %v1617 = vpop.f32.mrf.mxu0
      %v1618 = vadd.f32 %v1379, %v1617
      %1619 = vmatmul.f32.gmra.mxu0 %v435
      %v1620 = vpop.f32.mrf.mxu0
      %v1621 = vadd.f32 %v1382, %v1620
      %1622 = vmatmul.f32.gmra.mxu0 %v441
      %v1623 = vpop.f32.mrf.mxu0
      %v1624 = vadd.f32 %v1385, %v1623
      %1625 = vmatmul.f32.gmra.mxu0 %v447
      %v1626 = vpop.f32.mrf.mxu0
      %v1627 = vadd.f32 %v1388, %v1626
      %1628 = vmatmul.f32.gmra.mxu0 %v453
      %v1629 = vpop.f32.mrf.mxu0
      %v1630 = vadd.f32 %v1391, %v1629
      %1631 = vmatmul.f32.gmra.mxu0 %v459
      %v1632 = vpop.f32.mrf.mxu0
      %v1633 = vadd.f32 %v1394, %v1632
      %1634 = vmatmul.f32.gmra.mxu0 %v465
      %v1635 = vpop.f32.mrf.mxu0
      %v1636 = vadd.f32 %v1397, %v1635
      %1637 = vmatmul.f32.gmra.mxu0 %v471
      %v1638 = vpop.f32.mrf.mxu0
      %v1639 = vadd.f32 %v1400, %v1638
      %1640 = vmatmul.f32.gmra.mxu0 %v477
      %v1641 = vpop.f32.mrf.mxu0
      %v1642 = vadd.f32 %v1403, %v1641
      %1643 = vmatmul.f32.gmra.mxu0 %v483
      %v1644 = vpop.f32.mrf.mxu0
      %v1645 = vadd.f32 %v1406, %v1644
      %1646 = vmatmul.f32.gmra.mxu0 %v489
      %v1647 = vpop.f32.mrf.mxu0
      %v1648 = vadd.f32 %v1409, %v1647
      %1649 = vmatmul.f32.gmra.mxu0 %v495
      %v1650 = vpop.f32.mrf.mxu0
      %v1651 = vadd.f32 %v1412, %v1650
      %1652 = vmatmul.f32.gmra.mxu0 %v501
      %v1653 = vpop.f32.mrf.mxu0
      %v1654 = vadd.f32 %v1415, %v1653
      %1655 = vmatmul.f32.gmra.mxu0 %v507
      %v1656 = vpop.f32.mrf.mxu0
      %v1657 = vadd.f32 %v1418, %v1656
      %1658 = vmatmul.f32.gmra.mxu0 %v513
      %v1659 = vpop.f32.mrf.mxu0
      %v1660 = vadd.f32 %v1421, %v1659
      %1661 = vmatmul.f32.gmra.mxu0 %v519
      %v1662 = vpop.f32.mrf.mxu0
      %v1663 = vadd.f32 %v1424, %v1662
      %1664 = vmatmul.f32.gmra.mxu0 %v525
      %v1665 = vpop.f32.mrf.mxu0
      %v1666 = vadd.f32 %v1427, %v1665
      %1667 = vmatmul.f32.gmra.mxu0 %v531
      %v1668 = vpop.f32.mrf.mxu0
      %v1669 = vadd.f32 %v1430, %v1668
      %1670 = vmatmul.f32.gmra.mxu0 %v537
      %v1671 = vpop.f32.mrf.mxu0
      %v1672 = vadd.f32 %v1433, %v1671
      %1673 = vmatmul.f32.gmra.mxu0 %v543
      %v1674 = vpop.f32.mrf.mxu0
      %v1675 = vadd.f32 %v1436, %v1674
      %1676 = vmatmul.f32.gmra.mxu0 %v549
      %v1677 = vpop.f32.mrf.mxu0
      %v1678 = vadd.f32 %v1439, %v1677
      %1679 = vmatmul.f32.gmra.mxu0 %v555
      %v1680 = vpop.f32.mrf.mxu0
      %v1681 = vadd.f32 %v1442, %v1680
      %1682 = vmatmul.f32.gmra.mxu0 %v561
      %v1683 = vpop.f32.mrf.mxu0
      %v1684 = vadd.f32 %v1445, %v1683
      %1685 = vmatmul.f32.gmra.mxu0 %v567
      %v1686 = vpop.f32.mrf.mxu0
      %v1687 = vadd.f32 %v1448, %v1686
      %1688 = vmatmul.f32.gmra.mxu0 %v573
      %v1689 = vpop.f32.mrf.mxu0
      %v1690 = vadd.f32 %v1451, %v1689
      %1691 = vmatmul.f32.gmra.mxu0 %v579
      %v1692 = vpop.f32.mrf.mxu0
      %v1693 = vadd.f32 %v1454, %v1692
      %1694 = vmatmul.f32.gmra.mxu0 %v585
      %v1695 = vpop.f32.mrf.mxu0
      %v1696 = vadd.f32 %v1457, %v1695
      %1697 = vmatmul.f32.gmra.mxu0 %v591
      %v1698 = vpop.f32.mrf.mxu0
      %v1699 = vadd.f32 %v1460, %v1698
      %1700 = vmatmul.f32.gmra.mxu0 %v597
      %v1701 = vpop.f32.mrf.mxu0
      %v1702 = vadd.f32 %v1463, %v1701
      %1703 = vmatmul.f32.gmra.mxu0 %v603
      %v1704 = vpop.f32.mrf.mxu0
      %v1705 = vadd.f32 %v1466, %v1704
      %1706 = vmatmul.f32.gmra.mxu0 %v609
      %v1707 = vpop.f32.mrf.mxu0
      %v1708 = vadd.f32 %v1469, %v1707
      %1709 = vmatmul.f32.gmra.mxu0 %v615
      %v1710 = vpop.f32.mrf.mxu0
      %v1711 = vadd.f32 %v1472, %v1710
      %1712 = vmatmul.f32.gmra.mxu0 %v621
      %v1713 = vpop.f32.mrf.mxu0
      %v1714 = vadd.f32 %v1475, %v1713
      %1715 = vmatmul.f32.gmra.mxu0 %v627
      %v1716 = vpop.f32.mrf.mxu0
      %v1717 = vadd.f32 %v1478, %v1716
      %1718 = vmatmul.f32.gmra.mxu0 %v633
      %v1719 = vpop.f32.mrf.mxu0
      %v1720 = vadd.f32 %v1481, %v1719
      %1721 = vmatmul.f32.gmra.mxu0 %v639
      %v1722 = vpop.f32.mrf.mxu0
      %v1723 = vadd.f32 %v1484, %v1722
      %1724 = vmatmul.f32.gmra.mxu0 %v645
      %v1725 = vpop.f32.mrf.mxu0
      %v1726 = vadd.f32 %v1487, %v1725
      %1727 = vmatmul.f32.gmra.mxu0 %v651
      %v1728 = vpop.f32.mrf.mxu0
      %v1729 = vadd.f32 %v1490, %v1728
      %1730 = vmatmul.f32.gmra.mxu0 %v657
      %v1731 = vpop.f32.mrf.mxu0
      %v1732 = vadd.f32 %v1493, %v1731
      %1733 = vmatmul.f32.gmra.mxu0 %v663
      %v1734 = vpop.f32.mrf.mxu0
      %v1735 = vadd.f32 %v1496, %v1734
      %1736 = vmatmul.f32.gmra.mxu0 %v669
      %v1737 = vpop.f32.mrf.mxu0
      %v1738 = vadd.f32 %v1499, %v1737
      %1739 = vmatmul.f32.gmra.mxu0 %v675
      %v1740 = vpop.f32.mrf.mxu0
      %v1741 = vadd.f32 %v1502, %v1740
      %1742 = vmatmul.f32.gmra.mxu0 %v681
      %v1743 = vpop.f32.mrf.mxu0
      %v1744 = vadd.f32 %v1505, %v1743
      %1745 = vmatmul.f32.gmra.mxu0 %v687
      %v1746 = vpop.f32.mrf.mxu0
      %v1747 = vadd.f32 %v1508, %v1746
      %1748 = vmatmul.f32.gmra.mxu0 %v693
      %v1749 = vpop.f32.mrf.mxu0
      %v1750 = vadd.f32 %v1511, %v1749
      %1751 = vdwg.mxu0
      %1752 = vmatpush.msra.mxu0 %v775
      %1753 = vmatpush.msra.mxu0 %v774
      %1754 = vmatpush.msra.mxu0 %v773
      %1755 = vmatpush.msra.mxu0 %v772
      %1756 = vmatpush.msra.mxu0 %v771
      %1757 = vmatpush.msra.mxu0 %v770
      %1758 = vmatpush.msra.mxu0 %v769
      %1759 = vmatpush.msra.mxu0 %v768
      %1760 = vmatpush.msra.mxu0 %v767
      %1761 = vmatpush.msra.mxu0 %v766
      %1762 = vmatpush.msra.mxu0 %v765
      %1763 = vmatpush.msra.mxu0 %v764
      %1764 = vmatpush.msra.mxu0 %v763
      %1765 = vmatpush.msra.mxu0 %v762
      %1766 = vmatpush.msra.mxu0 %v761
      %1767 = vmatpush.msra.mxu0 %v760
      %1768 = vmatmul.f32.gmra.mxu0 %v256
      %v1769 = vpop.f32.mrf.mxu0
      %v1770 = vadd.f32 %v1531, %v1769
      %1771 = vmatmul.f32.gmra.mxu0 %v262
      %v1772 = vpop.f32.mrf.mxu0
      %v1773 = vadd.f32 %v1534, %v1772
      %1774 = vmatmul.f32.gmra.mxu0 %v268
      %v1775 = vpop.f32.mrf.mxu0
      %v1776 = vadd.f32 %v1537, %v1775
      %1777 = vmatmul.f32.gmra.mxu0 %v274
      %v1778 = vpop.f32.mrf.mxu0
      %v1779 = vadd.f32 %v1540, %v1778
      %1780 = vmatmul.f32.gmra.mxu0 %v280
      %v1781 = vpop.f32.mrf.mxu0
      %v1782 = vadd.f32 %v1543, %v1781
      %1783 = vmatmul.f32.gmra.mxu0 %v286
      %v1784 = vpop.f32.mrf.mxu0
      %v1785 = vadd.f32 %v1546, %v1784
      %1786 = vmatmul.f32.gmra.mxu0 %v292
      %v1787 = vpop.f32.mrf.mxu0
      %v1788 = vadd.f32 %v1549, %v1787
      %1789 = vmatmul.f32.gmra.mxu0 %v298
      %v1790 = vpop.f32.mrf.mxu0
      %v1791 = vadd.f32 %v1552, %v1790
      %1792 = vmatmul.f32.gmra.mxu0 %v304
      %v1793 = vpop.f32.mrf.mxu0
      %v1794 = vadd.f32 %v1555, %v1793
      %1795 = vmatmul.f32.gmra.mxu0 %v310
      %v1796 = vpop.f32.mrf.mxu0
      %v1797 = vadd.f32 %v1558, %v1796
      %1798 = vmatmul.f32.gmra.mxu0 %v316
      %v1799 = vpop.f32.mrf.mxu0
      %v1800 = vadd.f32 %v1561, %v1799
      %1801 = vmatmul.f32.gmra.mxu0 %v322
      %v1802 = vpop.f32.mrf.mxu0
      %v1803 = vadd.f32 %v1564, %v1802
      %1804 = vmatmul.f32.gmra.mxu0 %v328
      %v1805 = vpop.f32.mrf.mxu0
      %v1806 = vadd.f32 %v1567, %v1805
      %1807 = vmatmul.f32.gmra.mxu0 %v334
      %v1808 = vpop.f32.mrf.mxu0
      %v1809 = vadd.f32 %v1570, %v1808
      %1810 = vmatmul.f32.gmra.mxu0 %v340
      %v1811 = vpop.f32.mrf.mxu0
      %v1812 = vadd.f32 %v1573, %v1811
      %1813 = vmatmul.f32.gmra.mxu0 %v346
      %v1814 = vpop.f32.mrf.mxu0
      %v1815 = vadd.f32 %v1576, %v1814
      %1816 = vmatmul.f32.gmra.mxu0 %v352
      %v1817 = vpop.f32.mrf.mxu0
      %v1818 = vadd.f32 %v1579, %v1817
      %1819 = vmatmul.f32.gmra.mxu0 %v358
      %v1820 = vpop.f32.mrf.mxu0
      %v1821 = vadd.f32 %v1582, %v1820
      %1822 = vmatmul.f32.gmra.mxu0 %v364
      %v1823 = vpop.f32.mrf.mxu0
      %v1824 = vadd.f32 %v1585, %v1823
      %1825 = vmatmul.f32.gmra.mxu0 %v370
      %v1826 = vpop.f32.mrf.mxu0
      %v1827 = vadd.f32 %v1588, %v1826
      %1828 = vmatmul.f32.gmra.mxu0 %v376
      %v1829 = vpop.f32.mrf.mxu0
      %v1830 = vadd.f32 %v1591, %v1829
      %1831 = vmatmul.f32.gmra.mxu0 %v382
      %v1832 = vpop.f32.mrf.mxu0
      %v1833 = vadd.f32 %v1594, %v1832
      %1834 = vmatmul.f32.gmra.mxu0 %v388
      %v1835 = vpop.f32.mrf.mxu0
      %v1836 = vadd.f32 %v1597, %v1835
      %1837 = vmatmul.f32.gmra.mxu0 %v394
      %v1838 = vpop.f32.mrf.mxu0
      %v1839 = vadd.f32 %v1600, %v1838
      %1840 = vmatmul.f32.gmra.mxu0 %v400
      %v1841 = vpop.f32.mrf.mxu0
      %v1842 = vadd.f32 %v1603, %v1841
      %1843 = vmatmul.f32.gmra.mxu0 %v406
      %v1844 = vpop.f32.mrf.mxu0
      %v1845 = vadd.f32 %v1606, %v1844
      %1846 = vmatmul.f32.gmra.mxu0 %v412
      %v1847 = vpop.f32.mrf.mxu0
      %v1848 = vadd.f32 %v1609, %v1847
      %1849 = vmatmul.f32.gmra.mxu0 %v418
      %v1850 = vpop.f32.mrf.mxu0
      %v1851 = vadd.f32 %v1612, %v1850
      %1852 = vmatmul.f32.gmra.mxu0 %v424
      %v1853 = vpop.f32.mrf.mxu0
      %v1854 = vadd.f32 %v1615, %v1853
      %1855 = vmatmul.f32.gmra.mxu0 %v430
      %v1856 = vpop.f32.mrf.mxu0
      %v1857 = vadd.f32 %v1618, %v1856
      %1858 = vmatmul.f32.gmra.mxu0 %v436
      %v1859 = vpop.f32.mrf.mxu0
      %v1860 = vadd.f32 %v1621, %v1859
      %1861 = vmatmul.f32.gmra.mxu0 %v442
      %v1862 = vpop.f32.mrf.mxu0
      %v1863 = vadd.f32 %v1624, %v1862
      %1864 = vmatmul.f32.gmra.mxu0 %v448
      %v1865 = vpop.f32.mrf.mxu0
      %v1866 = vadd.f32 %v1627, %v1865
      %1867 = vmatmul.f32.gmra.mxu0 %v454
      %v1868 = vpop.f32.mrf.mxu0
      %v1869 = vadd.f32 %v1630, %v1868
      %1870 = vmatmul.f32.gmra.mxu0 %v460
      %v1871 = vpop.f32.mrf.mxu0
      %v1872 = vadd.f32 %v1633, %v1871
      %1873 = vmatmul.f32.gmra.mxu0 %v466
      %v1874 = vpop.f32.mrf.mxu0
      %v1875 = vadd.f32 %v1636, %v1874
      %1876 = vmatmul.f32.gmra.mxu0 %v472
      %v1877 = vpop.f32.mrf.mxu0
      %v1878 = vadd.f32 %v1639, %v1877
      %1879 = vmatmul.f32.gmra.mxu0 %v478
      %v1880 = vpop.f32.mrf.mxu0
      %v1881 = vadd.f32 %v1642, %v1880
      %1882 = vmatmul.f32.gmra.mxu0 %v484
      %v1883 = vpop.f32.mrf.mxu0
      %v1884 = vadd.f32 %v1645, %v1883
      %1885 = vmatmul.f32.gmra.mxu0 %v490
      %v1886 = vpop.f32.mrf.mxu0
      %v1887 = vadd.f32 %v1648, %v1886
      %1888 = vmatmul.f32.gmra.mxu0 %v496
      %v1889 = vpop.f32.mrf.mxu0
      %v1890 = vadd.f32 %v1651, %v1889
      %1891 = vmatmul.f32.gmra.mxu0 %v502
      %v1892 = vpop.f32.mrf.mxu0
      %v1893 = vadd.f32 %v1654, %v1892
      %1894 = vmatmul.f32.gmra.mxu0 %v508
      %v1895 = vpop.f32.mrf.mxu0
      %v1896 = vadd.f32 %v1657, %v1895
      %1897 = vmatmul.f32.gmra.mxu0 %v514
      %v1898 = vpop.f32.mrf.mxu0
      %v1899 = vadd.f32 %v1660, %v1898
      %1900 = vmatmul.f32.gmra.mxu0 %v520
      %v1901 = vpop.f32.mrf.mxu0
      %v1902 = vadd.f32 %v1663, %v1901
      %1903 = vmatmul.f32.gmra.mxu0 %v526
      %v1904 = vpop.f32.mrf.mxu0
      %v1905 = vadd.f32 %v1666, %v1904
      %1906 = vmatmul.f32.gmra.mxu0 %v532
      %v1907 = vpop.f32.mrf.mxu0
      %v1908 = vadd.f32 %v1669, %v1907
      %1909 = vmatmul.f32.gmra.mxu0 %v538
      %v1910 = vpop.f32.mrf.mxu0
      %v1911 = vadd.f32 %v1672, %v1910
      %1912 = vmatmul.f32.gmra.mxu0 %v544
      %v1913 = vpop.f32.mrf.mxu0
      %v1914 = vadd.f32 %v1675, %v1913
      %1915 = vmatmul.f32.gmra.mxu0 %v550
      %v1916 = vpop.f32.mrf.mxu0
      %v1917 = vadd.f32 %v1678, %v1916
      %1918 = vmatmul.f32.gmra.mxu0 %v556
      %v1919 = vpop.f32.mrf.mxu0
      %v1920 = vadd.f32 %v1681, %v1919
      %1921 = vmatmul.f32.gmra.mxu0 %v562
      %v1922 = vpop.f32.mrf.mxu0
      %v1923 = vadd.f32 %v1684, %v1922
      %1924 = vmatmul.f32.gmra.mxu0 %v568
      %v1925 = vpop.f32.mrf.mxu0
      %v1926 = vadd.f32 %v1687, %v1925
      %1927 = vmatmul.f32.gmra.mxu0 %v574
      %v1928 = vpop.f32.mrf.mxu0
      %v1929 = vadd.f32 %v1690, %v1928
      %1930 = vmatmul.f32.gmra.mxu0 %v580
      %v1931 = vpop.f32.mrf.mxu0
      %v1932 = vadd.f32 %v1693, %v1931
      %1933 = vmatmul.f32.gmra.mxu0 %v586
      %v1934 = vpop.f32.mrf.mxu0
      %v1935 = vadd.f32 %v1696, %v1934
      %1936 = vmatmul.f32.gmra.mxu0 %v592
      %v1937 = vpop.f32.mrf.mxu0
      %v1938 = vadd.f32 %v1699, %v1937
      %1939 = vmatmul.f32.gmra.mxu0 %v598
      %v1940 = vpop.f32.mrf.mxu0
      %v1941 = vadd.f32 %v1702, %v1940
      %1942 = vmatmul.f32.gmra.mxu0 %v604
      %v1943 = vpop.f32.mrf.mxu0
      %v1944 = vadd.f32 %v1705, %v1943
      %1945 = vmatmul.f32.gmra.mxu0 %v610
      %v1946 = vpop.f32.mrf.mxu0
      %v1947 = vadd.f32 %v1708, %v1946
      %1948 = vmatmul.f32.gmra.mxu0 %v616
      %v1949 = vpop.f32.mrf.mxu0
      %v1950 = vadd.f32 %v1711, %v1949
      %1951 = vmatmul.f32.gmra.mxu0 %v622
      %v1952 = vpop.f32.mrf.mxu0
      %v1953 = vadd.f32 %v1714, %v1952
      %1954 = vmatmul.f32.gmra.mxu0 %v628
      %v1955 = vpop.f32.mrf.mxu0
      %v1956 = vadd.f32 %v1717, %v1955
      %1957 = vmatmul.f32.gmra.mxu0 %v634
      %v1958 = vpop.f32.mrf.mxu0
      %v1959 = vadd.f32 %v1720, %v1958
      %1960 = vmatmul.f32.gmra.mxu0 %v640
      %v1961 = vpop.f32.mrf.mxu0
      %v1962 = vadd.f32 %v1723, %v1961
      %1963 = vmatmul.f32.gmra.mxu0 %v646
      %v1964 = vpop.f32.mrf.mxu0
      %v1965 = vadd.f32 %v1726, %v1964
      %1966 = vmatmul.f32.gmra.mxu0 %v652
      %v1967 = vpop.f32.mrf.mxu0
      %v1968 = vadd.f32 %v1729, %v1967
      %1969 = vmatmul.f32.gmra.mxu0 %v658
      %v1970 = vpop.f32.mrf.mxu0
      %v1971 = vadd.f32 %v1732, %v1970
      %1972 = vmatmul.f32.gmra.mxu0 %v664
      %v1973 = vpop.f32.mrf.mxu0
      %v1974 = vadd.f32 %v1735, %v1973
      %1975 = vmatmul.f32.gmra.mxu0 %v670
      %v1976 = vpop.f32.mrf.mxu0
      %v1977 = vadd.f32 %v1738, %v1976
      %1978 = vmatmul.f32.gmra.mxu0 %v676
      %v1979 = vpop.f32.mrf.mxu0
      %v1980 = vadd.f32 %v1741, %v1979
      %1981 = vmatmul.f32.gmra.mxu0 %v682
      %v1982 = vpop.f32.mrf.mxu0
      %v1983 = vadd.f32 %v1744, %v1982
      %1984 = vmatmul.f32.gmra.mxu0 %v688
      %v1985 = vpop.f32.mrf.mxu0
      %v1986 = vadd.f32 %v1747, %v1985
      %1987 = vmatmul.f32.gmra.mxu0 %v694
      %v1988 = vpop.f32.mrf.mxu0
      %v1989 = vadd.f32 %v1750, %v1988
      %1990 = vdwg.mxu0
      %1991 = vmatpush.msra.mxu0 %v791
      %1992 = vmatpush.msra.mxu0 %v790
      %1993 = vmatpush.msra.mxu0 %v789
      %1994 = vmatpush.msra.mxu0 %v788
      %1995 = vmatpush.msra.mxu0 %v787
      %1996 = vmatpush.msra.mxu0 %v786
      %1997 = vmatpush.msra.mxu0 %v785
      %1998 = vmatpush.msra.mxu0 %v784
      %1999 = vmatpush.msra.mxu0 %v783
      %2000 = vmatpush.msra.mxu0 %v782
      %2001 = vmatpush.msra.mxu0 %v781
      %2002 = vmatpush.msra.mxu0 %v780
      %2003 = vmatpush.msra.mxu0 %v779
      %2004 = vmatpush.msra.mxu0 %v778
      %2005 = vmatpush.msra.mxu0 %v777
      %2006 = vmatpush.msra.mxu0 %v776
      %2007 = vmatmul.f32.gmra.mxu0 %v257
      %v2008 = vpop.f32.mrf.mxu0
      %v2009 = vadd.f32 %v1770, %v2008
      %2010 = vmatmul.f32.gmra.mxu0 %v263
      %v2011 = vpop.f32.mrf.mxu0
      %v2012 = vadd.f32 %v1773, %v2011
      %2013 = vmatmul.f32.gmra.mxu0 %v269
      %v2014 = vpop.f32.mrf.mxu0
      %v2015 = vadd.f32 %v1776, %v2014
      %2016 = vmatmul.f32.gmra.mxu0 %v275
      %v2017 = vpop.f32.mrf.mxu0
      %v2018 = vadd.f32 %v1779, %v2017
      %2019 = vmatmul.f32.gmra.mxu0 %v281
      %v2020 = vpop.f32.mrf.mxu0
      %v2021 = vadd.f32 %v1782, %v2020
      %2022 = vmatmul.f32.gmra.mxu0 %v287
      %v2023 = vpop.f32.mrf.mxu0
      %v2024 = vadd.f32 %v1785, %v2023
      %2025 = vmatmul.f32.gmra.mxu0 %v293
      %v2026 = vpop.f32.mrf.mxu0
      %v2027 = vadd.f32 %v1788, %v2026
      %2028 = vmatmul.f32.gmra.mxu0 %v299
      %v2029 = vpop.f32.mrf.mxu0
      %v2030 = vadd.f32 %v1791, %v2029
      %2031 = vmatmul.f32.gmra.mxu0 %v305
      %v2032 = vpop.f32.mrf.mxu0
      %v2033 = vadd.f32 %v1794, %v2032
      %2034 = vmatmul.f32.gmra.mxu0 %v311
      %v2035 = vpop.f32.mrf.mxu0
      %v2036 = vadd.f32 %v1797, %v2035
      %2037 = vmatmul.f32.gmra.mxu0 %v317
      %v2038 = vpop.f32.mrf.mxu0
      %v2039 = vadd.f32 %v1800, %v2038
      %2040 = vmatmul.f32.gmra.mxu0 %v323
      %v2041 = vpop.f32.mrf.mxu0
      %v2042 = vadd.f32 %v1803, %v2041
      %2043 = vmatmul.f32.gmra.mxu0 %v329
      %v2044 = vpop.f32.mrf.mxu0
      %v2045 = vadd.f32 %v1806, %v2044
      %2046 = vmatmul.f32.gmra.mxu0 %v335
      %v2047 = vpop.f32.mrf.mxu0
      %v2048 = vadd.f32 %v1809, %v2047
      %2049 = vmatmul.f32.gmra.mxu0 %v341
      %v2050 = vpop.f32.mrf.mxu0
      %v2051 = vadd.f32 %v1812, %v2050
      %2052 = vmatmul.f32.gmra.mxu0 %v347
      %v2053 = vpop.f32.mrf.mxu0
      %v2054 = vadd.f32 %v1815, %v2053
      %2055 = vmatmul.f32.gmra.mxu0 %v353
      %v2056 = vpop.f32.mrf.mxu0
      %v2057 = vadd.f32 %v1818, %v2056
      %2058 = vmatmul.f32.gmra.mxu0 %v359
      %v2059 = vpop.f32.mrf.mxu0
      %v2060 = vadd.f32 %v1821, %v2059
      %2061 = vmatmul.f32.gmra.mxu0 %v365
      %v2062 = vpop.f32.mrf.mxu0
      %v2063 = vadd.f32 %v1824, %v2062
      %2064 = vmatmul.f32.gmra.mxu0 %v371
      %v2065 = vpop.f32.mrf.mxu0
      %v2066 = vadd.f32 %v1827, %v2065
      %2067 = vmatmul.f32.gmra.mxu0 %v377
      %v2068 = vpop.f32.mrf.mxu0
      %v2069 = vadd.f32 %v1830, %v2068
      %2070 = vmatmul.f32.gmra.mxu0 %v383
      %v2071 = vpop.f32.mrf.mxu0
      %v2072 = vadd.f32 %v1833, %v2071
      %2073 = vmatmul.f32.gmra.mxu0 %v389
      %v2074 = vpop.f32.mrf.mxu0
      %v2075 = vadd.f32 %v1836, %v2074
      %2076 = vmatmul.f32.gmra.mxu0 %v395
      %v2077 = vpop.f32.mrf.mxu0
      %v2078 = vadd.f32 %v1839, %v2077
      %2079 = vmatmul.f32.gmra.mxu0 %v401
      %v2080 = vpop.f32.mrf.mxu0
      %v2081 = vadd.f32 %v1842, %v2080
      %2082 = vmatmul.f32.gmra.mxu0 %v407
      %v2083 = vpop.f32.mrf.mxu0
      %v2084 = vadd.f32 %v1845, %v2083
      %2085 = vmatmul.f32.gmra.mxu0 %v413
      %v2086 = vpop.f32.mrf.mxu0
      %v2087 = vadd.f32 %v1848, %v2086
      %2088 = vmatmul.f32.gmra.mxu0 %v419
      %v2089 = vpop.f32.mrf.mxu0
      %v2090 = vadd.f32 %v1851, %v2089
      %2091 = vmatmul.f32.gmra.mxu0 %v425
      %v2092 = vpop.f32.mrf.mxu0
      %v2093 = vadd.f32 %v1854, %v2092
      %2094 = vmatmul.f32.gmra.mxu0 %v431
      %v2095 = vpop.f32.mrf.mxu0
      %v2096 = vadd.f32 %v1857, %v2095
      %2097 = vmatmul.f32.gmra.mxu0 %v437
      %v2098 = vpop.f32.mrf.mxu0
      %v2099 = vadd.f32 %v1860, %v2098
      %2100 = vmatmul.f32.gmra.mxu0 %v443
      %v2101 = vpop.f32.mrf.mxu0
      %v2102 = vadd.f32 %v1863, %v2101
      %2103 = vmatmul.f32.gmra.mxu0 %v449
      %v2104 = vpop.f32.mrf.mxu0
      %v2105 = vadd.f32 %v1866, %v2104
      %2106 = vmatmul.f32.gmra.mxu0 %v455
      %v2107 = vpop.f32.mrf.mxu0
      %v2108 = vadd.f32 %v1869, %v2107
      %2109 = vmatmul.f32.gmra.mxu0 %v461
      %v2110 = vpop.f32.mrf.mxu0
      %v2111 = vadd.f32 %v1872, %v2110
      %2112 = vmatmul.f32.gmra.mxu0 %v467
      %v2113 = vpop.f32.mrf.mxu0
      %v2114 = vadd.f32 %v1875, %v2113
      %2115 = vmatmul.f32.gmra.mxu0 %v473
      %v2116 = vpop.f32.mrf.mxu0
      %v2117 = vadd.f32 %v1878, %v2116
      %2118 = vmatmul.f32.gmra.mxu0 %v479
      %v2119 = vpop.f32.mrf.mxu0
      %v2120 = vadd.f32 %v1881, %v2119
      %2121 = vmatmul.f32.gmra.mxu0 %v485
      %v2122 = vpop.f32.mrf.mxu0
      %v2123 = vadd.f32 %v1884, %v2122
      %2124 = vmatmul.f32.gmra.mxu0 %v491
      %v2125 = vpop.f32.mrf.mxu0
      %v2126 = vadd.f32 %v1887, %v2125
      %2127 = vmatmul.f32.gmra.mxu0 %v497
      %v2128 = vpop.f32.mrf.mxu0
      %v2129 = vadd.f32 %v1890, %v2128
      %2130 = vmatmul.f32.gmra.mxu0 %v503
      %v2131 = vpop.f32.mrf.mxu0
      %v2132 = vadd.f32 %v1893, %v2131
      %2133 = vmatmul.f32.gmra.mxu0 %v509
      %v2134 = vpop.f32.mrf.mxu0
      %v2135 = vadd.f32 %v1896, %v2134
      %2136 = vmatmul.f32.gmra.mxu0 %v515
      %v2137 = vpop.f32.mrf.mxu0
      %v2138 = vadd.f32 %v1899, %v2137
      %2139 = vmatmul.f32.gmra.mxu0 %v521
      %v2140 = vpop.f32.mrf.mxu0
      %v2141 = vadd.f32 %v1902, %v2140
      %2142 = vmatmul.f32.gmra.mxu0 %v527
      %v2143 = vpop.f32.mrf.mxu0
      %v2144 = vadd.f32 %v1905, %v2143
      %2145 = vmatmul.f32.gmra.mxu0 %v533
      %v2146 = vpop.f32.mrf.mxu0
      %v2147 = vadd.f32 %v1908, %v2146
      %2148 = vmatmul.f32.gmra.mxu0 %v539
      %v2149 = vpop.f32.mrf.mxu0
      %v2150 = vadd.f32 %v1911, %v2149
      %2151 = vmatmul.f32.gmra.mxu0 %v545
      %v2152 = vpop.f32.mrf.mxu0
      %v2153 = vadd.f32 %v1914, %v2152
      %2154 = vmatmul.f32.gmra.mxu0 %v551
      %v2155 = vpop.f32.mrf.mxu0
      %v2156 = vadd.f32 %v1917, %v2155
      %2157 = vmatmul.f32.gmra.mxu0 %v557
      %v2158 = vpop.f32.mrf.mxu0
      %v2159 = vadd.f32 %v1920, %v2158
      %2160 = vmatmul.f32.gmra.mxu0 %v563
      %v2161 = vpop.f32.mrf.mxu0
      %v2162 = vadd.f32 %v1923, %v2161
      %2163 = vmatmul.f32.gmra.mxu0 %v569
      %v2164 = vpop.f32.mrf.mxu0
      %v2165 = vadd.f32 %v1926, %v2164
      %2166 = vmatmul.f32.gmra.mxu0 %v575
      %v2167 = vpop.f32.mrf.mxu0
      %v2168 = vadd.f32 %v1929, %v2167
      %2169 = vmatmul.f32.gmra.mxu0 %v581
      %v2170 = vpop.f32.mrf.mxu0
      %v2171 = vadd.f32 %v1932, %v2170
      %2172 = vmatmul.f32.gmra.mxu0 %v587
      %v2173 = vpop.f32.mrf.mxu0
      %v2174 = vadd.f32 %v1935, %v2173
      %2175 = vmatmul.f32.gmra.mxu0 %v593
      %v2176 = vpop.f32.mrf.mxu0
      %v2177 = vadd.f32 %v1938, %v2176
      %2178 = vmatmul.f32.gmra.mxu0 %v599
      %v2179 = vpop.f32.mrf.mxu0
      %v2180 = vadd.f32 %v1941, %v2179
      %2181 = vmatmul.f32.gmra.mxu0 %v605
      %v2182 = vpop.f32.mrf.mxu0
      %v2183 = vadd.f32 %v1944, %v2182
      %2184 = vmatmul.f32.gmra.mxu0 %v611
      %v2185 = vpop.f32.mrf.mxu0
      %v2186 = vadd.f32 %v1947, %v2185
      %2187 = vmatmul.f32.gmra.mxu0 %v617
      %v2188 = vpop.f32.mrf.mxu0
      %v2189 = vadd.f32 %v1950, %v2188
      %2190 = vmatmul.f32.gmra.mxu0 %v623
      %v2191 = vpop.f32.mrf.mxu0
      %v2192 = vadd.f32 %v1953, %v2191
      %2193 = vmatmul.f32.gmra.mxu0 %v629
      %v2194 = vpop.f32.mrf.mxu0
      %v2195 = vadd.f32 %v1956, %v2194
      %2196 = vmatmul.f32.gmra.mxu0 %v635
      %v2197 = vpop.f32.mrf.mxu0
      %v2198 = vadd.f32 %v1959, %v2197
      %2199 = vmatmul.f32.gmra.mxu0 %v641
      %v2200 = vpop.f32.mrf.mxu0
      %v2201 = vadd.f32 %v1962, %v2200
      %2202 = vmatmul.f32.gmra.mxu0 %v647
      %v2203 = vpop.f32.mrf.mxu0
      %v2204 = vadd.f32 %v1965, %v2203
      %2205 = vmatmul.f32.gmra.mxu0 %v653
      %v2206 = vpop.f32.mrf.mxu0
      %v2207 = vadd.f32 %v1968, %v2206
      %2208 = vmatmul.f32.gmra.mxu0 %v659
      %v2209 = vpop.f32.mrf.mxu0
      %v2210 = vadd.f32 %v1971, %v2209
      %2211 = vmatmul.f32.gmra.mxu0 %v665
      %v2212 = vpop.f32.mrf.mxu0
      %v2213 = vadd.f32 %v1974, %v2212
      %2214 = vmatmul.f32.gmra.mxu0 %v671
      %v2215 = vpop.f32.mrf.mxu0
      %v2216 = vadd.f32 %v1977, %v2215
      %2217 = vmatmul.f32.gmra.mxu0 %v677
      %v2218 = vpop.f32.mrf.mxu0
      %v2219 = vadd.f32 %v1980, %v2218
      %2220 = vmatmul.f32.gmra.mxu0 %v683
      %v2221 = vpop.f32.mrf.mxu0
      %v2222 = vadd.f32 %v1983, %v2221
      %2223 = vmatmul.f32.gmra.mxu0 %v689
      %v2224 = vpop.f32.mrf.mxu0
      %v2225 = vadd.f32 %v1986, %v2224
      %2226 = vmatmul.f32.gmra.mxu0 %v695
      %v2227 = vpop.f32.mrf.mxu0
      %v2228 = vadd.f32 %v1989, %v2227
      %2229 = vdwg.mxu0
      %v2230 = vmul.f32 %v2009, -1.702
      %v2231 = vmul.f32 %v2012, -1.702
      %v2232 = vmul.f32 %v2015, -1.702
      %v2233 = vmul.f32 %v2018, -1.702
      %v2234 = vmul.f32 %v2021, -1.702
      %v2235 = vmul.f32 %v2024, -1.702
      %v2236 = vmul.f32 %v2027, -1.702
      %v2237 = vmul.f32 %v2030, -1.702
      %v2238 = vmul.f32 %v2033, -1.702
      %v2239 = vmul.f32 %v2036, -1.702
      %v2240 = vmul.f32 %v2039, -1.702
      %v2241 = vmul.f32 %v2042, -1.702
      %v2242 = vmul.f32 %v2045, -1.702
      %v2243 = vmul.f32 %v2048, -1.702
      %v2244 = vmul.f32 %v2051, -1.702
      %v2245 = vmul.f32 %v2054, -1.702
      %v2246 = vmul.f32 %v2057, -1.702
      %v2247 = vmul.f32 %v2060, -1.702
      %v2248 = vmul.f32 %v2063, -1.702
      %v2249 = vmul.f32 %v2066, -1.702
      %v2250 = vmul.f32 %v2069, -1.702
      %v2251 = vmul.f32 %v2072, -1.702
      %v2252 = vmul.f32 %v2075, -1.702
      %v2253 = vmul.f32 %v2078, -1.702
      %v2254 = vmul.f32 %v2081, -1.702
      %v2255 = vmul.f32 %v2084, -1.702
      %v2256 = vmul.f32 %v2087, -1.702
      %v2257 = vmul.f32 %v2090, -1.702
      %v2258 = vmul.f32 %v2093, -1.702
      %v2259 = vmul.f32 %v2096, -1.702
      %v2260 = vmul.f32 %v2099, -1.702
      %v2261 = vmul.f32 %v2102, -1.702
      %v2262 = vmul.f32 %v2105, -1.702
      %v2263 = vmul.f32 %v2108, -1.702
      %v2264 = vmul.f32 %v2111, -1.702
      %v2265 = vmul.f32 %v2114, -1.702
      %v2266 = vmul.f32 %v2117, -1.702
      %v2267 = vmul.f32 %v2120, -1.702
      %v2268 = vmul.f32 %v2123, -1.702
      %v2269 = vmul.f32 %v2126, -1.702
      %v2270 = vmul.f32 %v2129, -1.702
      %v2271 = vmul.f32 %v2132, -1.702
      %v2272 = vmul.f32 %v2135, -1.702
      %v2273 = vmul.f32 %v2138, -1.702
      %v2274 = vmul.f32 %v2141, -1.702
      %v2275 = vmul.f32 %v2144, -1.702
      %v2276 = vmul.f32 %v2147, -1.702
      %v2277 = vmul.f32 %v2150, -1.702
      %v2278 = vmul.f32 %v2153, -1.702
      %v2279 = vmul.f32 %v2156, -1.702
      %v2280 = vmul.f32 %v2159, -1.702
      %v2281 = vmul.f32 %v2162, -1.702
      %v2282 = vmul.f32 %v2165, -1.702
      %v2283 = vmul.f32 %v2168, -1.702
      %v2284 = vmul.f32 %v2171, -1.702
      %v2285 = vmul.f32 %v2174, -1.702
      %v2286 = vmul.f32 %v2177, -1.702
      %v2287 = vmul.f32 %v2180, -1.702
      %v2288 = vmul.f32 %v2183, -1.702
      %v2289 = vmul.f32 %v2186, -1.702
      %v2290 = vmul.f32 %v2189, -1.702
      %v2291 = vmul.f32 %v2192, -1.702
      %v2292 = vmul.f32 %v2195, -1.702
      %v2293 = vmul.f32 %v2198, -1.702
      %v2294 = vmul.f32 %v2201, -1.702
      %v2295 = vmul.f32 %v2204, -1.702
      %v2296 = vmul.f32 %v2207, -1.702
      %v2297 = vmul.f32 %v2210, -1.702
      %v2298 = vmul.f32 %v2213, -1.702
      %v2299 = vmul.f32 %v2216, -1.702
      %v2300 = vmul.f32 %v2219, -1.702
      %v2301 = vmul.f32 %v2222, -1.702
      %v2302 = vmul.f32 %v2225, -1.702
      %v2303 = vmul.f32 %v2228, -1.702
      %v2304 = vmul.f32 %v2230, 1.442695
      %v2305 = vpow.pop %v2304
      %v2306 = vmul.f32 %v2231, 1.442695
      %v2307 = vpow.pop %v2306
      %v2308 = vmul.f32 %v2232, 1.442695
      %v2309 = vpow.pop %v2308
      %v2310 = vmul.f32 %v2233, 1.442695
      %v2311 = vpow.pop %v2310
      %v2312 = vmul.f32 %v2234, 1.442695
      %v2313 = vpow.pop %v2312
      %v2314 = vmul.f32 %v2235, 1.442695
      %v2315 = vpow.pop %v2314
      %v2316 = vmul.f32 %v2236, 1.442695
      %v2317 = vpow.pop %v2316
      %v2318 = vmul.f32 %v2237, 1.442695
      %v2319 = vpow.pop %v2318
      %v2320 = vmul.f32 %v2238, 1.442695
      %v2321 = vpow.pop %v2320
      %v2322 = vmul.f32 %v2239, 1.442695
      %v2323 = vpow.pop %v2322
      %v2324 = vmul.f32 %v2240, 1.442695
      %v2325 = vpow.pop %v2324
      %v2326 = vmul.f32 %v2241, 1.442695
      %v2327 = vpow.pop %v2326
      %v2328 = vmul.f32 %v2242, 1.442695
      %v2329 = vpow.pop %v2328
      %v2330 = vmul.f32 %v2243, 1.442695
      %v2331 = vpow.pop %v2330
      %v2332 = vmul.f32 %v2244, 1.442695
      %v2333 = vpow.pop %v2332
      %v2334 = vmul.f32 %v2245, 1.442695
      %v2335 = vpow.pop %v2334
      %v2336 = vmul.f32 %v2246, 1.442695
      %v2337 = vpow.pop %v2336
      %v2338 = vmul.f32 %v2247, 1.442695
      %v2339 = vpow.pop %v2338
      %v2340 = vmul.f32 %v2248, 1.442695
      %v2341 = vpow.pop %v2340
      %v2342 = vmul.f32 %v2249, 1.442695
      %v2343 = vpow.pop %v2342
      %v2344 = vmul.f32 %v2250, 1.442695
      %v2345 = vpow.pop %v2344
      %v2346 = vmul.f32 %v2251, 1.442695
      %v2347 = vpow.pop %v2346
      %v2348 = vmul.f32 %v2252, 1.442695
      %v2349 = vpow.pop %v2348
      %v2350 = vmul.f32 %v2253, 1.442695
      %v2351 = vpow.pop %v2350
      %v2352 = vmul.f32 %v2254, 1.442695
      %v2353 = vpow.pop %v2352
      %v2354 = vmul.f32 %v2255, 1.442695
      %v2355 = vpow.pop %v2354
      %v2356 = vmul.f32 %v2256, 1.442695
      %v2357 = vpow.pop %v2356
      %v2358 = vmul.f32 %v2257, 1.442695
      %v2359 = vpow.pop %v2358
      %v2360 = vmul.f32 %v2258, 1.442695
      %v2361 = vpow.pop %v2360
      %v2362 = vmul.f32 %v2259, 1.442695
      %v2363 = vpow.pop %v2362
      %v2364 = vmul.f32 %v2260, 1.442695
      %v2365 = vpow.pop %v2364
      %v2366 = vmul.f32 %v2261, 1.442695
      %v2367 = vpow.pop %v2366
      %v2368 = vmul.f32 %v2262, 1.442695
      %v2369 = vpow.pop %v2368
      %v2370 = vmul.f32 %v2263, 1.442695
      %v2371 = vpow.pop %v2370
      %v2372 = vmul.f32 %v2264, 1.442695
      %v2373 = vpow.pop %v2372
      %v2374 = vmul.f32 %v2265, 1.442695
      %v2375 = vpow.pop %v2374
      %v2376 = vmul.f32 %v2266, 1.442695
      %v2377 = vpow.pop %v2376
      %v2378 = vmul.f32 %v2267, 1.442695
      %v2379 = vpow.pop %v2378
      %v2380 = vmul.f32 %v2268, 1.442695
      %v2381 = vpow.pop %v2380
      %v2382 = vmul.f32 %v2269, 1.442695
      %v2383 = vpow.pop %v2382
      %v2384 = vmul.f32 %v2270, 1.442695
      %v2385 = vpow.pop %v2384
      %v2386 = vmul.f32 %v2271, 1.442695
      %v2387 = vpow.pop %v2386
      %v2388 = vmul.f32 %v2272, 1.442695
      %v2389 = vpow.pop %v2388
      %v2390 = vmul.f32 %v2273, 1.442695
      %v2391 = vpow.pop %v2390
      %v2392 = vmul.f32 %v2274, 1.442695
      %v2393 = vpow.pop %v2392
      %v2394 = vmul.f32 %v2275, 1.442695
      %v2395 = vpow.pop %v2394
      %v2396 = vmul.f32 %v2276, 1.442695
      %v2397 = vpow.pop %v2396
      %v2398 = vmul.f32 %v2277, 1.442695
      %v2399 = vpow.pop %v2398
      %v2400 = vmul.f32 %v2278, 1.442695
      %v2401 = vpow.pop %v2400
      %v2402 = vmul.f32 %v2279, 1.442695
      %v2403 = vpow.pop %v2402
      %v2404 = vmul.f32 %v2280, 1.442695
      %v2405 = vpow.pop %v2404
      %v2406 = vmul.f32 %v2281, 1.442695
      %v2407 = vpow.pop %v2406
      %v2408 = vmul.f32 %v2282, 1.442695
      %v2409 = vpow.pop %v2408
      %v2410 = vmul.f32 %v2283, 1.442695
      %v2411 = vpow.pop %v2410
      %v2412 = vmul.f32 %v2284, 1.442695
      %v2413 = vpow.pop %v2412
      %v2414 = vmul.f32 %v2285, 1.442695
      %v2415 = vpow.pop %v2414
      %v2416 = vmul.f32 %v2286, 1.442695
      %v2417 = vpow.pop %v2416
      %v2418 = vmul.f32 %v2287, 1.442695
      %v2419 = vpow.pop %v2418
      %v2420 = vmul.f32 %v2288, 1.442695
      %v2421 = vpow.pop %v2420
      %v2422 = vmul.f32 %v2289, 1.442695
      %v2423 = vpow.pop %v2422
      %v2424 = vmul.f32 %v2290, 1.442695
      %v2425 = vpow.pop %v2424
      %v2426 = vmul.f32 %v2291, 1.442695
      %v2427 = vpow.pop %v2426
      %v2428 = vmul.f32 %v2292, 1.442695
      %v2429 = vpow.pop %v2428
      %v2430 = vmul.f32 %v2293, 1.442695
      %v2431 = vpow.pop %v2430
      %v2432 = vmul.f32 %v2294, 1.442695
      %v2433 = vpow.pop %v2432
      %v2434 = vmul.f32 %v2295, 1.442695
      %v2435 = vpow.pop %v2434
      %v2436 = vmul.f32 %v2296, 1.442695
      %v2437 = vpow.pop %v2436
      %v2438 = vmul.f32 %v2297, 1.442695
      %v2439 = vpow.pop %v2438
      %v2440 = vmul.f32 %v2298, 1.442695
      %v2441 = vpow.pop %v2440
      %v2442 = vmul.f32 %v2299, 1.442695
      %v2443 = vpow.pop %v2442
      %v2444 = vmul.f32 %v2300, 1.442695
      %v2445 = vpow.pop %v2444
      %v2446 = vmul.f32 %v2301, 1.442695
      %v2447 = vpow.pop %v2446
      %v2448 = vmul.f32 %v2302, 1.442695
      %v2449 = vpow.pop %v2448
      %v2450 = vmul.f32 %v2303, 1.442695
      %v2451 = vpow.pop %v2450
      %v2452 = vadd.f32 %v2305, 1.0
      %v2453 = vadd.f32 %v2307, 1.0
      %v2454 = vadd.f32 %v2309, 1.0
      %v2455 = vadd.f32 %v2311, 1.0
      %v2456 = vadd.f32 %v2313, 1.0
      %v2457 = vadd.f32 %v2315, 1.0
      %v2458 = vadd.f32 %v2317, 1.0
      %v2459 = vadd.f32 %v2319, 1.0
      %v2460 = vadd.f32 %v2321, 1.0
      %v2461 = vadd.f32 %v2323, 1.0
      %v2462 = vadd.f32 %v2325, 1.0
      %v2463 = vadd.f32 %v2327, 1.0
      %v2464 = vadd.f32 %v2329, 1.0
      %v2465 = vadd.f32 %v2331, 1.0
      %v2466 = vadd.f32 %v2333, 1.0
      %v2467 = vadd.f32 %v2335, 1.0
      %v2468 = vadd.f32 %v2337, 1.0
      %v2469 = vadd.f32 %v2339, 1.0
      %v2470 = vadd.f32 %v2341, 1.0
      %v2471 = vadd.f32 %v2343, 1.0
      %v2472 = vadd.f32 %v2345, 1.0
      %v2473 = vadd.f32 %v2347, 1.0
      %v2474 = vadd.f32 %v2349, 1.0
      %v2475 = vadd.f32 %v2351, 1.0
      %v2476 = vadd.f32 %v2353, 1.0
      %v2477 = vadd.f32 %v2355, 1.0
      %v2478 = vadd.f32 %v2357, 1.0
      %v2479 = vadd.f32 %v2359, 1.0
      %v2480 = vadd.f32 %v2361, 1.0
      %v2481 = vadd.f32 %v2363, 1.0
      %v2482 = vadd.f32 %v2365, 1.0
      %v2483 = vadd.f32 %v2367, 1.0
      %v2484 = vadd.f32 %v2369, 1.0
      %v2485 = vadd.f32 %v2371, 1.0
      %v2486 = vadd.f32 %v2373, 1.0
      %v2487 = vadd.f32 %v2375, 1.0
      %v2488 = vadd.f32 %v2377, 1.0
      %v2489 = vadd.f32 %v2379, 1.0
      %v2490 = vadd.f32 %v2381, 1.0
      %v2491 = vadd.f32 %v2383, 1.0
      %v2492 = vadd.f32 %v2385, 1.0
      %v2493 = vadd.f32 %v2387, 1.0
      %v2494 = vadd.f32 %v2389, 1.0
      %v2495 = vadd.f32 %v2391, 1.0
      %v2496 = vadd.f32 %v2393, 1.0
      %v2497 = vadd.f32 %v2395, 1.0
      %v2498 = vadd.f32 %v2397, 1.0
      %v2499 = vadd.f32 %v2399, 1.0
      %v2500 = vadd.f32 %v2401, 1.0
      %v2501 = vadd.f32 %v2403, 1.0
      %v2502 = vadd.f32 %v2405, 1.0
      %v2503 = vadd.f32 %v2407, 1.0
      %v2504 = vadd.f32 %v2409, 1.0
      %v2505 = vadd.f32 %v2411, 1.0
      %v2506 = vadd.f32 %v2413, 1.0
      %v2507 = vadd.f32 %v2415, 1.0
      %v2508 = vadd.f32 %v2417, 1.0
      %v2509 = vadd.f32 %v2419, 1.0
      %v2510 = vadd.f32 %v2421, 1.0
      %v2511 = vadd.f32 %v2423, 1.0
      %v2512 = vadd.f32 %v2425, 1.0
      %v2513 = vadd.f32 %v2427, 1.0
      %v2514 = vadd.f32 %v2429, 1.0
      %v2515 = vadd.f32 %v2431, 1.0
      %v2516 = vadd.f32 %v2433, 1.0
      %v2517 = vadd.f32 %v2435, 1.0
      %v2518 = vadd.f32 %v2437, 1.0
      %v2519 = vadd.f32 %v2439, 1.0
      %v2520 = vadd.f32 %v2441, 1.0
      %v2521 = vadd.f32 %v2443, 1.0
      %v2522 = vadd.f32 %v2445, 1.0
      %v2523 = vadd.f32 %v2447, 1.0
      %v2524 = vadd.f32 %v2449, 1.0
      %v2525 = vadd.f32 %v2451, 1.0
      %v2526 = vrcp.pop %v2452
      %v2527 = vmul.f32 %v2452, %v2526
      %v2528 = vsub.f32 1.0, %v2527
      %v2529 = vmul.f32 %v2526, %v2528
      %v2530 = vadd.f32 %v2526, %v2529
      %vm2531 = vweird.f32 %v2452
      %vm2532 = vweird.f32 %v2526
      %vm2533 = vmor %vm2531, %vm2532
      %v2534 = vsel %vm2533, %v2526, %v2530
      %v2535 = vand.u32 2147483647, %v2452
      %vm2536 = vcmp.eq.f32.partialorder %v2535, 8.507059e+37
      %v2537 = vand.u32 %v2452, 2147483648
      %v2538 = vor.u32 1.1754944e-38, %v2537
      %v2539 = vsel %vm2536, %v2538, %v2534
      %v2540 = vmul.f32 1.0, %v2539
      %v2541 = vrcp.pop %v2453
      %v2542 = vmul.f32 %v2453, %v2541
      %v2543 = vsub.f32 1.0, %v2542
      %v2544 = vmul.f32 %v2541, %v2543
      %v2545 = vadd.f32 %v2541, %v2544
      %vm2546 = vweird.f32 %v2453
      %vm2547 = vweird.f32 %v2541
      %vm2548 = vmor %vm2546, %vm2547
      %v2549 = vsel %vm2548, %v2541, %v2545
      %v2550 = vand.u32 2147483647, %v2453
      %vm2551 = vcmp.eq.f32.partialorder %v2550, 8.507059e+37
      %v2552 = vand.u32 %v2453, 2147483648
      %v2553 = vor.u32 1.1754944e-38, %v2552
      %v2554 = vsel %vm2551, %v2553, %v2549
      %v2555 = vmul.f32 1.0, %v2554
      %v2556 = vrcp.pop %v2454
      %v2557 = vmul.f32 %v2454, %v2556
      %v2558 = vsub.f32 1.0, %v2557
      %v2559 = vmul.f32 %v2556, %v2558
      %v2560 = vadd.f32 %v2556, %v2559
      %vm2561 = vweird.f32 %v2454
      %vm2562 = vweird.f32 %v2556
      %vm2563 = vmor %vm2561, %vm2562
      %v2564 = vsel %vm2563, %v2556, %v2560
      %v2565 = vand.u32 2147483647, %v2454
      %vm2566 = vcmp.eq.f32.partialorder %v2565, 8.507059e+37
      %v2567 = vand.u32 %v2454, 2147483648
      %v2568 = vor.u32 1.1754944e-38, %v2567
      %v2569 = vsel %vm2566, %v2568, %v2564
      %v2570 = vmul.f32 1.0, %v2569
      %v2571 = vrcp.pop %v2455
      %v2572 = vmul.f32 %v2455, %v2571
      %v2573 = vsub.f32 1.0, %v2572
      %v2574 = vmul.f32 %v2571, %v2573
      %v2575 = vadd.f32 %v2571, %v2574
      %vm2576 = vweird.f32 %v2455
      %vm2577 = vweird.f32 %v2571
      %vm2578 = vmor %vm2576, %vm2577
      %v2579 = vsel %vm2578, %v2571, %v2575
      %v2580 = vand.u32 2147483647, %v2455
      %vm2581 = vcmp.eq.f32.partialorder %v2580, 8.507059e+37
      %v2582 = vand.u32 %v2455, 2147483648
      %v2583 = vor.u32 1.1754944e-38, %v2582
      %v2584 = vsel %vm2581, %v2583, %v2579
      %v2585 = vmul.f32 1.0, %v2584
      %v2586 = vrcp.pop %v2456
      %v2587 = vmul.f32 %v2456, %v2586
      %v2588 = vsub.f32 1.0, %v2587
      %v2589 = vmul.f32 %v2586, %v2588
      %v2590 = vadd.f32 %v2586, %v2589
      %vm2591 = vweird.f32 %v2456
      %vm2592 = vweird.f32 %v2586
      %vm2593 = vmor %vm2591, %vm2592
      %v2594 = vsel %vm2593, %v2586, %v2590
      %v2595 = vand.u32 2147483647, %v2456
      %vm2596 = vcmp.eq.f32.partialorder %v2595, 8.507059e+37
      %v2597 = vand.u32 %v2456, 2147483648
      %v2598 = vor.u32 1.1754944e-38, %v2597
      %v2599 = vsel %vm2596, %v2598, %v2594
      %v2600 = vmul.f32 1.0, %v2599
      %v2601 = vrcp.pop %v2457
      %v2602 = vmul.f32 %v2457, %v2601
      %v2603 = vsub.f32 1.0, %v2602
      %v2604 = vmul.f32 %v2601, %v2603
      %v2605 = vadd.f32 %v2601, %v2604
      %vm2606 = vweird.f32 %v2457
      %vm2607 = vweird.f32 %v2601
      %vm2608 = vmor %vm2606, %vm2607
      %v2609 = vsel %vm2608, %v2601, %v2605
      %v2610 = vand.u32 2147483647, %v2457
      %vm2611 = vcmp.eq.f32.partialorder %v2610, 8.507059e+37
      %v2612 = vand.u32 %v2457, 2147483648
      %v2613 = vor.u32 1.1754944e-38, %v2612
      %v2614 = vsel %vm2611, %v2613, %v2609
      %v2615 = vmul.f32 1.0, %v2614
      %v2616 = vrcp.pop %v2458
      %v2617 = vmul.f32 %v2458, %v2616
      %v2618 = vsub.f32 1.0, %v2617
      %v2619 = vmul.f32 %v2616, %v2618
      %v2620 = vadd.f32 %v2616, %v2619
      %vm2621 = vweird.f32 %v2458
      %vm2622 = vweird.f32 %v2616
      %vm2623 = vmor %vm2621, %vm2622
      %v2624 = vsel %vm2623, %v2616, %v2620
      %v2625 = vand.u32 2147483647, %v2458
      %vm2626 = vcmp.eq.f32.partialorder %v2625, 8.507059e+37
      %v2627 = vand.u32 %v2458, 2147483648
      %v2628 = vor.u32 1.1754944e-38, %v2627
      %v2629 = vsel %vm2626, %v2628, %v2624
      %v2630 = vmul.f32 1.0, %v2629
      %v2631 = vrcp.pop %v2459
      %v2632 = vmul.f32 %v2459, %v2631
      %v2633 = vsub.f32 1.0, %v2632
      %v2634 = vmul.f32 %v2631, %v2633
      %v2635 = vadd.f32 %v2631, %v2634
      %vm2636 = vweird.f32 %v2459
      %vm2637 = vweird.f32 %v2631
      %vm2638 = vmor %vm2636, %vm2637
      %v2639 = vsel %vm2638, %v2631, %v2635
      %v2640 = vand.u32 2147483647, %v2459
      %vm2641 = vcmp.eq.f32.partialorder %v2640, 8.507059e+37
      %v2642 = vand.u32 %v2459, 2147483648
      %v2643 = vor.u32 1.1754944e-38, %v2642
      %v2644 = vsel %vm2641, %v2643, %v2639
      %v2645 = vmul.f32 1.0, %v2644
      %v2646 = vrcp.pop %v2460
      %v2647 = vmul.f32 %v2460, %v2646
      %v2648 = vsub.f32 1.0, %v2647
      %v2649 = vmul.f32 %v2646, %v2648
      %v2650 = vadd.f32 %v2646, %v2649
      %vm2651 = vweird.f32 %v2460
      %vm2652 = vweird.f32 %v2646
      %vm2653 = vmor %vm2651, %vm2652
      %v2654 = vsel %vm2653, %v2646, %v2650
      %v2655 = vand.u32 2147483647, %v2460
      %vm2656 = vcmp.eq.f32.partialorder %v2655, 8.507059e+37
      %v2657 = vand.u32 %v2460, 2147483648
      %v2658 = vor.u32 1.1754944e-38, %v2657
      %v2659 = vsel %vm2656, %v2658, %v2654
      %v2660 = vmul.f32 1.0, %v2659
      %v2661 = vrcp.pop %v2461
      %v2662 = vmul.f32 %v2461, %v2661
      %v2663 = vsub.f32 1.0, %v2662
      %v2664 = vmul.f32 %v2661, %v2663
      %v2665 = vadd.f32 %v2661, %v2664
      %vm2666 = vweird.f32 %v2461
      %vm2667 = vweird.f32 %v2661
      %vm2668 = vmor %vm2666, %vm2667
      %v2669 = vsel %vm2668, %v2661, %v2665
      %v2670 = vand.u32 2147483647, %v2461
      %vm2671 = vcmp.eq.f32.partialorder %v2670, 8.507059e+37
      %v2672 = vand.u32 %v2461, 2147483648
      %v2673 = vor.u32 1.1754944e-38, %v2672
      %v2674 = vsel %vm2671, %v2673, %v2669
      %v2675 = vmul.f32 1.0, %v2674
      %v2676 = vrcp.pop %v2462
      %v2677 = vmul.f32 %v2462, %v2676
      %v2678 = vsub.f32 1.0, %v2677
      %v2679 = vmul.f32 %v2676, %v2678
      %v2680 = vadd.f32 %v2676, %v2679
      %vm2681 = vweird.f32 %v2462
      %vm2682 = vweird.f32 %v2676
      %vm2683 = vmor %vm2681, %vm2682
      %v2684 = vsel %vm2683, %v2676, %v2680
      %v2685 = vand.u32 2147483647, %v2462
      %vm2686 = vcmp.eq.f32.partialorder %v2685, 8.507059e+37
      %v2687 = vand.u32 %v2462, 2147483648
      %v2688 = vor.u32 1.1754944e-38, %v2687
      %v2689 = vsel %vm2686, %v2688, %v2684
      %v2690 = vmul.f32 1.0, %v2689
      %v2691 = vrcp.pop %v2463
      %v2692 = vmul.f32 %v2463, %v2691
      %v2693 = vsub.f32 1.0, %v2692
      %v2694 = vmul.f32 %v2691, %v2693
      %v2695 = vadd.f32 %v2691, %v2694
      %vm2696 = vweird.f32 %v2463
      %vm2697 = vweird.f32 %v2691
      %vm2698 = vmor %vm2696, %vm2697
      %v2699 = vsel %vm2698, %v2691, %v2695
      %v2700 = vand.u32 2147483647, %v2463
      %vm2701 = vcmp.eq.f32.partialorder %v2700, 8.507059e+37
      %v2702 = vand.u32 %v2463, 2147483648
      %v2703 = vor.u32 1.1754944e-38, %v2702
      %v2704 = vsel %vm2701, %v2703, %v2699
      %v2705 = vmul.f32 1.0, %v2704
      %v2706 = vrcp.pop %v2464
      %v2707 = vmul.f32 %v2464, %v2706
      %v2708 = vsub.f32 1.0, %v2707
      %v2709 = vmul.f32 %v2706, %v2708
      %v2710 = vadd.f32 %v2706, %v2709
      %vm2711 = vweird.f32 %v2464
      %vm2712 = vweird.f32 %v2706
      %vm2713 = vmor %vm2711, %vm2712
      %v2714 = vsel %vm2713, %v2706, %v2710
      %v2715 = vand.u32 2147483647, %v2464
      %vm2716 = vcmp.eq.f32.partialorder %v2715, 8.507059e+37
      %v2717 = vand.u32 %v2464, 2147483648
      %v2718 = vor.u32 1.1754944e-38, %v2717
      %v2719 = vsel %vm2716, %v2718, %v2714
      %v2720 = vmul.f32 1.0, %v2719
      %v2721 = vrcp.pop %v2465
      %v2722 = vmul.f32 %v2465, %v2721
      %v2723 = vsub.f32 1.0, %v2722
      %v2724 = vmul.f32 %v2721, %v2723
      %v2725 = vadd.f32 %v2721, %v2724
      %vm2726 = vweird.f32 %v2465
      %vm2727 = vweird.f32 %v2721
      %vm2728 = vmor %vm2726, %vm2727
      %v2729 = vsel %vm2728, %v2721, %v2725
      %v2730 = vand.u32 2147483647, %v2465
      %vm2731 = vcmp.eq.f32.partialorder %v2730, 8.507059e+37
      %v2732 = vand.u32 %v2465, 2147483648
      %v2733 = vor.u32 1.1754944e-38, %v2732
      %v2734 = vsel %vm2731, %v2733, %v2729
      %v2735 = vmul.f32 1.0, %v2734
      %v2736 = vrcp.pop %v2466
      %v2737 = vmul.f32 %v2466, %v2736
      %v2738 = vsub.f32 1.0, %v2737
      %v2739 = vmul.f32 %v2736, %v2738
      %v2740 = vadd.f32 %v2736, %v2739
      %vm2741 = vweird.f32 %v2466
      %vm2742 = vweird.f32 %v2736
      %vm2743 = vmor %vm2741, %vm2742
      %v2744 = vsel %vm2743, %v2736, %v2740
      %v2745 = vand.u32 2147483647, %v2466
      %vm2746 = vcmp.eq.f32.partialorder %v2745, 8.507059e+37
      %v2747 = vand.u32 %v2466, 2147483648
      %v2748 = vor.u32 1.1754944e-38, %v2747
      %v2749 = vsel %vm2746, %v2748, %v2744
      %v2750 = vmul.f32 1.0, %v2749
      %v2751 = vrcp.pop %v2467
      %v2752 = vmul.f32 %v2467, %v2751
      %v2753 = vsub.f32 1.0, %v2752
      %v2754 = vmul.f32 %v2751, %v2753
      %v2755 = vadd.f32 %v2751, %v2754
      %vm2756 = vweird.f32 %v2467
      %vm2757 = vweird.f32 %v2751
      %vm2758 = vmor %vm2756, %vm2757
      %v2759 = vsel %vm2758, %v2751, %v2755
      %v2760 = vand.u32 2147483647, %v2467
      %vm2761 = vcmp.eq.f32.partialorder %v2760, 8.507059e+37
      %v2762 = vand.u32 %v2467, 2147483648
      %v2763 = vor.u32 1.1754944e-38, %v2762
      %v2764 = vsel %vm2761, %v2763, %v2759
      %v2765 = vmul.f32 1.0, %v2764
      %v2766 = vrcp.pop %v2468
      %v2767 = vmul.f32 %v2468, %v2766
      %v2768 = vsub.f32 1.0, %v2767
      %v2769 = vmul.f32 %v2766, %v2768
      %v2770 = vadd.f32 %v2766, %v2769
      %vm2771 = vweird.f32 %v2468
      %vm2772 = vweird.f32 %v2766
      %vm2773 = vmor %vm2771, %vm2772
      %v2774 = vsel %vm2773, %v2766, %v2770
      %v2775 = vand.u32 2147483647, %v2468
      %vm2776 = vcmp.eq.f32.partialorder %v2775, 8.507059e+37
      %v2777 = vand.u32 %v2468, 2147483648
      %v2778 = vor.u32 1.1754944e-38, %v2777
      %v2779 = vsel %vm2776, %v2778, %v2774
      %v2780 = vmul.f32 1.0, %v2779
      %v2781 = vrcp.pop %v2469
      %v2782 = vmul.f32 %v2469, %v2781
      %v2783 = vsub.f32 1.0, %v2782
      %v2784 = vmul.f32 %v2781, %v2783
      %v2785 = vadd.f32 %v2781, %v2784
      %vm2786 = vweird.f32 %v2469
      %vm2787 = vweird.f32 %v2781
      %vm2788 = vmor %vm2786, %vm2787
      %v2789 = vsel %vm2788, %v2781, %v2785
      %v2790 = vand.u32 2147483647, %v2469
      %vm2791 = vcmp.eq.f32.partialorder %v2790, 8.507059e+37
      %v2792 = vand.u32 %v2469, 2147483648
      %v2793 = vor.u32 1.1754944e-38, %v2792
      %v2794 = vsel %vm2791, %v2793, %v2789
      %v2795 = vmul.f32 1.0, %v2794
      %v2796 = vrcp.pop %v2470
      %v2797 = vmul.f32 %v2470, %v2796
      %v2798 = vsub.f32 1.0, %v2797
      %v2799 = vmul.f32 %v2796, %v2798
      %v2800 = vadd.f32 %v2796, %v2799
      %vm2801 = vweird.f32 %v2470
      %vm2802 = vweird.f32 %v2796
      %vm2803 = vmor %vm2801, %vm2802
      %v2804 = vsel %vm2803, %v2796, %v2800
      %v2805 = vand.u32 2147483647, %v2470
      %vm2806 = vcmp.eq.f32.partialorder %v2805, 8.507059e+37
      %v2807 = vand.u32 %v2470, 2147483648
      %v2808 = vor.u32 1.1754944e-38, %v2807
      %v2809 = vsel %vm2806, %v2808, %v2804
      %v2810 = vmul.f32 1.0, %v2809
      %v2811 = vrcp.pop %v2471
      %v2812 = vmul.f32 %v2471, %v2811
      %v2813 = vsub.f32 1.0, %v2812
      %v2814 = vmul.f32 %v2811, %v2813
      %v2815 = vadd.f32 %v2811, %v2814
      %vm2816 = vweird.f32 %v2471
      %vm2817 = vweird.f32 %v2811
      %vm2818 = vmor %vm2816, %vm2817
      %v2819 = vsel %vm2818, %v2811, %v2815
      %v2820 = vand.u32 2147483647, %v2471
      %vm2821 = vcmp.eq.f32.partialorder %v2820, 8.507059e+37
      %v2822 = vand.u32 %v2471, 2147483648
      %v2823 = vor.u32 1.1754944e-38, %v2822
      %v2824 = vsel %vm2821, %v2823, %v2819
      %v2825 = vmul.f32 1.0, %v2824
      %v2826 = vrcp.pop %v2472
      %v2827 = vmul.f32 %v2472, %v2826
      %v2828 = vsub.f32 1.0, %v2827
      %v2829 = vmul.f32 %v2826, %v2828
      %v2830 = vadd.f32 %v2826, %v2829
      %vm2831 = vweird.f32 %v2472
      %vm2832 = vweird.f32 %v2826
      %vm2833 = vmor %vm2831, %vm2832
      %v2834 = vsel %vm2833, %v2826, %v2830
      %v2835 = vand.u32 2147483647, %v2472
      %vm2836 = vcmp.eq.f32.partialorder %v2835, 8.507059e+37
      %v2837 = vand.u32 %v2472, 2147483648
      %v2838 = vor.u32 1.1754944e-38, %v2837
      %v2839 = vsel %vm2836, %v2838, %v2834
      %v2840 = vmul.f32 1.0, %v2839
      %v2841 = vrcp.pop %v2473
      %v2842 = vmul.f32 %v2473, %v2841
      %v2843 = vsub.f32 1.0, %v2842
      %v2844 = vmul.f32 %v2841, %v2843
      %v2845 = vadd.f32 %v2841, %v2844
      %vm2846 = vweird.f32 %v2473
      %vm2847 = vweird.f32 %v2841
      %vm2848 = vmor %vm2846, %vm2847
      %v2849 = vsel %vm2848, %v2841, %v2845
      %v2850 = vand.u32 2147483647, %v2473
      %vm2851 = vcmp.eq.f32.partialorder %v2850, 8.507059e+37
      %v2852 = vand.u32 %v2473, 2147483648
      %v2853 = vor.u32 1.1754944e-38, %v2852
      %v2854 = vsel %vm2851, %v2853, %v2849
      %v2855 = vmul.f32 1.0, %v2854
      %v2856 = vrcp.pop %v2474
      %v2857 = vmul.f32 %v2474, %v2856
      %v2858 = vsub.f32 1.0, %v2857
      %v2859 = vmul.f32 %v2856, %v2858
      %v2860 = vadd.f32 %v2856, %v2859
      %vm2861 = vweird.f32 %v2474
      %vm2862 = vweird.f32 %v2856
      %vm2863 = vmor %vm2861, %vm2862
      %v2864 = vsel %vm2863, %v2856, %v2860
      %v2865 = vand.u32 2147483647, %v2474
      %vm2866 = vcmp.eq.f32.partialorder %v2865, 8.507059e+37
      %v2867 = vand.u32 %v2474, 2147483648
      %v2868 = vor.u32 1.1754944e-38, %v2867
      %v2869 = vsel %vm2866, %v2868, %v2864
      %v2870 = vmul.f32 1.0, %v2869
      %v2871 = vrcp.pop %v2475
      %v2872 = vmul.f32 %v2475, %v2871
      %v2873 = vsub.f32 1.0, %v2872
      %v2874 = vmul.f32 %v2871, %v2873
      %v2875 = vadd.f32 %v2871, %v2874
      %vm2876 = vweird.f32 %v2475
      %vm2877 = vweird.f32 %v2871
      %vm2878 = vmor %vm2876, %vm2877
      %v2879 = vsel %vm2878, %v2871, %v2875
      %v2880 = vand.u32 2147483647, %v2475
      %vm2881 = vcmp.eq.f32.partialorder %v2880, 8.507059e+37
      %v2882 = vand.u32 %v2475, 2147483648
      %v2883 = vor.u32 1.1754944e-38, %v2882
      %v2884 = vsel %vm2881, %v2883, %v2879
      %v2885 = vmul.f32 1.0, %v2884
      %v2886 = vrcp.pop %v2476
      %v2887 = vmul.f32 %v2476, %v2886
      %v2888 = vsub.f32 1.0, %v2887
      %v2889 = vmul.f32 %v2886, %v2888
      %v2890 = vadd.f32 %v2886, %v2889
      %vm2891 = vweird.f32 %v2476
      %vm2892 = vweird.f32 %v2886
      %vm2893 = vmor %vm2891, %vm2892
      %v2894 = vsel %vm2893, %v2886, %v2890
      %v2895 = vand.u32 2147483647, %v2476
      %vm2896 = vcmp.eq.f32.partialorder %v2895, 8.507059e+37
      %v2897 = vand.u32 %v2476, 2147483648
      %v2898 = vor.u32 1.1754944e-38, %v2897
      %v2899 = vsel %vm2896, %v2898, %v2894
      %v2900 = vmul.f32 1.0, %v2899
      %v2901 = vrcp.pop %v2477
      %v2902 = vmul.f32 %v2477, %v2901
      %v2903 = vsub.f32 1.0, %v2902
      %v2904 = vmul.f32 %v2901, %v2903
      %v2905 = vadd.f32 %v2901, %v2904
      %vm2906 = vweird.f32 %v2477
      %vm2907 = vweird.f32 %v2901
      %vm2908 = vmor %vm2906, %vm2907
      %v2909 = vsel %vm2908, %v2901, %v2905
      %v2910 = vand.u32 2147483647, %v2477
      %vm2911 = vcmp.eq.f32.partialorder %v2910, 8.507059e+37
      %v2912 = vand.u32 %v2477, 2147483648
      %v2913 = vor.u32 1.1754944e-38, %v2912
      %v2914 = vsel %vm2911, %v2913, %v2909
      %v2915 = vmul.f32 1.0, %v2914
      %v2916 = vrcp.pop %v2478
      %v2917 = vmul.f32 %v2478, %v2916
      %v2918 = vsub.f32 1.0, %v2917
      %v2919 = vmul.f32 %v2916, %v2918
      %v2920 = vadd.f32 %v2916, %v2919
      %vm2921 = vweird.f32 %v2478
      %vm2922 = vweird.f32 %v2916
      %vm2923 = vmor %vm2921, %vm2922
      %v2924 = vsel %vm2923, %v2916, %v2920
      %v2925 = vand.u32 2147483647, %v2478
      %vm2926 = vcmp.eq.f32.partialorder %v2925, 8.507059e+37
      %v2927 = vand.u32 %v2478, 2147483648
      %v2928 = vor.u32 1.1754944e-38, %v2927
      %v2929 = vsel %vm2926, %v2928, %v2924
      %v2930 = vmul.f32 1.0, %v2929
      %v2931 = vrcp.pop %v2479
      %v2932 = vmul.f32 %v2479, %v2931
      %v2933 = vsub.f32 1.0, %v2932
      %v2934 = vmul.f32 %v2931, %v2933
      %v2935 = vadd.f32 %v2931, %v2934
      %vm2936 = vweird.f32 %v2479
      %vm2937 = vweird.f32 %v2931
      %vm2938 = vmor %vm2936, %vm2937
      %v2939 = vsel %vm2938, %v2931, %v2935
      %v2940 = vand.u32 2147483647, %v2479
      %vm2941 = vcmp.eq.f32.partialorder %v2940, 8.507059e+37
      %v2942 = vand.u32 %v2479, 2147483648
      %v2943 = vor.u32 1.1754944e-38, %v2942
      %v2944 = vsel %vm2941, %v2943, %v2939
      %v2945 = vmul.f32 1.0, %v2944
      %v2946 = vrcp.pop %v2480
      %v2947 = vmul.f32 %v2480, %v2946
      %v2948 = vsub.f32 1.0, %v2947
      %v2949 = vmul.f32 %v2946, %v2948
      %v2950 = vadd.f32 %v2946, %v2949
      %vm2951 = vweird.f32 %v2480
      %vm2952 = vweird.f32 %v2946
      %vm2953 = vmor %vm2951, %vm2952
      %v2954 = vsel %vm2953, %v2946, %v2950
      %v2955 = vand.u32 2147483647, %v2480
      %vm2956 = vcmp.eq.f32.partialorder %v2955, 8.507059e+37
      %v2957 = vand.u32 %v2480, 2147483648
      %v2958 = vor.u32 1.1754944e-38, %v2957
      %v2959 = vsel %vm2956, %v2958, %v2954
      %v2960 = vmul.f32 1.0, %v2959
      %v2961 = vrcp.pop %v2481
      %v2962 = vmul.f32 %v2481, %v2961
      %v2963 = vsub.f32 1.0, %v2962
      %v2964 = vmul.f32 %v2961, %v2963
      %v2965 = vadd.f32 %v2961, %v2964
      %vm2966 = vweird.f32 %v2481
      %vm2967 = vweird.f32 %v2961
      %vm2968 = vmor %vm2966, %vm2967
      %v2969 = vsel %vm2968, %v2961, %v2965
      %v2970 = vand.u32 2147483647, %v2481
      %vm2971 = vcmp.eq.f32.partialorder %v2970, 8.507059e+37
      %v2972 = vand.u32 %v2481, 2147483648
      %v2973 = vor.u32 1.1754944e-38, %v2972
      %v2974 = vsel %vm2971, %v2973, %v2969
      %v2975 = vmul.f32 1.0, %v2974
      %v2976 = vrcp.pop %v2482
      %v2977 = vmul.f32 %v2482, %v2976
      %v2978 = vsub.f32 1.0, %v2977
      %v2979 = vmul.f32 %v2976, %v2978
      %v2980 = vadd.f32 %v2976, %v2979
      %vm2981 = vweird.f32 %v2482
      %vm2982 = vweird.f32 %v2976
      %vm2983 = vmor %vm2981, %vm2982
      %v2984 = vsel %vm2983, %v2976, %v2980
      %v2985 = vand.u32 2147483647, %v2482
      %vm2986 = vcmp.eq.f32.partialorder %v2985, 8.507059e+37
      %v2987 = vand.u32 %v2482, 2147483648
      %v2988 = vor.u32 1.1754944e-38, %v2987
      %v2989 = vsel %vm2986, %v2988, %v2984
      %v2990 = vmul.f32 1.0, %v2989
      %v2991 = vrcp.pop %v2483
      %v2992 = vmul.f32 %v2483, %v2991
      %v2993 = vsub.f32 1.0, %v2992
      %v2994 = vmul.f32 %v2991, %v2993
      %v2995 = vadd.f32 %v2991, %v2994
      %vm2996 = vweird.f32 %v2483
      %vm2997 = vweird.f32 %v2991
      %vm2998 = vmor %vm2996, %vm2997
      %v2999 = vsel %vm2998, %v2991, %v2995
      %v3000 = vand.u32 2147483647, %v2483
      %vm3001 = vcmp.eq.f32.partialorder %v3000, 8.507059e+37
      %v3002 = vand.u32 %v2483, 2147483648
      %v3003 = vor.u32 1.1754944e-38, %v3002
      %v3004 = vsel %vm3001, %v3003, %v2999
      %v3005 = vmul.f32 1.0, %v3004
      %v3006 = vrcp.pop %v2484
      %v3007 = vmul.f32 %v2484, %v3006
      %v3008 = vsub.f32 1.0, %v3007
      %v3009 = vmul.f32 %v3006, %v3008
      %v3010 = vadd.f32 %v3006, %v3009
      %vm3011 = vweird.f32 %v2484
      %vm3012 = vweird.f32 %v3006
      %vm3013 = vmor %vm3011, %vm3012
      %v3014 = vsel %vm3013, %v3006, %v3010
      %v3015 = vand.u32 2147483647, %v2484
      %vm3016 = vcmp.eq.f32.partialorder %v3015, 8.507059e+37
      %v3017 = vand.u32 %v2484, 2147483648
      %v3018 = vor.u32 1.1754944e-38, %v3017
      %v3019 = vsel %vm3016, %v3018, %v3014
      %v3020 = vmul.f32 1.0, %v3019
      %v3021 = vrcp.pop %v2485
      %v3022 = vmul.f32 %v2485, %v3021
      %v3023 = vsub.f32 1.0, %v3022
      %v3024 = vmul.f32 %v3021, %v3023
      %v3025 = vadd.f32 %v3021, %v3024
      %vm3026 = vweird.f32 %v2485
      %vm3027 = vweird.f32 %v3021
      %vm3028 = vmor %vm3026, %vm3027
      %v3029 = vsel %vm3028, %v3021, %v3025
      %v3030 = vand.u32 2147483647, %v2485
      %vm3031 = vcmp.eq.f32.partialorder %v3030, 8.507059e+37
      %v3032 = vand.u32 %v2485, 2147483648
      %v3033 = vor.u32 1.1754944e-38, %v3032
      %v3034 = vsel %vm3031, %v3033, %v3029
      %v3035 = vmul.f32 1.0, %v3034
      %v3036 = vrcp.pop %v2486
      %v3037 = vmul.f32 %v2486, %v3036
      %v3038 = vsub.f32 1.0, %v3037
      %v3039 = vmul.f32 %v3036, %v3038
      %v3040 = vadd.f32 %v3036, %v3039
      %vm3041 = vweird.f32 %v2486
      %vm3042 = vweird.f32 %v3036
      %vm3043 = vmor %vm3041, %vm3042
      %v3044 = vsel %vm3043, %v3036, %v3040
      %v3045 = vand.u32 2147483647, %v2486
      %vm3046 = vcmp.eq.f32.partialorder %v3045, 8.507059e+37
      %v3047 = vand.u32 %v2486, 2147483648
      %v3048 = vor.u32 1.1754944e-38, %v3047
      %v3049 = vsel %vm3046, %v3048, %v3044
      %v3050 = vmul.f32 1.0, %v3049
      %v3051 = vrcp.pop %v2487
      %v3052 = vmul.f32 %v2487, %v3051
      %v3053 = vsub.f32 1.0, %v3052
      %v3054 = vmul.f32 %v3051, %v3053
      %v3055 = vadd.f32 %v3051, %v3054
      %vm3056 = vweird.f32 %v2487
      %vm3057 = vweird.f32 %v3051
      %vm3058 = vmor %vm3056, %vm3057
      %v3059 = vsel %vm3058, %v3051, %v3055
      %v3060 = vand.u32 2147483647, %v2487
      %vm3061 = vcmp.eq.f32.partialorder %v3060, 8.507059e+37
      %v3062 = vand.u32 %v2487, 2147483648
      %v3063 = vor.u32 1.1754944e-38, %v3062
      %v3064 = vsel %vm3061, %v3063, %v3059
      %v3065 = vmul.f32 1.0, %v3064
      %v3066 = vrcp.pop %v2488
      %v3067 = vmul.f32 %v2488, %v3066
      %v3068 = vsub.f32 1.0, %v3067
      %v3069 = vmul.f32 %v3066, %v3068
      %v3070 = vadd.f32 %v3066, %v3069
      %vm3071 = vweird.f32 %v2488
      %vm3072 = vweird.f32 %v3066
      %vm3073 = vmor %vm3071, %vm3072
      %v3074 = vsel %vm3073, %v3066, %v3070
      %v3075 = vand.u32 2147483647, %v2488
      %vm3076 = vcmp.eq.f32.partialorder %v3075, 8.507059e+37
      %v3077 = vand.u32 %v2488, 2147483648
      %v3078 = vor.u32 1.1754944e-38, %v3077
      %v3079 = vsel %vm3076, %v3078, %v3074
      %v3080 = vmul.f32 1.0, %v3079
      %v3081 = vrcp.pop %v2489
      %v3082 = vmul.f32 %v2489, %v3081
      %v3083 = vsub.f32 1.0, %v3082
      %v3084 = vmul.f32 %v3081, %v3083
      %v3085 = vadd.f32 %v3081, %v3084
      %vm3086 = vweird.f32 %v2489
      %vm3087 = vweird.f32 %v3081
      %vm3088 = vmor %vm3086, %vm3087
      %v3089 = vsel %vm3088, %v3081, %v3085
      %v3090 = vand.u32 2147483647, %v2489
      %vm3091 = vcmp.eq.f32.partialorder %v3090, 8.507059e+37
      %v3092 = vand.u32 %v2489, 2147483648
      %v3093 = vor.u32 1.1754944e-38, %v3092
      %v3094 = vsel %vm3091, %v3093, %v3089
      %v3095 = vmul.f32 1.0, %v3094
      %v3096 = vrcp.pop %v2490
      %v3097 = vmul.f32 %v2490, %v3096
      %v3098 = vsub.f32 1.0, %v3097
      %v3099 = vmul.f32 %v3096, %v3098
      %v3100 = vadd.f32 %v3096, %v3099
      %vm3101 = vweird.f32 %v2490
      %vm3102 = vweird.f32 %v3096
      %vm3103 = vmor %vm3101, %vm3102
      %v3104 = vsel %vm3103, %v3096, %v3100
      %v3105 = vand.u32 2147483647, %v2490
      %vm3106 = vcmp.eq.f32.partialorder %v3105, 8.507059e+37
      %v3107 = vand.u32 %v2490, 2147483648
      %v3108 = vor.u32 1.1754944e-38, %v3107
      %v3109 = vsel %vm3106, %v3108, %v3104
      %v3110 = vmul.f32 1.0, %v3109
      %v3111 = vrcp.pop %v2491
      %v3112 = vmul.f32 %v2491, %v3111
      %v3113 = vsub.f32 1.0, %v3112
      %v3114 = vmul.f32 %v3111, %v3113
      %v3115 = vadd.f32 %v3111, %v3114
      %vm3116 = vweird.f32 %v2491
      %vm3117 = vweird.f32 %v3111
      %vm3118 = vmor %vm3116, %vm3117
      %v3119 = vsel %vm3118, %v3111, %v3115
      %v3120 = vand.u32 2147483647, %v2491
      %vm3121 = vcmp.eq.f32.partialorder %v3120, 8.507059e+37
      %v3122 = vand.u32 %v2491, 2147483648
      %v3123 = vor.u32 1.1754944e-38, %v3122
      %v3124 = vsel %vm3121, %v3123, %v3119
      %v3125 = vmul.f32 1.0, %v3124
      %v3126 = vrcp.pop %v2492
      %v3127 = vmul.f32 %v2492, %v3126
      %v3128 = vsub.f32 1.0, %v3127
      %v3129 = vmul.f32 %v3126, %v3128
      %v3130 = vadd.f32 %v3126, %v3129
      %vm3131 = vweird.f32 %v2492
      %vm3132 = vweird.f32 %v3126
      %vm3133 = vmor %vm3131, %vm3132
      %v3134 = vsel %vm3133, %v3126, %v3130
      %v3135 = vand.u32 2147483647, %v2492
      %vm3136 = vcmp.eq.f32.partialorder %v3135, 8.507059e+37
      %v3137 = vand.u32 %v2492, 2147483648
      %v3138 = vor.u32 1.1754944e-38, %v3137
      %v3139 = vsel %vm3136, %v3138, %v3134
      %v3140 = vmul.f32 1.0, %v3139
      %v3141 = vrcp.pop %v2493
      %v3142 = vmul.f32 %v2493, %v3141
      %v3143 = vsub.f32 1.0, %v3142
      %v3144 = vmul.f32 %v3141, %v3143
      %v3145 = vadd.f32 %v3141, %v3144
      %vm3146 = vweird.f32 %v2493
      %vm3147 = vweird.f32 %v3141
      %vm3148 = vmor %vm3146, %vm3147
      %v3149 = vsel %vm3148, %v3141, %v3145
      %v3150 = vand.u32 2147483647, %v2493
      %vm3151 = vcmp.eq.f32.partialorder %v3150, 8.507059e+37
      %v3152 = vand.u32 %v2493, 2147483648
      %v3153 = vor.u32 1.1754944e-38, %v3152
      %v3154 = vsel %vm3151, %v3153, %v3149
      %v3155 = vmul.f32 1.0, %v3154
      %v3156 = vrcp.pop %v2494
      %v3157 = vmul.f32 %v2494, %v3156
      %v3158 = vsub.f32 1.0, %v3157
      %v3159 = vmul.f32 %v3156, %v3158
      %v3160 = vadd.f32 %v3156, %v3159
      %vm3161 = vweird.f32 %v2494
      %vm3162 = vweird.f32 %v3156
      %vm3163 = vmor %vm3161, %vm3162
      %v3164 = vsel %vm3163, %v3156, %v3160
      %v3165 = vand.u32 2147483647, %v2494
      %vm3166 = vcmp.eq.f32.partialorder %v3165, 8.507059e+37
      %v3167 = vand.u32 %v2494, 2147483648
      %v3168 = vor.u32 1.1754944e-38, %v3167
      %v3169 = vsel %vm3166, %v3168, %v3164
      %v3170 = vmul.f32 1.0, %v3169
      %v3171 = vrcp.pop %v2495
      %v3172 = vmul.f32 %v2495, %v3171
      %v3173 = vsub.f32 1.0, %v3172
      %v3174 = vmul.f32 %v3171, %v3173
      %v3175 = vadd.f32 %v3171, %v3174
      %vm3176 = vweird.f32 %v2495
      %vm3177 = vweird.f32 %v3171
      %vm3178 = vmor %vm3176, %vm3177
      %v3179 = vsel %vm3178, %v3171, %v3175
      %v3180 = vand.u32 2147483647, %v2495
      %vm3181 = vcmp.eq.f32.partialorder %v3180, 8.507059e+37
      %v3182 = vand.u32 %v2495, 2147483648
      %v3183 = vor.u32 1.1754944e-38, %v3182
      %v3184 = vsel %vm3181, %v3183, %v3179
      %v3185 = vmul.f32 1.0, %v3184
      %v3186 = vrcp.pop %v2496
      %v3187 = vmul.f32 %v2496, %v3186
      %v3188 = vsub.f32 1.0, %v3187
      %v3189 = vmul.f32 %v3186, %v3188
      %v3190 = vadd.f32 %v3186, %v3189
      %vm3191 = vweird.f32 %v2496
      %vm3192 = vweird.f32 %v3186
      %vm3193 = vmor %vm3191, %vm3192
      %v3194 = vsel %vm3193, %v3186, %v3190
      %v3195 = vand.u32 2147483647, %v2496
      %vm3196 = vcmp.eq.f32.partialorder %v3195, 8.507059e+37
      %v3197 = vand.u32 %v2496, 2147483648
      %v3198 = vor.u32 1.1754944e-38, %v3197
      %v3199 = vsel %vm3196, %v3198, %v3194
      %v3200 = vmul.f32 1.0, %v3199
      %v3201 = vrcp.pop %v2497
      %v3202 = vmul.f32 %v2497, %v3201
      %v3203 = vsub.f32 1.0, %v3202
      %v3204 = vmul.f32 %v3201, %v3203
      %v3205 = vadd.f32 %v3201, %v3204
      %vm3206 = vweird.f32 %v2497
      %vm3207 = vweird.f32 %v3201
      %vm3208 = vmor %vm3206, %vm3207
      %v3209 = vsel %vm3208, %v3201, %v3205
      %v3210 = vand.u32 2147483647, %v2497
      %vm3211 = vcmp.eq.f32.partialorder %v3210, 8.507059e+37
      %v3212 = vand.u32 %v2497, 2147483648
      %v3213 = vor.u32 1.1754944e-38, %v3212
      %v3214 = vsel %vm3211, %v3213, %v3209
      %v3215 = vmul.f32 1.0, %v3214
      %v3216 = vrcp.pop %v2498
      %v3217 = vmul.f32 %v2498, %v3216
      %v3218 = vsub.f32 1.0, %v3217
      %v3219 = vmul.f32 %v3216, %v3218
      %v3220 = vadd.f32 %v3216, %v3219
      %vm3221 = vweird.f32 %v2498
      %vm3222 = vweird.f32 %v3216
      %vm3223 = vmor %vm3221, %vm3222
      %v3224 = vsel %vm3223, %v3216, %v3220
      %v3225 = vand.u32 2147483647, %v2498
      %vm3226 = vcmp.eq.f32.partialorder %v3225, 8.507059e+37
      %v3227 = vand.u32 %v2498, 2147483648
      %v3228 = vor.u32 1.1754944e-38, %v3227
      %v3229 = vsel %vm3226, %v3228, %v3224
      %v3230 = vmul.f32 1.0, %v3229
      %v3231 = vrcp.pop %v2499
      %v3232 = vmul.f32 %v2499, %v3231
      %v3233 = vsub.f32 1.0, %v3232
      %v3234 = vmul.f32 %v3231, %v3233
      %v3235 = vadd.f32 %v3231, %v3234
      %vm3236 = vweird.f32 %v2499
      %vm3237 = vweird.f32 %v3231
      %vm3238 = vmor %vm3236, %vm3237
      %v3239 = vsel %vm3238, %v3231, %v3235
      %v3240 = vand.u32 2147483647, %v2499
      %vm3241 = vcmp.eq.f32.partialorder %v3240, 8.507059e+37
      %v3242 = vand.u32 %v2499, 2147483648
      %v3243 = vor.u32 1.1754944e-38, %v3242
      %v3244 = vsel %vm3241, %v3243, %v3239
      %v3245 = vmul.f32 1.0, %v3244
      %v3246 = vrcp.pop %v2500
      %v3247 = vmul.f32 %v2500, %v3246
      %v3248 = vsub.f32 1.0, %v3247
      %v3249 = vmul.f32 %v3246, %v3248
      %v3250 = vadd.f32 %v3246, %v3249
      %vm3251 = vweird.f32 %v2500
      %vm3252 = vweird.f32 %v3246
      %vm3253 = vmor %vm3251, %vm3252
      %v3254 = vsel %vm3253, %v3246, %v3250
      %v3255 = vand.u32 2147483647, %v2500
      %vm3256 = vcmp.eq.f32.partialorder %v3255, 8.507059e+37
      %v3257 = vand.u32 %v2500, 2147483648
      %v3258 = vor.u32 1.1754944e-38, %v3257
      %v3259 = vsel %vm3256, %v3258, %v3254
      %v3260 = vmul.f32 1.0, %v3259
      %v3261 = vrcp.pop %v2501
      %v3262 = vmul.f32 %v2501, %v3261
      %v3263 = vsub.f32 1.0, %v3262
      %v3264 = vmul.f32 %v3261, %v3263
      %v3265 = vadd.f32 %v3261, %v3264
      %vm3266 = vweird.f32 %v2501
      %vm3267 = vweird.f32 %v3261
      %vm3268 = vmor %vm3266, %vm3267
      %v3269 = vsel %vm3268, %v3261, %v3265
      %v3270 = vand.u32 2147483647, %v2501
      %vm3271 = vcmp.eq.f32.partialorder %v3270, 8.507059e+37
      %v3272 = vand.u32 %v2501, 2147483648
      %v3273 = vor.u32 1.1754944e-38, %v3272
      %v3274 = vsel %vm3271, %v3273, %v3269
      %v3275 = vmul.f32 1.0, %v3274
      %v3276 = vrcp.pop %v2502
      %v3277 = vmul.f32 %v2502, %v3276
      %v3278 = vsub.f32 1.0, %v3277
      %v3279 = vmul.f32 %v3276, %v3278
      %v3280 = vadd.f32 %v3276, %v3279
      %vm3281 = vweird.f32 %v2502
      %vm3282 = vweird.f32 %v3276
      %vm3283 = vmor %vm3281, %vm3282
      %v3284 = vsel %vm3283, %v3276, %v3280
      %v3285 = vand.u32 2147483647, %v2502
      %vm3286 = vcmp.eq.f32.partialorder %v3285, 8.507059e+37
      %v3287 = vand.u32 %v2502, 2147483648
      %v3288 = vor.u32 1.1754944e-38, %v3287
      %v3289 = vsel %vm3286, %v3288, %v3284
      %v3290 = vmul.f32 1.0, %v3289
      %v3291 = vrcp.pop %v2503
      %v3292 = vmul.f32 %v2503, %v3291
      %v3293 = vsub.f32 1.0, %v3292
      %v3294 = vmul.f32 %v3291, %v3293
      %v3295 = vadd.f32 %v3291, %v3294
      %vm3296 = vweird.f32 %v2503
      %vm3297 = vweird.f32 %v3291
      %vm3298 = vmor %vm3296, %vm3297
      %v3299 = vsel %vm3298, %v3291, %v3295
      %v3300 = vand.u32 2147483647, %v2503
      %vm3301 = vcmp.eq.f32.partialorder %v3300, 8.507059e+37
      %v3302 = vand.u32 %v2503, 2147483648
      %v3303 = vor.u32 1.1754944e-38, %v3302
      %v3304 = vsel %vm3301, %v3303, %v3299
      %v3305 = vmul.f32 1.0, %v3304
      %v3306 = vrcp.pop %v2504
      %v3307 = vmul.f32 %v2504, %v3306
      %v3308 = vsub.f32 1.0, %v3307
      %v3309 = vmul.f32 %v3306, %v3308
      %v3310 = vadd.f32 %v3306, %v3309
      %vm3311 = vweird.f32 %v2504
      %vm3312 = vweird.f32 %v3306
      %vm3313 = vmor %vm3311, %vm3312
      %v3314 = vsel %vm3313, %v3306, %v3310
      %v3315 = vand.u32 2147483647, %v2504
      %vm3316 = vcmp.eq.f32.partialorder %v3315, 8.507059e+37
      %v3317 = vand.u32 %v2504, 2147483648
      %v3318 = vor.u32 1.1754944e-38, %v3317
      %v3319 = vsel %vm3316, %v3318, %v3314
      %v3320 = vmul.f32 1.0, %v3319
      %v3321 = vrcp.pop %v2505
      %v3322 = vmul.f32 %v2505, %v3321
      %v3323 = vsub.f32 1.0, %v3322
      %v3324 = vmul.f32 %v3321, %v3323
      %v3325 = vadd.f32 %v3321, %v3324
      %vm3326 = vweird.f32 %v2505
      %vm3327 = vweird.f32 %v3321
      %vm3328 = vmor %vm3326, %vm3327
      %v3329 = vsel %vm3328, %v3321, %v3325
      %v3330 = vand.u32 2147483647, %v2505
      %vm3331 = vcmp.eq.f32.partialorder %v3330, 8.507059e+37
      %v3332 = vand.u32 %v2505, 2147483648
      %v3333 = vor.u32 1.1754944e-38, %v3332
      %v3334 = vsel %vm3331, %v3333, %v3329
      %v3335 = vmul.f32 1.0, %v3334
      %v3336 = vrcp.pop %v2506
      %v3337 = vmul.f32 %v2506, %v3336
      %v3338 = vsub.f32 1.0, %v3337
      %v3339 = vmul.f32 %v3336, %v3338
      %v3340 = vadd.f32 %v3336, %v3339
      %vm3341 = vweird.f32 %v2506
      %vm3342 = vweird.f32 %v3336
      %vm3343 = vmor %vm3341, %vm3342
      %v3344 = vsel %vm3343, %v3336, %v3340
      %v3345 = vand.u32 2147483647, %v2506
      %vm3346 = vcmp.eq.f32.partialorder %v3345, 8.507059e+37
      %v3347 = vand.u32 %v2506, 2147483648
      %v3348 = vor.u32 1.1754944e-38, %v3347
      %v3349 = vsel %vm3346, %v3348, %v3344
      %v3350 = vmul.f32 1.0, %v3349
      %v3351 = vrcp.pop %v2507
      %v3352 = vmul.f32 %v2507, %v3351
      %v3353 = vsub.f32 1.0, %v3352
      %v3354 = vmul.f32 %v3351, %v3353
      %v3355 = vadd.f32 %v3351, %v3354
      %vm3356 = vweird.f32 %v2507
      %vm3357 = vweird.f32 %v3351
      %vm3358 = vmor %vm3356, %vm3357
      %v3359 = vsel %vm3358, %v3351, %v3355
      %v3360 = vand.u32 2147483647, %v2507
      %vm3361 = vcmp.eq.f32.partialorder %v3360, 8.507059e+37
      %v3362 = vand.u32 %v2507, 2147483648
      %v3363 = vor.u32 1.1754944e-38, %v3362
      %v3364 = vsel %vm3361, %v3363, %v3359
      %v3365 = vmul.f32 1.0, %v3364
      %v3366 = vrcp.pop %v2508
      %v3367 = vmul.f32 %v2508, %v3366
      %v3368 = vsub.f32 1.0, %v3367
      %v3369 = vmul.f32 %v3366, %v3368
      %v3370 = vadd.f32 %v3366, %v3369
      %vm3371 = vweird.f32 %v2508
      %vm3372 = vweird.f32 %v3366
      %vm3373 = vmor %vm3371, %vm3372
      %v3374 = vsel %vm3373, %v3366, %v3370
      %v3375 = vand.u32 2147483647, %v2508
      %vm3376 = vcmp.eq.f32.partialorder %v3375, 8.507059e+37
      %v3377 = vand.u32 %v2508, 2147483648
      %v3378 = vor.u32 1.1754944e-38, %v3377
      %v3379 = vsel %vm3376, %v3378, %v3374
      %v3380 = vmul.f32 1.0, %v3379
      %v3381 = vrcp.pop %v2509
      %v3382 = vmul.f32 %v2509, %v3381
      %v3383 = vsub.f32 1.0, %v3382
      %v3384 = vmul.f32 %v3381, %v3383
      %v3385 = vadd.f32 %v3381, %v3384
      %vm3386 = vweird.f32 %v2509
      %vm3387 = vweird.f32 %v3381
      %vm3388 = vmor %vm3386, %vm3387
      %v3389 = vsel %vm3388, %v3381, %v3385
      %v3390 = vand.u32 2147483647, %v2509
      %vm3391 = vcmp.eq.f32.partialorder %v3390, 8.507059e+37
      %v3392 = vand.u32 %v2509, 2147483648
      %v3393 = vor.u32 1.1754944e-38, %v3392
      %v3394 = vsel %vm3391, %v3393, %v3389
      %v3395 = vmul.f32 1.0, %v3394
      %v3396 = vrcp.pop %v2510
      %v3397 = vmul.f32 %v2510, %v3396
      %v3398 = vsub.f32 1.0, %v3397
      %v3399 = vmul.f32 %v3396, %v3398
      %v3400 = vadd.f32 %v3396, %v3399
      %vm3401 = vweird.f32 %v2510
      %vm3402 = vweird.f32 %v3396
      %vm3403 = vmor %vm3401, %vm3402
      %v3404 = vsel %vm3403, %v3396, %v3400
      %v3405 = vand.u32 2147483647, %v2510
      %vm3406 = vcmp.eq.f32.partialorder %v3405, 8.507059e+37
      %v3407 = vand.u32 %v2510, 2147483648
      %v3408 = vor.u32 1.1754944e-38, %v3407
      %v3409 = vsel %vm3406, %v3408, %v3404
      %v3410 = vmul.f32 1.0, %v3409
      %v3411 = vrcp.pop %v2511
      %v3412 = vmul.f32 %v2511, %v3411
      %v3413 = vsub.f32 1.0, %v3412
      %v3414 = vmul.f32 %v3411, %v3413
      %v3415 = vadd.f32 %v3411, %v3414
      %vm3416 = vweird.f32 %v2511
      %vm3417 = vweird.f32 %v3411
      %vm3418 = vmor %vm3416, %vm3417
      %v3419 = vsel %vm3418, %v3411, %v3415
      %v3420 = vand.u32 2147483647, %v2511
      %vm3421 = vcmp.eq.f32.partialorder %v3420, 8.507059e+37
      %v3422 = vand.u32 %v2511, 2147483648
      %v3423 = vor.u32 1.1754944e-38, %v3422
      %v3424 = vsel %vm3421, %v3423, %v3419
      %v3425 = vmul.f32 1.0, %v3424
      %v3426 = vrcp.pop %v2512
      %v3427 = vmul.f32 %v2512, %v3426
      %v3428 = vsub.f32 1.0, %v3427
      %v3429 = vmul.f32 %v3426, %v3428
      %v3430 = vadd.f32 %v3426, %v3429
      %vm3431 = vweird.f32 %v2512
      %vm3432 = vweird.f32 %v3426
      %vm3433 = vmor %vm3431, %vm3432
      %v3434 = vsel %vm3433, %v3426, %v3430
      %v3435 = vand.u32 2147483647, %v2512
      %vm3436 = vcmp.eq.f32.partialorder %v3435, 8.507059e+37
      %v3437 = vand.u32 %v2512, 2147483648
      %v3438 = vor.u32 1.1754944e-38, %v3437
      %v3439 = vsel %vm3436, %v3438, %v3434
      %v3440 = vmul.f32 1.0, %v3439
      %v3441 = vrcp.pop %v2513
      %v3442 = vmul.f32 %v2513, %v3441
      %v3443 = vsub.f32 1.0, %v3442
      %v3444 = vmul.f32 %v3441, %v3443
      %v3445 = vadd.f32 %v3441, %v3444
      %vm3446 = vweird.f32 %v2513
      %vm3447 = vweird.f32 %v3441
      %vm3448 = vmor %vm3446, %vm3447
      %v3449 = vsel %vm3448, %v3441, %v3445
      %v3450 = vand.u32 2147483647, %v2513
      %vm3451 = vcmp.eq.f32.partialorder %v3450, 8.507059e+37
      %v3452 = vand.u32 %v2513, 2147483648
      %v3453 = vor.u32 1.1754944e-38, %v3452
      %v3454 = vsel %vm3451, %v3453, %v3449
      %v3455 = vmul.f32 1.0, %v3454
      %v3456 = vrcp.pop %v2514
      %v3457 = vmul.f32 %v2514, %v3456
      %v3458 = vsub.f32 1.0, %v3457
      %v3459 = vmul.f32 %v3456, %v3458
      %v3460 = vadd.f32 %v3456, %v3459
      %vm3461 = vweird.f32 %v2514
      %vm3462 = vweird.f32 %v3456
      %vm3463 = vmor %vm3461, %vm3462
      %v3464 = vsel %vm3463, %v3456, %v3460
      %v3465 = vand.u32 2147483647, %v2514
      %vm3466 = vcmp.eq.f32.partialorder %v3465, 8.507059e+37
      %v3467 = vand.u32 %v2514, 2147483648
      %v3468 = vor.u32 1.1754944e-38, %v3467
      %v3469 = vsel %vm3466, %v3468, %v3464
      %v3470 = vmul.f32 1.0, %v3469
      %v3471 = vrcp.pop %v2515
      %v3472 = vmul.f32 %v2515, %v3471
      %v3473 = vsub.f32 1.0, %v3472
      %v3474 = vmul.f32 %v3471, %v3473
      %v3475 = vadd.f32 %v3471, %v3474
      %vm3476 = vweird.f32 %v2515
      %vm3477 = vweird.f32 %v3471
      %vm3478 = vmor %vm3476, %vm3477
      %v3479 = vsel %vm3478, %v3471, %v3475
      %v3480 = vand.u32 2147483647, %v2515
      %vm3481 = vcmp.eq.f32.partialorder %v3480, 8.507059e+37
      %v3482 = vand.u32 %v2515, 2147483648
      %v3483 = vor.u32 1.1754944e-38, %v3482
      %v3484 = vsel %vm3481, %v3483, %v3479
      %v3485 = vmul.f32 1.0, %v3484
      %v3486 = vrcp.pop %v2516
      %v3487 = vmul.f32 %v2516, %v3486
      %v3488 = vsub.f32 1.0, %v3487
      %v3489 = vmul.f32 %v3486, %v3488
      %v3490 = vadd.f32 %v3486, %v3489
      %vm3491 = vweird.f32 %v2516
      %vm3492 = vweird.f32 %v3486
      %vm3493 = vmor %vm3491, %vm3492
      %v3494 = vsel %vm3493, %v3486, %v3490
      %v3495 = vand.u32 2147483647, %v2516
      %vm3496 = vcmp.eq.f32.partialorder %v3495, 8.507059e+37
      %v3497 = vand.u32 %v2516, 2147483648
      %v3498 = vor.u32 1.1754944e-38, %v3497
      %v3499 = vsel %vm3496, %v3498, %v3494
      %v3500 = vmul.f32 1.0, %v3499
      %v3501 = vrcp.pop %v2517
      %v3502 = vmul.f32 %v2517, %v3501
      %v3503 = vsub.f32 1.0, %v3502
      %v3504 = vmul.f32 %v3501, %v3503
      %v3505 = vadd.f32 %v3501, %v3504
      %vm3506 = vweird.f32 %v2517
      %vm3507 = vweird.f32 %v3501
      %vm3508 = vmor %vm3506, %vm3507
      %v3509 = vsel %vm3508, %v3501, %v3505
      %v3510 = vand.u32 2147483647, %v2517
      %vm3511 = vcmp.eq.f32.partialorder %v3510, 8.507059e+37
      %v3512 = vand.u32 %v2517, 2147483648
      %v3513 = vor.u32 1.1754944e-38, %v3512
      %v3514 = vsel %vm3511, %v3513, %v3509
      %v3515 = vmul.f32 1.0, %v3514
      %v3516 = vrcp.pop %v2518
      %v3517 = vmul.f32 %v2518, %v3516
      %v3518 = vsub.f32 1.0, %v3517
      %v3519 = vmul.f32 %v3516, %v3518
      %v3520 = vadd.f32 %v3516, %v3519
      %vm3521 = vweird.f32 %v2518
      %vm3522 = vweird.f32 %v3516
      %vm3523 = vmor %vm3521, %vm3522
      %v3524 = vsel %vm3523, %v3516, %v3520
      %v3525 = vand.u32 2147483647, %v2518
      %vm3526 = vcmp.eq.f32.partialorder %v3525, 8.507059e+37
      %v3527 = vand.u32 %v2518, 2147483648
      %v3528 = vor.u32 1.1754944e-38, %v3527
      %v3529 = vsel %vm3526, %v3528, %v3524
      %v3530 = vmul.f32 1.0, %v3529
      %v3531 = vrcp.pop %v2519
      %v3532 = vmul.f32 %v2519, %v3531
      %v3533 = vsub.f32 1.0, %v3532
      %v3534 = vmul.f32 %v3531, %v3533
      %v3535 = vadd.f32 %v3531, %v3534
      %vm3536 = vweird.f32 %v2519
      %vm3537 = vweird.f32 %v3531
      %vm3538 = vmor %vm3536, %vm3537
      %v3539 = vsel %vm3538, %v3531, %v3535
      %v3540 = vand.u32 2147483647, %v2519
      %vm3541 = vcmp.eq.f32.partialorder %v3540, 8.507059e+37
      %v3542 = vand.u32 %v2519, 2147483648
      %v3543 = vor.u32 1.1754944e-38, %v3542
      %v3544 = vsel %vm3541, %v3543, %v3539
      %v3545 = vmul.f32 1.0, %v3544
      %v3546 = vrcp.pop %v2520
      %v3547 = vmul.f32 %v2520, %v3546
      %v3548 = vsub.f32 1.0, %v3547
      %v3549 = vmul.f32 %v3546, %v3548
      %v3550 = vadd.f32 %v3546, %v3549
      %vm3551 = vweird.f32 %v2520
      %vm3552 = vweird.f32 %v3546
      %vm3553 = vmor %vm3551, %vm3552
      %v3554 = vsel %vm3553, %v3546, %v3550
      %v3555 = vand.u32 2147483647, %v2520
      %vm3556 = vcmp.eq.f32.partialorder %v3555, 8.507059e+37
      %v3557 = vand.u32 %v2520, 2147483648
      %v3558 = vor.u32 1.1754944e-38, %v3557
      %v3559 = vsel %vm3556, %v3558, %v3554
      %v3560 = vmul.f32 1.0, %v3559
      %v3561 = vrcp.pop %v2521
      %v3562 = vmul.f32 %v2521, %v3561
      %v3563 = vsub.f32 1.0, %v3562
      %v3564 = vmul.f32 %v3561, %v3563
      %v3565 = vadd.f32 %v3561, %v3564
      %vm3566 = vweird.f32 %v2521
      %vm3567 = vweird.f32 %v3561
      %vm3568 = vmor %vm3566, %vm3567
      %v3569 = vsel %vm3568, %v3561, %v3565
      %v3570 = vand.u32 2147483647, %v2521
      %vm3571 = vcmp.eq.f32.partialorder %v3570, 8.507059e+37
      %v3572 = vand.u32 %v2521, 2147483648
      %v3573 = vor.u32 1.1754944e-38, %v3572
      %v3574 = vsel %vm3571, %v3573, %v3569
      %v3575 = vmul.f32 1.0, %v3574
      %v3576 = vrcp.pop %v2522
      %v3577 = vmul.f32 %v2522, %v3576
      %v3578 = vsub.f32 1.0, %v3577
      %v3579 = vmul.f32 %v3576, %v3578
      %v3580 = vadd.f32 %v3576, %v3579
      %vm3581 = vweird.f32 %v2522
      %vm3582 = vweird.f32 %v3576
      %vm3583 = vmor %vm3581, %vm3582
      %v3584 = vsel %vm3583, %v3576, %v3580
      %v3585 = vand.u32 2147483647, %v2522
      %vm3586 = vcmp.eq.f32.partialorder %v3585, 8.507059e+37
      %v3587 = vand.u32 %v2522, 2147483648
      %v3588 = vor.u32 1.1754944e-38, %v3587
      %v3589 = vsel %vm3586, %v3588, %v3584
      %v3590 = vmul.f32 1.0, %v3589
      %v3591 = vrcp.pop %v2523
      %v3592 = vmul.f32 %v2523, %v3591
      %v3593 = vsub.f32 1.0, %v3592
      %v3594 = vmul.f32 %v3591, %v3593
      %v3595 = vadd.f32 %v3591, %v3594
      %vm3596 = vweird.f32 %v2523
      %vm3597 = vweird.f32 %v3591
      %vm3598 = vmor %vm3596, %vm3597
      %v3599 = vsel %vm3598, %v3591, %v3595
      %v3600 = vand.u32 2147483647, %v2523
      %vm3601 = vcmp.eq.f32.partialorder %v3600, 8.507059e+37
      %v3602 = vand.u32 %v2523, 2147483648
      %v3603 = vor.u32 1.1754944e-38, %v3602
      %v3604 = vsel %vm3601, %v3603, %v3599
      %v3605 = vmul.f32 1.0, %v3604
      %v3606 = vrcp.pop %v2524
      %v3607 = vmul.f32 %v2524, %v3606
      %v3608 = vsub.f32 1.0, %v3607
      %v3609 = vmul.f32 %v3606, %v3608
      %v3610 = vadd.f32 %v3606, %v3609
      %vm3611 = vweird.f32 %v2524
      %vm3612 = vweird.f32 %v3606
      %vm3613 = vmor %vm3611, %vm3612
      %v3614 = vsel %vm3613, %v3606, %v3610
      %v3615 = vand.u32 2147483647, %v2524
      %vm3616 = vcmp.eq.f32.partialorder %v3615, 8.507059e+37
      %v3617 = vand.u32 %v2524, 2147483648
      %v3618 = vor.u32 1.1754944e-38, %v3617
      %v3619 = vsel %vm3616, %v3618, %v3614
      %v3620 = vmul.f32 1.0, %v3619
      %v3621 = vrcp.pop %v2525
      %v3622 = vmul.f32 %v2525, %v3621
      %v3623 = vsub.f32 1.0, %v3622
      %v3624 = vmul.f32 %v3621, %v3623
      %v3625 = vadd.f32 %v3621, %v3624
      %vm3626 = vweird.f32 %v2525
      %vm3627 = vweird.f32 %v3621
      %vm3628 = vmor %vm3626, %vm3627
      %v3629 = vsel %vm3628, %v3621, %v3625
      %v3630 = vand.u32 2147483647, %v2525
      %vm3631 = vcmp.eq.f32.partialorder %v3630, 8.507059e+37
      %v3632 = vand.u32 %v2525, 2147483648
      %v3633 = vor.u32 1.1754944e-38, %v3632
      %v3634 = vsel %vm3631, %v3633, %v3629
      %v3635 = vmul.f32 1.0, %v3634
      %v3636 = vmul.f32 %v2009, %v2540
      %v3637 = vmul.f32 %v2012, %v2555
      %v3638 = vmul.f32 %v2015, %v2570
      %v3639 = vmul.f32 %v2018, %v2585
      %v3640 = vmul.f32 %v2021, %v2600
      %v3641 = vmul.f32 %v2024, %v2615
      %v3642 = vmul.f32 %v2027, %v2630
      %v3643 = vmul.f32 %v2030, %v2645
      %v3644 = vmul.f32 %v2033, %v2660
      %v3645 = vmul.f32 %v2036, %v2675
      %v3646 = vmul.f32 %v2039, %v2690
      %v3647 = vmul.f32 %v2042, %v2705
      %v3648 = vmul.f32 %v2045, %v2720
      %v3649 = vmul.f32 %v2048, %v2735
      %v3650 = vmul.f32 %v2051, %v2750
      %v3651 = vmul.f32 %v2054, %v2765
      %v3652 = vmul.f32 %v2057, %v2780
      %v3653 = vmul.f32 %v2060, %v2795
      %v3654 = vmul.f32 %v2063, %v2810
      %v3655 = vmul.f32 %v2066, %v2825
      %v3656 = vmul.f32 %v2069, %v2840
      %v3657 = vmul.f32 %v2072, %v2855
      %v3658 = vmul.f32 %v2075, %v2870
      %v3659 = vmul.f32 %v2078, %v2885
      %v3660 = vmul.f32 %v2081, %v2900
      %v3661 = vmul.f32 %v2084, %v2915
      %v3662 = vmul.f32 %v2087, %v2930
      %v3663 = vmul.f32 %v2090, %v2945
      %v3664 = vmul.f32 %v2093, %v2960
      %v3665 = vmul.f32 %v2096, %v2975
      %v3666 = vmul.f32 %v2099, %v2990
      %v3667 = vmul.f32 %v2102, %v3005
      %v3668 = vmul.f32 %v2105, %v3020
      %v3669 = vmul.f32 %v2108, %v3035
      %v3670 = vmul.f32 %v2111, %v3050
      %v3671 = vmul.f32 %v2114, %v3065
      %v3672 = vmul.f32 %v2117, %v3080
      %v3673 = vmul.f32 %v2120, %v3095
      %v3674 = vmul.f32 %v2123, %v3110
      %v3675 = vmul.f32 %v2126, %v3125
      %v3676 = vmul.f32 %v2129, %v3140
      %v3677 = vmul.f32 %v2132, %v3155
      %v3678 = vmul.f32 %v2135, %v3170
      %v3679 = vmul.f32 %v2138, %v3185
      %v3680 = vmul.f32 %v2141, %v3200
      %v3681 = vmul.f32 %v2144, %v3215
      %v3682 = vmul.f32 %v2147, %v3230
      %v3683 = vmul.f32 %v2150, %v3245
      %v3684 = vmul.f32 %v2153, %v3260
      %v3685 = vmul.f32 %v2156, %v3275
      %v3686 = vmul.f32 %v2159, %v3290
      %v3687 = vmul.f32 %v2162, %v3305
      %v3688 = vmul.f32 %v2165, %v3320
      %v3689 = vmul.f32 %v2168, %v3335
      %v3690 = vmul.f32 %v2171, %v3350
      %v3691 = vmul.f32 %v2174, %v3365
      %v3692 = vmul.f32 %v2177, %v3380
      %v3693 = vmul.f32 %v2180, %v3395
      %v3694 = vmul.f32 %v2183, %v3410
      %v3695 = vmul.f32 %v2186, %v3425
      %v3696 = vmul.f32 %v2189, %v3440
      %v3697 = vmul.f32 %v2192, %v3455
      %v3698 = vmul.f32 %v2195, %v3470
      %v3699 = vmul.f32 %v2198, %v3485
      %v3700 = vmul.f32 %v2201, %v3500
      %v3701 = vmul.f32 %v2204, %v3515
      %v3702 = vmul.f32 %v2207, %v3530
      %v3703 = vmul.f32 %v2210, %v3545
      %v3704 = vmul.f32 %v2213, %v3560
      %v3705 = vmul.f32 %v2216, %v3575
      %v3706 = vmul.f32 %v2219, %v3590
      %v3707 = vmul.f32 %v2222, %v3605
      %v3708 = vmul.f32 %v2225, %v3620
      %v3709 = vmul.f32 %v2228, %v3635
      %vm3736 = vcmask 1043456
      %v3737 = vrot.slane %v3660, 4
      %v3738 = vrot.slane %v3661, 4
      %v3739 = vsel %vm3736, %v3737, %v3738
      %v3740 = vrot.slane %v3662, 4
      %v3741 = vsel %vm3736, %v3738, %v3740
      %v3742 = vrot.slane %v3663, 4
      %v3743 = vsel %vm3736, %v3740, %v3742
      %v3744 = vrot.slane %v3664, 4
      %v3745 = vsel %vm3736, %v3742, %v3744
      %v3746 = vrot.slane %v3665, 4
      %v3747 = vsel %vm3736, %v3744, %v3746
      %v3748 = vrot.slane %v3666, 4
      %v3749 = vsel %vm3736, %v3746, %v3748
      %v3750 = vrot.slane %v3667, 4
      %v3751 = vsel %vm3736, %v3748, %v3750
      %v3752 = vrot.slane %v3668, 4
      %v3753 = vsel %vm3736, %v3750, %v3752
      %v3754 = vrot.slane %v3669, 4
      %v3755 = vsel %vm3736, %v3752, %v3754
      %v3756 = vrot.slane %v3670, 4
      %v3757 = vsel %vm3736, %v3754, %v3756
      %v3758 = vrot.slane %v3671, 4
      %v3759 = vsel %vm3736, %v3756, %v3758
      %v3760 = vrot.slane %v3672, 4
      %v3761 = vsel %vm3736, %v3758, %v3760
      %v3762 = vrot.slane %v3673, 4
      %v3763 = vsel %vm3736, %v3760, %v3762
      %v3764 = vrot.slane %v3674, 4
      %v3765 = vsel %vm3736, %v3762, %v3764
      %v3766 = vrot.slane %v3675, 4
      %v3767 = vsel %vm3736, %v3764, %v3766
      %v3768 = vrot.slane %v3676, 4
      %v3769 = vsel %vm3736, %v3766, %v3768
      %v3770 = vrot.slane %v3677, 4
      %v3771 = vsel %vm3736, %v3768, %v3770
      %v3772 = vrot.slane %v3678, 4
      %v3773 = vsel %vm3736, %v3770, %v3772
      %v3774 = vrot.slane %v3679, 4
      %v3775 = vsel %vm3736, %v3772, %v3774
      %v3776 = vrot.slane %v3680, 4
      %v3777 = vsel %vm3736, %v3774, %v3776
      %v3778 = vrot.slane %v3681, 4
      %v3779 = vsel %vm3736, %v3776, %v3778
      %v3780 = vrot.slane %v3682, 4
      %v3781 = vsel %vm3736, %v3778, %v3780
      %v3782 = vrot.slane %v3683, 4
      %v3783 = vsel %vm3736, %v3780, %v3782
      %v3784 = vrot.slane %v3684, 4
      %v3785 = vsel %vm3736, %v3782, %v3784
      %v3786 = vrot.slane %v3685, 4
      %v3787 = vsel %vm3736, %v3784, %v3786
      %3788 = vrot.lane.b32.xlu0 %v3739, 8
      %v3789 = vpop.permute.xlu0 %3788
      %3790 = vrot.lane.b32.xlu0 %v3741, 8
      %v3791 = vpop.permute.xlu0 %3790
      %3792 = vrot.lane.b32.xlu0 %v3743, 8
      %v3793 = vpop.permute.xlu0 %3792
      %3794 = vrot.lane.b32.xlu0 %v3745, 8
      %v3795 = vpop.permute.xlu0 %3794
      %3796 = vrot.lane.b32.xlu0 %v3747, 8
      %v3797 = vpop.permute.xlu0 %3796
      %3798 = vrot.lane.b32.xlu0 %v3749, 8
      %v3799 = vpop.permute.xlu0 %3798
      %3800 = vrot.lane.b32.xlu0 %v3751, 8
      %v3801 = vpop.permute.xlu0 %3800
      %3802 = vrot.lane.b32.xlu0 %v3753, 8
      %v3803 = vpop.permute.xlu0 %3802
      %3804 = vrot.lane.b32.xlu0 %v3755, 8
      %v3805 = vpop.permute.xlu0 %3804
      %3806 = vrot.lane.b32.xlu0 %v3757, 8
      %v3807 = vpop.permute.xlu0 %3806
      %3808 = vrot.lane.b32.xlu0 %v3759, 8
      %v3809 = vpop.permute.xlu0 %3808
      %3810 = vrot.lane.b32.xlu0 %v3761, 8
      %v3811 = vpop.permute.xlu0 %3810
      %3812 = vrot.lane.b32.xlu0 %v3763, 8
      %v3813 = vpop.permute.xlu0 %3812
      %3814 = vrot.lane.b32.xlu0 %v3765, 8
      %v3815 = vpop.permute.xlu0 %3814
      %3816 = vrot.lane.b32.xlu0 %v3767, 8
      %v3817 = vpop.permute.xlu0 %3816
      %3818 = vrot.lane.b32.xlu0 %v3769, 8
      %v3819 = vpop.permute.xlu0 %3818
      %3820 = vrot.lane.b32.xlu0 %v3771, 8
      %v3821 = vpop.permute.xlu0 %3820
      %3822 = vrot.lane.b32.xlu0 %v3773, 8
      %v3823 = vpop.permute.xlu0 %3822
      %3824 = vrot.lane.b32.xlu0 %v3775, 8
      %v3825 = vpop.permute.xlu0 %3824
      %3826 = vrot.lane.b32.xlu0 %v3777, 8
      %v3827 = vpop.permute.xlu0 %3826
      %3828 = vrot.lane.b32.xlu0 %v3779, 8
      %v3829 = vpop.permute.xlu0 %3828
      %3830 = vrot.lane.b32.xlu0 %v3781, 8
      %v3831 = vpop.permute.xlu0 %3830
      %3832 = vrot.lane.b32.xlu0 %v3783, 8
      %v3833 = vpop.permute.xlu0 %3832
      %3834 = vrot.lane.b32.xlu0 %v3785, 8
      %v3835 = vpop.permute.xlu0 %3834
      %3836 = vrot.lane.b32.xlu0 %v3787, 8
      %v3837 = vpop.permute.xlu0 %3836
      %3887 = vrot.lane.b32.xlu0 %v3685, 16
      %v3888 = vpop.permute.xlu0 %3887
      %3889 = vrot.lane.b32.xlu0 %v3686, 16
      %v3890 = vpop.permute.xlu0 %3889
      %3891 = vrot.lane.b32.xlu0 %v3687, 16
      %v3892 = vpop.permute.xlu0 %3891
      %3893 = vrot.lane.b32.xlu0 %v3688, 16
      %v3894 = vpop.permute.xlu0 %3893
      %3895 = vrot.lane.b32.xlu0 %v3689, 16
      %v3896 = vpop.permute.xlu0 %3895
      %3897 = vrot.lane.b32.xlu0 %v3690, 16
      %v3898 = vpop.permute.xlu0 %3897
      %3899 = vrot.lane.b32.xlu0 %v3691, 16
      %v3900 = vpop.permute.xlu0 %3899
      %3901 = vrot.lane.b32.xlu0 %v3692, 16
      %v3902 = vpop.permute.xlu0 %3901
      %3903 = vrot.lane.b32.xlu0 %v3693, 16
      %v3904 = vpop.permute.xlu0 %3903
      %3905 = vrot.lane.b32.xlu0 %v3694, 16
      %v3906 = vpop.permute.xlu0 %3905
      %3907 = vrot.lane.b32.xlu0 %v3695, 16
      %v3908 = vpop.permute.xlu0 %3907
      %3909 = vrot.lane.b32.xlu0 %v3696, 16
      %v3910 = vpop.permute.xlu0 %3909
      %3911 = vrot.lane.b32.xlu0 %v3697, 16
      %v3912 = vpop.permute.xlu0 %3911
      %3913 = vrot.lane.b32.xlu0 %v3698, 16
      %v3914 = vpop.permute.xlu0 %3913
      %3915 = vrot.lane.b32.xlu0 %v3699, 16
      %v3916 = vpop.permute.xlu0 %3915
      %3917 = vrot.lane.b32.xlu0 %v3700, 16
      %v3918 = vpop.permute.xlu0 %3917
      %3919 = vrot.lane.b32.xlu0 %v3701, 16
      %v3920 = vpop.permute.xlu0 %3919
      %3921 = vrot.lane.b32.xlu0 %v3702, 16
      %v3922 = vpop.permute.xlu0 %3921
      %3923 = vrot.lane.b32.xlu0 %v3703, 16
      %v3924 = vpop.permute.xlu0 %3923
      %3925 = vrot.lane.b32.xlu0 %v3704, 16
      %v3926 = vpop.permute.xlu0 %3925
      %3927 = vrot.lane.b32.xlu0 %v3705, 16
      %v3928 = vpop.permute.xlu0 %3927
      %3929 = vrot.lane.b32.xlu0 %v3706, 16
      %v3930 = vpop.permute.xlu0 %3929
      %3931 = vrot.lane.b32.xlu0 %v3707, 16
      %v3932 = vpop.permute.xlu0 %3931
      %3933 = vrot.lane.b32.xlu0 %v3708, 16
      %v3934 = vpop.permute.xlu0 %3933
      %3935 = vrot.lane.b32.xlu0 %v3709, 16
      %v3936 = vpop.permute.xlu0 %3935
      %vm3962 = vcmask 64512
      %v3963 = vsel %vm3962, %v3636, %v3789
      %v3964 = vsel %vm3962, %v3637, %v3791
      %v3965 = vsel %vm3962, %v3638, %v3793
      %v3966 = vsel %vm3962, %v3639, %v3795
      %v3967 = vsel %vm3962, %v3640, %v3797
      %v3968 = vsel %vm3962, %v3641, %v3799
      %v3969 = vsel %vm3962, %v3642, %v3801
      %v3970 = vsel %vm3962, %v3643, %v3803
      %v3971 = vsel %vm3962, %v3644, %v3805
      %v3972 = vsel %vm3962, %v3645, %v3807
      %v3973 = vsel %vm3962, %v3646, %v3809
      %v3974 = vsel %vm3962, %v3647, %v3811
      %v3975 = vsel %vm3962, %v3648, %v3813
      %v3976 = vsel %vm3962, %v3649, %v3815
      %v3977 = vsel %vm3962, %v3650, %v3817
      %v3978 = vsel %vm3962, %v3651, %v3819
      %v3979 = vsel %vm3962, %v3652, %v3821
      %v3980 = vsel %vm3962, %v3653, %v3823
      %v3981 = vsel %vm3962, %v3654, %v3825
      %v3982 = vsel %vm3962, %v3655, %v3827
      %v3983 = vsel %vm3962, %v3656, %v3829
      %v3984 = vsel %vm3962, %v3657, %v3831
      %v3985 = vsel %vm3962, %v3658, %v3833
      %v3986 = vsel %vm3962, %v3659, %v3835
      %v3987 = vsel %vm3962, %v3660, %v3837
      %vm3988 = vcmask 130048
      %v3989 = vsel %vm3988, %v3963, %v3888
      %v3990 = vsel %vm3988, %v3964, %v3890
      %v3991 = vsel %vm3988, %v3965, %v3892
      %v3992 = vsel %vm3988, %v3966, %v3894
      %v3993 = vsel %vm3988, %v3967, %v3896
      %v3994 = vsel %vm3988, %v3968, %v3898
      %v3995 = vsel %vm3988, %v3969, %v3900
      %v3996 = vsel %vm3988, %v3970, %v3902
      %v3997 = vsel %vm3988, %v3971, %v3904
      %v3998 = vsel %vm3988, %v3972, %v3906
      %v3999 = vsel %vm3988, %v3973, %v3908
      %v4000 = vsel %vm3988, %v3974, %v3910
      %v4001 = vsel %vm3988, %v3975, %v3912
      %v4002 = vsel %vm3988, %v3976, %v3914
      %v4003 = vsel %vm3988, %v3977, %v3916
      %v4004 = vsel %vm3988, %v3978, %v3918
      %v4005 = vsel %vm3988, %v3979, %v3920
      %v4006 = vsel %vm3988, %v3980, %v3922
      %v4007 = vsel %vm3988, %v3981, %v3924
      %v4008 = vsel %vm3988, %v3982, %v3926
      %v4009 = vsel %vm3988, %v3983, %v3928
      %v4010 = vsel %vm3988, %v3984, %v3930
      %v4011 = vsel %vm3988, %v3985, %v3932
      %v4012 = vsel %vm3988, %v3986, %v3934
      %v4013 = vsel %vm3988, %v3987, %v3936
      %v4039 = vrot.slane %v3989, 2
      %v4040 = vrot.slane %v3989, 4
      %v4041 = vrot.slane %v3989, 6
      %v4042 = vrot.slane %v3990, 2
      %v4043 = vrot.slane %v3990, 4
      %v4044 = vrot.slane %v3990, 6
      %v4045 = vrot.slane %v3991, 2
      %v4046 = vrot.slane %v3991, 4
      %v4047 = vrot.slane %v3991, 6
      %v4048 = vrot.slane %v3992, 2
      %v4049 = vrot.slane %v3992, 4
      %v4050 = vrot.slane %v3992, 6
      %v4051 = vrot.slane %v3993, 2
      %v4052 = vrot.slane %v3993, 4
      %v4053 = vrot.slane %v3993, 6
      %v4054 = vrot.slane %v3994, 2
      %v4055 = vrot.slane %v3994, 4
      %v4056 = vrot.slane %v3994, 6
      %v4057 = vrot.slane %v3995, 2
      %v4058 = vrot.slane %v3995, 4
      %v4059 = vrot.slane %v3995, 6
      %v4060 = vrot.slane %v3996, 2
      %v4061 = vrot.slane %v3996, 4
      %v4062 = vrot.slane %v3996, 6
      %v4063 = vrot.slane %v3997, 2
      %v4064 = vrot.slane %v3997, 4
      %v4065 = vrot.slane %v3997, 6
      %v4066 = vrot.slane %v3998, 2
      %v4067 = vrot.slane %v3998, 4
      %v4068 = vrot.slane %v3998, 6
      %v4069 = vrot.slane %v3999, 2
      %v4070 = vrot.slane %v3999, 4
      %v4071 = vrot.slane %v3999, 6
      %v4072 = vrot.slane %v4000, 2
      %v4073 = vrot.slane %v4000, 4
      %v4074 = vrot.slane %v4000, 6
      %v4075 = vrot.slane %v4001, 2
      %v4076 = vrot.slane %v4001, 4
      %v4077 = vrot.slane %v4001, 6
      %v4078 = vrot.slane %v4002, 2
      %v4079 = vrot.slane %v4002, 4
      %v4080 = vrot.slane %v4002, 6
      %v4081 = vrot.slane %v4003, 2
      %v4082 = vrot.slane %v4003, 4
      %v4083 = vrot.slane %v4003, 6
      %v4084 = vrot.slane %v4004, 2
      %v4085 = vrot.slane %v4004, 4
      %v4086 = vrot.slane %v4004, 6
      %v4087 = vrot.slane %v4005, 2
      %v4088 = vrot.slane %v4005, 4
      %v4089 = vrot.slane %v4005, 6
      %v4090 = vrot.slane %v4006, 2
      %v4091 = vrot.slane %v4006, 4
      %v4092 = vrot.slane %v4006, 6
      %v4093 = vrot.slane %v4007, 2
      %v4094 = vrot.slane %v4007, 4
      %v4095 = vrot.slane %v4007, 6
      %v4096 = vrot.slane %v4008, 2
      %v4097 = vrot.slane %v4008, 4
      %v4098 = vrot.slane %v4008, 6
      %v4099 = vrot.slane %v4009, 2
      %v4100 = vrot.slane %v4009, 4
      %v4101 = vrot.slane %v4009, 6
      %v4102 = vrot.slane %v4010, 2
      %v4103 = vrot.slane %v4010, 4
      %v4104 = vrot.slane %v4010, 6
      %v4105 = vrot.slane %v4011, 2
      %v4106 = vrot.slane %v4011, 4
      %v4107 = vrot.slane %v4011, 6
      %v4108 = vrot.slane %v4012, 2
      %v4109 = vrot.slane %v4012, 4
      %v4110 = vrot.slane %v4012, 6
      %v4111 = vrot.slane %v4013, 2
      %v4112 = vrot.slane %v4013, 4
      %vm4113 = vcmask 1040384
      %vm4114 = vcmask 1042434
      %vm4115 = vmor %vm4113, %vm4114
      %vm4116 = vcmask 1044484
      %vm4117 = vmor %vm4115, %vm4116
      %vm4118 = vcmask 1046534
      %vm4119 = vmor %vm4117, %vm4118
      %v4120 = vrot.slane %v3989, 7
      %v4121 = vrot.slane %v4120, 2
      %v4122 = vrot.slane %v4039, 7
      %v4123 = vsel %vm4119, %v4121, %v4122
      %v4124 = vrot.slane %v4122, 2
      %v4125 = vrot.slane %v4040, 7
      %v4126 = vsel %vm4119, %v4124, %v4125
      %v4127 = vrot.slane %v4125, 2
      %v4128 = vrot.slane %v4041, 7
      %v4129 = vsel %vm4119, %v4127, %v4128
      %v4130 = vrot.slane %v4128, 2
      %v4131 = vrot.slane %v3990, 7
      %v4132 = vsel %vm4119, %v4130, %v4131
      %v4133 = vrot.slane %v4131, 2
      %v4134 = vrot.slane %v4042, 7
      %v4135 = vsel %vm4119, %v4133, %v4134
      %v4136 = vrot.slane %v4134, 2
      %v4137 = vrot.slane %v4043, 7
      %v4138 = vsel %vm4119, %v4136, %v4137
      %v4139 = vrot.slane %v4137, 2
      %v4140 = vrot.slane %v4044, 7
      %v4141 = vsel %vm4119, %v4139, %v4140
      %v4142 = vrot.slane %v4140, 2
      %v4143 = vrot.slane %v3991, 7
      %v4144 = vsel %vm4119, %v4142, %v4143
      %v4145 = vrot.slane %v4143, 2
      %v4146 = vrot.slane %v4045, 7
      %v4147 = vsel %vm4119, %v4145, %v4146
      %v4148 = vrot.slane %v4146, 2
      %v4149 = vrot.slane %v4046, 7
      %v4150 = vsel %vm4119, %v4148, %v4149
      %v4151 = vrot.slane %v4149, 2
      %v4152 = vrot.slane %v4047, 7
      %v4153 = vsel %vm4119, %v4151, %v4152
      %v4154 = vrot.slane %v4152, 2
      %v4155 = vrot.slane %v3992, 7
      %v4156 = vsel %vm4119, %v4154, %v4155
      %v4157 = vrot.slane %v4155, 2
      %v4158 = vrot.slane %v4048, 7
      %v4159 = vsel %vm4119, %v4157, %v4158
      %v4160 = vrot.slane %v4158, 2
      %v4161 = vrot.slane %v4049, 7
      %v4162 = vsel %vm4119, %v4160, %v4161
      %v4163 = vrot.slane %v4161, 2
      %v4164 = vrot.slane %v4050, 7
      %v4165 = vsel %vm4119, %v4163, %v4164
      %v4166 = vrot.slane %v4164, 2
      %v4167 = vrot.slane %v3993, 7
      %v4168 = vsel %vm4119, %v4166, %v4167
      %v4169 = vrot.slane %v4167, 2
      %v4170 = vrot.slane %v4051, 7
      %v4171 = vsel %vm4119, %v4169, %v4170
      %v4172 = vrot.slane %v4170, 2
      %v4173 = vrot.slane %v4052, 7
      %v4174 = vsel %vm4119, %v4172, %v4173
      %v4175 = vrot.slane %v4173, 2
      %v4176 = vrot.slane %v4053, 7
      %v4177 = vsel %vm4119, %v4175, %v4176
      %v4178 = vrot.slane %v4176, 2
      %v4179 = vrot.slane %v3994, 7
      %v4180 = vsel %vm4119, %v4178, %v4179
      %v4181 = vrot.slane %v4179, 2
      %v4182 = vrot.slane %v4054, 7
      %v4183 = vsel %vm4119, %v4181, %v4182
      %v4184 = vrot.slane %v4182, 2
      %v4185 = vrot.slane %v4055, 7
      %v4186 = vsel %vm4119, %v4184, %v4185
      %v4187 = vrot.slane %v4185, 2
      %v4188 = vrot.slane %v4056, 7
      %v4189 = vsel %vm4119, %v4187, %v4188
      %v4190 = vrot.slane %v4188, 2
      %v4191 = vrot.slane %v3995, 7
      %v4192 = vsel %vm4119, %v4190, %v4191
      %v4193 = vrot.slane %v4191, 2
      %v4194 = vrot.slane %v4057, 7
      %v4195 = vsel %vm4119, %v4193, %v4194
      %v4196 = vrot.slane %v4194, 2
      %v4197 = vrot.slane %v4058, 7
      %v4198 = vsel %vm4119, %v4196, %v4197
      %v4199 = vrot.slane %v4197, 2
      %v4200 = vrot.slane %v4059, 7
      %v4201 = vsel %vm4119, %v4199, %v4200
      %v4202 = vrot.slane %v4200, 2
      %v4203 = vrot.slane %v3996, 7
      %v4204 = vsel %vm4119, %v4202, %v4203
      %v4205 = vrot.slane %v4203, 2
      %v4206 = vrot.slane %v4060, 7
      %v4207 = vsel %vm4119, %v4205, %v4206
      %v4208 = vrot.slane %v4206, 2
      %v4209 = vrot.slane %v4061, 7
      %v4210 = vsel %vm4119, %v4208, %v4209
      %v4211 = vrot.slane %v4209, 2
      %v4212 = vrot.slane %v4062, 7
      %v4213 = vsel %vm4119, %v4211, %v4212
      %v4214 = vrot.slane %v4212, 2
      %v4215 = vrot.slane %v3997, 7
      %v4216 = vsel %vm4119, %v4214, %v4215
      %v4217 = vrot.slane %v4215, 2
      %v4218 = vrot.slane %v4063, 7
      %v4219 = vsel %vm4119, %v4217, %v4218
      %v4220 = vrot.slane %v4218, 2
      %v4221 = vrot.slane %v4064, 7
      %v4222 = vsel %vm4119, %v4220, %v4221
      %v4223 = vrot.slane %v4221, 2
      %v4224 = vrot.slane %v4065, 7
      %v4225 = vsel %vm4119, %v4223, %v4224
      %v4226 = vrot.slane %v4224, 2
      %v4227 = vrot.slane %v3998, 7
      %v4228 = vsel %vm4119, %v4226, %v4227
      %v4229 = vrot.slane %v4227, 2
      %v4230 = vrot.slane %v4066, 7
      %v4231 = vsel %vm4119, %v4229, %v4230
      %v4232 = vrot.slane %v4230, 2
      %v4233 = vrot.slane %v4067, 7
      %v4234 = vsel %vm4119, %v4232, %v4233
      %v4235 = vrot.slane %v4233, 2
      %v4236 = vrot.slane %v4068, 7
      %v4237 = vsel %vm4119, %v4235, %v4236
      %v4238 = vrot.slane %v4236, 2
      %v4239 = vrot.slane %v3999, 7
      %v4240 = vsel %vm4119, %v4238, %v4239
      %v4241 = vrot.slane %v4239, 2
      %v4242 = vrot.slane %v4069, 7
      %v4243 = vsel %vm4119, %v4241, %v4242
      %v4244 = vrot.slane %v4242, 2
      %v4245 = vrot.slane %v4070, 7
      %v4246 = vsel %vm4119, %v4244, %v4245
      %v4247 = vrot.slane %v4245, 2
      %v4248 = vrot.slane %v4071, 7
      %v4249 = vsel %vm4119, %v4247, %v4248
      %v4250 = vrot.slane %v4248, 2
      %v4251 = vrot.slane %v4000, 7
      %v4252 = vsel %vm4119, %v4250, %v4251
      %v4253 = vrot.slane %v4251, 2
      %v4254 = vrot.slane %v4072, 7
      %v4255 = vsel %vm4119, %v4253, %v4254
      %v4256 = vrot.slane %v4254, 2
      %v4257 = vrot.slane %v4073, 7
      %v4258 = vsel %vm4119, %v4256, %v4257
      %v4259 = vrot.slane %v4257, 2
      %v4260 = vrot.slane %v4074, 7
      %v4261 = vsel %vm4119, %v4259, %v4260
      %v4262 = vrot.slane %v4260, 2
      %v4263 = vrot.slane %v4001, 7
      %v4264 = vsel %vm4119, %v4262, %v4263
      %v4265 = vrot.slane %v4263, 2
      %v4266 = vrot.slane %v4075, 7
      %v4267 = vsel %vm4119, %v4265, %v4266
      %v4268 = vrot.slane %v4266, 2
      %v4269 = vrot.slane %v4076, 7
      %v4270 = vsel %vm4119, %v4268, %v4269
      %v4271 = vrot.slane %v4269, 2
      %v4272 = vrot.slane %v4077, 7
      %v4273 = vsel %vm4119, %v4271, %v4272
      %v4274 = vrot.slane %v4272, 2
      %v4275 = vrot.slane %v4002, 7
      %v4276 = vsel %vm4119, %v4274, %v4275
      %v4277 = vrot.slane %v4275, 2
      %v4278 = vrot.slane %v4078, 7
      %v4279 = vsel %vm4119, %v4277, %v4278
      %v4280 = vrot.slane %v4278, 2
      %v4281 = vrot.slane %v4079, 7
      %v4282 = vsel %vm4119, %v4280, %v4281
      %v4283 = vrot.slane %v4281, 2
      %v4284 = vrot.slane %v4080, 7
      %v4285 = vsel %vm4119, %v4283, %v4284
      %v4286 = vrot.slane %v4284, 2
      %v4287 = vrot.slane %v4003, 7
      %v4288 = vsel %vm4119, %v4286, %v4287
      %v4289 = vrot.slane %v4287, 2
      %v4290 = vrot.slane %v4081, 7
      %v4291 = vsel %vm4119, %v4289, %v4290
      %v4292 = vrot.slane %v4290, 2
      %v4293 = vrot.slane %v4082, 7
      %v4294 = vsel %vm4119, %v4292, %v4293
      %v4295 = vrot.slane %v4293, 2
      %v4296 = vrot.slane %v4083, 7
      %v4297 = vsel %vm4119, %v4295, %v4296
      %v4298 = vrot.slane %v4296, 2
      %v4299 = vrot.slane %v4004, 7
      %v4300 = vsel %vm4119, %v4298, %v4299
      %v4301 = vrot.slane %v4299, 2
      %v4302 = vrot.slane %v4084, 7
      %v4303 = vsel %vm4119, %v4301, %v4302
      %v4304 = vrot.slane %v4302, 2
      %v4305 = vrot.slane %v4085, 7
      %v4306 = vsel %vm4119, %v4304, %v4305
      %v4307 = vrot.slane %v4305, 2
      %v4308 = vrot.slane %v4086, 7
      %v4309 = vsel %vm4119, %v4307, %v4308
      %v4310 = vrot.slane %v4308, 2
      %v4311 = vrot.slane %v4005, 7
      %v4312 = vsel %vm4119, %v4310, %v4311
      %v4313 = vrot.slane %v4311, 2
      %v4314 = vrot.slane %v4087, 7
      %v4315 = vsel %vm4119, %v4313, %v4314
      %v4316 = vrot.slane %v4314, 2
      %v4317 = vrot.slane %v4088, 7
      %v4318 = vsel %vm4119, %v4316, %v4317
      %v4319 = vrot.slane %v4317, 2
      %v4320 = vrot.slane %v4089, 7
      %v4321 = vsel %vm4119, %v4319, %v4320
      %v4322 = vrot.slane %v4320, 2
      %v4323 = vrot.slane %v4006, 7
      %v4324 = vsel %vm4119, %v4322, %v4323
      %v4325 = vrot.slane %v4323, 2
      %v4326 = vrot.slane %v4090, 7
      %v4327 = vsel %vm4119, %v4325, %v4326
      %v4328 = vrot.slane %v4326, 2
      %v4329 = vrot.slane %v4091, 7
      %v4330 = vsel %vm4119, %v4328, %v4329
      %v4331 = vrot.slane %v4329, 2
      %v4332 = vrot.slane %v4092, 7
      %v4333 = vsel %vm4119, %v4331, %v4332
      %v4334 = vrot.slane %v4332, 2
      %v4335 = vrot.slane %v4007, 7
      %v4336 = vsel %vm4119, %v4334, %v4335
      %v4337 = vrot.slane %v4335, 2
      %v4338 = vrot.slane %v4093, 7
      %v4339 = vsel %vm4119, %v4337, %v4338
      %v4340 = vrot.slane %v4338, 2
      %v4341 = vrot.slane %v4094, 7
      %v4342 = vsel %vm4119, %v4340, %v4341
      %v4343 = vrot.slane %v4341, 2
      %v4344 = vrot.slane %v4095, 7
      %v4345 = vsel %vm4119, %v4343, %v4344
      %v4346 = vrot.slane %v4344, 2
      %v4347 = vrot.slane %v4008, 7
      %v4348 = vsel %vm4119, %v4346, %v4347
      %v4349 = vrot.slane %v4347, 2
      %v4350 = vrot.slane %v4096, 7
      %v4351 = vsel %vm4119, %v4349, %v4350
      %v4352 = vrot.slane %v4350, 2
      %v4353 = vrot.slane %v4097, 7
      %v4354 = vsel %vm4119, %v4352, %v4353
      %v4355 = vrot.slane %v4353, 2
      %v4356 = vrot.slane %v4098, 7
      %v4357 = vsel %vm4119, %v4355, %v4356
      %v4358 = vrot.slane %v4356, 2
      %v4359 = vrot.slane %v4009, 7
      %v4360 = vsel %vm4119, %v4358, %v4359
      %v4361 = vrot.slane %v4359, 2
      %v4362 = vrot.slane %v4099, 7
      %v4363 = vsel %vm4119, %v4361, %v4362
      %v4364 = vrot.slane %v4362, 2
      %v4365 = vrot.slane %v4100, 7
      %v4366 = vsel %vm4119, %v4364, %v4365
      %v4367 = vrot.slane %v4365, 2
      %v4368 = vrot.slane %v4101, 7
      %v4369 = vsel %vm4119, %v4367, %v4368
      %v4370 = vrot.slane %v4368, 2
      %v4371 = vrot.slane %v4010, 7
      %v4372 = vsel %vm4119, %v4370, %v4371
      %v4373 = vrot.slane %v4371, 2
      %v4374 = vrot.slane %v4102, 7
      %v4375 = vsel %vm4119, %v4373, %v4374
      %v4376 = vrot.slane %v4374, 2
      %v4377 = vrot.slane %v4103, 7
      %v4378 = vsel %vm4119, %v4376, %v4377
      %v4379 = vrot.slane %v4377, 2
      %v4380 = vrot.slane %v4104, 7
      %v4381 = vsel %vm4119, %v4379, %v4380
      %v4382 = vrot.slane %v4380, 2
      %v4383 = vrot.slane %v4011, 7
      %v4384 = vsel %vm4119, %v4382, %v4383
      %v4385 = vrot.slane %v4383, 2
      %v4386 = vrot.slane %v4105, 7
      %v4387 = vsel %vm4119, %v4385, %v4386
      %v4388 = vrot.slane %v4386, 2
      %v4389 = vrot.slane %v4106, 7
      %v4390 = vsel %vm4119, %v4388, %v4389
      %v4391 = vrot.slane %v4389, 2
      %v4392 = vrot.slane %v4107, 7
      %v4393 = vsel %vm4119, %v4391, %v4392
      %v4394 = vrot.slane %v4392, 2
      %v4395 = vrot.slane %v4012, 7
      %v4396 = vsel %vm4119, %v4394, %v4395
      %v4397 = vrot.slane %v4395, 2
      %v4398 = vrot.slane %v4108, 7
      %v4399 = vsel %vm4119, %v4397, %v4398
      %v4400 = vrot.slane %v4398, 2
      %v4401 = vrot.slane %v4109, 7
      %v4402 = vsel %vm4119, %v4400, %v4401
      %v4403 = vrot.slane %v4401, 2
      %v4404 = vrot.slane %v4110, 7
      %v4405 = vsel %vm4119, %v4403, %v4404
      %v4406 = vrot.slane %v4404, 2
      %v4407 = vrot.slane %v4013, 7
      %v4408 = vsel %vm4119, %v4406, %v4407
      %v4409 = vrot.slane %v4407, 2
      %v4410 = vrot.slane %v4111, 7
      %v4411 = vsel %vm4119, %v4409, %v4410
      %v4412 = vrot.slane %v4410, 2
      %v4413 = vrot.slane %v4112, 7
      %v4414 = vsel %vm4119, %v4412, %v4413
      %4415 = vst [vmem:[#allocation1] ss:$4 sm:$0xff] %v4123
      %s4416 = scalar_lea.vmem [#allocation1], 1
      %4417 = vst [vmem:[%s4416] ss:$4 sm:$0xff] %v4126
      %s4418 = scalar_lea.vmem [#allocation1], 2
      %4419 = vst [vmem:[%s4418] ss:$4 sm:$0xff] %v4129
      %s4420 = scalar_lea.vmem [#allocation1], 3
      %4421 = vst [vmem:[%s4420] ss:$4 sm:$0xff] %v4132
      %s4422 = scalar_lea.vmem [#allocation1], 32
      %4423 = vst [vmem:[%s4422] ss:$4 sm:$0xff] %v4135
      %s4424 = scalar_lea.vmem [#allocation1], 33
      %4425 = vst [vmem:[%s4424] ss:$4 sm:$0xff] %v4138
      %s4426 = scalar_lea.vmem [#allocation1], 34
      %4427 = vst [vmem:[%s4426] ss:$4 sm:$0xff] %v4141
      %v4428 = vld.sshfl [vmem:[#allocation1] sm:$0xff pattern:$0x73625140]
      %v4429 = vld.sshfl [vmem:[#allocation1 + $0x20] sm:$0xff pattern:$0x73625140]
      %4430 = vst [vmem:[#allocation1] ss:$4 sm:$0xff] %v4144
      %4431 = vst [vmem:[%s4416] ss:$4 sm:$0xff] %v4147
      %4432 = vst [vmem:[%s4418] ss:$4 sm:$0xff] %v4150
      %4433 = vst [vmem:[%s4420] ss:$4 sm:$0xff] %v4153
      %4434 = vst [vmem:[%s4422] ss:$4 sm:$0xff] %v4156
      %4435 = vst [vmem:[%s4424] ss:$4 sm:$0xff] %v4159
      %4436 = vst [vmem:[%s4426] ss:$4 sm:$0xff] %v4162
      %v4437 = vld.sshfl [vmem:[#allocation1] sm:$0xff pattern:$0x73625140]
      %v4438 = vld.sshfl [vmem:[#allocation1 + $0x20] sm:$0xff pattern:$0x73625140]
      %4439 = vst [vmem:[#allocation1] ss:$4 sm:$0xff] %v4165
      %4440 = vst [vmem:[%s4416] ss:$4 sm:$0xff] %v4168
      %4441 = vst [vmem:[%s4418] ss:$4 sm:$0xff] %v4171
      %4442 = vst [vmem:[%s4420] ss:$4 sm:$0xff] %v4174
      %4443 = vst [vmem:[%s4422] ss:$4 sm:$0xff] %v4177
      %4444 = vst [vmem:[%s4424] ss:$4 sm:$0xff] %v4180
      %4445 = vst [vmem:[%s4426] ss:$4 sm:$0xff] %v4183
      %v4446 = vld.sshfl [vmem:[#allocation1] sm:$0xff pattern:$0x73625140]
      %v4447 = vld.sshfl [vmem:[#allocation1 + $0x20] sm:$0xff pattern:$0x73625140]
      %4448 = vst [vmem:[#allocation1] ss:$4 sm:$0xff] %v4186
      %4449 = vst [vmem:[%s4416] ss:$4 sm:$0xff] %v4189
      %4450 = vst [vmem:[%s4418] ss:$4 sm:$0xff] %v4192
      %4451 = vst [vmem:[%s4420] ss:$4 sm:$0xff] %v4195
      %4452 = vst [vmem:[%s4422] ss:$4 sm:$0xff] %v4198
      %4453 = vst [vmem:[%s4424] ss:$4 sm:$0xff] %v4201
      %4454 = vst [vmem:[%s4426] ss:$4 sm:$0xff] %v4204
      %v4455 = vld.sshfl [vmem:[#allocation1] sm:$0xff pattern:$0x73625140]
      %v4456 = vld.sshfl [vmem:[#allocation1 + $0x20] sm:$0xff pattern:$0x73625140]
      %4457 = vst [vmem:[#allocation1] ss:$4 sm:$0xff] %v4207
      %4458 = vst [vmem:[%s4416] ss:$4 sm:$0xff] %v4210
      %4459 = vst [vmem:[%s4418] ss:$4 sm:$0xff] %v4213
      %4460 = vst [vmem:[%s4420] ss:$4 sm:$0xff] %v4216
      %4461 = vst [vmem:[%s4422] ss:$4 sm:$0xff] %v4219
      %4462 = vst [vmem:[%s4424] ss:$4 sm:$0xff] %v4222
      %4463 = vst [vmem:[%s4426] ss:$4 sm:$0xff] %v4225
      %v4464 = vld.sshfl [vmem:[#allocation1] sm:$0xff pattern:$0x73625140]
      %v4465 = vld.sshfl [vmem:[#allocation1 + $0x20] sm:$0xff pattern:$0x73625140]
      %4466 = vst [vmem:[#allocation1] ss:$4 sm:$0xff] %v4228
      %4467 = vst [vmem:[%s4416] ss:$4 sm:$0xff] %v4231
      %4468 = vst [vmem:[%s4418] ss:$4 sm:$0xff] %v4234
      %4469 = vst [vmem:[%s4420] ss:$4 sm:$0xff] %v4237
      %4470 = vst [vmem:[%s4422] ss:$4 sm:$0xff] %v4240
      %4471 = vst [vmem:[%s4424] ss:$4 sm:$0xff] %v4243
      %4472 = vst [vmem:[%s4426] ss:$4 sm:$0xff] %v4246
      %v4473 = vld.sshfl [vmem:[#allocation1] sm:$0xff pattern:$0x73625140]
      %v4474 = vld.sshfl [vmem:[#allocation1 + $0x20] sm:$0xff pattern:$0x73625140]
      %4475 = vst [vmem:[#allocation1] ss:$4 sm:$0xff] %v4249
      %4476 = vst [vmem:[%s4416] ss:$4 sm:$0xff] %v4252
      %4477 = vst [vmem:[%s4418] ss:$4 sm:$0xff] %v4255
      %4478 = vst [vmem:[%s4420] ss:$4 sm:$0xff] %v4258
      %4479 = vst [vmem:[%s4422] ss:$4 sm:$0xff] %v4261
      %4480 = vst [vmem:[%s4424] ss:$4 sm:$0xff] %v4264
      %4481 = vst [vmem:[%s4426] ss:$4 sm:$0xff] %v4267
      %v4482 = vld.sshfl [vmem:[#allocation1] sm:$0xff pattern:$0x73625140]
      %v4483 = vld.sshfl [vmem:[#allocation1 + $0x20] sm:$0xff pattern:$0x73625140]
      %4484 = vst [vmem:[#allocation1] ss:$4 sm:$0xff] %v4270
      %4485 = vst [vmem:[%s4416] ss:$4 sm:$0xff] %v4273
      %4486 = vst [vmem:[%s4418] ss:$4 sm:$0xff] %v4276
      %4487 = vst [vmem:[%s4420] ss:$4 sm:$0xff] %v4279
      %4488 = vst [vmem:[%s4422] ss:$4 sm:$0xff] %v4282
      %4489 = vst [vmem:[%s4424] ss:$4 sm:$0xff] %v4285
      %4490 = vst [vmem:[%s4426] ss:$4 sm:$0xff] %v4288
      %v4491 = vld.sshfl [vmem:[#allocation1] sm:$0xff pattern:$0x73625140]
      %v4492 = vld.sshfl [vmem:[#allocation1 + $0x20] sm:$0xff pattern:$0x73625140]
      %4493 = vst [vmem:[#allocation1] ss:$4 sm:$0xff] %v4291
      %4494 = vst [vmem:[%s4416] ss:$4 sm:$0xff] %v4294
      %4495 = vst [vmem:[%s4418] ss:$4 sm:$0xff] %v4297
      %4496 = vst [vmem:[%s4420] ss:$4 sm:$0xff] %v4300
      %4497 = vst [vmem:[%s4422] ss:$4 sm:$0xff] %v4303
      %4498 = vst [vmem:[%s4424] ss:$4 sm:$0xff] %v4306
      %4499 = vst [vmem:[%s4426] ss:$4 sm:$0xff] %v4309
      %v4500 = vld.sshfl [vmem:[#allocation1] sm:$0xff pattern:$0x73625140]
      %v4501 = vld.sshfl [vmem:[#allocation1 + $0x20] sm:$0xff pattern:$0x73625140]
      %4502 = vst [vmem:[#allocation1] ss:$4 sm:$0xff] %v4312
      %4503 = vst [vmem:[%s4416] ss:$4 sm:$0xff] %v4315
      %4504 = vst [vmem:[%s4418] ss:$4 sm:$0xff] %v4318
      %4505 = vst [vmem:[%s4420] ss:$4 sm:$0xff] %v4321
      %4506 = vst [vmem:[%s4422] ss:$4 sm:$0xff] %v4324
      %4507 = vst [vmem:[%s4424] ss:$4 sm:$0xff] %v4327
      %4508 = vst [vmem:[%s4426] ss:$4 sm:$0xff] %v4330
      %v4509 = vld.sshfl [vmem:[#allocation1] sm:$0xff pattern:$0x73625140]
      %v4510 = vld.sshfl [vmem:[#allocation1 + $0x20] sm:$0xff pattern:$0x73625140]
      %4511 = vst [vmem:[#allocation1] ss:$4 sm:$0xff] %v4333
      %4512 = vst [vmem:[%s4416] ss:$4 sm:$0xff] %v4336
      %4513 = vst [vmem:[%s4418] ss:$4 sm:$0xff] %v4339
      %4514 = vst [vmem:[%s4420] ss:$4 sm:$0xff] %v4342
      %4515 = vst [vmem:[%s4422] ss:$4 sm:$0xff] %v4345
      %4516 = vst [vmem:[%s4424] ss:$4 sm:$0xff] %v4348
      %4517 = vst [vmem:[%s4426] ss:$4 sm:$0xff] %v4351
      %v4518 = vld.sshfl [vmem:[#allocation1] sm:$0xff pattern:$0x73625140]
      %v4519 = vld.sshfl [vmem:[#allocation1 + $0x20] sm:$0xff pattern:$0x73625140]
      %4520 = vst [vmem:[#allocation1] ss:$4 sm:$0xff] %v4354
      %4521 = vst [vmem:[%s4416] ss:$4 sm:$0xff] %v4357
      %4522 = vst [vmem:[%s4418] ss:$4 sm:$0xff] %v4360
      %4523 = vst [vmem:[%s4420] ss:$4 sm:$0xff] %v4363
      %4524 = vst [vmem:[%s4422] ss:$4 sm:$0xff] %v4366
      %4525 = vst [vmem:[%s4424] ss:$4 sm:$0xff] %v4369
      %4526 = vst [vmem:[%s4426] ss:$4 sm:$0xff] %v4372
      %v4527 = vld.sshfl [vmem:[#allocation1] sm:$0xff pattern:$0x73625140]
      %v4528 = vld.sshfl [vmem:[#allocation1 + $0x20] sm:$0xff pattern:$0x73625140]
      %4529 = vst [vmem:[#allocation1] ss:$4 sm:$0xff] %v4375
      %4530 = vst [vmem:[%s4416] ss:$4 sm:$0xff] %v4378
      %4531 = vst [vmem:[%s4418] ss:$4 sm:$0xff] %v4381
      %4532 = vst [vmem:[%s4420] ss:$4 sm:$0xff] %v4384
      %4533 = vst [vmem:[%s4422] ss:$4 sm:$0xff] %v4387
      %4534 = vst [vmem:[%s4424] ss:$4 sm:$0xff] %v4390
      %4535 = vst [vmem:[%s4426] ss:$4 sm:$0xff] %v4393
      %v4536 = vld.sshfl [vmem:[#allocation1] sm:$0xff pattern:$0x73625140]
      %v4537 = vld.sshfl [vmem:[#allocation1 + $0x20] sm:$0xff pattern:$0x73625140]
      %4538 = vst [vmem:[#allocation1] ss:$4 sm:$0xff] %v4396
      %4539 = vst [vmem:[%s4416] ss:$4 sm:$0xff] %v4399
      %4540 = vst [vmem:[%s4418] ss:$4 sm:$0xff] %v4402
      %4541 = vst [vmem:[%s4420] ss:$4 sm:$0xff] %v4405
      %4542 = vst [vmem:[%s4422] ss:$4 sm:$0xff] %v4408
      %4543 = vst [vmem:[%s4424] ss:$4 sm:$0xff] %v4411
      %4544 = vst [vmem:[%s4426] ss:$4 sm:$0xff] %v4414
      %v4545 = vld.sshfl [vmem:[#allocation1] sm:$0xff pattern:$0x73625140]
      %v4546 = vld.sshfl [vmem:[#allocation1 + $0x20] sm:$0xff pattern:$0x73625140]
      %vm4575 = vcmask 1045504
      %v4576 = vsel %vm4575, %v4429, 0.0
      %v4577 = vsel %vm4575, %v4438, 0.0
      %v4578 = vsel %vm4575, %v4447, 0.0
      %v4579 = vsel %vm4575, %v4456, 0.0
      %v4580 = vsel %vm4575, %v4465, 0.0
      %v4581 = vsel %vm4575, %v4474, 0.0
      %v4582 = vsel %vm4575, %v4483, 0.0
      %v4583 = vsel %vm4575, %v4492, 0.0
      %v4584 = vsel %vm4575, %v4501, 0.0
      %v4585 = vsel %vm4575, %v4510, 0.0
      %v4586 = vsel %vm4575, %v4519, 0.0
      %v4587 = vsel %vm4575, %v4528, 0.0
      %v4588 = vsel %vm4575, %v4537, 0.0
      %v4589 = vsel %vm4575, %v4546, 0.0
      %vm4590 = vcmask 195584
      %4591 = vst.msk [vmem:[#allocation2] sm:$0xff] %vm4590, 0.0
      %4592 = vst.msk [vmem:[#allocation2 + $0x8] sm:$0xff] %vm4590, 0.0
      %4593 = vst.msk [vmem:[#allocation2 + $0x10] sm:$0xff] %vm4590, 0.0
      %4594 = vst.msk [vmem:[#allocation2 + $0x18] sm:$0xff] %vm4590, 0.0
      %4595 = vst.msk [vmem:[#allocation2 + $0x20] sm:$0xff] %vm4590, 0.0
      %4596 = vst.msk [vmem:[#allocation2 + $0x28] sm:$0xff] %vm4590, 0.0
      %4597 = vst.msk [vmem:[#allocation2 + $0x30] sm:$0xff] %vm4590, 0.0
      %4598 = vst.msk [vmem:[#allocation2 + $0x38] sm:$0xff] %vm4590, 0.0
      %4599 = vst.msk [vmem:[#allocation2 + $0x40] sm:$0xff] %vm4590, 0.0
      %4600 = vst.msk [vmem:[#allocation2 + $0x48] sm:$0xff] %vm4590, 0.0
      %4601 = vst.msk [vmem:[#allocation2 + $0x50] sm:$0xff] %vm4590, 0.0
      %4602 = vst.msk [vmem:[#allocation2 + $0x58] sm:$0xff] %vm4590, 0.0
      %4603 = vst.msk [vmem:[#allocation2 + $0x60] sm:$0xff] %vm4590, 0.0
      %4604 = vst.msk [vmem:[#allocation2 + $0x68] sm:$0xff] %vm4590, 0.0
      %4605 = vst.msk [vmem:[#allocation2 + $0x70] sm:$0xff] %vm4590, 0.0
      %4606 = vst.msk [vmem:[#allocation2 + $0x78] sm:$0xff] %vm4590, 0.0
      %4607 = vst.msk [vmem:[#allocation2 + $0x80] sm:$0xff] %vm4590, 0.0
      %4608 = vst.msk [vmem:[#allocation2 + $0x88] sm:$0xff] %vm4590, 0.0
      %4609 = vst.msk [vmem:[#allocation2 + $0x90] sm:$0xff] %vm4590, 0.0
      %4610 = vst.msk [vmem:[#allocation2 + $0x98] sm:$0xff] %vm4590, 0.0
      %4611 = vst.msk [vmem:[#allocation2 + $0xa0] sm:$0xff] %vm4590, 0.0
      %4612 = vst.msk [vmem:[#allocation2 + $0xa8] sm:$0xff] %vm4590, 0.0
      %4613 = vst.msk [vmem:[#allocation2 + $0xb0] sm:$0xff] %vm4590, 0.0
      %4614 = vst.msk [vmem:[#allocation2 + $0xb8] sm:$0xff] %vm4590, 0.0
      %4615 = vst.msk [vmem:[#allocation2 + $0xc0] sm:$0xff] %vm4590, 0.0
      %4616 = vst.msk [vmem:[#allocation2 + $0xc8] sm:$0xff] %vm4590, 0.0
      %4617 = vst.msk [vmem:[#allocation2 + $0xd0] sm:$0xff] %vm4590, 0.0
      %4618 = vst.msk [vmem:[#allocation2 + $0xd8] sm:$0xff] %vm4590, 0.0
      %4619 = vst.msk [vmem:[#allocation2 + $0xe0] sm:$0xff] %vm4590, 0.0
      %4620 = vst.msk [vmem:[#allocation2 + $0xe8] sm:$0xff] %vm4590, 0.0
      %4621 = vst.msk [vmem:[#allocation2 + $0xf0] sm:$0xff] %vm4590, 0.0
      %4622 = vst.msk [vmem:[#allocation2 + $0xf8] sm:$0xff] %vm4590, 0.0
      %4623 = vst.msk [vmem:[#allocation2 + $0x100] sm:$0xff] %vm4590, 0.0
      %4624 = vst.msk [vmem:[#allocation2 + $0x108] sm:$0xff] %vm4590, 0.0
      %4625 = vst.msk [vmem:[#allocation2 + $0x18] sm:$0xff] %vm4590, %v4428
      %4626 = vst.msk [vmem:[#allocation2 + $0x20] sm:$0xff] %vm4590, %v4576
      %4627 = vst.msk [vmem:[#allocation2 + $0x28] sm:$0xff] %vm4590, %v4437
      %4628 = vst.msk [vmem:[#allocation2 + $0x30] sm:$0xff] %vm4590, %v4577
      %4629 = vst.msk [vmem:[#allocation2 + $0x38] sm:$0xff] %vm4590, %v4446
      %4630 = vst.msk [vmem:[#allocation2 + $0x40] sm:$0xff] %vm4590, %v4578
      %4631 = vst.msk [vmem:[#allocation2 + $0x48] sm:$0xff] %vm4590, %v4455
      %4632 = vst.msk [vmem:[#allocation2 + $0x50] sm:$0xff] %vm4590, %v4579
      %4633 = vst.msk [vmem:[#allocation2 + $0x58] sm:$0xff] %vm4590, %v4464
      %4634 = vst.msk [vmem:[#allocation2 + $0x60] sm:$0xff] %vm4590, %v4580
      %4635 = vst.msk [vmem:[#allocation2 + $0x68] sm:$0xff] %vm4590, %v4473
      %4636 = vst.msk [vmem:[#allocation2 + $0x70] sm:$0xff] %vm4590, %v4581
      %4637 = vst.msk [vmem:[#allocation2 + $0x78] sm:$0xff] %vm4590, %v4482
      %4638 = vst.msk [vmem:[#allocation2 + $0x80] sm:$0xff] %vm4590, %v4582
      %4639 = vst.msk [vmem:[#allocation2 + $0x88] sm:$0xff] %vm4590, %v4491
      %4640 = vst.msk [vmem:[#allocation2 + $0x90] sm:$0xff] %vm4590, %v4583
      %4641 = vst.msk [vmem:[#allocation2 + $0x98] sm:$0xff] %vm4590, %v4500
      %4642 = vst.msk [vmem:[#allocation2 + $0xa0] sm:$0xff] %vm4590, %v4584
      %4643 = vst.msk [vmem:[#allocation2 + $0xa8] sm:$0xff] %vm4590, %v4509
      %4644 = vst.msk [vmem:[#allocation2 + $0xb0] sm:$0xff] %vm4590, %v4585
      %4645 = vst.msk [vmem:[#allocation2 + $0xb8] sm:$0xff] %vm4590, %v4518
      %4646 = vst.msk [vmem:[#allocation2 + $0xc0] sm:$0xff] %vm4590, %v4586
      %4647 = vst.msk [vmem:[#allocation2 + $0xc8] sm:$0xff] %vm4590, %v4527
      %4648 = vst.msk [vmem:[#allocation2 + $0xd0] sm:$0xff] %vm4590, %v4587
      %4649 = vst.msk [vmem:[#allocation2 + $0xd8] sm:$0xff] %vm4590, %v4536
      %4650 = vst.msk [vmem:[#allocation2 + $0xe0] sm:$0xff] %vm4590, %v4588
      %4651 = vst.msk [vmem:[#allocation2 + $0xe8] sm:$0xff] %vm4590, %v4545
      %4652 = vst.msk [vmem:[#allocation2 + $0xf0] sm:$0xff] %vm4590, %v4589
      %v4653 = vld [vmem:[#allocation2 + $0x7] sm:$0xff]
      %v4654 = vld [vmem:[#allocation2 + $0xf] sm:$0xff]
      %v4655 = vld [vmem:[#allocation2 + $0x17] sm:$0xff]
      %v4656 = vld [vmem:[#allocation2 + $0x1f] sm:$0xff]
      %v4657 = vld [vmem:[#allocation2 + $0x27] sm:$0xff]
      %v4658 = vld [vmem:[#allocation2 + $0x2f] sm:$0xff]
      %v4659 = vld [vmem:[#allocation2 + $0x37] sm:$0xff]
      %v4660 = vld [vmem:[#allocation2 + $0x3f] sm:$0xff]
      %v4661 = vld [vmem:[#allocation2 + $0x47] sm:$0xff]
      %v4662 = vld [vmem:[#allocation2 + $0x4f] sm:$0xff]
      %v4663 = vld [vmem:[#allocation2 + $0x57] sm:$0xff]
      %v4664 = vld [vmem:[#allocation2 + $0x5f] sm:$0xff]
      %v4665 = vld [vmem:[#allocation2 + $0x67] sm:$0xff]
      %v4666 = vld [vmem:[#allocation2 + $0x6f] sm:$0xff]
      %v4667 = vld [vmem:[#allocation2 + $0x77] sm:$0xff]
      %v4668 = vld [vmem:[#allocation2 + $0x7f] sm:$0xff]
      %v4669 = vld [vmem:[#allocation2 + $0x87] sm:$0xff]
      %v4670 = vld [vmem:[#allocation2 + $0x8f] sm:$0xff]
      %v4671 = vld [vmem:[#allocation2 + $0x97] sm:$0xff]
      %v4672 = vld [vmem:[#allocation2 + $0x9f] sm:$0xff]
      %v4673 = vld [vmem:[#allocation2 + $0xa7] sm:$0xff]
      %v4674 = vld [vmem:[#allocation2 + $0xaf] sm:$0xff]
      %v4675 = vld [vmem:[#allocation2 + $0xb7] sm:$0xff]
      %v4676 = vld [vmem:[#allocation2 + $0xbf] sm:$0xff]
      %v4677 = vld [vmem:[#allocation2 + $0xc7] sm:$0xff]
      %v4678 = vld [vmem:[#allocation2 + $0xcf] sm:$0xff]
      %v4679 = vld [vmem:[#allocation2 + $0xd7] sm:$0xff]
      %v4680 = vld [vmem:[#allocation2 + $0xdf] sm:$0xff]
      %v4681 = vld [vmem:[%s3] sm:$0xff]
      %v4682 = vld [vmem:[%s3 + $0x8] sm:$0xff]
      %v4683 = vld [vmem:[%s3 + $0x10] sm:$0xff]
      %v4684 = vld [vmem:[#allocation2 + $0x8] sm:$0xff]
      %v4685 = vld [vmem:[#allocation2 + $0x10] sm:$0xff]
      %v4686 = vld [vmem:[#allocation2 + $0x18] sm:$0xff]
      %v4687 = vld [vmem:[#allocation2 + $0x20] sm:$0xff]
      %v4688 = vld [vmem:[#allocation2 + $0x28] sm:$0xff]
      %v4689 = vld [vmem:[#allocation2 + $0x30] sm:$0xff]
      %v4690 = vld [vmem:[#allocation2 + $0x38] sm:$0xff]
      %v4691 = vld [vmem:[#allocation2 + $0x40] sm:$0xff]
      %v4692 = vld [vmem:[#allocation2 + $0x48] sm:$0xff]
      %v4693 = vld [vmem:[#allocation2 + $0x50] sm:$0xff]
      %v4694 = vld [vmem:[#allocation2 + $0x58] sm:$0xff]
      %v4695 = vld [vmem:[#allocation2 + $0x60] sm:$0xff]
      %v4696 = vld [vmem:[#allocation2 + $0x68] sm:$0xff]
      %v4697 = vld [vmem:[#allocation2 + $0x70] sm:$0xff]
      %v4698 = vld [vmem:[#allocation2 + $0x78] sm:$0xff]
      %v4699 = vld [vmem:[#allocation2 + $0x80] sm:$0xff]
      %v4700 = vld [vmem:[#allocation2 + $0x88] sm:$0xff]
      %v4701 = vld [vmem:[#allocation2 + $0x90] sm:$0xff]
      %v4702 = vld [vmem:[#allocation2 + $0x98] sm:$0xff]
      %v4703 = vld [vmem:[#allocation2 + $0xa0] sm:$0xff]
      %v4704 = vld [vmem:[#allocation2 + $0xa8] sm:$0xff]
      %v4705 = vld [vmem:[#allocation2 + $0xb0] sm:$0xff]
      %v4706 = vld [vmem:[#allocation2 + $0xb8] sm:$0xff]
      %v4707 = vld [vmem:[#allocation2 + $0xc0] sm:$0xff]
      %v4708 = vld [vmem:[#allocation2 + $0xc8] sm:$0xff]
      %v4709 = vld [vmem:[#allocation2 + $0xd0] sm:$0xff]
      %v4710 = vld [vmem:[#allocation2 + $0xd8] sm:$0xff]
      %v4711 = vld [vmem:[#allocation2 + $0xe0] sm:$0xff]
      %v4712 = vld [vmem:[%s3 + $0x18] sm:$0xff]
      %v4713 = vld [vmem:[%s3 + $0x20] sm:$0xff]
      %v4714 = vld [vmem:[%s3 + $0x28] sm:$0xff]
      %v4716 = vsel %vm4590, %v4684, 0
      %v4719 = vsel %vm4590, %v4685, 0
      %v4722 = vsel %vm4590, %v4686, 0
      %v4725 = vsel %vm4590, %v4687, 0
      %v4728 = vsel %vm4590, %v4688, 0
      %v4731 = vsel %vm4590, %v4689, 0
      %v4734 = vsel %vm4590, %v4690, 0
      %v4737 = vsel %vm4590, %v4691, 0
      %v4740 = vsel %vm4590, %v4692, 0
      %v4743 = vsel %vm4590, %v4693, 0
      %v4746 = vsel %vm4590, %v4694, 0
      %v4749 = vsel %vm4590, %v4695, 0
      %v4752 = vsel %vm4590, %v4696, 0
      %v4755 = vsel %vm4590, %v4697, 0
      %v4758 = vsel %vm4590, %v4698, 0
      %v4761 = vsel %vm4590, %v4699, 0
      %v4764 = vsel %vm4590, %v4700, 0
      %v4767 = vsel %vm4590, %v4701, 0
      %v4770 = vsel %vm4590, %v4702, 0
      %v4773 = vsel %vm4590, %v4703, 0
      %v4776 = vsel %vm4590, %v4704, 0
      %v4779 = vsel %vm4590, %v4705, 0
      %v4782 = vsel %vm4590, %v4706, 0
      %v4785 = vsel %vm4590, %v4707, 0
      %v4788 = vsel %vm4590, %v4708, 0
      %v4791 = vsel %vm4590, %v4709, 0
      %v4794 = vsel %vm4590, %v4710, 0
      %v4797 = vsel %vm4590, %v4711, 0
      %4799 = vmatpush.msra.mxu0 0.0
      %4800 = vmatpush.msra.mxu0 0.0
      %4801 = vmatpush.msra.mxu0 0.0
      %4802 = vmatpush.msra.mxu0 0.0
      %4803 = vmatpush.msra.mxu0 0.0
      %4804 = vmatpush.msra.mxu0 0.0
      %4805 = vmatpush.msra.mxu0 0.0
      %4806 = vmatpush.msra.mxu0 0.0
      %4807 = vmatpush.msra.mxu0 0.0
      %4808 = vmatpush.msra.mxu0 0.0
      %4809 = vmatpush.msra.mxu0 0.0
      %4810 = vmatpush.msra.mxu0 0.0
      %4811 = vmatpush.msra.mxu0 0.0
      %4812 = vmatpush.msra.mxu0 %v4714
      %4813 = vmatpush.msra.mxu0 %v4713
      %4814 = vmatpush.msra.mxu0 %v4712
      %4815 = vmatmul.f32.gmra.mxu0 %v4716
      %v4816 = vpop.f32.mrf.mxu0
      %v4817 = vadd.f32 0.0, %v4816
      %4818 = vmatmul.f32.gmra.mxu0 %v4719
      %v4819 = vpop.f32.mrf.mxu0
      %v4820 = vadd.f32 0.0, %v4819
      %4821 = vmatmul.f32.gmra.mxu0 %v4722
      %v4822 = vpop.f32.mrf.mxu0
      %v4823 = vadd.f32 0.0, %v4822
      %4824 = vmatmul.f32.gmra.mxu0 %v4725
      %v4825 = vpop.f32.mrf.mxu0
      %v4826 = vadd.f32 0.0, %v4825
      %4827 = vmatmul.f32.gmra.mxu0 %v4728
      %v4828 = vpop.f32.mrf.mxu0
      %v4829 = vadd.f32 0.0, %v4828
      %4830 = vmatmul.f32.gmra.mxu0 %v4731
      %v4831 = vpop.f32.mrf.mxu0
      %v4832 = vadd.f32 0.0, %v4831
      %4833 = vmatmul.f32.gmra.mxu0 %v4734
      %v4834 = vpop.f32.mrf.mxu0
      %v4835 = vadd.f32 0.0, %v4834
      %4836 = vmatmul.f32.gmra.mxu0 %v4737
      %v4837 = vpop.f32.mrf.mxu0
      %v4838 = vadd.f32 0.0, %v4837
      %4839 = vmatmul.f32.gmra.mxu0 %v4740
      %v4840 = vpop.f32.mrf.mxu0
      %v4841 = vadd.f32 0.0, %v4840
      %4842 = vmatmul.f32.gmra.mxu0 %v4743
      %v4843 = vpop.f32.mrf.mxu0
      %v4844 = vadd.f32 0.0, %v4843
      %4845 = vmatmul.f32.gmra.mxu0 %v4746
      %v4846 = vpop.f32.mrf.mxu0
      %v4847 = vadd.f32 0.0, %v4846
      %4848 = vmatmul.f32.gmra.mxu0 %v4749
      %v4849 = vpop.f32.mrf.mxu0
      %v4850 = vadd.f32 0.0, %v4849
      %4851 = vmatmul.f32.gmra.mxu0 %v4752
      %v4852 = vpop.f32.mrf.mxu0
      %v4853 = vadd.f32 0.0, %v4852
      %4854 = vmatmul.f32.gmra.mxu0 %v4755
      %v4855 = vpop.f32.mrf.mxu0
      %v4856 = vadd.f32 0.0, %v4855
      %4857 = vmatmul.f32.gmra.mxu0 %v4758
      %v4858 = vpop.f32.mrf.mxu0
      %v4859 = vadd.f32 0.0, %v4858
      %4860 = vmatmul.f32.gmra.mxu0 %v4761
      %v4861 = vpop.f32.mrf.mxu0
      %v4862 = vadd.f32 0.0, %v4861
      %4863 = vmatmul.f32.gmra.mxu0 %v4764
      %v4864 = vpop.f32.mrf.mxu0
      %v4865 = vadd.f32 0.0, %v4864
      %4866 = vmatmul.f32.gmra.mxu0 %v4767
      %v4867 = vpop.f32.mrf.mxu0
      %v4868 = vadd.f32 0.0, %v4867
      %4869 = vmatmul.f32.gmra.mxu0 %v4770
      %v4870 = vpop.f32.mrf.mxu0
      %v4871 = vadd.f32 0.0, %v4870
      %4872 = vmatmul.f32.gmra.mxu0 %v4773
      %v4873 = vpop.f32.mrf.mxu0
      %v4874 = vadd.f32 0.0, %v4873
      %4875 = vmatmul.f32.gmra.mxu0 %v4776
      %v4876 = vpop.f32.mrf.mxu0
      %v4877 = vadd.f32 0.0, %v4876
      %4878 = vmatmul.f32.gmra.mxu0 %v4779
      %v4879 = vpop.f32.mrf.mxu0
      %v4880 = vadd.f32 0.0, %v4879
      %4881 = vmatmul.f32.gmra.mxu0 %v4782
      %v4882 = vpop.f32.mrf.mxu0
      %v4883 = vadd.f32 0.0, %v4882
      %4884 = vmatmul.f32.gmra.mxu0 %v4785
      %v4885 = vpop.f32.mrf.mxu0
      %v4886 = vadd.f32 0.0, %v4885
      %4887 = vmatmul.f32.gmra.mxu0 %v4788
      %v4888 = vpop.f32.mrf.mxu0
      %v4889 = vadd.f32 0.0, %v4888
      %4890 = vmatmul.f32.gmra.mxu0 %v4791
      %v4891 = vpop.f32.mrf.mxu0
      %v4892 = vadd.f32 0.0, %v4891
      %4893 = vmatmul.f32.gmra.mxu0 %v4794
      %v4894 = vpop.f32.mrf.mxu0
      %v4895 = vadd.f32 0.0, %v4894
      %4896 = vmatmul.f32.gmra.mxu0 %v4797
      %v4897 = vpop.f32.mrf.mxu0
      %v4898 = vadd.f32 0.0, %v4897
      %4899 = vdwg.mxu0
      %v4901 = vsel %vm4590, %v4653, 0
      %v4904 = vsel %vm4590, %v4654, 0
      %v4907 = vsel %vm4590, %v4655, 0
      %v4910 = vsel %vm4590, %v4656, 0
      %v4913 = vsel %vm4590, %v4657, 0
      %v4916 = vsel %vm4590, %v4658, 0
      %v4919 = vsel %vm4590, %v4659, 0
      %v4922 = vsel %vm4590, %v4660, 0
      %v4925 = vsel %vm4590, %v4661, 0
      %v4928 = vsel %vm4590, %v4662, 0
      %v4931 = vsel %vm4590, %v4663, 0
      %v4934 = vsel %vm4590, %v4664, 0
      %v4937 = vsel %vm4590, %v4665, 0
      %v4940 = vsel %vm4590, %v4666, 0
      %v4943 = vsel %vm4590, %v4667, 0
      %v4946 = vsel %vm4590, %v4668, 0
      %v4949 = vsel %vm4590, %v4669, 0
      %v4952 = vsel %vm4590, %v4670, 0
      %v4955 = vsel %vm4590, %v4671, 0
      %v4958 = vsel %vm4590, %v4672, 0
      %v4961 = vsel %vm4590, %v4673, 0
      %v4964 = vsel %vm4590, %v4674, 0
      %v4967 = vsel %vm4590, %v4675, 0
      %v4970 = vsel %vm4590, %v4676, 0
      %v4973 = vsel %vm4590, %v4677, 0
      %v4976 = vsel %vm4590, %v4678, 0
      %v4979 = vsel %vm4590, %v4679, 0
      %v4982 = vsel %vm4590, %v4680, 0
      %4984 = vmatpush.msra.mxu0 0.0
      %4985 = vmatpush.msra.mxu0 0.0
      %4986 = vmatpush.msra.mxu0 0.0
      %4987 = vmatpush.msra.mxu0 0.0
      %4988 = vmatpush.msra.mxu0 0.0
      %4989 = vmatpush.msra.mxu0 0.0
      %4990 = vmatpush.msra.mxu0 0.0
      %4991 = vmatpush.msra.mxu0 0.0
      %4992 = vmatpush.msra.mxu0 0.0
      %4993 = vmatpush.msra.mxu0 0.0
      %4994 = vmatpush.msra.mxu0 0.0
      %4995 = vmatpush.msra.mxu0 0.0
      %4996 = vmatpush.msra.mxu0 0.0
      %4997 = vmatpush.msra.mxu0 %v4683
      %4998 = vmatpush.msra.mxu0 %v4682
      %4999 = vmatpush.msra.mxu0 %v4681
      %5000 = vmatmul.f32.gmra.mxu0 %v4901
      %v5001 = vpop.f32.mrf.mxu0
      %v5002 = vadd.f32 %v4817, %v5001
      %5003 = vmatmul.f32.gmra.mxu0 %v4904
      %v5004 = vpop.f32.mrf.mxu0
      %v5005 = vadd.f32 %v4820, %v5004
      %5006 = vmatmul.f32.gmra.mxu0 %v4907
      %v5007 = vpop.f32.mrf.mxu0
      %v5008 = vadd.f32 %v4823, %v5007
      %5009 = vmatmul.f32.gmra.mxu0 %v4910
      %v5010 = vpop.f32.mrf.mxu0
      %v5011 = vadd.f32 %v4826, %v5010
      %5012 = vmatmul.f32.gmra.mxu0 %v4913
      %v5013 = vpop.f32.mrf.mxu0
      %v5014 = vadd.f32 %v4829, %v5013
      %5015 = vmatmul.f32.gmra.mxu0 %v4916
      %v5016 = vpop.f32.mrf.mxu0
      %v5017 = vadd.f32 %v4832, %v5016
      %5018 = vmatmul.f32.gmra.mxu0 %v4919
      %v5019 = vpop.f32.mrf.mxu0
      %v5020 = vadd.f32 %v4835, %v5019
      %5021 = vmatmul.f32.gmra.mxu0 %v4922
      %v5022 = vpop.f32.mrf.mxu0
      %v5023 = vadd.f32 %v4838, %v5022
      %5024 = vmatmul.f32.gmra.mxu0 %v4925
      %v5025 = vpop.f32.mrf.mxu0
      %v5026 = vadd.f32 %v4841, %v5025
      %5027 = vmatmul.f32.gmra.mxu0 %v4928
      %v5028 = vpop.f32.mrf.mxu0
      %v5029 = vadd.f32 %v4844, %v5028
      %5030 = vmatmul.f32.gmra.mxu0 %v4931
      %v5031 = vpop.f32.mrf.mxu0
      %v5032 = vadd.f32 %v4847, %v5031
      %5033 = vmatmul.f32.gmra.mxu0 %v4934
      %v5034 = vpop.f32.mrf.mxu0
      %v5035 = vadd.f32 %v4850, %v5034
      %5036 = vmatmul.f32.gmra.mxu0 %v4937
      %v5037 = vpop.f32.mrf.mxu0
      %v5038 = vadd.f32 %v4853, %v5037
      %5039 = vmatmul.f32.gmra.mxu0 %v4940
      %v5040 = vpop.f32.mrf.mxu0
      %v5041 = vadd.f32 %v4856, %v5040
      %5042 = vmatmul.f32.gmra.mxu0 %v4943
      %v5043 = vpop.f32.mrf.mxu0
      %v5044 = vadd.f32 %v4859, %v5043
      %5045 = vmatmul.f32.gmra.mxu0 %v4946
      %v5046 = vpop.f32.mrf.mxu0
      %v5047 = vadd.f32 %v4862, %v5046
      %5048 = vmatmul.f32.gmra.mxu0 %v4949
      %v5049 = vpop.f32.mrf.mxu0
      %v5050 = vadd.f32 %v4865, %v5049
      %5051 = vmatmul.f32.gmra.mxu0 %v4952
      %v5052 = vpop.f32.mrf.mxu0
      %v5053 = vadd.f32 %v4868, %v5052
      %5054 = vmatmul.f32.gmra.mxu0 %v4955
      %v5055 = vpop.f32.mrf.mxu0
      %v5056 = vadd.f32 %v4871, %v5055
      %5057 = vmatmul.f32.gmra.mxu0 %v4958
      %v5058 = vpop.f32.mrf.mxu0
      %v5059 = vadd.f32 %v4874, %v5058
      %5060 = vmatmul.f32.gmra.mxu0 %v4961
      %v5061 = vpop.f32.mrf.mxu0
      %v5062 = vadd.f32 %v4877, %v5061
      %5063 = vmatmul.f32.gmra.mxu0 %v4964
      %v5064 = vpop.f32.mrf.mxu0
      %v5065 = vadd.f32 %v4880, %v5064
      %5066 = vmatmul.f32.gmra.mxu0 %v4967
      %v5067 = vpop.f32.mrf.mxu0
      %v5068 = vadd.f32 %v4883, %v5067
      %5069 = vmatmul.f32.gmra.mxu0 %v4970
      %v5070 = vpop.f32.mrf.mxu0
      %v5071 = vadd.f32 %v4886, %v5070
      %5072 = vmatmul.f32.gmra.mxu0 %v4973
      %v5073 = vpop.f32.mrf.mxu0
      %v5074 = vadd.f32 %v4889, %v5073
      %5075 = vmatmul.f32.gmra.mxu0 %v4976
      %v5076 = vpop.f32.mrf.mxu0
      %v5077 = vadd.f32 %v4892, %v5076
      %5078 = vmatmul.f32.gmra.mxu0 %v4979
      %v5079 = vpop.f32.mrf.mxu0
      %v5080 = vadd.f32 %v4895, %v5079
      %5081 = vmatmul.f32.gmra.mxu0 %v4982
      %v5082 = vpop.f32.mrf.mxu0
      %v5083 = vadd.f32 %v4898, %v5082
      %5084 = vdwg.mxu0
      %v5085 = vld [vmem:[#allocation2 + $0x9] sm:$0xff]
      %v5086 = vld [vmem:[#allocation2 + $0x11] sm:$0xff]
      %v5087 = vld [vmem:[#allocation2 + $0x19] sm:$0xff]
      %v5088 = vld [vmem:[#allocation2 + $0x21] sm:$0xff]
      %v5089 = vld [vmem:[#allocation2 + $0x29] sm:$0xff]
      %v5090 = vld [vmem:[#allocation2 + $0x31] sm:$0xff]
      %v5091 = vld [vmem:[#allocation2 + $0x39] sm:$0xff]
      %v5092 = vld [vmem:[#allocation2 + $0x41] sm:$0xff]
      %v5093 = vld [vmem:[#allocation2 + $0x49] sm:$0xff]
      %v5094 = vld [vmem:[#allocation2 + $0x51] sm:$0xff]
      %v5095 = vld [vmem:[#allocation2 + $0x59] sm:$0xff]
      %v5096 = vld [vmem:[#allocation2 + $0x61] sm:$0xff]
      %v5097 = vld [vmem:[#allocation2 + $0x69] sm:$0xff]
      %v5098 = vld [vmem:[#allocation2 + $0x71] sm:$0xff]
      %v5099 = vld [vmem:[#allocation2 + $0x79] sm:$0xff]
      %v5100 = vld [vmem:[#allocation2 + $0x81] sm:$0xff]
      %v5101 = vld [vmem:[#allocation2 + $0x89] sm:$0xff]
      %v5102 = vld [vmem:[#allocation2 + $0x91] sm:$0xff]
      %v5103 = vld [vmem:[#allocation2 + $0x99] sm:$0xff]
      %v5104 = vld [vmem:[#allocation2 + $0xa1] sm:$0xff]
      %v5105 = vld [vmem:[#allocation2 + $0xa9] sm:$0xff]
      %v5106 = vld [vmem:[#allocation2 + $0xb1] sm:$0xff]
      %v5107 = vld [vmem:[#allocation2 + $0xb9] sm:$0xff]
      %v5108 = vld [vmem:[#allocation2 + $0xc1] sm:$0xff]
      %v5109 = vld [vmem:[#allocation2 + $0xc9] sm:$0xff]
      %v5110 = vld [vmem:[#allocation2 + $0xd1] sm:$0xff]
      %v5111 = vld [vmem:[#allocation2 + $0xd9] sm:$0xff]
      %v5112 = vld [vmem:[#allocation2 + $0xe1] sm:$0xff]
      %v5113 = vld [vmem:[%s3 + $0x30] sm:$0xff]
      %v5114 = vld [vmem:[%s3 + $0x38] sm:$0xff]
      %v5115 = vld [vmem:[%s3 + $0x40] sm:$0xff]
      %v5117 = vsel %vm4590, %v5085, 0
      %v5120 = vsel %vm4590, %v5086, 0
      %v5123 = vsel %vm4590, %v5087, 0
      %v5126 = vsel %vm4590, %v5088, 0
      %v5129 = vsel %vm4590, %v5089, 0
      %v5132 = vsel %vm4590, %v5090, 0
      %v5135 = vsel %vm4590, %v5091, 0
      %v5138 = vsel %vm4590, %v5092, 0
      %v5141 = vsel %vm4590, %v5093, 0
      %v5144 = vsel %vm4590, %v5094, 0
      %v5147 = vsel %vm4590, %v5095, 0
      %v5150 = vsel %vm4590, %v5096, 0
      %v5153 = vsel %vm4590, %v5097, 0
      %v5156 = vsel %vm4590, %v5098, 0
      %v5159 = vsel %vm4590, %v5099, 0
      %v5162 = vsel %vm4590, %v5100, 0
      %v5165 = vsel %vm4590, %v5101, 0
      %v5168 = vsel %vm4590, %v5102, 0
      %v5171 = vsel %vm4590, %v5103, 0
      %v5174 = vsel %vm4590, %v5104, 0
      %v5177 = vsel %vm4590, %v5105, 0
      %v5180 = vsel %vm4590, %v5106, 0
      %v5183 = vsel %vm4590, %v5107, 0
      %v5186 = vsel %vm4590, %v5108, 0
      %v5189 = vsel %vm4590, %v5109, 0
      %v5192 = vsel %vm4590, %v5110, 0
      %v5195 = vsel %vm4590, %v5111, 0
      %v5198 = vsel %vm4590, %v5112, 0
      %5200 = vmatpush.msra.mxu0 0.0
      %5201 = vmatpush.msra.mxu0 0.0
      %5202 = vmatpush.msra.mxu0 0.0
      %5203 = vmatpush.msra.mxu0 0.0
      %5204 = vmatpush.msra.mxu0 0.0
      %5205 = vmatpush.msra.mxu0 0.0
      %5206 = vmatpush.msra.mxu0 0.0
      %5207 = vmatpush.msra.mxu0 0.0
      %5208 = vmatpush.msra.mxu0 0.0
      %5209 = vmatpush.msra.mxu0 0.0
      %5210 = vmatpush.msra.mxu0 0.0
      %5211 = vmatpush.msra.mxu0 0.0
      %5212 = vmatpush.msra.mxu0 0.0
      %5213 = vmatpush.msra.mxu0 %v5115
      %5214 = vmatpush.msra.mxu0 %v5114
      %5215 = vmatpush.msra.mxu0 %v5113
      %5216 = vmatmul.f32.gmra.mxu0 %v5117
      %v5217 = vpop.f32.mrf.mxu0
      %v5218 = vadd.f32 0.0, %v5217
      %5219 = vmatmul.f32.gmra.mxu0 %v5120
      %v5220 = vpop.f32.mrf.mxu0
      %v5221 = vadd.f32 0.0, %v5220
      %5222 = vmatmul.f32.gmra.mxu0 %v5123
      %v5223 = vpop.f32.mrf.mxu0
      %v5224 = vadd.f32 0.0, %v5223
      %5225 = vmatmul.f32.gmra.mxu0 %v5126
      %v5226 = vpop.f32.mrf.mxu0
      %v5227 = vadd.f32 0.0, %v5226
      %5228 = vmatmul.f32.gmra.mxu0 %v5129
      %v5229 = vpop.f32.mrf.mxu0
      %v5230 = vadd.f32 0.0, %v5229
      %5231 = vmatmul.f32.gmra.mxu0 %v5132
      %v5232 = vpop.f32.mrf.mxu0
      %v5233 = vadd.f32 0.0, %v5232
      %5234 = vmatmul.f32.gmra.mxu0 %v5135
      %v5235 = vpop.f32.mrf.mxu0
      %v5236 = vadd.f32 0.0, %v5235
      %5237 = vmatmul.f32.gmra.mxu0 %v5138
      %v5238 = vpop.f32.mrf.mxu0
      %v5239 = vadd.f32 0.0, %v5238
      %5240 = vmatmul.f32.gmra.mxu0 %v5141
      %v5241 = vpop.f32.mrf.mxu0
      %v5242 = vadd.f32 0.0, %v5241
      %5243 = vmatmul.f32.gmra.mxu0 %v5144
      %v5244 = vpop.f32.mrf.mxu0
      %v5245 = vadd.f32 0.0, %v5244
      %5246 = vmatmul.f32.gmra.mxu0 %v5147
      %v5247 = vpop.f32.mrf.mxu0
      %v5248 = vadd.f32 0.0, %v5247
      %5249 = vmatmul.f32.gmra.mxu0 %v5150
      %v5250 = vpop.f32.mrf.mxu0
      %v5251 = vadd.f32 0.0, %v5250
      %5252 = vmatmul.f32.gmra.mxu0 %v5153
      %v5253 = vpop.f32.mrf.mxu0
      %v5254 = vadd.f32 0.0, %v5253
      %5255 = vmatmul.f32.gmra.mxu0 %v5156
      %v5256 = vpop.f32.mrf.mxu0
      %v5257 = vadd.f32 0.0, %v5256
      %5258 = vmatmul.f32.gmra.mxu0 %v5159
      %v5259 = vpop.f32.mrf.mxu0
      %v5260 = vadd.f32 0.0, %v5259
      %5261 = vmatmul.f32.gmra.mxu0 %v5162
      %v5262 = vpop.f32.mrf.mxu0
      %v5263 = vadd.f32 0.0, %v5262
      %5264 = vmatmul.f32.gmra.mxu0 %v5165
      %v5265 = vpop.f32.mrf.mxu0
      %v5266 = vadd.f32 0.0, %v5265
      %5267 = vmatmul.f32.gmra.mxu0 %v5168
      %v5268 = vpop.f32.mrf.mxu0
      %v5269 = vadd.f32 0.0, %v5268
      %5270 = vmatmul.f32.gmra.mxu0 %v5171
      %v5271 = vpop.f32.mrf.mxu0
      %v5272 = vadd.f32 0.0, %v5271
      %5273 = vmatmul.f32.gmra.mxu0 %v5174
      %v5274 = vpop.f32.mrf.mxu0
      %v5275 = vadd.f32 0.0, %v5274
      %5276 = vmatmul.f32.gmra.mxu0 %v5177
      %v5277 = vpop.f32.mrf.mxu0
      %v5278 = vadd.f32 0.0, %v5277
      %5279 = vmatmul.f32.gmra.mxu0 %v5180
      %v5280 = vpop.f32.mrf.mxu0
      %v5281 = vadd.f32 0.0, %v5280
      %5282 = vmatmul.f32.gmra.mxu0 %v5183
      %v5283 = vpop.f32.mrf.mxu0
      %v5284 = vadd.f32 0.0, %v5283
      %5285 = vmatmul.f32.gmra.mxu0 %v5186
      %v5286 = vpop.f32.mrf.mxu0
      %v5287 = vadd.f32 0.0, %v5286
      %5288 = vmatmul.f32.gmra.mxu0 %v5189
      %v5289 = vpop.f32.mrf.mxu0
      %v5290 = vadd.f32 0.0, %v5289
      %5291 = vmatmul.f32.gmra.mxu0 %v5192
      %v5292 = vpop.f32.mrf.mxu0
      %v5293 = vadd.f32 0.0, %v5292
      %5294 = vmatmul.f32.gmra.mxu0 %v5195
      %v5295 = vpop.f32.mrf.mxu0
      %v5296 = vadd.f32 0.0, %v5295
      %5297 = vmatmul.f32.gmra.mxu0 %v5198
      %v5298 = vpop.f32.mrf.mxu0
      %v5299 = vadd.f32 0.0, %v5298
      %5300 = vdwg.mxu0
      %v5301 = vadd.f32 %v5002, %v5218
      %v5302 = vadd.f32 %v5005, %v5221
      %v5303 = vadd.f32 %v5008, %v5224
      %v5304 = vadd.f32 %v5011, %v5227
      %v5305 = vadd.f32 %v5014, %v5230
      %v5306 = vadd.f32 %v5017, %v5233
      %v5307 = vadd.f32 %v5020, %v5236
      %v5308 = vadd.f32 %v5023, %v5239
      %v5309 = vadd.f32 %v5026, %v5242
      %v5310 = vadd.f32 %v5029, %v5245
      %v5311 = vadd.f32 %v5032, %v5248
      %v5312 = vadd.f32 %v5035, %v5251
      %v5313 = vadd.f32 %v5038, %v5254
      %v5314 = vadd.f32 %v5041, %v5257
      %v5315 = vadd.f32 %v5044, %v5260
      %v5316 = vadd.f32 %v5047, %v5263
      %v5317 = vadd.f32 %v5050, %v5266
      %v5318 = vadd.f32 %v5053, %v5269
      %v5319 = vadd.f32 %v5056, %v5272
      %v5320 = vadd.f32 %v5059, %v5275
      %v5321 = vadd.f32 %v5062, %v5278
      %v5322 = vadd.f32 %v5065, %v5281
      %v5323 = vadd.f32 %v5068, %v5284
      %v5324 = vadd.f32 %v5071, %v5287
      %v5325 = vadd.f32 %v5074, %v5290
      %v5326 = vadd.f32 %v5077, %v5293
      %v5327 = vadd.f32 %v5080, %v5296
      %v5328 = vadd.f32 %v5083, %v5299
      %v5329 = vld [vmem:[#allocation2 + $0x17] sm:$0xff]
      %v5330 = vld [vmem:[#allocation2 + $0x1f] sm:$0xff]
      %v5331 = vld [vmem:[#allocation2 + $0x27] sm:$0xff]
      %v5332 = vld [vmem:[#allocation2 + $0x2f] sm:$0xff]
      %v5333 = vld [vmem:[#allocation2 + $0x37] sm:$0xff]
      %v5334 = vld [vmem:[#allocation2 + $0x3f] sm:$0xff]
      %v5335 = vld [vmem:[#allocation2 + $0x47] sm:$0xff]
      %v5336 = vld [vmem:[#allocation2 + $0x4f] sm:$0xff]
      %v5337 = vld [vmem:[#allocation2 + $0x57] sm:$0xff]
      %v5338 = vld [vmem:[#allocation2 + $0x5f] sm:$0xff]
      %v5339 = vld [vmem:[#allocation2 + $0x67] sm:$0xff]
      %v5340 = vld [vmem:[#allocation2 + $0x6f] sm:$0xff]
      %v5341 = vld [vmem:[#allocation2 + $0x77] sm:$0xff]
      %v5342 = vld [vmem:[#allocation2 + $0x7f] sm:$0xff]
      %v5343 = vld [vmem:[#allocation2 + $0x87] sm:$0xff]
      %v5344 = vld [vmem:[#allocation2 + $0x8f] sm:$0xff]
      %v5345 = vld [vmem:[#allocation2 + $0x97] sm:$0xff]
      %v5346 = vld [vmem:[#allocation2 + $0x9f] sm:$0xff]
      %v5347 = vld [vmem:[#allocation2 + $0xa7] sm:$0xff]
      %v5348 = vld [vmem:[#allocation2 + $0xaf] sm:$0xff]
      %v5349 = vld [vmem:[#allocation2 + $0xb7] sm:$0xff]
      %v5350 = vld [vmem:[#allocation2 + $0xbf] sm:$0xff]
      %v5351 = vld [vmem:[#allocation2 + $0xc7] sm:$0xff]
      %v5352 = vld [vmem:[#allocation2 + $0xcf] sm:$0xff]
      %v5353 = vld [vmem:[#allocation2 + $0xd7] sm:$0xff]
      %v5354 = vld [vmem:[#allocation2 + $0xdf] sm:$0xff]
      %v5355 = vld [vmem:[#allocation2 + $0xe7] sm:$0xff]
      %v5356 = vld [vmem:[#allocation2 + $0xef] sm:$0xff]
      %v5357 = vld [vmem:[%s3 + $0x48] sm:$0xff]
      %v5358 = vld [vmem:[%s3 + $0x50] sm:$0xff]
      %v5359 = vld [vmem:[%s3 + $0x58] sm:$0xff]
      %v5361 = vsel %vm4590, %v5329, 0
      %v5364 = vsel %vm4590, %v5330, 0
      %v5367 = vsel %vm4590, %v5331, 0
      %v5370 = vsel %vm4590, %v5332, 0
      %v5373 = vsel %vm4590, %v5333, 0
      %v5376 = vsel %vm4590, %v5334, 0
      %v5379 = vsel %vm4590, %v5335, 0
      %v5382 = vsel %vm4590, %v5336, 0
      %v5385 = vsel %vm4590, %v5337, 0
      %v5388 = vsel %vm4590, %v5338, 0
      %v5391 = vsel %vm4590, %v5339, 0
      %v5394 = vsel %vm4590, %v5340, 0
      %v5397 = vsel %vm4590, %v5341, 0
      %v5400 = vsel %vm4590, %v5342, 0
      %v5403 = vsel %vm4590, %v5343, 0
      %v5406 = vsel %vm4590, %v5344, 0
      %v5409 = vsel %vm4590, %v5345, 0
      %v5412 = vsel %vm4590, %v5346, 0
      %v5415 = vsel %vm4590, %v5347, 0
      %v5418 = vsel %vm4590, %v5348, 0
      %v5421 = vsel %vm4590, %v5349, 0
      %v5424 = vsel %vm4590, %v5350, 0
      %v5427 = vsel %vm4590, %v5351, 0
      %v5430 = vsel %vm4590, %v5352, 0
      %v5433 = vsel %vm4590, %v5353, 0
      %v5436 = vsel %vm4590, %v5354, 0
      %v5439 = vsel %vm4590, %v5355, 0
      %v5442 = vsel %vm4590, %v5356, 0
      %5444 = vmatpush.msra.mxu0 0.0
      %5445 = vmatpush.msra.mxu0 0.0
      %5446 = vmatpush.msra.mxu0 0.0
      %5447 = vmatpush.msra.mxu0 0.0
      %5448 = vmatpush.msra.mxu0 0.0
      %5449 = vmatpush.msra.mxu0 0.0
      %5450 = vmatpush.msra.mxu0 0.0
      %5451 = vmatpush.msra.mxu0 0.0
      %5452 = vmatpush.msra.mxu0 0.0
      %5453 = vmatpush.msra.mxu0 0.0
      %5454 = vmatpush.msra.mxu0 0.0
      %5455 = vmatpush.msra.mxu0 0.0
      %5456 = vmatpush.msra.mxu0 0.0
      %5457 = vmatpush.msra.mxu0 %v5359
      %5458 = vmatpush.msra.mxu0 %v5358
      %5459 = vmatpush.msra.mxu0 %v5357
      %5460 = vmatmul.f32.gmra.mxu0 %v5361
      %v5461 = vpop.f32.mrf.mxu0
      %v5462 = vadd.f32 0.0, %v5461
      %5463 = vmatmul.f32.gmra.mxu0 %v5364
      %v5464 = vpop.f32.mrf.mxu0
      %v5465 = vadd.f32 0.0, %v5464
      %5466 = vmatmul.f32.gmra.mxu0 %v5367
      %v5467 = vpop.f32.mrf.mxu0
      %v5468 = vadd.f32 0.0, %v5467
      %5469 = vmatmul.f32.gmra.mxu0 %v5370
      %v5470 = vpop.f32.mrf.mxu0
      %v5471 = vadd.f32 0.0, %v5470
      %5472 = vmatmul.f32.gmra.mxu0 %v5373
      %v5473 = vpop.f32.mrf.mxu0
      %v5474 = vadd.f32 0.0, %v5473
      %5475 = vmatmul.f32.gmra.mxu0 %v5376
      %v5476 = vpop.f32.mrf.mxu0
      %v5477 = vadd.f32 0.0, %v5476
      %5478 = vmatmul.f32.gmra.mxu0 %v5379
      %v5479 = vpop.f32.mrf.mxu0
      %v5480 = vadd.f32 0.0, %v5479
      %5481 = vmatmul.f32.gmra.mxu0 %v5382
      %v5482 = vpop.f32.mrf.mxu0
      %v5483 = vadd.f32 0.0, %v5482
      %5484 = vmatmul.f32.gmra.mxu0 %v5385
      %v5485 = vpop.f32.mrf.mxu0
      %v5486 = vadd.f32 0.0, %v5485
      %5487 = vmatmul.f32.gmra.mxu0 %v5388
      %v5488 = vpop.f32.mrf.mxu0
      %v5489 = vadd.f32 0.0, %v5488
      %5490 = vmatmul.f32.gmra.mxu0 %v5391
      %v5491 = vpop.f32.mrf.mxu0
      %v5492 = vadd.f32 0.0, %v5491
      %5493 = vmatmul.f32.gmra.mxu0 %v5394
      %v5494 = vpop.f32.mrf.mxu0
      %v5495 = vadd.f32 0.0, %v5494
      %5496 = vmatmul.f32.gmra.mxu0 %v5397
      %v5497 = vpop.f32.mrf.mxu0
      %v5498 = vadd.f32 0.0, %v5497
      %5499 = vmatmul.f32.gmra.mxu0 %v5400
      %v5500 = vpop.f32.mrf.mxu0
      %v5501 = vadd.f32 0.0, %v5500
      %5502 = vmatmul.f32.gmra.mxu0 %v5403
      %v5503 = vpop.f32.mrf.mxu0
      %v5504 = vadd.f32 0.0, %v5503
      %5505 = vmatmul.f32.gmra.mxu0 %v5406
      %v5506 = vpop.f32.mrf.mxu0
      %v5507 = vadd.f32 0.0, %v5506
      %5508 = vmatmul.f32.gmra.mxu0 %v5409
      %v5509 = vpop.f32.mrf.mxu0
      %v5510 = vadd.f32 0.0, %v5509
      %5511 = vmatmul.f32.gmra.mxu0 %v5412
      %v5512 = vpop.f32.mrf.mxu0
      %v5513 = vadd.f32 0.0, %v5512
      %5514 = vmatmul.f32.gmra.mxu0 %v5415
      %v5515 = vpop.f32.mrf.mxu0
      %v5516 = vadd.f32 0.0, %v5515
      %5517 = vmatmul.f32.gmra.mxu0 %v5418
      %v5518 = vpop.f32.mrf.mxu0
      %v5519 = vadd.f32 0.0, %v5518
      %5520 = vmatmul.f32.gmra.mxu0 %v5421
      %v5521 = vpop.f32.mrf.mxu0
      %v5522 = vadd.f32 0.0, %v5521
      %5523 = vmatmul.f32.gmra.mxu0 %v5424
      %v5524 = vpop.f32.mrf.mxu0
      %v5525 = vadd.f32 0.0, %v5524
      %5526 = vmatmul.f32.gmra.mxu0 %v5427
      %v5527 = vpop.f32.mrf.mxu0
      %v5528 = vadd.f32 0.0, %v5527
      %5529 = vmatmul.f32.gmra.mxu0 %v5430
      %v5530 = vpop.f32.mrf.mxu0
      %v5531 = vadd.f32 0.0, %v5530
      %5532 = vmatmul.f32.gmra.mxu0 %v5433
      %v5533 = vpop.f32.mrf.mxu0
      %v5534 = vadd.f32 0.0, %v5533
      %5535 = vmatmul.f32.gmra.mxu0 %v5436
      %v5536 = vpop.f32.mrf.mxu0
      %v5537 = vadd.f32 0.0, %v5536
      %5538 = vmatmul.f32.gmra.mxu0 %v5439
      %v5539 = vpop.f32.mrf.mxu0
      %v5540 = vadd.f32 0.0, %v5539
      %5541 = vmatmul.f32.gmra.mxu0 %v5442
      %v5542 = vpop.f32.mrf.mxu0
      %v5543 = vadd.f32 0.0, %v5542
      %5544 = vdwg.mxu0
      %v5545 = vadd.f32 %v5301, %v5462
      %v5546 = vadd.f32 %v5302, %v5465
      %v5547 = vadd.f32 %v5303, %v5468
      %v5548 = vadd.f32 %v5304, %v5471
      %v5549 = vadd.f32 %v5305, %v5474
      %v5550 = vadd.f32 %v5306, %v5477
      %v5551 = vadd.f32 %v5307, %v5480
      %v5552 = vadd.f32 %v5308, %v5483
      %v5553 = vadd.f32 %v5309, %v5486
      %v5554 = vadd.f32 %v5310, %v5489
      %v5555 = vadd.f32 %v5311, %v5492
      %v5556 = vadd.f32 %v5312, %v5495
      %v5557 = vadd.f32 %v5313, %v5498
      %v5558 = vadd.f32 %v5314, %v5501
      %v5559 = vadd.f32 %v5315, %v5504
      %v5560 = vadd.f32 %v5316, %v5507
      %v5561 = vadd.f32 %v5317, %v5510
      %v5562 = vadd.f32 %v5318, %v5513
      %v5563 = vadd.f32 %v5319, %v5516
      %v5564 = vadd.f32 %v5320, %v5519
      %v5565 = vadd.f32 %v5321, %v5522
      %v5566 = vadd.f32 %v5322, %v5525
      %v5567 = vadd.f32 %v5323, %v5528
      %v5568 = vadd.f32 %v5324, %v5531
      %v5569 = vadd.f32 %v5325, %v5534
      %v5570 = vadd.f32 %v5326, %v5537
      %v5571 = vadd.f32 %v5327, %v5540
      %v5572 = vadd.f32 %v5328, %v5543
      %v5573 = vld [vmem:[#allocation2 + $0x18] sm:$0xff]
      %v5574 = vld [vmem:[#allocation2 + $0x20] sm:$0xff]
      %v5575 = vld [vmem:[#allocation2 + $0x28] sm:$0xff]
      %v5576 = vld [vmem:[#allocation2 + $0x30] sm:$0xff]
      %v5577 = vld [vmem:[#allocation2 + $0x38] sm:$0xff]
      %v5578 = vld [vmem:[#allocation2 + $0x40] sm:$0xff]
      %v5579 = vld [vmem:[#allocation2 + $0x48] sm:$0xff]
      %v5580 = vld [vmem:[#allocation2 + $0x50] sm:$0xff]
      %v5581 = vld [vmem:[#allocation2 + $0x58] sm:$0xff]
      %v5582 = vld [vmem:[#allocation2 + $0x60] sm:$0xff]
      %v5583 = vld [vmem:[#allocation2 + $0x68] sm:$0xff]
      %v5584 = vld [vmem:[#allocation2 + $0x70] sm:$0xff]
      %v5585 = vld [vmem:[#allocation2 + $0x78] sm:$0xff]
      %v5586 = vld [vmem:[#allocation2 + $0x80] sm:$0xff]
      %v5587 = vld [vmem:[#allocation2 + $0x88] sm:$0xff]
      %v5588 = vld [vmem:[#allocation2 + $0x90] sm:$0xff]
      %v5589 = vld [vmem:[#allocation2 + $0x98] sm:$0xff]
      %v5590 = vld [vmem:[#allocation2 + $0xa0] sm:$0xff]
      %v5591 = vld [vmem:[#allocation2 + $0xa8] sm:$0xff]
      %v5592 = vld [vmem:[#allocation2 + $0xb0] sm:$0xff]
      %v5593 = vld [vmem:[#allocation2 + $0xb8] sm:$0xff]
      %v5594 = vld [vmem:[#allocation2 + $0xc0] sm:$0xff]
      %v5595 = vld [vmem:[#allocation2 + $0xc8] sm:$0xff]
      %v5596 = vld [vmem:[#allocation2 + $0xd0] sm:$0xff]
      %v5597 = vld [vmem:[#allocation2 + $0xd8] sm:$0xff]
      %v5598 = vld [vmem:[#allocation2 + $0xe0] sm:$0xff]
      %v5599 = vld [vmem:[#allocation2 + $0xe8] sm:$0xff]
      %v5600 = vld [vmem:[#allocation2 + $0xf0] sm:$0xff]
      %v5601 = vld [vmem:[%s3 + $0x60] sm:$0xff]
      %v5602 = vld [vmem:[%s3 + $0x68] sm:$0xff]
      %v5603 = vld [vmem:[%s3 + $0x70] sm:$0xff]
      %v5605 = vsel %vm4590, %v5573, 0
      %v5608 = vsel %vm4590, %v5574, 0
      %v5611 = vsel %vm4590, %v5575, 0
      %v5614 = vsel %vm4590, %v5576, 0
      %v5617 = vsel %vm4590, %v5577, 0
      %v5620 = vsel %vm4590, %v5578, 0
      %v5623 = vsel %vm4590, %v5579, 0
      %v5626 = vsel %vm4590, %v5580, 0
      %v5629 = vsel %vm4590, %v5581, 0
      %v5632 = vsel %vm4590, %v5582, 0
      %v5635 = vsel %vm4590, %v5583, 0
      %v5638 = vsel %vm4590, %v5584, 0
      %v5641 = vsel %vm4590, %v5585, 0
      %v5644 = vsel %vm4590, %v5586, 0
      %v5647 = vsel %vm4590, %v5587, 0
      %v5650 = vsel %vm4590, %v5588, 0
      %v5653 = vsel %vm4590, %v5589, 0
      %v5656 = vsel %vm4590, %v5590, 0
      %v5659 = vsel %vm4590, %v5591, 0
      %v5662 = vsel %vm4590, %v5592, 0
      %v5665 = vsel %vm4590, %v5593, 0
      %v5668 = vsel %vm4590, %v5594, 0
      %v5671 = vsel %vm4590, %v5595, 0
      %v5674 = vsel %vm4590, %v5596, 0
      %v5677 = vsel %vm4590, %v5597, 0
      %v5680 = vsel %vm4590, %v5598, 0
      %v5683 = vsel %vm4590, %v5599, 0
      %v5686 = vsel %vm4590, %v5600, 0
      %5688 = vmatpush.msra.mxu0 0.0
      %5689 = vmatpush.msra.mxu0 0.0
      %5690 = vmatpush.msra.mxu0 0.0
      %5691 = vmatpush.msra.mxu0 0.0
      %5692 = vmatpush.msra.mxu0 0.0
      %5693 = vmatpush.msra.mxu0 0.0
      %5694 = vmatpush.msra.mxu0 0.0
      %5695 = vmatpush.msra.mxu0 0.0
      %5696 = vmatpush.msra.mxu0 0.0
      %5697 = vmatpush.msra.mxu0 0.0
      %5698 = vmatpush.msra.mxu0 0.0
      %5699 = vmatpush.msra.mxu0 0.0
      %5700 = vmatpush.msra.mxu0 0.0
      %5701 = vmatpush.msra.mxu0 %v5603
      %5702 = vmatpush.msra.mxu0 %v5602
      %5703 = vmatpush.msra.mxu0 %v5601
      %5704 = vmatmul.f32.gmra.mxu0 %v5605
      %v5705 = vpop.f32.mrf.mxu0
      %v5706 = vadd.f32 0.0, %v5705
      %5707 = vmatmul.f32.gmra.mxu0 %v5608
      %v5708 = vpop.f32.mrf.mxu0
      %v5709 = vadd.f32 0.0, %v5708
      %5710 = vmatmul.f32.gmra.mxu0 %v5611
      %v5711 = vpop.f32.mrf.mxu0
      %v5712 = vadd.f32 0.0, %v5711
      %5713 = vmatmul.f32.gmra.mxu0 %v5614
      %v5714 = vpop.f32.mrf.mxu0
      %v5715 = vadd.f32 0.0, %v5714
      %5716 = vmatmul.f32.gmra.mxu0 %v5617
      %v5717 = vpop.f32.mrf.mxu0
      %v5718 = vadd.f32 0.0, %v5717
      %5719 = vmatmul.f32.gmra.mxu0 %v5620
      %v5720 = vpop.f32.mrf.mxu0
      %v5721 = vadd.f32 0.0, %v5720
      %5722 = vmatmul.f32.gmra.mxu0 %v5623
      %v5723 = vpop.f32.mrf.mxu0
      %v5724 = vadd.f32 0.0, %v5723
      %5725 = vmatmul.f32.gmra.mxu0 %v5626
      %v5726 = vpop.f32.mrf.mxu0
      %v5727 = vadd.f32 0.0, %v5726
      %5728 = vmatmul.f32.gmra.mxu0 %v5629
      %v5729 = vpop.f32.mrf.mxu0
      %v5730 = vadd.f32 0.0, %v5729
      %5731 = vmatmul.f32.gmra.mxu0 %v5632
      %v5732 = vpop.f32.mrf.mxu0
      %v5733 = vadd.f32 0.0, %v5732
      %5734 = vmatmul.f32.gmra.mxu0 %v5635
      %v5735 = vpop.f32.mrf.mxu0
      %v5736 = vadd.f32 0.0, %v5735
      %5737 = vmatmul.f32.gmra.mxu0 %v5638
      %v5738 = vpop.f32.mrf.mxu0
      %v5739 = vadd.f32 0.0, %v5738
      %5740 = vmatmul.f32.gmra.mxu0 %v5641
      %v5741 = vpop.f32.mrf.mxu0
      %v5742 = vadd.f32 0.0, %v5741
      %5743 = vmatmul.f32.gmra.mxu0 %v5644
      %v5744 = vpop.f32.mrf.mxu0
      %v5745 = vadd.f32 0.0, %v5744
      %5746 = vmatmul.f32.gmra.mxu0 %v5647
      %v5747 = vpop.f32.mrf.mxu0
      %v5748 = vadd.f32 0.0, %v5747
      %5749 = vmatmul.f32.gmra.mxu0 %v5650
      %v5750 = vpop.f32.mrf.mxu0
      %v5751 = vadd.f32 0.0, %v5750
      %5752 = vmatmul.f32.gmra.mxu0 %v5653
      %v5753 = vpop.f32.mrf.mxu0
      %v5754 = vadd.f32 0.0, %v5753
      %5755 = vmatmul.f32.gmra.mxu0 %v5656
      %v5756 = vpop.f32.mrf.mxu0
      %v5757 = vadd.f32 0.0, %v5756
      %5758 = vmatmul.f32.gmra.mxu0 %v5659
      %v5759 = vpop.f32.mrf.mxu0
      %v5760 = vadd.f32 0.0, %v5759
      %5761 = vmatmul.f32.gmra.mxu0 %v5662
      %v5762 = vpop.f32.mrf.mxu0
      %v5763 = vadd.f32 0.0, %v5762
      %5764 = vmatmul.f32.gmra.mxu0 %v5665
      %v5765 = vpop.f32.mrf.mxu0
      %v5766 = vadd.f32 0.0, %v5765
      %5767 = vmatmul.f32.gmra.mxu0 %v5668
      %v5768 = vpop.f32.mrf.mxu0
      %v5769 = vadd.f32 0.0, %v5768
      %5770 = vmatmul.f32.gmra.mxu0 %v5671
      %v5771 = vpop.f32.mrf.mxu0
      %v5772 = vadd.f32 0.0, %v5771
      %5773 = vmatmul.f32.gmra.mxu0 %v5674
      %v5774 = vpop.f32.mrf.mxu0
      %v5775 = vadd.f32 0.0, %v5774
      %5776 = vmatmul.f32.gmra.mxu0 %v5677
      %v5777 = vpop.f32.mrf.mxu0
      %v5778 = vadd.f32 0.0, %v5777
      %5779 = vmatmul.f32.gmra.mxu0 %v5680
      %v5780 = vpop.f32.mrf.mxu0
      %v5781 = vadd.f32 0.0, %v5780
      %5782 = vmatmul.f32.gmra.mxu0 %v5683
      %v5783 = vpop.f32.mrf.mxu0
      %v5784 = vadd.f32 0.0, %v5783
      %5785 = vmatmul.f32.gmra.mxu0 %v5686
      %v5786 = vpop.f32.mrf.mxu0
      %v5787 = vadd.f32 0.0, %v5786
      %5788 = vdwg.mxu0
      %v5789 = vadd.f32 %v5545, %v5706
      %v5790 = vadd.f32 %v5546, %v5709
      %v5791 = vadd.f32 %v5547, %v5712
      %v5792 = vadd.f32 %v5548, %v5715
      %v5793 = vadd.f32 %v5549, %v5718
      %v5794 = vadd.f32 %v5550, %v5721
      %v5795 = vadd.f32 %v5551, %v5724
      %v5796 = vadd.f32 %v5552, %v5727
      %v5797 = vadd.f32 %v5553, %v5730
      %v5798 = vadd.f32 %v5554, %v5733
      %v5799 = vadd.f32 %v5555, %v5736
      %v5800 = vadd.f32 %v5556, %v5739
      %v5801 = vadd.f32 %v5557, %v5742
      %v5802 = vadd.f32 %v5558, %v5745
      %v5803 = vadd.f32 %v5559, %v5748
      %v5804 = vadd.f32 %v5560, %v5751
      %v5805 = vadd.f32 %v5561, %v5754
      %v5806 = vadd.f32 %v5562, %v5757
      %v5807 = vadd.f32 %v5563, %v5760
      %v5808 = vadd.f32 %v5564, %v5763
      %v5809 = vadd.f32 %v5565, %v5766
      %v5810 = vadd.f32 %v5566, %v5769
      %v5811 = vadd.f32 %v5567, %v5772
      %v5812 = vadd.f32 %v5568, %v5775
      %v5813 = vadd.f32 %v5569, %v5778
      %v5814 = vadd.f32 %v5570, %v5781
      %v5815 = vadd.f32 %v5571, %v5784
      %v5816 = vadd.f32 %v5572, %v5787
      %v5817 = vld [vmem:[#allocation2 + $0x19] sm:$0xff]
      %v5818 = vld [vmem:[#allocation2 + $0x21] sm:$0xff]
      %v5819 = vld [vmem:[#allocation2 + $0x29] sm:$0xff]
      %v5820 = vld [vmem:[#allocation2 + $0x31] sm:$0xff]
      %v5821 = vld [vmem:[#allocation2 + $0x39] sm:$0xff]
      %v5822 = vld [vmem:[#allocation2 + $0x41] sm:$0xff]
      %v5823 = vld [vmem:[#allocation2 + $0x49] sm:$0xff]
      %v5824 = vld [vmem:[#allocation2 + $0x51] sm:$0xff]
      %v5825 = vld [vmem:[#allocation2 + $0x59] sm:$0xff]
      %v5826 = vld [vmem:[#allocation2 + $0x61] sm:$0xff]
      %v5827 = vld [vmem:[#allocation2 + $0x69] sm:$0xff]
      %v5828 = vld [vmem:[#allocation2 + $0x71] sm:$0xff]
      %v5829 = vld [vmem:[#allocation2 + $0x79] sm:$0xff]
      %v5830 = vld [vmem:[#allocation2 + $0x81] sm:$0xff]
      %v5831 = vld [vmem:[#allocation2 + $0x89] sm:$0xff]
      %v5832 = vld [vmem:[#allocation2 + $0x91] sm:$0xff]
      %v5833 = vld [vmem:[#allocation2 + $0x99] sm:$0xff]
      %v5834 = vld [vmem:[#allocation2 + $0xa1] sm:$0xff]
      %v5835 = vld [vmem:[#allocation2 + $0xa9] sm:$0xff]
      %v5836 = vld [vmem:[#allocation2 + $0xb1] sm:$0xff]
      %v5837 = vld [vmem:[#allocation2 + $0xb9] sm:$0xff]
      %v5838 = vld [vmem:[#allocation2 + $0xc1] sm:$0xff]
      %v5839 = vld [vmem:[#allocation2 + $0xc9] sm:$0xff]
      %v5840 = vld [vmem:[#allocation2 + $0xd1] sm:$0xff]
      %v5841 = vld [vmem:[#allocation2 + $0xd9] sm:$0xff]
      %v5842 = vld [vmem:[#allocation2 + $0xe1] sm:$0xff]
      %v5843 = vld [vmem:[#allocation2 + $0xe9] sm:$0xff]
      %v5844 = vld [vmem:[#allocation2 + $0xf1] sm:$0xff]
      %v5845 = vld [vmem:[%s3 + $0x78] sm:$0xff]
      %v5846 = vld [vmem:[%s3 + $0x80] sm:$0xff]
      %v5847 = vld [vmem:[%s3 + $0x88] sm:$0xff]
      %v5849 = vsel %vm4590, %v5817, 0
      %v5852 = vsel %vm4590, %v5818, 0
      %v5855 = vsel %vm4590, %v5819, 0
      %v5858 = vsel %vm4590, %v5820, 0
      %v5861 = vsel %vm4590, %v5821, 0
      %v5864 = vsel %vm4590, %v5822, 0
      %v5867 = vsel %vm4590, %v5823, 0
      %v5870 = vsel %vm4590, %v5824, 0
      %v5873 = vsel %vm4590, %v5825, 0
      %v5876 = vsel %vm4590, %v5826, 0
      %v5879 = vsel %vm4590, %v5827, 0
      %v5882 = vsel %vm4590, %v5828, 0
      %v5885 = vsel %vm4590, %v5829, 0
      %v5888 = vsel %vm4590, %v5830, 0
      %v5891 = vsel %vm4590, %v5831, 0
      %v5894 = vsel %vm4590, %v5832, 0
      %v5897 = vsel %vm4590, %v5833, 0
      %v5900 = vsel %vm4590, %v5834, 0
      %v5903 = vsel %vm4590, %v5835, 0
      %v5906 = vsel %vm4590, %v5836, 0
      %v5909 = vsel %vm4590, %v5837, 0
      %v5912 = vsel %vm4590, %v5838, 0
      %v5915 = vsel %vm4590, %v5839, 0
      %v5918 = vsel %vm4590, %v5840, 0
      %v5921 = vsel %vm4590, %v5841, 0
      %v5924 = vsel %vm4590, %v5842, 0
      %v5927 = vsel %vm4590, %v5843, 0
      %v5930 = vsel %vm4590, %v5844, 0
      %5932 = vmatpush.msra.mxu0 0.0
      %5933 = vmatpush.msra.mxu0 0.0
      %5934 = vmatpush.msra.mxu0 0.0
      %5935 = vmatpush.msra.mxu0 0.0
      %5936 = vmatpush.msra.mxu0 0.0
      %5937 = vmatpush.msra.mxu0 0.0
      %5938 = vmatpush.msra.mxu0 0.0
      %5939 = vmatpush.msra.mxu0 0.0
      %5940 = vmatpush.msra.mxu0 0.0
      %5941 = vmatpush.msra.mxu0 0.0
      %5942 = vmatpush.msra.mxu0 0.0
      %5943 = vmatpush.msra.mxu0 0.0
      %5944 = vmatpush.msra.mxu0 0.0
      %5945 = vmatpush.msra.mxu0 %v5847
      %5946 = vmatpush.msra.mxu0 %v5846
      %5947 = vmatpush.msra.mxu0 %v5845
      %5948 = vmatmul.f32.gmra.mxu0 %v5849
      %v5949 = vpop.f32.mrf.mxu0
      %v5950 = vadd.f32 0.0, %v5949
      %5951 = vmatmul.f32.gmra.mxu0 %v5852
      %v5952 = vpop.f32.mrf.mxu0
      %v5953 = vadd.f32 0.0, %v5952
      %5954 = vmatmul.f32.gmra.mxu0 %v5855
      %v5955 = vpop.f32.mrf.mxu0
      %v5956 = vadd.f32 0.0, %v5955
      %5957 = vmatmul.f32.gmra.mxu0 %v5858
      %v5958 = vpop.f32.mrf.mxu0
      %v5959 = vadd.f32 0.0, %v5958
      %5960 = vmatmul.f32.gmra.mxu0 %v5861
      %v5961 = vpop.f32.mrf.mxu0
      %v5962 = vadd.f32 0.0, %v5961
      %5963 = vmatmul.f32.gmra.mxu0 %v5864
      %v5964 = vpop.f32.mrf.mxu0
      %v5965 = vadd.f32 0.0, %v5964
      %5966 = vmatmul.f32.gmra.mxu0 %v5867
      %v5967 = vpop.f32.mrf.mxu0
      %v5968 = vadd.f32 0.0, %v5967
      %5969 = vmatmul.f32.gmra.mxu0 %v5870
      %v5970 = vpop.f32.mrf.mxu0
      %v5971 = vadd.f32 0.0, %v5970
      %5972 = vmatmul.f32.gmra.mxu0 %v5873
      %v5973 = vpop.f32.mrf.mxu0
      %v5974 = vadd.f32 0.0, %v5973
      %5975 = vmatmul.f32.gmra.mxu0 %v5876
      %v5976 = vpop.f32.mrf.mxu0
      %v5977 = vadd.f32 0.0, %v5976
      %5978 = vmatmul.f32.gmra.mxu0 %v5879
      %v5979 = vpop.f32.mrf.mxu0
      %v5980 = vadd.f32 0.0, %v5979
      %5981 = vmatmul.f32.gmra.mxu0 %v5882
      %v5982 = vpop.f32.mrf.mxu0
      %v5983 = vadd.f32 0.0, %v5982
      %5984 = vmatmul.f32.gmra.mxu0 %v5885
      %v5985 = vpop.f32.mrf.mxu0
      %v5986 = vadd.f32 0.0, %v5985
      %5987 = vmatmul.f32.gmra.mxu0 %v5888
      %v5988 = vpop.f32.mrf.mxu0
      %v5989 = vadd.f32 0.0, %v5988
      %5990 = vmatmul.f32.gmra.mxu0 %v5891
      %v5991 = vpop.f32.mrf.mxu0
      %v5992 = vadd.f32 0.0, %v5991
      %5993 = vmatmul.f32.gmra.mxu0 %v5894
      %v5994 = vpop.f32.mrf.mxu0
      %v5995 = vadd.f32 0.0, %v5994
      %5996 = vmatmul.f32.gmra.mxu0 %v5897
      %v5997 = vpop.f32.mrf.mxu0
      %v5998 = vadd.f32 0.0, %v5997
      %5999 = vmatmul.f32.gmra.mxu0 %v5900
      %v6000 = vpop.f32.mrf.mxu0
      %v6001 = vadd.f32 0.0, %v6000
      %6002 = vmatmul.f32.gmra.mxu0 %v5903
      %v6003 = vpop.f32.mrf.mxu0
      %v6004 = vadd.f32 0.0, %v6003
      %6005 = vmatmul.f32.gmra.mxu0 %v5906
      %v6006 = vpop.f32.mrf.mxu0
      %v6007 = vadd.f32 0.0, %v6006
      %6008 = vmatmul.f32.gmra.mxu0 %v5909
      %v6009 = vpop.f32.mrf.mxu0
      %v6010 = vadd.f32 0.0, %v6009
      %6011 = vmatmul.f32.gmra.mxu0 %v5912
      %v6012 = vpop.f32.mrf.mxu0
      %v6013 = vadd.f32 0.0, %v6012
      %6014 = vmatmul.f32.gmra.mxu0 %v5915
      %v6015 = vpop.f32.mrf.mxu0
      %v6016 = vadd.f32 0.0, %v6015
      %6017 = vmatmul.f32.gmra.mxu0 %v5918
      %v6018 = vpop.f32.mrf.mxu0
      %v6019 = vadd.f32 0.0, %v6018
      %6020 = vmatmul.f32.gmra.mxu0 %v5921
      %v6021 = vpop.f32.mrf.mxu0
      %v6022 = vadd.f32 0.0, %v6021
      %6023 = vmatmul.f32.gmra.mxu0 %v5924
      %v6024 = vpop.f32.mrf.mxu0
      %v6025 = vadd.f32 0.0, %v6024
      %6026 = vmatmul.f32.gmra.mxu0 %v5927
      %v6027 = vpop.f32.mrf.mxu0
      %v6028 = vadd.f32 0.0, %v6027
      %6029 = vmatmul.f32.gmra.mxu0 %v5930
      %v6030 = vpop.f32.mrf.mxu0
      %v6031 = vadd.f32 0.0, %v6030
      %6032 = vdwg.mxu0
      %v6033 = vadd.f32 %v5789, %v5950
      %v6034 = vadd.f32 %v5790, %v5953
      %v6035 = vadd.f32 %v5791, %v5956
      %v6036 = vadd.f32 %v5792, %v5959
      %v6037 = vadd.f32 %v5793, %v5962
      %v6038 = vadd.f32 %v5794, %v5965
      %v6039 = vadd.f32 %v5795, %v5968
      %v6040 = vadd.f32 %v5796, %v5971
      %v6041 = vadd.f32 %v5797, %v5974
      %v6042 = vadd.f32 %v5798, %v5977
      %v6043 = vadd.f32 %v5799, %v5980
      %v6044 = vadd.f32 %v5800, %v5983
      %v6045 = vadd.f32 %v5801, %v5986
      %v6046 = vadd.f32 %v5802, %v5989
      %v6047 = vadd.f32 %v5803, %v5992
      %v6048 = vadd.f32 %v5804, %v5995
      %v6049 = vadd.f32 %v5805, %v5998
      %v6050 = vadd.f32 %v5806, %v6001
      %v6051 = vadd.f32 %v5807, %v6004
      %v6052 = vadd.f32 %v5808, %v6007
      %v6053 = vadd.f32 %v5809, %v6010
      %v6054 = vadd.f32 %v5810, %v6013
      %v6055 = vadd.f32 %v5811, %v6016
      %v6056 = vadd.f32 %v5812, %v6019
      %v6057 = vadd.f32 %v5813, %v6022
      %v6058 = vadd.f32 %v5814, %v6025
      %v6059 = vadd.f32 %v5815, %v6028
      %v6060 = vadd.f32 %v5816, %v6031
      %v6061 = vld [vmem:[#allocation2 + $0x27] sm:$0xff]
      %v6062 = vld [vmem:[#allocation2 + $0x2f] sm:$0xff]
      %v6063 = vld [vmem:[#allocation2 + $0x37] sm:$0xff]
      %v6064 = vld [vmem:[#allocation2 + $0x3f] sm:$0xff]
      %v6065 = vld [vmem:[#allocation2 + $0x47] sm:$0xff]
      %v6066 = vld [vmem:[#allocation2 + $0x4f] sm:$0xff]
      %v6067 = vld [vmem:[#allocation2 + $0x57] sm:$0xff]
      %v6068 = vld [vmem:[#allocation2 + $0x5f] sm:$0xff]
      %v6069 = vld [vmem:[#allocation2 + $0x67] sm:$0xff]
      %v6070 = vld [vmem:[#allocation2 + $0x6f] sm:$0xff]
      %v6071 = vld [vmem:[#allocation2 + $0x77] sm:$0xff]
      %v6072 = vld [vmem:[#allocation2 + $0x7f] sm:$0xff]
      %v6073 = vld [vmem:[#allocation2 + $0x87] sm:$0xff]
      %v6074 = vld [vmem:[#allocation2 + $0x8f] sm:$0xff]
      %v6075 = vld [vmem:[#allocation2 + $0x97] sm:$0xff]
      %v6076 = vld [vmem:[#allocation2 + $0x9f] sm:$0xff]
      %v6077 = vld [vmem:[#allocation2 + $0xa7] sm:$0xff]
      %v6078 = vld [vmem:[#allocation2 + $0xaf] sm:$0xff]
      %v6079 = vld [vmem:[#allocation2 + $0xb7] sm:$0xff]
      %v6080 = vld [vmem:[#allocation2 + $0xbf] sm:$0xff]
      %v6081 = vld [vmem:[#allocation2 + $0xc7] sm:$0xff]
      %v6082 = vld [vmem:[#allocation2 + $0xcf] sm:$0xff]
      %v6083 = vld [vmem:[#allocation2 + $0xd7] sm:$0xff]
      %v6084 = vld [vmem:[#allocation2 + $0xdf] sm:$0xff]
      %v6085 = vld [vmem:[#allocation2 + $0xe7] sm:$0xff]
      %v6086 = vld [vmem:[#allocation2 + $0xef] sm:$0xff]
      %v6087 = vld [vmem:[#allocation2 + $0xf7] sm:$0xff]
      %v6088 = vld [vmem:[#allocation2 + $0xff] sm:$0xff]
      %v6089 = vld [vmem:[%s3 + $0x90] sm:$0xff]
      %v6090 = vld [vmem:[%s3 + $0x98] sm:$0xff]
      %v6091 = vld [vmem:[%s3 + $0xa0] sm:$0xff]
      %v6093 = vsel %vm4590, %v6061, 0
      %v6096 = vsel %vm4590, %v6062, 0
      %v6099 = vsel %vm4590, %v6063, 0
      %v6102 = vsel %vm4590, %v6064, 0
      %v6105 = vsel %vm4590, %v6065, 0
      %v6108 = vsel %vm4590, %v6066, 0
      %v6111 = vsel %vm4590, %v6067, 0
      %v6114 = vsel %vm4590, %v6068, 0
      %v6117 = vsel %vm4590, %v6069, 0
      %v6120 = vsel %vm4590, %v6070, 0
      %v6123 = vsel %vm4590, %v6071, 0
      %v6126 = vsel %vm4590, %v6072, 0
      %v6129 = vsel %vm4590, %v6073, 0
      %v6132 = vsel %vm4590, %v6074, 0
      %v6135 = vsel %vm4590, %v6075, 0
      %v6138 = vsel %vm4590, %v6076, 0
      %v6141 = vsel %vm4590, %v6077, 0
      %v6144 = vsel %vm4590, %v6078, 0
      %v6147 = vsel %vm4590, %v6079, 0
      %v6150 = vsel %vm4590, %v6080, 0
      %v6153 = vsel %vm4590, %v6081, 0
      %v6156 = vsel %vm4590, %v6082, 0
      %v6159 = vsel %vm4590, %v6083, 0
      %v6162 = vsel %vm4590, %v6084, 0
      %v6165 = vsel %vm4590, %v6085, 0
      %v6168 = vsel %vm4590, %v6086, 0
      %v6171 = vsel %vm4590, %v6087, 0
      %v6174 = vsel %vm4590, %v6088, 0
      %6176 = vmatpush.msra.mxu0 0.0
      %6177 = vmatpush.msra.mxu0 0.0
      %6178 = vmatpush.msra.mxu0 0.0
      %6179 = vmatpush.msra.mxu0 0.0
      %6180 = vmatpush.msra.mxu0 0.0
      %6181 = vmatpush.msra.mxu0 0.0
      %6182 = vmatpush.msra.mxu0 0.0
      %6183 = vmatpush.msra.mxu0 0.0
      %6184 = vmatpush.msra.mxu0 0.0
      %6185 = vmatpush.msra.mxu0 0.0
      %6186 = vmatpush.msra.mxu0 0.0
      %6187 = vmatpush.msra.mxu0 0.0
      %6188 = vmatpush.msra.mxu0 0.0
      %6189 = vmatpush.msra.mxu0 %v6091
      %6190 = vmatpush.msra.mxu0 %v6090
      %6191 = vmatpush.msra.mxu0 %v6089
      %6192 = vmatmul.f32.gmra.mxu0 %v6093
      %v6193 = vpop.f32.mrf.mxu0
      %v6194 = vadd.f32 0.0, %v6193
      %6195 = vmatmul.f32.gmra.mxu0 %v6096
      %v6196 = vpop.f32.mrf.mxu0
      %v6197 = vadd.f32 0.0, %v6196
      %6198 = vmatmul.f32.gmra.mxu0 %v6099
      %v6199 = vpop.f32.mrf.mxu0
      %v6200 = vadd.f32 0.0, %v6199
      %6201 = vmatmul.f32.gmra.mxu0 %v6102
      %v6202 = vpop.f32.mrf.mxu0
      %v6203 = vadd.f32 0.0, %v6202
      %6204 = vmatmul.f32.gmra.mxu0 %v6105
      %v6205 = vpop.f32.mrf.mxu0
      %v6206 = vadd.f32 0.0, %v6205
      %6207 = vmatmul.f32.gmra.mxu0 %v6108
      %v6208 = vpop.f32.mrf.mxu0
      %v6209 = vadd.f32 0.0, %v6208
      %6210 = vmatmul.f32.gmra.mxu0 %v6111
      %v6211 = vpop.f32.mrf.mxu0
      %v6212 = vadd.f32 0.0, %v6211
      %6213 = vmatmul.f32.gmra.mxu0 %v6114
      %v6214 = vpop.f32.mrf.mxu0
      %v6215 = vadd.f32 0.0, %v6214
      %6216 = vmatmul.f32.gmra.mxu0 %v6117
      %v6217 = vpop.f32.mrf.mxu0
      %v6218 = vadd.f32 0.0, %v6217
      %6219 = vmatmul.f32.gmra.mxu0 %v6120
      %v6220 = vpop.f32.mrf.mxu0
      %v6221 = vadd.f32 0.0, %v6220
      %6222 = vmatmul.f32.gmra.mxu0 %v6123
      %v6223 = vpop.f32.mrf.mxu0
      %v6224 = vadd.f32 0.0, %v6223
      %6225 = vmatmul.f32.gmra.mxu0 %v6126
      %v6226 = vpop.f32.mrf.mxu0
      %v6227 = vadd.f32 0.0, %v6226
      %6228 = vmatmul.f32.gmra.mxu0 %v6129
      %v6229 = vpop.f32.mrf.mxu0
      %v6230 = vadd.f32 0.0, %v6229
      %6231 = vmatmul.f32.gmra.mxu0 %v6132
      %v6232 = vpop.f32.mrf.mxu0
      %v6233 = vadd.f32 0.0, %v6232
      %6234 = vmatmul.f32.gmra.mxu0 %v6135
      %v6235 = vpop.f32.mrf.mxu0
      %v6236 = vadd.f32 0.0, %v6235
      %6237 = vmatmul.f32.gmra.mxu0 %v6138
      %v6238 = vpop.f32.mrf.mxu0
      %v6239 = vadd.f32 0.0, %v6238
      %6240 = vmatmul.f32.gmra.mxu0 %v6141
      %v6241 = vpop.f32.mrf.mxu0
      %v6242 = vadd.f32 0.0, %v6241
      %6243 = vmatmul.f32.gmra.mxu0 %v6144
      %v6244 = vpop.f32.mrf.mxu0
      %v6245 = vadd.f32 0.0, %v6244
      %6246 = vmatmul.f32.gmra.mxu0 %v6147
      %v6247 = vpop.f32.mrf.mxu0
      %v6248 = vadd.f32 0.0, %v6247
      %6249 = vmatmul.f32.gmra.mxu0 %v6150
      %v6250 = vpop.f32.mrf.mxu0
      %v6251 = vadd.f32 0.0, %v6250
      %6252 = vmatmul.f32.gmra.mxu0 %v6153
      %v6253 = vpop.f32.mrf.mxu0
      %v6254 = vadd.f32 0.0, %v6253
      %6255 = vmatmul.f32.gmra.mxu0 %v6156
      %v6256 = vpop.f32.mrf.mxu0
      %v6257 = vadd.f32 0.0, %v6256
      %6258 = vmatmul.f32.gmra.mxu0 %v6159
      %v6259 = vpop.f32.mrf.mxu0
      %v6260 = vadd.f32 0.0, %v6259
      %6261 = vmatmul.f32.gmra.mxu0 %v6162
      %v6262 = vpop.f32.mrf.mxu0
      %v6263 = vadd.f32 0.0, %v6262
      %6264 = vmatmul.f32.gmra.mxu0 %v6165
      %v6265 = vpop.f32.mrf.mxu0
      %v6266 = vadd.f32 0.0, %v6265
      %6267 = vmatmul.f32.gmra.mxu0 %v6168
      %v6268 = vpop.f32.mrf.mxu0
      %v6269 = vadd.f32 0.0, %v6268
      %6270 = vmatmul.f32.gmra.mxu0 %v6171
      %v6271 = vpop.f32.mrf.mxu0
      %v6272 = vadd.f32 0.0, %v6271
      %6273 = vmatmul.f32.gmra.mxu0 %v6174
      %v6274 = vpop.f32.mrf.mxu0
      %v6275 = vadd.f32 0.0, %v6274
      %6276 = vdwg.mxu0
      %v6277 = vadd.f32 %v6033, %v6194
      %v6278 = vadd.f32 %v6034, %v6197
      %v6279 = vadd.f32 %v6035, %v6200
      %v6280 = vadd.f32 %v6036, %v6203
      %v6281 = vadd.f32 %v6037, %v6206
      %v6282 = vadd.f32 %v6038, %v6209
      %v6283 = vadd.f32 %v6039, %v6212
      %v6284 = vadd.f32 %v6040, %v6215
      %v6285 = vadd.f32 %v6041, %v6218
      %v6286 = vadd.f32 %v6042, %v6221
      %v6287 = vadd.f32 %v6043, %v6224
      %v6288 = vadd.f32 %v6044, %v6227
      %v6289 = vadd.f32 %v6045, %v6230
      %v6290 = vadd.f32 %v6046, %v6233
      %v6291 = vadd.f32 %v6047, %v6236
      %v6292 = vadd.f32 %v6048, %v6239
      %v6293 = vadd.f32 %v6049, %v6242
      %v6294 = vadd.f32 %v6050, %v6245
      %v6295 = vadd.f32 %v6051, %v6248
      %v6296 = vadd.f32 %v6052, %v6251
      %v6297 = vadd.f32 %v6053, %v6254
      %v6298 = vadd.f32 %v6054, %v6257
      %v6299 = vadd.f32 %v6055, %v6260
      %v6300 = vadd.f32 %v6056, %v6263
      %v6301 = vadd.f32 %v6057, %v6266
      %v6302 = vadd.f32 %v6058, %v6269
      %v6303 = vadd.f32 %v6059, %v6272
      %v6304 = vadd.f32 %v6060, %v6275
      %v6305 = vld [vmem:[#allocation2 + $0x28] sm:$0xff]
      %v6306 = vld [vmem:[#allocation2 + $0x30] sm:$0xff]
      %v6307 = vld [vmem:[#allocation2 + $0x38] sm:$0xff]
      %v6308 = vld [vmem:[#allocation2 + $0x40] sm:$0xff]
      %v6309 = vld [vmem:[#allocation2 + $0x48] sm:$0xff]
      %v6310 = vld [vmem:[#allocation2 + $0x50] sm:$0xff]
      %v6311 = vld [vmem:[#allocation2 + $0x58] sm:$0xff]
      %v6312 = vld [vmem:[#allocation2 + $0x60] sm:$0xff]
      %v6313 = vld [vmem:[#allocation2 + $0x68] sm:$0xff]
      %v6314 = vld [vmem:[#allocation2 + $0x70] sm:$0xff]
      %v6315 = vld [vmem:[#allocation2 + $0x78] sm:$0xff]
      %v6316 = vld [vmem:[#allocation2 + $0x80] sm:$0xff]
      %v6317 = vld [vmem:[#allocation2 + $0x88] sm:$0xff]
      %v6318 = vld [vmem:[#allocation2 + $0x90] sm:$0xff]
      %v6319 = vld [vmem:[#allocation2 + $0x98] sm:$0xff]
      %v6320 = vld [vmem:[#allocation2 + $0xa0] sm:$0xff]
      %v6321 = vld [vmem:[#allocation2 + $0xa8] sm:$0xff]
      %v6322 = vld [vmem:[#allocation2 + $0xb0] sm:$0xff]
      %v6323 = vld [vmem:[#allocation2 + $0xb8] sm:$0xff]
      %v6324 = vld [vmem:[#allocation2 + $0xc0] sm:$0xff]
      %v6325 = vld [vmem:[#allocation2 + $0xc8] sm:$0xff]
      %v6326 = vld [vmem:[#allocation2 + $0xd0] sm:$0xff]
      %v6327 = vld [vmem:[#allocation2 + $0xd8] sm:$0xff]
      %v6328 = vld [vmem:[#allocation2 + $0xe0] sm:$0xff]
      %v6329 = vld [vmem:[#allocation2 + $0xe8] sm:$0xff]
      %v6330 = vld [vmem:[#allocation2 + $0xf0] sm:$0xff]
      %v6331 = vld [vmem:[#allocation2 + $0xf8] sm:$0xff]
      %v6332 = vld [vmem:[#allocation2 + $0x100] sm:$0xff]
      %v6333 = vld [vmem:[%s3 + $0xa8] sm:$0xff]
      %v6334 = vld [vmem:[%s3 + $0xb0] sm:$0xff]
      %v6335 = vld [vmem:[%s3 + $0xb8] sm:$0xff]
      %v6337 = vsel %vm4590, %v6305, 0
      %v6340 = vsel %vm4590, %v6306, 0
      %v6343 = vsel %vm4590, %v6307, 0
      %v6346 = vsel %vm4590, %v6308, 0
      %v6349 = vsel %vm4590, %v6309, 0
      %v6352 = vsel %vm4590, %v6310, 0
      %v6355 = vsel %vm4590, %v6311, 0
      %v6358 = vsel %vm4590, %v6312, 0
      %v6361 = vsel %vm4590, %v6313, 0
      %v6364 = vsel %vm4590, %v6314, 0
      %v6367 = vsel %vm4590, %v6315, 0
      %v6370 = vsel %vm4590, %v6316, 0
      %v6373 = vsel %vm4590, %v6317, 0
      %v6376 = vsel %vm4590, %v6318, 0
      %v6379 = vsel %vm4590, %v6319, 0
      %v6382 = vsel %vm4590, %v6320, 0
      %v6385 = vsel %vm4590, %v6321, 0
      %v6388 = vsel %vm4590, %v6322, 0
      %v6391 = vsel %vm4590, %v6323, 0
      %v6394 = vsel %vm4590, %v6324, 0
      %v6397 = vsel %vm4590, %v6325, 0
      %v6400 = vsel %vm4590, %v6326, 0
      %v6403 = vsel %vm4590, %v6327, 0
      %v6406 = vsel %vm4590, %v6328, 0
      %v6409 = vsel %vm4590, %v6329, 0
      %v6412 = vsel %vm4590, %v6330, 0
      %v6415 = vsel %vm4590, %v6331, 0
      %v6418 = vsel %vm4590, %v6332, 0
      %6420 = vmatpush.msra.mxu0 0.0
      %6421 = vmatpush.msra.mxu0 0.0
      %6422 = vmatpush.msra.mxu0 0.0
      %6423 = vmatpush.msra.mxu0 0.0
      %6424 = vmatpush.msra.mxu0 0.0
      %6425 = vmatpush.msra.mxu0 0.0
      %6426 = vmatpush.msra.mxu0 0.0
      %6427 = vmatpush.msra.mxu0 0.0
      %6428 = vmatpush.msra.mxu0 0.0
      %6429 = vmatpush.msra.mxu0 0.0
      %6430 = vmatpush.msra.mxu0 0.0
      %6431 = vmatpush.msra.mxu0 0.0
      %6432 = vmatpush.msra.mxu0 0.0
      %6433 = vmatpush.msra.mxu0 %v6335
      %6434 = vmatpush.msra.mxu0 %v6334
      %6435 = vmatpush.msra.mxu0 %v6333
      %6436 = vmatmul.f32.gmra.mxu0 %v6337
      %v6437 = vpop.f32.mrf.mxu0
      %v6438 = vadd.f32 0.0, %v6437
      %6439 = vmatmul.f32.gmra.mxu0 %v6340
      %v6440 = vpop.f32.mrf.mxu0
      %v6441 = vadd.f32 0.0, %v6440
      %6442 = vmatmul.f32.gmra.mxu0 %v6343
      %v6443 = vpop.f32.mrf.mxu0
      %v6444 = vadd.f32 0.0, %v6443
      %6445 = vmatmul.f32.gmra.mxu0 %v6346
      %v6446 = vpop.f32.mrf.mxu0
      %v6447 = vadd.f32 0.0, %v6446
      %6448 = vmatmul.f32.gmra.mxu0 %v6349
      %v6449 = vpop.f32.mrf.mxu0
      %v6450 = vadd.f32 0.0, %v6449
      %6451 = vmatmul.f32.gmra.mxu0 %v6352
      %v6452 = vpop.f32.mrf.mxu0
      %v6453 = vadd.f32 0.0, %v6452
      %6454 = vmatmul.f32.gmra.mxu0 %v6355
      %v6455 = vpop.f32.mrf.mxu0
      %v6456 = vadd.f32 0.0, %v6455
      %6457 = vmatmul.f32.gmra.mxu0 %v6358
      %v6458 = vpop.f32.mrf.mxu0
      %v6459 = vadd.f32 0.0, %v6458
      %6460 = vmatmul.f32.gmra.mxu0 %v6361
      %v6461 = vpop.f32.mrf.mxu0
      %v6462 = vadd.f32 0.0, %v6461
      %6463 = vmatmul.f32.gmra.mxu0 %v6364
      %v6464 = vpop.f32.mrf.mxu0
      %v6465 = vadd.f32 0.0, %v6464
      %6466 = vmatmul.f32.gmra.mxu0 %v6367
      %v6467 = vpop.f32.mrf.mxu0
      %v6468 = vadd.f32 0.0, %v6467
      %6469 = vmatmul.f32.gmra.mxu0 %v6370
      %v6470 = vpop.f32.mrf.mxu0
      %v6471 = vadd.f32 0.0, %v6470
      %6472 = vmatmul.f32.gmra.mxu0 %v6373
      %v6473 = vpop.f32.mrf.mxu0
      %v6474 = vadd.f32 0.0, %v6473
      %6475 = vmatmul.f32.gmra.mxu0 %v6376
      %v6476 = vpop.f32.mrf.mxu0
      %v6477 = vadd.f32 0.0, %v6476
      %6478 = vmatmul.f32.gmra.mxu0 %v6379
      %v6479 = vpop.f32.mrf.mxu0
      %v6480 = vadd.f32 0.0, %v6479
      %6481 = vmatmul.f32.gmra.mxu0 %v6382
      %v6482 = vpop.f32.mrf.mxu0
      %v6483 = vadd.f32 0.0, %v6482
      %6484 = vmatmul.f32.gmra.mxu0 %v6385
      %v6485 = vpop.f32.mrf.mxu0
      %v6486 = vadd.f32 0.0, %v6485
      %6487 = vmatmul.f32.gmra.mxu0 %v6388
      %v6488 = vpop.f32.mrf.mxu0
      %v6489 = vadd.f32 0.0, %v6488
      %6490 = vmatmul.f32.gmra.mxu0 %v6391
      %v6491 = vpop.f32.mrf.mxu0
      %v6492 = vadd.f32 0.0, %v6491
      %6493 = vmatmul.f32.gmra.mxu0 %v6394
      %v6494 = vpop.f32.mrf.mxu0
      %v6495 = vadd.f32 0.0, %v6494
      %6496 = vmatmul.f32.gmra.mxu0 %v6397
      %v6497 = vpop.f32.mrf.mxu0
      %v6498 = vadd.f32 0.0, %v6497
      %6499 = vmatmul.f32.gmra.mxu0 %v6400
      %v6500 = vpop.f32.mrf.mxu0
      %v6501 = vadd.f32 0.0, %v6500
      %6502 = vmatmul.f32.gmra.mxu0 %v6403
      %v6503 = vpop.f32.mrf.mxu0
      %v6504 = vadd.f32 0.0, %v6503
      %6505 = vmatmul.f32.gmra.mxu0 %v6406
      %v6506 = vpop.f32.mrf.mxu0
      %v6507 = vadd.f32 0.0, %v6506
      %6508 = vmatmul.f32.gmra.mxu0 %v6409
      %v6509 = vpop.f32.mrf.mxu0
      %v6510 = vadd.f32 0.0, %v6509
      %6511 = vmatmul.f32.gmra.mxu0 %v6412
      %v6512 = vpop.f32.mrf.mxu0
      %v6513 = vadd.f32 0.0, %v6512
      %6514 = vmatmul.f32.gmra.mxu0 %v6415
      %v6515 = vpop.f32.mrf.mxu0
      %v6516 = vadd.f32 0.0, %v6515
      %6517 = vmatmul.f32.gmra.mxu0 %v6418
      %v6518 = vpop.f32.mrf.mxu0
      %v6519 = vadd.f32 0.0, %v6518
      %6520 = vdwg.mxu0
      %v6521 = vadd.f32 %v6277, %v6438
      %v6522 = vadd.f32 %v6278, %v6441
      %v6523 = vadd.f32 %v6279, %v6444
      %v6524 = vadd.f32 %v6280, %v6447
      %v6525 = vadd.f32 %v6281, %v6450
      %v6526 = vadd.f32 %v6282, %v6453
      %v6527 = vadd.f32 %v6283, %v6456
      %v6528 = vadd.f32 %v6284, %v6459
      %v6529 = vadd.f32 %v6285, %v6462
      %v6530 = vadd.f32 %v6286, %v6465
      %v6531 = vadd.f32 %v6287, %v6468
      %v6532 = vadd.f32 %v6288, %v6471
      %v6533 = vadd.f32 %v6289, %v6474
      %v6534 = vadd.f32 %v6290, %v6477
      %v6535 = vadd.f32 %v6291, %v6480
      %v6536 = vadd.f32 %v6292, %v6483
      %v6537 = vadd.f32 %v6293, %v6486
      %v6538 = vadd.f32 %v6294, %v6489
      %v6539 = vadd.f32 %v6295, %v6492
      %v6540 = vadd.f32 %v6296, %v6495
      %v6541 = vadd.f32 %v6297, %v6498
      %v6542 = vadd.f32 %v6298, %v6501
      %v6543 = vadd.f32 %v6299, %v6504
      %v6544 = vadd.f32 %v6300, %v6507
      %v6545 = vadd.f32 %v6301, %v6510
      %v6546 = vadd.f32 %v6302, %v6513
      %v6547 = vadd.f32 %v6303, %v6516
      %v6548 = vadd.f32 %v6304, %v6519
      %v6549 = vld [vmem:[#allocation2 + $0x29] sm:$0xff]
      %v6550 = vld [vmem:[#allocation2 + $0x31] sm:$0xff]
      %v6551 = vld [vmem:[#allocation2 + $0x39] sm:$0xff]
      %v6552 = vld [vmem:[#allocation2 + $0x41] sm:$0xff]
      %v6553 = vld [vmem:[#allocation2 + $0x49] sm:$0xff]
      %v6554 = vld [vmem:[#allocation2 + $0x51] sm:$0xff]
      %v6555 = vld [vmem:[#allocation2 + $0x59] sm:$0xff]
      %v6556 = vld [vmem:[#allocation2 + $0x61] sm:$0xff]
      %v6557 = vld [vmem:[#allocation2 + $0x69] sm:$0xff]
      %v6558 = vld [vmem:[#allocation2 + $0x71] sm:$0xff]
      %v6559 = vld [vmem:[#allocation2 + $0x79] sm:$0xff]
      %v6560 = vld [vmem:[#allocation2 + $0x81] sm:$0xff]
      %v6561 = vld [vmem:[#allocation2 + $0x89] sm:$0xff]
      %v6562 = vld [vmem:[#allocation2 + $0x91] sm:$0xff]
      %v6563 = vld [vmem:[#allocation2 + $0x99] sm:$0xff]
      %v6564 = vld [vmem:[#allocation2 + $0xa1] sm:$0xff]
      %v6565 = vld [vmem:[#allocation2 + $0xa9] sm:$0xff]
      %v6566 = vld [vmem:[#allocation2 + $0xb1] sm:$0xff]
      %v6567 = vld [vmem:[#allocation2 + $0xb9] sm:$0xff]
      %v6568 = vld [vmem:[#allocation2 + $0xc1] sm:$0xff]
      %v6569 = vld [vmem:[#allocation2 + $0xc9] sm:$0xff]
      %v6570 = vld [vmem:[#allocation2 + $0xd1] sm:$0xff]
      %v6571 = vld [vmem:[#allocation2 + $0xd9] sm:$0xff]
      %v6572 = vld [vmem:[#allocation2 + $0xe1] sm:$0xff]
      %v6573 = vld [vmem:[#allocation2 + $0xe9] sm:$0xff]
      %v6574 = vld [vmem:[#allocation2 + $0xf1] sm:$0xff]
      %v6575 = vld [vmem:[#allocation2 + $0xf9] sm:$0xff]
      %v6576 = vld [vmem:[#allocation2 + $0x101] sm:$0xff]
      %v6577 = vld [vmem:[%s3 + $0xc0] sm:$0xff]
      %v6578 = vld [vmem:[%s3 + $0xc8] sm:$0xff]
      %v6579 = vld [vmem:[%s3 + $0xd0] sm:$0xff]
      %v6581 = vsel %vm4590, %v6549, 0
      %v6584 = vsel %vm4590, %v6550, 0
      %v6587 = vsel %vm4590, %v6551, 0
      %v6590 = vsel %vm4590, %v6552, 0
      %v6593 = vsel %vm4590, %v6553, 0
      %v6596 = vsel %vm4590, %v6554, 0
      %v6599 = vsel %vm4590, %v6555, 0
      %v6602 = vsel %vm4590, %v6556, 0
      %v6605 = vsel %vm4590, %v6557, 0
      %v6608 = vsel %vm4590, %v6558, 0
      %v6611 = vsel %vm4590, %v6559, 0
      %v6614 = vsel %vm4590, %v6560, 0
      %v6617 = vsel %vm4590, %v6561, 0
      %v6620 = vsel %vm4590, %v6562, 0
      %v6623 = vsel %vm4590, %v6563, 0
      %v6626 = vsel %vm4590, %v6564, 0
      %v6629 = vsel %vm4590, %v6565, 0
      %v6632 = vsel %vm4590, %v6566, 0
      %v6635 = vsel %vm4590, %v6567, 0
      %v6638 = vsel %vm4590, %v6568, 0
      %v6641 = vsel %vm4590, %v6569, 0
      %v6644 = vsel %vm4590, %v6570, 0
      %v6647 = vsel %vm4590, %v6571, 0
      %v6650 = vsel %vm4590, %v6572, 0
      %v6653 = vsel %vm4590, %v6573, 0
      %v6656 = vsel %vm4590, %v6574, 0
      %v6659 = vsel %vm4590, %v6575, 0
      %v6662 = vsel %vm4590, %v6576, 0
      %6664 = vmatpush.msra.mxu0 0.0
      %6665 = vmatpush.msra.mxu0 0.0
      %6666 = vmatpush.msra.mxu0 0.0
      %6667 = vmatpush.msra.mxu0 0.0
      %6668 = vmatpush.msra.mxu0 0.0
      %6669 = vmatpush.msra.mxu0 0.0
      %6670 = vmatpush.msra.mxu0 0.0
      %6671 = vmatpush.msra.mxu0 0.0
      %6672 = vmatpush.msra.mxu0 0.0
      %6673 = vmatpush.msra.mxu0 0.0
      %6674 = vmatpush.msra.mxu0 0.0
      %6675 = vmatpush.msra.mxu0 0.0
      %6676 = vmatpush.msra.mxu0 0.0
      %6677 = vmatpush.msra.mxu0 %v6579
      %6678 = vmatpush.msra.mxu0 %v6578
      %6679 = vmatpush.msra.mxu0 %v6577
      %6680 = vmatmul.f32.gmra.mxu0 %v6581
      %v6681 = vpop.f32.mrf.mxu0
      %v6682 = vadd.f32 0.0, %v6681
      %6683 = vmatmul.f32.gmra.mxu0 %v6584
      %v6684 = vpop.f32.mrf.mxu0
      %v6685 = vadd.f32 0.0, %v6684
      %6686 = vmatmul.f32.gmra.mxu0 %v6587
      %v6687 = vpop.f32.mrf.mxu0
      %v6688 = vadd.f32 0.0, %v6687
      %6689 = vmatmul.f32.gmra.mxu0 %v6590
      %v6690 = vpop.f32.mrf.mxu0
      %v6691 = vadd.f32 0.0, %v6690
      %6692 = vmatmul.f32.gmra.mxu0 %v6593
      %v6693 = vpop.f32.mrf.mxu0
      %v6694 = vadd.f32 0.0, %v6693
      %6695 = vmatmul.f32.gmra.mxu0 %v6596
      %v6696 = vpop.f32.mrf.mxu0
      %v6697 = vadd.f32 0.0, %v6696
      %6698 = vmatmul.f32.gmra.mxu0 %v6599
      %v6699 = vpop.f32.mrf.mxu0
      %v6700 = vadd.f32 0.0, %v6699
      %6701 = vmatmul.f32.gmra.mxu0 %v6602
      %v6702 = vpop.f32.mrf.mxu0
      %v6703 = vadd.f32 0.0, %v6702
      %6704 = vmatmul.f32.gmra.mxu0 %v6605
      %v6705 = vpop.f32.mrf.mxu0
      %v6706 = vadd.f32 0.0, %v6705
      %6707 = vmatmul.f32.gmra.mxu0 %v6608
      %v6708 = vpop.f32.mrf.mxu0
      %v6709 = vadd.f32 0.0, %v6708
      %6710 = vmatmul.f32.gmra.mxu0 %v6611
      %v6711 = vpop.f32.mrf.mxu0
      %v6712 = vadd.f32 0.0, %v6711
      %6713 = vmatmul.f32.gmra.mxu0 %v6614
      %v6714 = vpop.f32.mrf.mxu0
      %v6715 = vadd.f32 0.0, %v6714
      %6716 = vmatmul.f32.gmra.mxu0 %v6617
      %v6717 = vpop.f32.mrf.mxu0
      %v6718 = vadd.f32 0.0, %v6717
      %6719 = vmatmul.f32.gmra.mxu0 %v6620
      %v6720 = vpop.f32.mrf.mxu0
      %v6721 = vadd.f32 0.0, %v6720
      %6722 = vmatmul.f32.gmra.mxu0 %v6623
      %v6723 = vpop.f32.mrf.mxu0
      %v6724 = vadd.f32 0.0, %v6723
      %6725 = vmatmul.f32.gmra.mxu0 %v6626
      %v6726 = vpop.f32.mrf.mxu0
      %v6727 = vadd.f32 0.0, %v6726
      %6728 = vmatmul.f32.gmra.mxu0 %v6629
      %v6729 = vpop.f32.mrf.mxu0
      %v6730 = vadd.f32 0.0, %v6729
      %6731 = vmatmul.f32.gmra.mxu0 %v6632
      %v6732 = vpop.f32.mrf.mxu0
      %v6733 = vadd.f32 0.0, %v6732
      %6734 = vmatmul.f32.gmra.mxu0 %v6635
      %v6735 = vpop.f32.mrf.mxu0
      %v6736 = vadd.f32 0.0, %v6735
      %6737 = vmatmul.f32.gmra.mxu0 %v6638
      %v6738 = vpop.f32.mrf.mxu0
      %v6739 = vadd.f32 0.0, %v6738
      %6740 = vmatmul.f32.gmra.mxu0 %v6641
      %v6741 = vpop.f32.mrf.mxu0
      %v6742 = vadd.f32 0.0, %v6741
      %6743 = vmatmul.f32.gmra.mxu0 %v6644
      %v6744 = vpop.f32.mrf.mxu0
      %v6745 = vadd.f32 0.0, %v6744
      %6746 = vmatmul.f32.gmra.mxu0 %v6647
      %v6747 = vpop.f32.mrf.mxu0
      %v6748 = vadd.f32 0.0, %v6747
      %6749 = vmatmul.f32.gmra.mxu0 %v6650
      %v6750 = vpop.f32.mrf.mxu0
      %v6751 = vadd.f32 0.0, %v6750
      %6752 = vmatmul.f32.gmra.mxu0 %v6653
      %v6753 = vpop.f32.mrf.mxu0
      %v6754 = vadd.f32 0.0, %v6753
      %6755 = vmatmul.f32.gmra.mxu0 %v6656
      %v6756 = vpop.f32.mrf.mxu0
      %v6757 = vadd.f32 0.0, %v6756
      %6758 = vmatmul.f32.gmra.mxu0 %v6659
      %v6759 = vpop.f32.mrf.mxu0
      %v6760 = vadd.f32 0.0, %v6759
      %6761 = vmatmul.f32.gmra.mxu0 %v6662
      %v6762 = vpop.f32.mrf.mxu0
      %v6763 = vadd.f32 0.0, %v6762
      %6764 = vdwg.mxu0
      %v6765 = vadd.f32 %v6521, %v6682
      %v6766 = vadd.f32 %v6522, %v6685
      %v6767 = vadd.f32 %v6523, %v6688
      %v6768 = vadd.f32 %v6524, %v6691
      %v6769 = vadd.f32 %v6525, %v6694
      %v6770 = vadd.f32 %v6526, %v6697
      %v6771 = vadd.f32 %v6527, %v6700
      %v6772 = vadd.f32 %v6528, %v6703
      %v6773 = vadd.f32 %v6529, %v6706
      %v6774 = vadd.f32 %v6530, %v6709
      %v6775 = vadd.f32 %v6531, %v6712
      %v6776 = vadd.f32 %v6532, %v6715
      %v6777 = vadd.f32 %v6533, %v6718
      %v6778 = vadd.f32 %v6534, %v6721
      %v6779 = vadd.f32 %v6535, %v6724
      %v6780 = vadd.f32 %v6536, %v6727
      %v6781 = vadd.f32 %v6537, %v6730
      %v6782 = vadd.f32 %v6538, %v6733
      %v6783 = vadd.f32 %v6539, %v6736
      %v6784 = vadd.f32 %v6540, %v6739
      %v6785 = vadd.f32 %v6541, %v6742
      %v6786 = vadd.f32 %v6542, %v6745
      %v6787 = vadd.f32 %v6543, %v6748
      %v6788 = vadd.f32 %v6544, %v6751
      %v6789 = vadd.f32 %v6545, %v6754
      %v6790 = vadd.f32 %v6546, %v6757
      %v6791 = vadd.f32 %v6547, %v6760
      %v6792 = vadd.f32 %v6548, %v6763
      %v6821 = vrot.slane %v6765, 2
      %v6822 = vrot.slane %v6765, 4
      %v6823 = vrot.slane %v6765, 6
      %v6824 = vrot.slane %v6766, 2
      %v6825 = vrot.slane %v6766, 4
      %v6826 = vrot.slane %v6767, 2
      %v6827 = vrot.slane %v6767, 4
      %v6828 = vrot.slane %v6767, 6
      %v6829 = vrot.slane %v6768, 2
      %v6830 = vrot.slane %v6768, 4
      %v6831 = vrot.slane %v6769, 2
      %v6832 = vrot.slane %v6769, 4
      %v6833 = vrot.slane %v6769, 6
      %v6834 = vrot.slane %v6770, 2
      %v6835 = vrot.slane %v6770, 4
      %v6836 = vrot.slane %v6771, 2
      %v6837 = vrot.slane %v6771, 4
      %v6838 = vrot.slane %v6771, 6
      %v6839 = vrot.slane %v6772, 2
      %v6840 = vrot.slane %v6772, 4
      %v6841 = vrot.slane %v6773, 2
      %v6842 = vrot.slane %v6773, 4
      %v6843 = vrot.slane %v6773, 6
      %v6844 = vrot.slane %v6774, 2
      %v6845 = vrot.slane %v6774, 4
      %v6846 = vrot.slane %v6775, 2
      %v6847 = vrot.slane %v6775, 4
      %v6848 = vrot.slane %v6775, 6
      %v6849 = vrot.slane %v6776, 2
      %v6850 = vrot.slane %v6776, 4
      %v6851 = vrot.slane %v6777, 2
      %v6852 = vrot.slane %v6777, 4
      %v6853 = vrot.slane %v6777, 6
      %v6854 = vrot.slane %v6778, 2
      %v6855 = vrot.slane %v6778, 4
      %v6856 = vrot.slane %v6779, 2
      %v6857 = vrot.slane %v6779, 4
      %v6858 = vrot.slane %v6779, 6
      %v6859 = vrot.slane %v6780, 2
      %v6860 = vrot.slane %v6780, 4
      %v6861 = vrot.slane %v6781, 2
      %v6862 = vrot.slane %v6781, 4
      %v6863 = vrot.slane %v6781, 6
      %v6864 = vrot.slane %v6782, 2
      %v6865 = vrot.slane %v6782, 4
      %v6866 = vrot.slane %v6783, 2
      %v6867 = vrot.slane %v6783, 4
      %v6868 = vrot.slane %v6783, 6
      %v6869 = vrot.slane %v6784, 2
      %v6870 = vrot.slane %v6784, 4
      %v6871 = vrot.slane %v6785, 2
      %v6872 = vrot.slane %v6785, 4
      %v6873 = vrot.slane %v6785, 6
      %v6874 = vrot.slane %v6786, 2
      %v6875 = vrot.slane %v6786, 4
      %v6876 = vrot.slane %v6787, 2
      %v6877 = vrot.slane %v6787, 4
      %v6878 = vrot.slane %v6787, 6
      %v6879 = vrot.slane %v6788, 2
      %v6880 = vrot.slane %v6788, 4
      %v6881 = vrot.slane %v6789, 2
      %v6882 = vrot.slane %v6789, 4
      %v6883 = vrot.slane %v6789, 6
      %v6884 = vrot.slane %v6790, 2
      %v6885 = vrot.slane %v6790, 4
      %v6886 = vrot.slane %v6791, 2
      %v6887 = vrot.slane %v6791, 4
      %v6888 = vrot.slane %v6791, 6
      %v6889 = vrot.slane %v6792, 2
      %v6890 = vrot.slane %v6792, 4
      %6891 = vst [vmem:[#allocation1] ss:$4 sm:$0xff] %v6765
      %s6892 = scalar_lea.vmem [#allocation1], 1
      %6893 = vst [vmem:[%s6892] ss:$4 sm:$0xff] %v6821
      %s6894 = scalar_lea.vmem [#allocation1], 2
      %6895 = vst [vmem:[%s6894] ss:$4 sm:$0xff] %v6822
      %s6896 = scalar_lea.vmem [#allocation1], 3
      %6897 = vst [vmem:[%s6896] ss:$4 sm:$0xff] %v6823
      %s6898 = scalar_lea.vmem [#allocation1], 32
      %6899 = vst [vmem:[%s6898] ss:$4 sm:$0xff] %v6766
      %s6900 = scalar_lea.vmem [#allocation1], 33
      %6901 = vst [vmem:[%s6900] ss:$4 sm:$0xff] %v6824
      %s6902 = scalar_lea.vmem [#allocation1], 34
      %6903 = vst [vmem:[%s6902] ss:$4 sm:$0xff] %v6825
      %s6904 = scalar_lea.vmem [#allocation1], 35
      %6905 = vst [vmem:[%s6904] ss:$4 sm:$0xff] %v6767
      %v6906 = vld.sshfl [vmem:[#allocation1] sm:$0xff pattern:$0x73625140]
      %v6907 = vld.sshfl [vmem:[#allocation1 + $0x20] sm:$0xff pattern:$0x73625140]
      %6908 = vst [vmem:[#allocation1] ss:$4 sm:$0xff] %v6826
      %6909 = vst [vmem:[%s6892] ss:$4 sm:$0xff] %v6827
      %6910 = vst [vmem:[%s6894] ss:$4 sm:$0xff] %v6828
      %6911 = vst [vmem:[%s6896] ss:$4 sm:$0xff] %v6768
      %6912 = vst [vmem:[%s6898] ss:$4 sm:$0xff] %v6829
      %6913 = vst [vmem:[%s6900] ss:$4 sm:$0xff] %v6830
      %6914 = vst [vmem:[%s6902] ss:$4 sm:$0xff] %v6769
      %6915 = vst [vmem:[%s6904] ss:$4 sm:$0xff] %v6831
      %v6916 = vld.sshfl [vmem:[#allocation1] sm:$0xff pattern:$0x73625140]
      %v6917 = vld.sshfl [vmem:[#allocation1 + $0x20] sm:$0xff pattern:$0x73625140]
      %6918 = vst [vmem:[#allocation1] ss:$4 sm:$0xff] %v6832
      %6919 = vst [vmem:[%s6892] ss:$4 sm:$0xff] %v6833
      %6920 = vst [vmem:[%s6894] ss:$4 sm:$0xff] %v6770
      %6921 = vst [vmem:[%s6896] ss:$4 sm:$0xff] %v6834
      %6922 = vst [vmem:[%s6898] ss:$4 sm:$0xff] %v6835
      %6923 = vst [vmem:[%s6900] ss:$4 sm:$0xff] %v6771
      %6924 = vst [vmem:[%s6902] ss:$4 sm:$0xff] %v6836
      %6925 = vst [vmem:[%s6904] ss:$4 sm:$0xff] %v6837
      %v6926 = vld.sshfl [vmem:[#allocation1] sm:$0xff pattern:$0x73625140]
      %v6927 = vld.sshfl [vmem:[#allocation1 + $0x20] sm:$0xff pattern:$0x73625140]
      %6928 = vst [vmem:[#allocation1] ss:$4 sm:$0xff] %v6838
      %6929 = vst [vmem:[%s6892] ss:$4 sm:$0xff] %v6772
      %6930 = vst [vmem:[%s6894] ss:$4 sm:$0xff] %v6839
      %6931 = vst [vmem:[%s6896] ss:$4 sm:$0xff] %v6840
      %6932 = vst [vmem:[%s6898] ss:$4 sm:$0xff] %v6773
      %6933 = vst [vmem:[%s6900] ss:$4 sm:$0xff] %v6841
      %6934 = vst [vmem:[%s6902] ss:$4 sm:$0xff] %v6842
      %6935 = vst [vmem:[%s6904] ss:$4 sm:$0xff] %v6843
      %v6936 = vld.sshfl [vmem:[#allocation1] sm:$0xff pattern:$0x73625140]
      %v6937 = vld.sshfl [vmem:[#allocation1 + $0x20] sm:$0xff pattern:$0x73625140]
      %6938 = vst [vmem:[#allocation1] ss:$4 sm:$0xff] %v6774
      %6939 = vst [vmem:[%s6892] ss:$4 sm:$0xff] %v6844
      %6940 = vst [vmem:[%s6894] ss:$4 sm:$0xff] %v6845
      %6941 = vst [vmem:[%s6896] ss:$4 sm:$0xff] %v6775
      %6942 = vst [vmem:[%s6898] ss:$4 sm:$0xff] %v6846
      %6943 = vst [vmem:[%s6900] ss:$4 sm:$0xff] %v6847
      %6944 = vst [vmem:[%s6902] ss:$4 sm:$0xff] %v6848
      %6945 = vst [vmem:[%s6904] ss:$4 sm:$0xff] %v6776
      %v6946 = vld.sshfl [vmem:[#allocation1] sm:$0xff pattern:$0x73625140]
      %v6947 = vld.sshfl [vmem:[#allocation1 + $0x20] sm:$0xff pattern:$0x73625140]
      %6948 = vst [vmem:[#allocation1] ss:$4 sm:$0xff] %v6849
      %6949 = vst [vmem:[%s6892] ss:$4 sm:$0xff] %v6850
      %6950 = vst [vmem:[%s6894] ss:$4 sm:$0xff] %v6777
      %6951 = vst [vmem:[%s6896] ss:$4 sm:$0xff] %v6851
      %6952 = vst [vmem:[%s6898] ss:$4 sm:$0xff] %v6852
      %6953 = vst [vmem:[%s6900] ss:$4 sm:$0xff] %v6853
      %6954 = vst [vmem:[%s6902] ss:$4 sm:$0xff] %v6778
      %6955 = vst [vmem:[%s6904] ss:$4 sm:$0xff] %v6854
      %v6956 = vld.sshfl [vmem:[#allocation1] sm:$0xff pattern:$0x73625140]
      %v6957 = vld.sshfl [vmem:[#allocation1 + $0x20] sm:$0xff pattern:$0x73625140]
      %6958 = vst [vmem:[#allocation1] ss:$4 sm:$0xff] %v6855
      %6959 = vst [vmem:[%s6892] ss:$4 sm:$0xff] %v6779
      %6960 = vst [vmem:[%s6894] ss:$4 sm:$0xff] %v6856
      %6961 = vst [vmem:[%s6896] ss:$4 sm:$0xff] %v6857
      %6962 = vst [vmem:[%s6898] ss:$4 sm:$0xff] %v6858
      %6963 = vst [vmem:[%s6900] ss:$4 sm:$0xff] %v6780
      %6964 = vst [vmem:[%s6902] ss:$4 sm:$0xff] %v6859
      %6965 = vst [vmem:[%s6904] ss:$4 sm:$0xff] %v6860
      %v6966 = vld.sshfl [vmem:[#allocation1] sm:$0xff pattern:$0x73625140]
      %v6967 = vld.sshfl [vmem:[#allocation1 + $0x20] sm:$0xff pattern:$0x73625140]
      %6968 = vst [vmem:[#allocation1] ss:$4 sm:$0xff] %v6781
      %6969 = vst [vmem:[%s6892] ss:$4 sm:$0xff] %v6861
      %6970 = vst [vmem:[%s6894] ss:$4 sm:$0xff] %v6862
      %6971 = vst [vmem:[%s6896] ss:$4 sm:$0xff] %v6863
      %6972 = vst [vmem:[%s6898] ss:$4 sm:$0xff] %v6782
      %6973 = vst [vmem:[%s6900] ss:$4 sm:$0xff] %v6864
      %6974 = vst [vmem:[%s6902] ss:$4 sm:$0xff] %v6865
      %6975 = vst [vmem:[%s6904] ss:$4 sm:$0xff] %v6783
      %v6976 = vld.sshfl [vmem:[#allocation1] sm:$0xff pattern:$0x73625140]
      %v6977 = vld.sshfl [vmem:[#allocation1 + $0x20] sm:$0xff pattern:$0x73625140]
      %6978 = vst [vmem:[#allocation1] ss:$4 sm:$0xff] %v6866
      %6979 = vst [vmem:[%s6892] ss:$4 sm:$0xff] %v6867
      %6980 = vst [vmem:[%s6894] ss:$4 sm:$0xff] %v6868
      %6981 = vst [vmem:[%s6896] ss:$4 sm:$0xff] %v6784
      %6982 = vst [vmem:[%s6898] ss:$4 sm:$0xff] %v6869
      %6983 = vst [vmem:[%s6900] ss:$4 sm:$0xff] %v6870
      %6984 = vst [vmem:[%s6902] ss:$4 sm:$0xff] %v6785
      %6985 = vst [vmem:[%s6904] ss:$4 sm:$0xff] %v6871
      %v6986 = vld.sshfl [vmem:[#allocation1] sm:$0xff pattern:$0x73625140]
      %v6987 = vld.sshfl [vmem:[#allocation1 + $0x20] sm:$0xff pattern:$0x73625140]
      %6988 = vst [vmem:[#allocation1] ss:$4 sm:$0xff] %v6872
      %6989 = vst [vmem:[%s6892] ss:$4 sm:$0xff] %v6873
      %6990 = vst [vmem:[%s6894] ss:$4 sm:$0xff] %v6786
      %6991 = vst [vmem:[%s6896] ss:$4 sm:$0xff] %v6874
      %6992 = vst [vmem:[%s6898] ss:$4 sm:$0xff] %v6875
      %6993 = vst [vmem:[%s6900] ss:$4 sm:$0xff] %v6787
      %6994 = vst [vmem:[%s6902] ss:$4 sm:$0xff] %v6876
      %6995 = vst [vmem:[%s6904] ss:$4 sm:$0xff] %v6877
      %v6996 = vld.sshfl [vmem:[#allocation1] sm:$0xff pattern:$0x73625140]
      %v6997 = vld.sshfl [vmem:[#allocation1 + $0x20] sm:$0xff pattern:$0x73625140]
      %6998 = vst [vmem:[#allocation1] ss:$4 sm:$0xff] %v6878
      %6999 = vst [vmem:[%s6892] ss:$4 sm:$0xff] %v6788
      %7000 = vst [vmem:[%s6894] ss:$4 sm:$0xff] %v6879
      %7001 = vst [vmem:[%s6896] ss:$4 sm:$0xff] %v6880
      %7002 = vst [vmem:[%s6898] ss:$4 sm:$0xff] %v6789
      %7003 = vst [vmem:[%s6900] ss:$4 sm:$0xff] %v6881
      %7004 = vst [vmem:[%s6902] ss:$4 sm:$0xff] %v6882
      %7005 = vst [vmem:[%s6904] ss:$4 sm:$0xff] %v6883
      %v7006 = vld.sshfl [vmem:[#allocation1] sm:$0xff pattern:$0x73625140]
      %v7007 = vld.sshfl [vmem:[#allocation1 + $0x20] sm:$0xff pattern:$0x73625140]
      %7008 = vst [vmem:[#allocation1] ss:$4 sm:$0xff] %v6790
      %7009 = vst [vmem:[%s6892] ss:$4 sm:$0xff] %v6884
      %7010 = vst [vmem:[%s6894] ss:$4 sm:$0xff] %v6885
      %7011 = vst [vmem:[%s6896] ss:$4 sm:$0xff] %v6791
      %7012 = vst [vmem:[%s6898] ss:$4 sm:$0xff] %v6886
      %7013 = vst [vmem:[%s6900] ss:$4 sm:$0xff] %v6887
      %7014 = vst [vmem:[%s6902] ss:$4 sm:$0xff] %v6888
      %7015 = vst [vmem:[%s6904] ss:$4 sm:$0xff] %v6792
      %v7016 = vld.sshfl [vmem:[#allocation1] sm:$0xff pattern:$0x73625140]
      %v7017 = vld.sshfl [vmem:[#allocation1 + $0x20] sm:$0xff pattern:$0x73625140]
      %7018 = vst [vmem:[#allocation1] ss:$4 sm:$0xff] %v6889
      %7019 = vst [vmem:[%s6892] ss:$4 sm:$0xff] %v6890
      %v7020 = vld.sshfl [vmem:[#allocation1] sm:$0xff pattern:$0x73625140]
      %v7021 = vrot.slane %v6906, 7
      %v7022 = vrot.slane %v6907, 7
      %v7023 = vsel %vm4113, %v7021, %v7022
      %v7024 = vrot.slane %v6916, 7
      %v7025 = vsel %vm4113, %v7022, %v7024
      %v7026 = vrot.slane %v6917, 7
      %v7027 = vsel %vm4113, %v7024, %v7026
      %v7028 = vrot.slane %v6926, 7
      %v7029 = vsel %vm4113, %v7026, %v7028
      %v7030 = vrot.slane %v6927, 7
      %v7031 = vsel %vm4113, %v7028, %v7030
      %v7032 = vrot.slane %v6936, 7
      %v7033 = vsel %vm4113, %v7030, %v7032
      %v7034 = vrot.slane %v6937, 7
      %v7035 = vsel %vm4113, %v7032, %v7034
      %v7036 = vrot.slane %v6946, 7
      %v7037 = vsel %vm4113, %v7034, %v7036
      %v7038 = vrot.slane %v6947, 7
      %v7039 = vsel %vm4113, %v7036, %v7038
      %v7040 = vrot.slane %v6956, 7
      %v7041 = vsel %vm4113, %v7038, %v7040
      %v7042 = vrot.slane %v6957, 7
      %v7043 = vsel %vm4113, %v7040, %v7042
      %v7044 = vrot.slane %v6966, 7
      %v7045 = vsel %vm4113, %v7042, %v7044
      %v7046 = vrot.slane %v6967, 7
      %v7047 = vsel %vm4113, %v7044, %v7046
      %v7048 = vrot.slane %v6976, 7
      %v7049 = vsel %vm4113, %v7046, %v7048
      %v7050 = vrot.slane %v6977, 7
      %v7051 = vsel %vm4113, %v7048, %v7050
      %v7052 = vrot.slane %v6986, 7
      %v7053 = vsel %vm4113, %v7050, %v7052
      %v7054 = vrot.slane %v6987, 7
      %v7055 = vsel %vm4113, %v7052, %v7054
      %v7056 = vrot.slane %v6996, 7
      %v7057 = vsel %vm4113, %v7054, %v7056
      %v7058 = vrot.slane %v6997, 7
      %v7059 = vsel %vm4113, %v7056, %v7058
      %v7060 = vrot.slane %v7006, 7
      %v7061 = vsel %vm4113, %v7058, %v7060
      %v7062 = vrot.slane %v7007, 7
      %v7063 = vsel %vm4113, %v7060, %v7062
      %v7064 = vrot.slane %v7016, 7
      %v7065 = vsel %vm4113, %v7062, %v7064
      %v7066 = vrot.slane %v7017, 7
      %v7067 = vsel %vm4113, %v7064, %v7066
      %v7068 = vrot.slane %v7020, 7
      %v7069 = vsel %vm4113, %v7066, %v7068
      %7095 = vst [vmem:[#allocation1] ss:$4 sm:$0xff] %v6765
      %s7096 = scalar_lea.vmem [#allocation1], 1
      %7097 = vst [vmem:[%s7096] ss:$4 sm:$0xff] %v6821
      %s7098 = scalar_lea.vmem [#allocation1], 2
      %7099 = vst [vmem:[%s7098] ss:$4 sm:$0xff] %v6822
      %s7100 = scalar_lea.vmem [#allocation1], 3
      %7101 = vst [vmem:[%s7100] ss:$4 sm:$0xff] %v6823
      %s7102 = scalar_lea.vmem [#allocation1], 32
      %7103 = vst [vmem:[%s7102] ss:$4 sm:$0xff] %v6766
      %s7104 = scalar_lea.vmem [#allocation1], 33
      %7105 = vst [vmem:[%s7104] ss:$4 sm:$0xff] %v6824
      %s7106 = scalar_lea.vmem [#allocation1], 34
      %7107 = vst [vmem:[%s7106] ss:$4 sm:$0xff] %v6825
      %s7108 = scalar_lea.vmem [#allocation1], 35
      %7109 = vst [vmem:[%s7108] ss:$4 sm:$0xff] %v6767
      %v7110 = vld.sshfl [vmem:[#allocation1] sm:$0xff pattern:$0x73625140]
      %v7111 = vld.sshfl [vmem:[#allocation1 + $0x20] sm:$0xff pattern:$0x73625140]
      %7112 = vst [vmem:[#allocation1] ss:$4 sm:$0xff] %v6826
      %7113 = vst [vmem:[%s7096] ss:$4 sm:$0xff] %v6827
      %7114 = vst [vmem:[%s7098] ss:$4 sm:$0xff] %v6828
      %7115 = vst [vmem:[%s7100] ss:$4 sm:$0xff] %v6768
      %7116 = vst [vmem:[%s7102] ss:$4 sm:$0xff] %v6829
      %7117 = vst [vmem:[%s7104] ss:$4 sm:$0xff] %v6830
      %7118 = vst [vmem:[%s7106] ss:$4 sm:$0xff] %v6769
      %7119 = vst [vmem:[%s7108] ss:$4 sm:$0xff] %v6831
      %v7120 = vld.sshfl [vmem:[#allocation1] sm:$0xff pattern:$0x73625140]
      %v7121 = vld.sshfl [vmem:[#allocation1 + $0x20] sm:$0xff pattern:$0x73625140]
      %7122 = vst [vmem:[#allocation1] ss:$4 sm:$0xff] %v6832
      %7123 = vst [vmem:[%s7096] ss:$4 sm:$0xff] %v6833
      %7124 = vst [vmem:[%s7098] ss:$4 sm:$0xff] %v6770
      %7125 = vst [vmem:[%s7100] ss:$4 sm:$0xff] %v6834
      %7126 = vst [vmem:[%s7102] ss:$4 sm:$0xff] %v6835
      %7127 = vst [vmem:[%s7104] ss:$4 sm:$0xff] %v6771
      %7128 = vst [vmem:[%s7106] ss:$4 sm:$0xff] %v6836
      %7129 = vst [vmem:[%s7108] ss:$4 sm:$0xff] %v6837
      %v7130 = vld.sshfl [vmem:[#allocation1] sm:$0xff pattern:$0x73625140]
      %v7131 = vld.sshfl [vmem:[#allocation1 + $0x20] sm:$0xff pattern:$0x73625140]
      %7132 = vst [vmem:[#allocation1] ss:$4 sm:$0xff] %v6838
      %7133 = vst [vmem:[%s7096] ss:$4 sm:$0xff] %v6772
      %7134 = vst [vmem:[%s7098] ss:$4 sm:$0xff] %v6839
      %7135 = vst [vmem:[%s7100] ss:$4 sm:$0xff] %v6840
      %7136 = vst [vmem:[%s7102] ss:$4 sm:$0xff] %v6773
      %7137 = vst [vmem:[%s7104] ss:$4 sm:$0xff] %v6841
      %7138 = vst [vmem:[%s7106] ss:$4 sm:$0xff] %v6842
      %7139 = vst [vmem:[%s7108] ss:$4 sm:$0xff] %v6843
      %v7140 = vld.sshfl [vmem:[#allocation1] sm:$0xff pattern:$0x73625140]
      %v7141 = vld.sshfl [vmem:[#allocation1 + $0x20] sm:$0xff pattern:$0x73625140]
      %7142 = vst [vmem:[#allocation1] ss:$4 sm:$0xff] %v6774
      %7143 = vst [vmem:[%s7096] ss:$4 sm:$0xff] %v6844
      %7144 = vst [vmem:[%s7098] ss:$4 sm:$0xff] %v6845
      %7145 = vst [vmem:[%s7100] ss:$4 sm:$0xff] %v6775
      %7146 = vst [vmem:[%s7102] ss:$4 sm:$0xff] %v6846
      %7147 = vst [vmem:[%s7104] ss:$4 sm:$0xff] %v6847
      %7148 = vst [vmem:[%s7106] ss:$4 sm:$0xff] %v6848
      %7149 = vst [vmem:[%s7108] ss:$4 sm:$0xff] %v6776
      %v7150 = vld.sshfl [vmem:[#allocation1] sm:$0xff pattern:$0x73625140]
      %v7151 = vld.sshfl [vmem:[#allocation1 + $0x20] sm:$0xff pattern:$0x73625140]
      %7152 = vst [vmem:[#allocation1] ss:$4 sm:$0xff] %v6849
      %7153 = vst [vmem:[%s7096] ss:$4 sm:$0xff] %v6850
      %7154 = vst [vmem:[%s7098] ss:$4 sm:$0xff] %v6777
      %7155 = vst [vmem:[%s7100] ss:$4 sm:$0xff] %v6851
      %7156 = vst [vmem:[%s7102] ss:$4 sm:$0xff] %v6852
      %7157 = vst [vmem:[%s7104] ss:$4 sm:$0xff] %v6853
      %7158 = vst [vmem:[%s7106] ss:$4 sm:$0xff] %v6778
      %7159 = vst [vmem:[%s7108] ss:$4 sm:$0xff] %v6854
      %v7160 = vld.sshfl [vmem:[#allocation1] sm:$0xff pattern:$0x73625140]
      %v7161 = vld.sshfl [vmem:[#allocation1 + $0x20] sm:$0xff pattern:$0x73625140]
      %7162 = vst [vmem:[#allocation1] ss:$4 sm:$0xff] %v6855
      %7163 = vst [vmem:[%s7096] ss:$4 sm:$0xff] %v6779
      %7164 = vst [vmem:[%s7098] ss:$4 sm:$0xff] %v6856
      %7165 = vst [vmem:[%s7100] ss:$4 sm:$0xff] %v6857
      %7166 = vst [vmem:[%s7102] ss:$4 sm:$0xff] %v6858
      %7167 = vst [vmem:[%s7104] ss:$4 sm:$0xff] %v6780
      %7168 = vst [vmem:[%s7106] ss:$4 sm:$0xff] %v6859
      %7169 = vst [vmem:[%s7108] ss:$4 sm:$0xff] %v6860
      %v7170 = vld.sshfl [vmem:[#allocation1] sm:$0xff pattern:$0x73625140]
      %v7171 = vld.sshfl [vmem:[#allocation1 + $0x20] sm:$0xff pattern:$0x73625140]
      %7172 = vst [vmem:[#allocation1] ss:$4 sm:$0xff] %v6781
      %7173 = vst [vmem:[%s7096] ss:$4 sm:$0xff] %v6861
      %7174 = vst [vmem:[%s7098] ss:$4 sm:$0xff] %v6862
      %7175 = vst [vmem:[%s7100] ss:$4 sm:$0xff] %v6863
      %7176 = vst [vmem:[%s7102] ss:$4 sm:$0xff] %v6782
      %7177 = vst [vmem:[%s7104] ss:$4 sm:$0xff] %v6864
      %7178 = vst [vmem:[%s7106] ss:$4 sm:$0xff] %v6865
      %7179 = vst [vmem:[%s7108] ss:$4 sm:$0xff] %v6783
      %v7180 = vld.sshfl [vmem:[#allocation1] sm:$0xff pattern:$0x73625140]
      %v7181 = vld.sshfl [vmem:[#allocation1 + $0x20] sm:$0xff pattern:$0x73625140]
      %7182 = vst [vmem:[#allocation1] ss:$4 sm:$0xff] %v6866
      %7183 = vst [vmem:[%s7096] ss:$4 sm:$0xff] %v6867
      %7184 = vst [vmem:[%s7098] ss:$4 sm:$0xff] %v6868
      %7185 = vst [vmem:[%s7100] ss:$4 sm:$0xff] %v6784
      %7186 = vst [vmem:[%s7102] ss:$4 sm:$0xff] %v6869
      %7187 = vst [vmem:[%s7104] ss:$4 sm:$0xff] %v6870
      %7188 = vst [vmem:[%s7106] ss:$4 sm:$0xff] %v6785
      %7189 = vst [vmem:[%s7108] ss:$4 sm:$0xff] %v6871
      %v7190 = vld.sshfl [vmem:[#allocation1] sm:$0xff pattern:$0x73625140]
      %v7191 = vld.sshfl [vmem:[#allocation1 + $0x20] sm:$0xff pattern:$0x73625140]
      %7192 = vst [vmem:[#allocation1] ss:$4 sm:$0xff] %v6872
      %7193 = vst [vmem:[%s7096] ss:$4 sm:$0xff] %v6873
      %7194 = vst [vmem:[%s7098] ss:$4 sm:$0xff] %v6786
      %7195 = vst [vmem:[%s7100] ss:$4 sm:$0xff] %v6874
      %7196 = vst [vmem:[%s7102] ss:$4 sm:$0xff] %v6875
      %7197 = vst [vmem:[%s7104] ss:$4 sm:$0xff] %v6787
      %7198 = vst [vmem:[%s7106] ss:$4 sm:$0xff] %v6876
      %7199 = vst [vmem:[%s7108] ss:$4 sm:$0xff] %v6877
      %v7200 = vld.sshfl [vmem:[#allocation1] sm:$0xff pattern:$0x73625140]
      %v7201 = vld.sshfl [vmem:[#allocation1 + $0x20] sm:$0xff pattern:$0x73625140]
      %7202 = vst [vmem:[#allocation1] ss:$4 sm:$0xff] %v6878
      %7203 = vst [vmem:[%s7096] ss:$4 sm:$0xff] %v6788
      %7204 = vst [vmem:[%s7098] ss:$4 sm:$0xff] %v6879
      %7205 = vst [vmem:[%s7100] ss:$4 sm:$0xff] %v6880
      %7206 = vst [vmem:[%s7102] ss:$4 sm:$0xff] %v6789
      %7207 = vst [vmem:[%s7104] ss:$4 sm:$0xff] %v6881
      %7208 = vst [vmem:[%s7106] ss:$4 sm:$0xff] %v6882
      %7209 = vst [vmem:[%s7108] ss:$4 sm:$0xff] %v6883
      %v7210 = vld.sshfl [vmem:[#allocation1] sm:$0xff pattern:$0x73625140]
      %v7211 = vld.sshfl [vmem:[#allocation1 + $0x20] sm:$0xff pattern:$0x73625140]
      %7212 = vst [vmem:[#allocation1] ss:$4 sm:$0xff] %v6790
      %7213 = vst [vmem:[%s7096] ss:$4 sm:$0xff] %v6884
      %7214 = vst [vmem:[%s7098] ss:$4 sm:$0xff] %v6885
      %7215 = vst [vmem:[%s7100] ss:$4 sm:$0xff] %v6791
      %7216 = vst [vmem:[%s7102] ss:$4 sm:$0xff] %v6886
      %7217 = vst [vmem:[%s7104] ss:$4 sm:$0xff] %v6887
      %7218 = vst [vmem:[%s7106] ss:$4 sm:$0xff] %v6888
      %7219 = vst [vmem:[%s7108] ss:$4 sm:$0xff] %v6792
      %v7220 = vld.sshfl [vmem:[#allocation1] sm:$0xff pattern:$0x73625140]
      %v7221 = vld.sshfl [vmem:[#allocation1 + $0x20] sm:$0xff pattern:$0x73625140]
      %7222 = vst [vmem:[#allocation1] ss:$4 sm:$0xff] %v6889
      %7223 = vst [vmem:[%s7096] ss:$4 sm:$0xff] %v6890
      %v7224 = vld.sshfl [vmem:[#allocation1] sm:$0xff pattern:$0x73625140]
      %vm7225 = vcmask 1044480
      %v7226 = vrot.slane %v7110, 3
      %v7227 = vrot.slane %v7111, 3
      %v7228 = vsel %vm7225, %v7226, %v7227
      %v7229 = vrot.slane %v7120, 3
      %v7230 = vsel %vm7225, %v7227, %v7229
      %v7231 = vrot.slane %v7121, 3
      %v7232 = vsel %vm7225, %v7229, %v7231
      %v7233 = vrot.slane %v7130, 3
      %v7234 = vsel %vm7225, %v7231, %v7233
      %v7235 = vrot.slane %v7131, 3
      %v7236 = vsel %vm7225, %v7233, %v7235
      %v7237 = vrot.slane %v7140, 3
      %v7238 = vsel %vm7225, %v7235, %v7237
      %v7239 = vrot.slane %v7141, 3
      %v7240 = vsel %vm7225, %v7237, %v7239
      %v7241 = vrot.slane %v7150, 3
      %v7242 = vsel %vm7225, %v7239, %v7241
      %v7243 = vrot.slane %v7151, 3
      %v7244 = vsel %vm7225, %v7241, %v7243
      %v7245 = vrot.slane %v7160, 3
      %v7246 = vsel %vm7225, %v7243, %v7245
      %v7247 = vrot.slane %v7161, 3
      %v7248 = vsel %vm7225, %v7245, %v7247
      %v7249 = vrot.slane %v7170, 3
      %v7250 = vsel %vm7225, %v7247, %v7249
      %v7251 = vrot.slane %v7171, 3
      %v7252 = vsel %vm7225, %v7249, %v7251
      %v7253 = vrot.slane %v7180, 3
      %v7254 = vsel %vm7225, %v7251, %v7253
      %v7255 = vrot.slane %v7181, 3
      %v7256 = vsel %vm7225, %v7253, %v7255
      %v7257 = vrot.slane %v7190, 3
      %v7258 = vsel %vm7225, %v7255, %v7257
      %v7259 = vrot.slane %v7191, 3
      %v7260 = vsel %vm7225, %v7257, %v7259
      %v7261 = vrot.slane %v7200, 3
      %v7262 = vsel %vm7225, %v7259, %v7261
      %v7263 = vrot.slane %v7201, 3
      %v7264 = vsel %vm7225, %v7261, %v7263
      %v7265 = vrot.slane %v7210, 3
      %v7266 = vsel %vm7225, %v7263, %v7265
      %v7267 = vrot.slane %v7211, 3
      %v7268 = vsel %vm7225, %v7265, %v7267
      %v7269 = vrot.slane %v7220, 3
      %v7270 = vsel %vm7225, %v7267, %v7269
      %v7271 = vrot.slane %v7221, 3
      %v7272 = vsel %vm7225, %v7269, %v7271
      %v7273 = vrot.slane %v7224, 3
      %v7274 = vsel %vm7225, %v7271, %v7273
      %7301 = vst [vmem:[#allocation1] ss:$4 sm:$0xff] %v6765
      %s7302 = scalar_lea.vmem [#allocation1], 1
      %7303 = vst [vmem:[%s7302] ss:$4 sm:$0xff] %v6821
      %s7304 = scalar_lea.vmem [#allocation1], 2
      %7305 = vst [vmem:[%s7304] ss:$4 sm:$0xff] %v6822
      %s7306 = scalar_lea.vmem [#allocation1], 3
      %7307 = vst [vmem:[%s7306] ss:$4 sm:$0xff] %v6823
      %s7308 = scalar_lea.vmem [#allocation1], 32
      %7309 = vst [vmem:[%s7308] ss:$4 sm:$0xff] %v6766
      %s7310 = scalar_lea.vmem [#allocation1], 33
      %7311 = vst [vmem:[%s7310] ss:$4 sm:$0xff] %v6824
      %s7312 = scalar_lea.vmem [#allocation1], 34
      %7313 = vst [vmem:[%s7312] ss:$4 sm:$0xff] %v6825
      %s7314 = scalar_lea.vmem [#allocation1], 35
      %7315 = vst [vmem:[%s7314] ss:$4 sm:$0xff] %v6767
      %v7316 = vld.sshfl [vmem:[#allocation1] sm:$0xff pattern:$0x73625140]
      %v7317 = vld.sshfl [vmem:[#allocation1 + $0x20] sm:$0xff pattern:$0x73625140]
      %7318 = vst [vmem:[#allocation1] ss:$4 sm:$0xff] %v6826
      %7319 = vst [vmem:[%s7302] ss:$4 sm:$0xff] %v6827
      %7320 = vst [vmem:[%s7304] ss:$4 sm:$0xff] %v6828
      %7321 = vst [vmem:[%s7306] ss:$4 sm:$0xff] %v6768
      %7322 = vst [vmem:[%s7308] ss:$4 sm:$0xff] %v6829
      %7323 = vst [vmem:[%s7310] ss:$4 sm:$0xff] %v6830
      %7324 = vst [vmem:[%s7312] ss:$4 sm:$0xff] %v6769
      %7325 = vst [vmem:[%s7314] ss:$4 sm:$0xff] %v6831
      %v7326 = vld.sshfl [vmem:[#allocation1] sm:$0xff pattern:$0x73625140]
      %v7327 = vld.sshfl [vmem:[#allocation1 + $0x20] sm:$0xff pattern:$0x73625140]
      %7328 = vst [vmem:[#allocation1] ss:$4 sm:$0xff] %v6832
      %7329 = vst [vmem:[%s7302] ss:$4 sm:$0xff] %v6833
      %7330 = vst [vmem:[%s7304] ss:$4 sm:$0xff] %v6770
      %7331 = vst [vmem:[%s7306] ss:$4 sm:$0xff] %v6834
      %7332 = vst [vmem:[%s7308] ss:$4 sm:$0xff] %v6835
      %7333 = vst [vmem:[%s7310] ss:$4 sm:$0xff] %v6771
      %7334 = vst [vmem:[%s7312] ss:$4 sm:$0xff] %v6836
      %7335 = vst [vmem:[%s7314] ss:$4 sm:$0xff] %v6837
      %v7336 = vld.sshfl [vmem:[#allocation1] sm:$0xff pattern:$0x73625140]
      %v7337 = vld.sshfl [vmem:[#allocation1 + $0x20] sm:$0xff pattern:$0x73625140]
      %7338 = vst [vmem:[#allocation1] ss:$4 sm:$0xff] %v6838
      %7339 = vst [vmem:[%s7302] ss:$4 sm:$0xff] %v6772
      %7340 = vst [vmem:[%s7304] ss:$4 sm:$0xff] %v6839
      %7341 = vst [vmem:[%s7306] ss:$4 sm:$0xff] %v6840
      %7342 = vst [vmem:[%s7308] ss:$4 sm:$0xff] %v6773
      %7343 = vst [vmem:[%s7310] ss:$4 sm:$0xff] %v6841
      %7344 = vst [vmem:[%s7312] ss:$4 sm:$0xff] %v6842
      %7345 = vst [vmem:[%s7314] ss:$4 sm:$0xff] %v6843
      %v7346 = vld.sshfl [vmem:[#allocation1] sm:$0xff pattern:$0x73625140]
      %v7347 = vld.sshfl [vmem:[#allocation1 + $0x20] sm:$0xff pattern:$0x73625140]
      %7348 = vst [vmem:[#allocation1] ss:$4 sm:$0xff] %v6774
      %7349 = vst [vmem:[%s7302] ss:$4 sm:$0xff] %v6844
      %7350 = vst [vmem:[%s7304] ss:$4 sm:$0xff] %v6845
      %7351 = vst [vmem:[%s7306] ss:$4 sm:$0xff] %v6775
      %7352 = vst [vmem:[%s7308] ss:$4 sm:$0xff] %v6846
      %7353 = vst [vmem:[%s7310] ss:$4 sm:$0xff] %v6847
      %7354 = vst [vmem:[%s7312] ss:$4 sm:$0xff] %v6848
      %7355 = vst [vmem:[%s7314] ss:$4 sm:$0xff] %v6776
      %v7356 = vld.sshfl [vmem:[#allocation1] sm:$0xff pattern:$0x73625140]
      %v7357 = vld.sshfl [vmem:[#allocation1 + $0x20] sm:$0xff pattern:$0x73625140]
      %7358 = vst [vmem:[#allocation1] ss:$4 sm:$0xff] %v6849
      %7359 = vst [vmem:[%s7302] ss:$4 sm:$0xff] %v6850
      %7360 = vst [vmem:[%s7304] ss:$4 sm:$0xff] %v6777
      %7361 = vst [vmem:[%s7306] ss:$4 sm:$0xff] %v6851
      %7362 = vst [vmem:[%s7308] ss:$4 sm:$0xff] %v6852
      %7363 = vst [vmem:[%s7310] ss:$4 sm:$0xff] %v6853
      %7364 = vst [vmem:[%s7312] ss:$4 sm:$0xff] %v6778
      %7365 = vst [vmem:[%s7314] ss:$4 sm:$0xff] %v6854
      %v7366 = vld.sshfl [vmem:[#allocation1] sm:$0xff pattern:$0x73625140]
      %v7367 = vld.sshfl [vmem:[#allocation1 + $0x20] sm:$0xff pattern:$0x73625140]
      %7368 = vst [vmem:[#allocation1] ss:$4 sm:$0xff] %v6855
      %7369 = vst [vmem:[%s7302] ss:$4 sm:$0xff] %v6779
      %7370 = vst [vmem:[%s7304] ss:$4 sm:$0xff] %v6856
      %7371 = vst [vmem:[%s7306] ss:$4 sm:$0xff] %v6857
      %7372 = vst [vmem:[%s7308] ss:$4 sm:$0xff] %v6858
      %7373 = vst [vmem:[%s7310] ss:$4 sm:$0xff] %v6780
      %7374 = vst [vmem:[%s7312] ss:$4 sm:$0xff] %v6859
      %7375 = vst [vmem:[%s7314] ss:$4 sm:$0xff] %v6860
      %v7376 = vld.sshfl [vmem:[#allocation1] sm:$0xff pattern:$0x73625140]
      %v7377 = vld.sshfl [vmem:[#allocation1 + $0x20] sm:$0xff pattern:$0x73625140]
      %7378 = vst [vmem:[#allocation1] ss:$4 sm:$0xff] %v6781
      %7379 = vst [vmem:[%s7302] ss:$4 sm:$0xff] %v6861
      %7380 = vst [vmem:[%s7304] ss:$4 sm:$0xff] %v6862
      %7381 = vst [vmem:[%s7306] ss:$4 sm:$0xff] %v6863
      %7382 = vst [vmem:[%s7308] ss:$4 sm:$0xff] %v6782
      %7383 = vst [vmem:[%s7310] ss:$4 sm:$0xff] %v6864
      %7384 = vst [vmem:[%s7312] ss:$4 sm:$0xff] %v6865
      %7385 = vst [vmem:[%s7314] ss:$4 sm:$0xff] %v6783
      %v7386 = vld.sshfl [vmem:[#allocation1] sm:$0xff pattern:$0x73625140]
      %v7387 = vld.sshfl [vmem:[#allocation1 + $0x20] sm:$0xff pattern:$0x73625140]
      %7388 = vst [vmem:[#allocation1] ss:$4 sm:$0xff] %v6866
      %7389 = vst [vmem:[%s7302] ss:$4 sm:$0xff] %v6867
      %7390 = vst [vmem:[%s7304] ss:$4 sm:$0xff] %v6868
      %7391 = vst [vmem:[%s7306] ss:$4 sm:$0xff] %v6784
      %7392 = vst [vmem:[%s7308] ss:$4 sm:$0xff] %v6869
      %7393 = vst [vmem:[%s7310] ss:$4 sm:$0xff] %v6870
      %7394 = vst [vmem:[%s7312] ss:$4 sm:$0xff] %v6785
      %7395 = vst [vmem:[%s7314] ss:$4 sm:$0xff] %v6871
      %v7396 = vld.sshfl [vmem:[#allocation1] sm:$0xff pattern:$0x73625140]
      %v7397 = vld.sshfl [vmem:[#allocation1 + $0x20] sm:$0xff pattern:$0x73625140]
      %7398 = vst [vmem:[#allocation1] ss:$4 sm:$0xff] %v6872
      %7399 = vst [vmem:[%s7302] ss:$4 sm:$0xff] %v6873
      %7400 = vst [vmem:[%s7304] ss:$4 sm:$0xff] %v6786
      %7401 = vst [vmem:[%s7306] ss:$4 sm:$0xff] %v6874
      %7402 = vst [vmem:[%s7308] ss:$4 sm:$0xff] %v6875
      %7403 = vst [vmem:[%s7310] ss:$4 sm:$0xff] %v6787
      %7404 = vst [vmem:[%s7312] ss:$4 sm:$0xff] %v6876
      %7405 = vst [vmem:[%s7314] ss:$4 sm:$0xff] %v6877
      %v7406 = vld.sshfl [vmem:[#allocation1] sm:$0xff pattern:$0x73625140]
      %v7407 = vld.sshfl [vmem:[#allocation1 + $0x20] sm:$0xff pattern:$0x73625140]
      %7408 = vst [vmem:[#allocation1] ss:$4 sm:$0xff] %v6878
      %7409 = vst [vmem:[%s7302] ss:$4 sm:$0xff] %v6788
      %7410 = vst [vmem:[%s7304] ss:$4 sm:$0xff] %v6879
      %7411 = vst [vmem:[%s7306] ss:$4 sm:$0xff] %v6880
      %7412 = vst [vmem:[%s7308] ss:$4 sm:$0xff] %v6789
      %7413 = vst [vmem:[%s7310] ss:$4 sm:$0xff] %v6881
      %7414 = vst [vmem:[%s7312] ss:$4 sm:$0xff] %v6882
      %7415 = vst [vmem:[%s7314] ss:$4 sm:$0xff] %v6883
      %v7416 = vld.sshfl [vmem:[#allocation1] sm:$0xff pattern:$0x73625140]
      %v7417 = vld.sshfl [vmem:[#allocation1 + $0x20] sm:$0xff pattern:$0x73625140]
      %7418 = vst [vmem:[#allocation1] ss:$4 sm:$0xff] %v6790
      %7419 = vst [vmem:[%s7302] ss:$4 sm:$0xff] %v6884
      %7420 = vst [vmem:[%s7304] ss:$4 sm:$0xff] %v6885
      %7421 = vst [vmem:[%s7306] ss:$4 sm:$0xff] %v6791
      %7422 = vst [vmem:[%s7308] ss:$4 sm:$0xff] %v6886
      %7423 = vst [vmem:[%s7310] ss:$4 sm:$0xff] %v6887
      %7424 = vst [vmem:[%s7312] ss:$4 sm:$0xff] %v6888
      %7425 = vst [vmem:[%s7314] ss:$4 sm:$0xff] %v6792
      %v7426 = vld.sshfl [vmem:[#allocation1] sm:$0xff pattern:$0x73625140]
      %v7427 = vld.sshfl [vmem:[#allocation1 + $0x20] sm:$0xff pattern:$0x73625140]
      %7428 = vst [vmem:[#allocation1] ss:$4 sm:$0xff] %v6889
      %7429 = vst [vmem:[%s7302] ss:$4 sm:$0xff] %v6890
      %v7430 = vld.sshfl [vmem:[#allocation1] sm:$0xff pattern:$0x73625140]
      %v7431 = vrot.slane %v7316, 7
      %v7432 = vrot.slane %v7317, 7
      %v7433 = vsel %vm4113, %v7431, %v7432
      %v7434 = vrot.slane %v7326, 7
      %v7435 = vsel %vm4113, %v7432, %v7434
      %v7436 = vrot.slane %v7327, 7
      %v7437 = vsel %vm4113, %v7434, %v7436
      %v7438 = vrot.slane %v7336, 7
      %v7439 = vsel %vm4113, %v7436, %v7438
      %v7440 = vrot.slane %v7337, 7
      %v7441 = vsel %vm4113, %v7438, %v7440
      %v7442 = vrot.slane %v7346, 7
      %v7443 = vsel %vm4113, %v7440, %v7442
      %v7444 = vrot.slane %v7347, 7
      %v7445 = vsel %vm4113, %v7442, %v7444
      %v7446 = vrot.slane %v7356, 7
      %v7447 = vsel %vm4113, %v7444, %v7446
      %v7448 = vrot.slane %v7357, 7
      %v7449 = vsel %vm4113, %v7446, %v7448
      %v7450 = vrot.slane %v7366, 7
      %v7451 = vsel %vm4113, %v7448, %v7450
      %v7452 = vrot.slane %v7367, 7
      %v7453 = vsel %vm4113, %v7450, %v7452
      %v7454 = vrot.slane %v7376, 7
      %v7455 = vsel %vm4113, %v7452, %v7454
      %v7456 = vrot.slane %v7377, 7
      %v7457 = vsel %vm4113, %v7454, %v7456
      %v7458 = vrot.slane %v7386, 7
      %v7459 = vsel %vm4113, %v7456, %v7458
      %v7460 = vrot.slane %v7387, 7
      %v7461 = vsel %vm4113, %v7458, %v7460
      %v7462 = vrot.slane %v7396, 7
      %v7463 = vsel %vm4113, %v7460, %v7462
      %v7464 = vrot.slane %v7397, 7
      %v7465 = vsel %vm4113, %v7462, %v7464
      %v7466 = vrot.slane %v7406, 7
      %v7467 = vsel %vm4113, %v7464, %v7466
      %v7468 = vrot.slane %v7407, 7
      %v7469 = vsel %vm4113, %v7466, %v7468
      %v7470 = vrot.slane %v7416, 7
      %v7471 = vsel %vm4113, %v7468, %v7470
      %v7472 = vrot.slane %v7417, 7
      %v7473 = vsel %vm4113, %v7470, %v7472
      %v7474 = vrot.slane %v7426, 7
      %v7475 = vsel %vm4113, %v7472, %v7474
      %v7476 = vrot.slane %v7427, 7
      %v7477 = vsel %vm4113, %v7474, %v7476
      %v7478 = vrot.slane %v7430, 7
      %v7479 = vsel %vm4113, %v7476, %v7478
      %v7505 = vsel %vm4113, %v3636, %v7021
      %v7506 = vsel %vm7225, %v7069, %v7226
      %v7507 = vsel %vm4113, %v7273, %v7431
      %v7508 = vmul.f32 %v7505, -1.702
      %v7509 = vmul.f32 %v7023, -1.702
      %v7510 = vmul.f32 %v7025, -1.702
      %v7511 = vmul.f32 %v7027, -1.702
      %v7512 = vmul.f32 %v7029, -1.702
      %v7513 = vmul.f32 %v7031, -1.702
      %v7514 = vmul.f32 %v7033, -1.702
      %v7515 = vmul.f32 %v7035, -1.702
      %v7516 = vmul.f32 %v7037, -1.702
      %v7517 = vmul.f32 %v7039, -1.702
      %v7518 = vmul.f32 %v7041, -1.702
      %v7519 = vmul.f32 %v7043, -1.702
      %v7520 = vmul.f32 %v7045, -1.702
      %v7521 = vmul.f32 %v7047, -1.702
      %v7522 = vmul.f32 %v7049, -1.702
      %v7523 = vmul.f32 %v7051, -1.702
      %v7524 = vmul.f32 %v7053, -1.702
      %v7525 = vmul.f32 %v7055, -1.702
      %v7526 = vmul.f32 %v7057, -1.702
      %v7527 = vmul.f32 %v7059, -1.702
      %v7528 = vmul.f32 %v7061, -1.702
      %v7529 = vmul.f32 %v7063, -1.702
      %v7530 = vmul.f32 %v7065, -1.702
      %v7531 = vmul.f32 %v7067, -1.702
      %v7532 = vmul.f32 %v7506, -1.702
      %v7533 = vmul.f32 %v7228, -1.702
      %v7534 = vmul.f32 %v7230, -1.702
      %v7535 = vmul.f32 %v7232, -1.702
      %v7536 = vmul.f32 %v7234, -1.702
      %v7537 = vmul.f32 %v7236, -1.702
      %v7538 = vmul.f32 %v7238, -1.702
      %v7539 = vmul.f32 %v7240, -1.702
      %v7540 = vmul.f32 %v7242, -1.702
      %v7541 = vmul.f32 %v7244, -1.702
      %v7542 = vmul.f32 %v7246, -1.702
      %v7543 = vmul.f32 %v7248, -1.702
      %v7544 = vmul.f32 %v7250, -1.702
      %v7545 = vmul.f32 %v7252, -1.702
      %v7546 = vmul.f32 %v7254, -1.702
      %v7547 = vmul.f32 %v7256, -1.702
      %v7548 = vmul.f32 %v7258, -1.702
      %v7549 = vmul.f32 %v7260, -1.702
      %v7550 = vmul.f32 %v7262, -1.702
      %v7551 = vmul.f32 %v7264, -1.702
      %v7552 = vmul.f32 %v7266, -1.702
      %v7553 = vmul.f32 %v7268, -1.702
      %v7554 = vmul.f32 %v7270, -1.702
      %v7555 = vmul.f32 %v7272, -1.702
      %v7556 = vmul.f32 %v7274, -1.702
      %v7557 = vmul.f32 %v7507, -1.702
      %v7558 = vmul.f32 %v7433, -1.702
      %v7559 = vmul.f32 %v7435, -1.702
      %v7560 = vmul.f32 %v7437, -1.702
      %v7561 = vmul.f32 %v7439, -1.702
      %v7562 = vmul.f32 %v7441, -1.702
      %v7563 = vmul.f32 %v7443, -1.702
      %v7564 = vmul.f32 %v7445, -1.702
      %v7565 = vmul.f32 %v7447, -1.702
      %v7566 = vmul.f32 %v7449, -1.702
      %v7567 = vmul.f32 %v7451, -1.702
      %v7568 = vmul.f32 %v7453, -1.702
      %v7569 = vmul.f32 %v7455, -1.702
      %v7570 = vmul.f32 %v7457, -1.702
      %v7571 = vmul.f32 %v7459, -1.702
      %v7572 = vmul.f32 %v7461, -1.702
      %v7573 = vmul.f32 %v7463, -1.702
      %v7574 = vmul.f32 %v7465, -1.702
      %v7575 = vmul.f32 %v7467, -1.702
      %v7576 = vmul.f32 %v7469, -1.702
      %v7577 = vmul.f32 %v7471, -1.702
      %v7578 = vmul.f32 %v7473, -1.702
      %v7579 = vmul.f32 %v7475, -1.702
      %v7580 = vmul.f32 %v7477, -1.702
      %v7581 = vmul.f32 %v7479, -1.702
      %v7582 = vmul.f32 %v7508, 1.442695
      %v7583 = vpow.pop %v7582
      %v7584 = vmul.f32 %v7509, 1.442695
      %v7585 = vpow.pop %v7584
      %v7586 = vmul.f32 %v7510, 1.442695
      %v7587 = vpow.pop %v7586
      %v7588 = vmul.f32 %v7511, 1.442695
      %v7589 = vpow.pop %v7588
      %v7590 = vmul.f32 %v7512, 1.442695
      %v7591 = vpow.pop %v7590
      %v7592 = vmul.f32 %v7513, 1.442695
      %v7593 = vpow.pop %v7592
      %v7594 = vmul.f32 %v7514, 1.442695
      %v7595 = vpow.pop %v7594
      %v7596 = vmul.f32 %v7515, 1.442695
      %v7597 = vpow.pop %v7596
      %v7598 = vmul.f32 %v7516, 1.442695
      %v7599 = vpow.pop %v7598
      %v7600 = vmul.f32 %v7517, 1.442695
      %v7601 = vpow.pop %v7600
      %v7602 = vmul.f32 %v7518, 1.442695
      %v7603 = vpow.pop %v7602
      %v7604 = vmul.f32 %v7519, 1.442695
      %v7605 = vpow.pop %v7604
      %v7606 = vmul.f32 %v7520, 1.442695
      %v7607 = vpow.pop %v7606
      %v7608 = vmul.f32 %v7521, 1.442695
      %v7609 = vpow.pop %v7608
      %v7610 = vmul.f32 %v7522, 1.442695
      %v7611 = vpow.pop %v7610
      %v7612 = vmul.f32 %v7523, 1.442695
      %v7613 = vpow.pop %v7612
      %v7614 = vmul.f32 %v7524, 1.442695
      %v7615 = vpow.pop %v7614
      %v7616 = vmul.f32 %v7525, 1.442695
      %v7617 = vpow.pop %v7616
      %v7618 = vmul.f32 %v7526, 1.442695
      %v7619 = vpow.pop %v7618
      %v7620 = vmul.f32 %v7527, 1.442695
      %v7621 = vpow.pop %v7620
      %v7622 = vmul.f32 %v7528, 1.442695
      %v7623 = vpow.pop %v7622
      %v7624 = vmul.f32 %v7529, 1.442695
      %v7625 = vpow.pop %v7624
      %v7626 = vmul.f32 %v7530, 1.442695
      %v7627 = vpow.pop %v7626
      %v7628 = vmul.f32 %v7531, 1.442695
      %v7629 = vpow.pop %v7628
      %v7630 = vmul.f32 %v7532, 1.442695
      %v7631 = vpow.pop %v7630
      %v7632 = vmul.f32 %v7533, 1.442695
      %v7633 = vpow.pop %v7632
      %v7634 = vmul.f32 %v7534, 1.442695
      %v7635 = vpow.pop %v7634
      %v7636 = vmul.f32 %v7535, 1.442695
      %v7637 = vpow.pop %v7636
      %v7638 = vmul.f32 %v7536, 1.442695
      %v7639 = vpow.pop %v7638
      %v7640 = vmul.f32 %v7537, 1.442695
      %v7641 = vpow.pop %v7640
      %v7642 = vmul.f32 %v7538, 1.442695
      %v7643 = vpow.pop %v7642
      %v7644 = vmul.f32 %v7539, 1.442695
      %v7645 = vpow.pop %v7644
      %v7646 = vmul.f32 %v7540, 1.442695
      %v7647 = vpow.pop %v7646
      %v7648 = vmul.f32 %v7541, 1.442695
      %v7649 = vpow.pop %v7648
      %v7650 = vmul.f32 %v7542, 1.442695
      %v7651 = vpow.pop %v7650
      %v7652 = vmul.f32 %v7543, 1.442695
      %v7653 = vpow.pop %v7652
      %v7654 = vmul.f32 %v7544, 1.442695
      %v7655 = vpow.pop %v7654
      %v7656 = vmul.f32 %v7545, 1.442695
      %v7657 = vpow.pop %v7656
      %v7658 = vmul.f32 %v7546, 1.442695
      %v7659 = vpow.pop %v7658
      %v7660 = vmul.f32 %v7547, 1.442695
      %v7661 = vpow.pop %v7660
      %v7662 = vmul.f32 %v7548, 1.442695
      %v7663 = vpow.pop %v7662
      %v7664 = vmul.f32 %v7549, 1.442695
      %v7665 = vpow.pop %v7664
      %v7666 = vmul.f32 %v7550, 1.442695
      %v7667 = vpow.pop %v7666
      %v7668 = vmul.f32 %v7551, 1.442695
      %v7669 = vpow.pop %v7668
      %v7670 = vmul.f32 %v7552, 1.442695
      %v7671 = vpow.pop %v7670
      %v7672 = vmul.f32 %v7553, 1.442695
      %v7673 = vpow.pop %v7672
      %v7674 = vmul.f32 %v7554, 1.442695
      %v7675 = vpow.pop %v7674
      %v7676 = vmul.f32 %v7555, 1.442695
      %v7677 = vpow.pop %v7676
      %v7678 = vmul.f32 %v7556, 1.442695
      %v7679 = vpow.pop %v7678
      %v7680 = vmul.f32 %v7557, 1.442695
      %v7681 = vpow.pop %v7680
      %v7682 = vmul.f32 %v7558, 1.442695
      %v7683 = vpow.pop %v7682
      %v7684 = vmul.f32 %v7559, 1.442695
      %v7685 = vpow.pop %v7684
      %v7686 = vmul.f32 %v7560, 1.442695
      %v7687 = vpow.pop %v7686
      %v7688 = vmul.f32 %v7561, 1.442695
      %v7689 = vpow.pop %v7688
      %v7690 = vmul.f32 %v7562, 1.442695
      %v7691 = vpow.pop %v7690
      %v7692 = vmul.f32 %v7563, 1.442695
      %v7693 = vpow.pop %v7692
      %v7694 = vmul.f32 %v7564, 1.442695
      %v7695 = vpow.pop %v7694
      %v7696 = vmul.f32 %v7565, 1.442695
      %v7697 = vpow.pop %v7696
      %v7698 = vmul.f32 %v7566, 1.442695
      %v7699 = vpow.pop %v7698
      %v7700 = vmul.f32 %v7567, 1.442695
      %v7701 = vpow.pop %v7700
      %v7702 = vmul.f32 %v7568, 1.442695
      %v7703 = vpow.pop %v7702
      %v7704 = vmul.f32 %v7569, 1.442695
      %v7705 = vpow.pop %v7704
      %v7706 = vmul.f32 %v7570, 1.442695
      %v7707 = vpow.pop %v7706
      %v7708 = vmul.f32 %v7571, 1.442695
      %v7709 = vpow.pop %v7708
      %v7710 = vmul.f32 %v7572, 1.442695
      %v7711 = vpow.pop %v7710
      %v7712 = vmul.f32 %v7573, 1.442695
      %v7713 = vpow.pop %v7712
      %v7714 = vmul.f32 %v7574, 1.442695
      %v7715 = vpow.pop %v7714
      %v7716 = vmul.f32 %v7575, 1.442695
      %v7717 = vpow.pop %v7716
      %v7718 = vmul.f32 %v7576, 1.442695
      %v7719 = vpow.pop %v7718
      %v7720 = vmul.f32 %v7577, 1.442695
      %v7721 = vpow.pop %v7720
      %v7722 = vmul.f32 %v7578, 1.442695
      %v7723 = vpow.pop %v7722
      %v7724 = vmul.f32 %v7579, 1.442695
      %v7725 = vpow.pop %v7724
      %v7726 = vmul.f32 %v7580, 1.442695
      %v7727 = vpow.pop %v7726
      %v7728 = vmul.f32 %v7581, 1.442695
      %v7729 = vpow.pop %v7728
      %v7730 = vadd.f32 %v7583, 1.0
      %v7731 = vadd.f32 %v7585, 1.0
      %v7732 = vadd.f32 %v7587, 1.0
      %v7733 = vadd.f32 %v7589, 1.0
      %v7734 = vadd.f32 %v7591, 1.0
      %v7735 = vadd.f32 %v7593, 1.0
      %v7736 = vadd.f32 %v7595, 1.0
      %v7737 = vadd.f32 %v7597, 1.0
      %v7738 = vadd.f32 %v7599, 1.0
      %v7739 = vadd.f32 %v7601, 1.0
      %v7740 = vadd.f32 %v7603, 1.0
      %v7741 = vadd.f32 %v7605, 1.0
      %v7742 = vadd.f32 %v7607, 1.0
      %v7743 = vadd.f32 %v7609, 1.0
      %v7744 = vadd.f32 %v7611, 1.0
      %v7745 = vadd.f32 %v7613, 1.0
      %v7746 = vadd.f32 %v7615, 1.0
      %v7747 = vadd.f32 %v7617, 1.0
      %v7748 = vadd.f32 %v7619, 1.0
      %v7749 = vadd.f32 %v7621, 1.0
      %v7750 = vadd.f32 %v7623, 1.0
      %v7751 = vadd.f32 %v7625, 1.0
      %v7752 = vadd.f32 %v7627, 1.0
      %v7753 = vadd.f32 %v7629, 1.0
      %v7754 = vadd.f32 %v7631, 1.0
      %v7755 = vadd.f32 %v7633, 1.0
      %v7756 = vadd.f32 %v7635, 1.0
      %v7757 = vadd.f32 %v7637, 1.0
      %v7758 = vadd.f32 %v7639, 1.0
      %v7759 = vadd.f32 %v7641, 1.0
      %v7760 = vadd.f32 %v7643, 1.0
      %v7761 = vadd.f32 %v7645, 1.0
      %v7762 = vadd.f32 %v7647, 1.0
      %v7763 = vadd.f32 %v7649, 1.0
      %v7764 = vadd.f32 %v7651, 1.0
      %v7765 = vadd.f32 %v7653, 1.0
      %v7766 = vadd.f32 %v7655, 1.0
      %v7767 = vadd.f32 %v7657, 1.0
      %v7768 = vadd.f32 %v7659, 1.0
      %v7769 = vadd.f32 %v7661, 1.0
      %v7770 = vadd.f32 %v7663, 1.0
      %v7771 = vadd.f32 %v7665, 1.0
      %v7772 = vadd.f32 %v7667, 1.0
      %v7773 = vadd.f32 %v7669, 1.0
      %v7774 = vadd.f32 %v7671, 1.0
      %v7775 = vadd.f32 %v7673, 1.0
      %v7776 = vadd.f32 %v7675, 1.0
      %v7777 = vadd.f32 %v7677, 1.0
      %v7778 = vadd.f32 %v7679, 1.0
      %v7779 = vadd.f32 %v7681, 1.0
      %v7780 = vadd.f32 %v7683, 1.0
      %v7781 = vadd.f32 %v7685, 1.0
      %v7782 = vadd.f32 %v7687, 1.0
      %v7783 = vadd.f32 %v7689, 1.0
      %v7784 = vadd.f32 %v7691, 1.0
      %v7785 = vadd.f32 %v7693, 1.0
      %v7786 = vadd.f32 %v7695, 1.0
      %v7787 = vadd.f32 %v7697, 1.0
      %v7788 = vadd.f32 %v7699, 1.0
      %v7789 = vadd.f32 %v7701, 1.0
      %v7790 = vadd.f32 %v7703, 1.0
      %v7791 = vadd.f32 %v7705, 1.0
      %v7792 = vadd.f32 %v7707, 1.0
      %v7793 = vadd.f32 %v7709, 1.0
      %v7794 = vadd.f32 %v7711, 1.0
      %v7795 = vadd.f32 %v7713, 1.0
      %v7796 = vadd.f32 %v7715, 1.0
      %v7797 = vadd.f32 %v7717, 1.0
      %v7798 = vadd.f32 %v7719, 1.0
      %v7799 = vadd.f32 %v7721, 1.0
      %v7800 = vadd.f32 %v7723, 1.0
      %v7801 = vadd.f32 %v7725, 1.0
      %v7802 = vadd.f32 %v7727, 1.0
      %v7803 = vadd.f32 %v7729, 1.0
      %v7804 = vrcp.pop %v7730
      %v7805 = vmul.f32 %v7730, %v7804
      %v7806 = vsub.f32 1.0, %v7805
      %v7807 = vmul.f32 %v7804, %v7806
      %v7808 = vadd.f32 %v7804, %v7807
      %vm7809 = vweird.f32 %v7730
      %vm7810 = vweird.f32 %v7804
      %vm7811 = vmor %vm7809, %vm7810
      %v7812 = vsel %vm7811, %v7804, %v7808
      %v7813 = vand.u32 2147483647, %v7730
      %vm7814 = vcmp.eq.f32.partialorder %v7813, 8.507059e+37
      %v7815 = vand.u32 %v7730, 2147483648
      %v7816 = vor.u32 1.1754944e-38, %v7815
      %v7817 = vsel %vm7814, %v7816, %v7812
      %v7818 = vmul.f32 1.0, %v7817
      %v7819 = vrcp.pop %v7731
      %v7820 = vmul.f32 %v7731, %v7819
      %v7821 = vsub.f32 1.0, %v7820
      %v7822 = vmul.f32 %v7819, %v7821
      %v7823 = vadd.f32 %v7819, %v7822
      %vm7824 = vweird.f32 %v7731
      %vm7825 = vweird.f32 %v7819
      %vm7826 = vmor %vm7824, %vm7825
      %v7827 = vsel %vm7826, %v7819, %v7823
      %v7828 = vand.u32 2147483647, %v7731
      %vm7829 = vcmp.eq.f32.partialorder %v7828, 8.507059e+37
      %v7830 = vand.u32 %v7731, 2147483648
      %v7831 = vor.u32 1.1754944e-38, %v7830
      %v7832 = vsel %vm7829, %v7831, %v7827
      %v7833 = vmul.f32 1.0, %v7832
      %v7834 = vrcp.pop %v7732
      %v7835 = vmul.f32 %v7732, %v7834
      %v7836 = vsub.f32 1.0, %v7835
      %v7837 = vmul.f32 %v7834, %v7836
      %v7838 = vadd.f32 %v7834, %v7837
      %vm7839 = vweird.f32 %v7732
      %vm7840 = vweird.f32 %v7834
      %vm7841 = vmor %vm7839, %vm7840
      %v7842 = vsel %vm7841, %v7834, %v7838
      %v7843 = vand.u32 2147483647, %v7732
      %vm7844 = vcmp.eq.f32.partialorder %v7843, 8.507059e+37
      %v7845 = vand.u32 %v7732, 2147483648
      %v7846 = vor.u32 1.1754944e-38, %v7845
      %v7847 = vsel %vm7844, %v7846, %v7842
      %v7848 = vmul.f32 1.0, %v7847
      %v7849 = vrcp.pop %v7733
      %v7850 = vmul.f32 %v7733, %v7849
      %v7851 = vsub.f32 1.0, %v7850
      %v7852 = vmul.f32 %v7849, %v7851
      %v7853 = vadd.f32 %v7849, %v7852
      %vm7854 = vweird.f32 %v7733
      %vm7855 = vweird.f32 %v7849
      %vm7856 = vmor %vm7854, %vm7855
      %v7857 = vsel %vm7856, %v7849, %v7853
      %v7858 = vand.u32 2147483647, %v7733
      %vm7859 = vcmp.eq.f32.partialorder %v7858, 8.507059e+37
      %v7860 = vand.u32 %v7733, 2147483648
      %v7861 = vor.u32 1.1754944e-38, %v7860
      %v7862 = vsel %vm7859, %v7861, %v7857
      %v7863 = vmul.f32 1.0, %v7862
      %v7864 = vrcp.pop %v7734
      %v7865 = vmul.f32 %v7734, %v7864
      %v7866 = vsub.f32 1.0, %v7865
      %v7867 = vmul.f32 %v7864, %v7866
      %v7868 = vadd.f32 %v7864, %v7867
      %vm7869 = vweird.f32 %v7734
      %vm7870 = vweird.f32 %v7864
      %vm7871 = vmor %vm7869, %vm7870
      %v7872 = vsel %vm7871, %v7864, %v7868
      %v7873 = vand.u32 2147483647, %v7734
      %vm7874 = vcmp.eq.f32.partialorder %v7873, 8.507059e+37
      %v7875 = vand.u32 %v7734, 2147483648
      %v7876 = vor.u32 1.1754944e-38, %v7875
      %v7877 = vsel %vm7874, %v7876, %v7872
      %v7878 = vmul.f32 1.0, %v7877
      %v7879 = vrcp.pop %v7735
      %v7880 = vmul.f32 %v7735, %v7879
      %v7881 = vsub.f32 1.0, %v7880
      %v7882 = vmul.f32 %v7879, %v7881
      %v7883 = vadd.f32 %v7879, %v7882
      %vm7884 = vweird.f32 %v7735
      %vm7885 = vweird.f32 %v7879
      %vm7886 = vmor %vm7884, %vm7885
      %v7887 = vsel %vm7886, %v7879, %v7883
      %v7888 = vand.u32 2147483647, %v7735
      %vm7889 = vcmp.eq.f32.partialorder %v7888, 8.507059e+37
      %v7890 = vand.u32 %v7735, 2147483648
      %v7891 = vor.u32 1.1754944e-38, %v7890
      %v7892 = vsel %vm7889, %v7891, %v7887
      %v7893 = vmul.f32 1.0, %v7892
      %v7894 = vrcp.pop %v7736
      %v7895 = vmul.f32 %v7736, %v7894
      %v7896 = vsub.f32 1.0, %v7895
      %v7897 = vmul.f32 %v7894, %v7896
      %v7898 = vadd.f32 %v7894, %v7897
      %vm7899 = vweird.f32 %v7736
      %vm7900 = vweird.f32 %v7894
      %vm7901 = vmor %vm7899, %vm7900
      %v7902 = vsel %vm7901, %v7894, %v7898
      %v7903 = vand.u32 2147483647, %v7736
      %vm7904 = vcmp.eq.f32.partialorder %v7903, 8.507059e+37
      %v7905 = vand.u32 %v7736, 2147483648
      %v7906 = vor.u32 1.1754944e-38, %v7905
      %v7907 = vsel %vm7904, %v7906, %v7902
      %v7908 = vmul.f32 1.0, %v7907
      %v7909 = vrcp.pop %v7737
      %v7910 = vmul.f32 %v7737, %v7909
      %v7911 = vsub.f32 1.0, %v7910
      %v7912 = vmul.f32 %v7909, %v7911
      %v7913 = vadd.f32 %v7909, %v7912
      %vm7914 = vweird.f32 %v7737
      %vm7915 = vweird.f32 %v7909
      %vm7916 = vmor %vm7914, %vm7915
      %v7917 = vsel %vm7916, %v7909, %v7913
      %v7918 = vand.u32 2147483647, %v7737
      %vm7919 = vcmp.eq.f32.partialorder %v7918, 8.507059e+37
      %v7920 = vand.u32 %v7737, 2147483648
      %v7921 = vor.u32 1.1754944e-38, %v7920
      %v7922 = vsel %vm7919, %v7921, %v7917
      %v7923 = vmul.f32 1.0, %v7922
      %v7924 = vrcp.pop %v7738
      %v7925 = vmul.f32 %v7738, %v7924
      %v7926 = vsub.f32 1.0, %v7925
      %v7927 = vmul.f32 %v7924, %v7926
      %v7928 = vadd.f32 %v7924, %v7927
      %vm7929 = vweird.f32 %v7738
      %vm7930 = vweird.f32 %v7924
      %vm7931 = vmor %vm7929, %vm7930
      %v7932 = vsel %vm7931, %v7924, %v7928
      %v7933 = vand.u32 2147483647, %v7738
      %vm7934 = vcmp.eq.f32.partialorder %v7933, 8.507059e+37
      %v7935 = vand.u32 %v7738, 2147483648
      %v7936 = vor.u32 1.1754944e-38, %v7935
      %v7937 = vsel %vm7934, %v7936, %v7932
      %v7938 = vmul.f32 1.0, %v7937
      %v7939 = vrcp.pop %v7739
      %v7940 = vmul.f32 %v7739, %v7939
      %v7941 = vsub.f32 1.0, %v7940
      %v7942 = vmul.f32 %v7939, %v7941
      %v7943 = vadd.f32 %v7939, %v7942
      %vm7944 = vweird.f32 %v7739
      %vm7945 = vweird.f32 %v7939
      %vm7946 = vmor %vm7944, %vm7945
      %v7947 = vsel %vm7946, %v7939, %v7943
      %v7948 = vand.u32 2147483647, %v7739
      %vm7949 = vcmp.eq.f32.partialorder %v7948, 8.507059e+37
      %v7950 = vand.u32 %v7739, 2147483648
      %v7951 = vor.u32 1.1754944e-38, %v7950
      %v7952 = vsel %vm7949, %v7951, %v7947
      %v7953 = vmul.f32 1.0, %v7952
      %v7954 = vrcp.pop %v7740
      %v7955 = vmul.f32 %v7740, %v7954
      %v7956 = vsub.f32 1.0, %v7955
      %v7957 = vmul.f32 %v7954, %v7956
      %v7958 = vadd.f32 %v7954, %v7957
      %vm7959 = vweird.f32 %v7740
      %vm7960 = vweird.f32 %v7954
      %vm7961 = vmor %vm7959, %vm7960
      %v7962 = vsel %vm7961, %v7954, %v7958
      %v7963 = vand.u32 2147483647, %v7740
      %vm7964 = vcmp.eq.f32.partialorder %v7963, 8.507059e+37
      %v7965 = vand.u32 %v7740, 2147483648
      %v7966 = vor.u32 1.1754944e-38, %v7965
      %v7967 = vsel %vm7964, %v7966, %v7962
      %v7968 = vmul.f32 1.0, %v7967
      %v7969 = vrcp.pop %v7741
      %v7970 = vmul.f32 %v7741, %v7969
      %v7971 = vsub.f32 1.0, %v7970
      %v7972 = vmul.f32 %v7969, %v7971
      %v7973 = vadd.f32 %v7969, %v7972
      %vm7974 = vweird.f32 %v7741
      %vm7975 = vweird.f32 %v7969
      %vm7976 = vmor %vm7974, %vm7975
      %v7977 = vsel %vm7976, %v7969, %v7973
      %v7978 = vand.u32 2147483647, %v7741
      %vm7979 = vcmp.eq.f32.partialorder %v7978, 8.507059e+37
      %v7980 = vand.u32 %v7741, 2147483648
      %v7981 = vor.u32 1.1754944e-38, %v7980
      %v7982 = vsel %vm7979, %v7981, %v7977
      %v7983 = vmul.f32 1.0, %v7982
      %v7984 = vrcp.pop %v7742
      %v7985 = vmul.f32 %v7742, %v7984
      %v7986 = vsub.f32 1.0, %v7985
      %v7987 = vmul.f32 %v7984, %v7986
      %v7988 = vadd.f32 %v7984, %v7987
      %vm7989 = vweird.f32 %v7742
      %vm7990 = vweird.f32 %v7984
      %vm7991 = vmor %vm7989, %vm7990
      %v7992 = vsel %vm7991, %v7984, %v7988
      %v7993 = vand.u32 2147483647, %v7742
      %vm7994 = vcmp.eq.f32.partialorder %v7993, 8.507059e+37
      %v7995 = vand.u32 %v7742, 2147483648
      %v7996 = vor.u32 1.1754944e-38, %v7995
      %v7997 = vsel %vm7994, %v7996, %v7992
      %v7998 = vmul.f32 1.0, %v7997
      %v7999 = vrcp.pop %v7743
      %v8000 = vmul.f32 %v7743, %v7999
      %v8001 = vsub.f32 1.0, %v8000
      %v8002 = vmul.f32 %v7999, %v8001
      %v8003 = vadd.f32 %v7999, %v8002
      %vm8004 = vweird.f32 %v7743
      %vm8005 = vweird.f32 %v7999
      %vm8006 = vmor %vm8004, %vm8005
      %v8007 = vsel %vm8006, %v7999, %v8003
      %v8008 = vand.u32 2147483647, %v7743
      %vm8009 = vcmp.eq.f32.partialorder %v8008, 8.507059e+37
      %v8010 = vand.u32 %v7743, 2147483648
      %v8011 = vor.u32 1.1754944e-38, %v8010
      %v8012 = vsel %vm8009, %v8011, %v8007
      %v8013 = vmul.f32 1.0, %v8012
      %v8014 = vrcp.pop %v7744
      %v8015 = vmul.f32 %v7744, %v8014
      %v8016 = vsub.f32 1.0, %v8015
      %v8017 = vmul.f32 %v8014, %v8016
      %v8018 = vadd.f32 %v8014, %v8017
      %vm8019 = vweird.f32 %v7744
      %vm8020 = vweird.f32 %v8014
      %vm8021 = vmor %vm8019, %vm8020
      %v8022 = vsel %vm8021, %v8014, %v8018
      %v8023 = vand.u32 2147483647, %v7744
      %vm8024 = vcmp.eq.f32.partialorder %v8023, 8.507059e+37
      %v8025 = vand.u32 %v7744, 2147483648
      %v8026 = vor.u32 1.1754944e-38, %v8025
      %v8027 = vsel %vm8024, %v8026, %v8022
      %v8028 = vmul.f32 1.0, %v8027
      %v8029 = vrcp.pop %v7745
      %v8030 = vmul.f32 %v7745, %v8029
      %v8031 = vsub.f32 1.0, %v8030
      %v8032 = vmul.f32 %v8029, %v8031
      %v8033 = vadd.f32 %v8029, %v8032
      %vm8034 = vweird.f32 %v7745
      %vm8035 = vweird.f32 %v8029
      %vm8036 = vmor %vm8034, %vm8035
      %v8037 = vsel %vm8036, %v8029, %v8033
      %v8038 = vand.u32 2147483647, %v7745
      %vm8039 = vcmp.eq.f32.partialorder %v8038, 8.507059e+37
      %v8040 = vand.u32 %v7745, 2147483648
      %v8041 = vor.u32 1.1754944e-38, %v8040
      %v8042 = vsel %vm8039, %v8041, %v8037
      %v8043 = vmul.f32 1.0, %v8042
      %v8044 = vrcp.pop %v7746
      %v8045 = vmul.f32 %v7746, %v8044
      %v8046 = vsub.f32 1.0, %v8045
      %v8047 = vmul.f32 %v8044, %v8046
      %v8048 = vadd.f32 %v8044, %v8047
      %vm8049 = vweird.f32 %v7746
      %vm8050 = vweird.f32 %v8044
      %vm8051 = vmor %vm8049, %vm8050
      %v8052 = vsel %vm8051, %v8044, %v8048
      %v8053 = vand.u32 2147483647, %v7746
      %vm8054 = vcmp.eq.f32.partialorder %v8053, 8.507059e+37
      %v8055 = vand.u32 %v7746, 2147483648
      %v8056 = vor.u32 1.1754944e-38, %v8055
      %v8057 = vsel %vm8054, %v8056, %v8052
      %v8058 = vmul.f32 1.0, %v8057
      %v8059 = vrcp.pop %v7747
      %v8060 = vmul.f32 %v7747, %v8059
      %v8061 = vsub.f32 1.0, %v8060
      %v8062 = vmul.f32 %v8059, %v8061
      %v8063 = vadd.f32 %v8059, %v8062
      %vm8064 = vweird.f32 %v7747
      %vm8065 = vweird.f32 %v8059
      %vm8066 = vmor %vm8064, %vm8065
      %v8067 = vsel %vm8066, %v8059, %v8063
      %v8068 = vand.u32 2147483647, %v7747
      %vm8069 = vcmp.eq.f32.partialorder %v8068, 8.507059e+37
      %v8070 = vand.u32 %v7747, 2147483648
      %v8071 = vor.u32 1.1754944e-38, %v8070
      %v8072 = vsel %vm8069, %v8071, %v8067
      %v8073 = vmul.f32 1.0, %v8072
      %v8074 = vrcp.pop %v7748
      %v8075 = vmul.f32 %v7748, %v8074
      %v8076 = vsub.f32 1.0, %v8075
      %v8077 = vmul.f32 %v8074, %v8076
      %v8078 = vadd.f32 %v8074, %v8077
      %vm8079 = vweird.f32 %v7748
      %vm8080 = vweird.f32 %v8074
      %vm8081 = vmor %vm8079, %vm8080
      %v8082 = vsel %vm8081, %v8074, %v8078
      %v8083 = vand.u32 2147483647, %v7748
      %vm8084 = vcmp.eq.f32.partialorder %v8083, 8.507059e+37
      %v8085 = vand.u32 %v7748, 2147483648
      %v8086 = vor.u32 1.1754944e-38, %v8085
      %v8087 = vsel %vm8084, %v8086, %v8082
      %v8088 = vmul.f32 1.0, %v8087
      %v8089 = vrcp.pop %v7749
      %v8090 = vmul.f32 %v7749, %v8089
      %v8091 = vsub.f32 1.0, %v8090
      %v8092 = vmul.f32 %v8089, %v8091
      %v8093 = vadd.f32 %v8089, %v8092
      %vm8094 = vweird.f32 %v7749
      %vm8095 = vweird.f32 %v8089
      %vm8096 = vmor %vm8094, %vm8095
      %v8097 = vsel %vm8096, %v8089, %v8093
      %v8098 = vand.u32 2147483647, %v7749
      %vm8099 = vcmp.eq.f32.partialorder %v8098, 8.507059e+37
      %v8100 = vand.u32 %v7749, 2147483648
      %v8101 = vor.u32 1.1754944e-38, %v8100
      %v8102 = vsel %vm8099, %v8101, %v8097
      %v8103 = vmul.f32 1.0, %v8102
      %v8104 = vrcp.pop %v7750
      %v8105 = vmul.f32 %v7750, %v8104
      %v8106 = vsub.f32 1.0, %v8105
      %v8107 = vmul.f32 %v8104, %v8106
      %v8108 = vadd.f32 %v8104, %v8107
      %vm8109 = vweird.f32 %v7750
      %vm8110 = vweird.f32 %v8104
      %vm8111 = vmor %vm8109, %vm8110
      %v8112 = vsel %vm8111, %v8104, %v8108
      %v8113 = vand.u32 2147483647, %v7750
      %vm8114 = vcmp.eq.f32.partialorder %v8113, 8.507059e+37
      %v8115 = vand.u32 %v7750, 2147483648
      %v8116 = vor.u32 1.1754944e-38, %v8115
      %v8117 = vsel %vm8114, %v8116, %v8112
      %v8118 = vmul.f32 1.0, %v8117
      %v8119 = vrcp.pop %v7751
      %v8120 = vmul.f32 %v7751, %v8119
      %v8121 = vsub.f32 1.0, %v8120
      %v8122 = vmul.f32 %v8119, %v8121
      %v8123 = vadd.f32 %v8119, %v8122
      %vm8124 = vweird.f32 %v7751
      %vm8125 = vweird.f32 %v8119
      %vm8126 = vmor %vm8124, %vm8125
      %v8127 = vsel %vm8126, %v8119, %v8123
      %v8128 = vand.u32 2147483647, %v7751
      %vm8129 = vcmp.eq.f32.partialorder %v8128, 8.507059e+37
      %v8130 = vand.u32 %v7751, 2147483648
      %v8131 = vor.u32 1.1754944e-38, %v8130
      %v8132 = vsel %vm8129, %v8131, %v8127
      %v8133 = vmul.f32 1.0, %v8132
      %v8134 = vrcp.pop %v7752
      %v8135 = vmul.f32 %v7752, %v8134
      %v8136 = vsub.f32 1.0, %v8135
      %v8137 = vmul.f32 %v8134, %v8136
      %v8138 = vadd.f32 %v8134, %v8137
      %vm8139 = vweird.f32 %v7752
      %vm8140 = vweird.f32 %v8134
      %vm8141 = vmor %vm8139, %vm8140
      %v8142 = vsel %vm8141, %v8134, %v8138
      %v8143 = vand.u32 2147483647, %v7752
      %vm8144 = vcmp.eq.f32.partialorder %v8143, 8.507059e+37
      %v8145 = vand.u32 %v7752, 2147483648
      %v8146 = vor.u32 1.1754944e-38, %v8145
      %v8147 = vsel %vm8144, %v8146, %v8142
      %v8148 = vmul.f32 1.0, %v8147
      %v8149 = vrcp.pop %v7753
      %v8150 = vmul.f32 %v7753, %v8149
      %v8151 = vsub.f32 1.0, %v8150
      %v8152 = vmul.f32 %v8149, %v8151
      %v8153 = vadd.f32 %v8149, %v8152
      %vm8154 = vweird.f32 %v7753
      %vm8155 = vweird.f32 %v8149
      %vm8156 = vmor %vm8154, %vm8155
      %v8157 = vsel %vm8156, %v8149, %v8153
      %v8158 = vand.u32 2147483647, %v7753
      %vm8159 = vcmp.eq.f32.partialorder %v8158, 8.507059e+37
      %v8160 = vand.u32 %v7753, 2147483648
      %v8161 = vor.u32 1.1754944e-38, %v8160
      %v8162 = vsel %vm8159, %v8161, %v8157
      %v8163 = vmul.f32 1.0, %v8162
      %v8164 = vrcp.pop %v7754
      %v8165 = vmul.f32 %v7754, %v8164
      %v8166 = vsub.f32 1.0, %v8165
      %v8167 = vmul.f32 %v8164, %v8166
      %v8168 = vadd.f32 %v8164, %v8167
      %vm8169 = vweird.f32 %v7754
      %vm8170 = vweird.f32 %v8164
      %vm8171 = vmor %vm8169, %vm8170
      %v8172 = vsel %vm8171, %v8164, %v8168
      %v8173 = vand.u32 2147483647, %v7754
      %vm8174 = vcmp.eq.f32.partialorder %v8173, 8.507059e+37
      %v8175 = vand.u32 %v7754, 2147483648
      %v8176 = vor.u32 1.1754944e-38, %v8175
      %v8177 = vsel %vm8174, %v8176, %v8172
      %v8178 = vmul.f32 1.0, %v8177
      %v8179 = vrcp.pop %v7755
      %v8180 = vmul.f32 %v7755, %v8179
      %v8181 = vsub.f32 1.0, %v8180
      %v8182 = vmul.f32 %v8179, %v8181
      %v8183 = vadd.f32 %v8179, %v8182
      %vm8184 = vweird.f32 %v7755
      %vm8185 = vweird.f32 %v8179
      %vm8186 = vmor %vm8184, %vm8185
      %v8187 = vsel %vm8186, %v8179, %v8183
      %v8188 = vand.u32 2147483647, %v7755
      %vm8189 = vcmp.eq.f32.partialorder %v8188, 8.507059e+37
      %v8190 = vand.u32 %v7755, 2147483648
      %v8191 = vor.u32 1.1754944e-38, %v8190
      %v8192 = vsel %vm8189, %v8191, %v8187
      %v8193 = vmul.f32 1.0, %v8192
      %v8194 = vrcp.pop %v7756
      %v8195 = vmul.f32 %v7756, %v8194
      %v8196 = vsub.f32 1.0, %v8195
      %v8197 = vmul.f32 %v8194, %v8196
      %v8198 = vadd.f32 %v8194, %v8197
      %vm8199 = vweird.f32 %v7756
      %vm8200 = vweird.f32 %v8194
      %vm8201 = vmor %vm8199, %vm8200
      %v8202 = vsel %vm8201, %v8194, %v8198
      %v8203 = vand.u32 2147483647, %v7756
      %vm8204 = vcmp.eq.f32.partialorder %v8203, 8.507059e+37
      %v8205 = vand.u32 %v7756, 2147483648
      %v8206 = vor.u32 1.1754944e-38, %v8205
      %v8207 = vsel %vm8204, %v8206, %v8202
      %v8208 = vmul.f32 1.0, %v8207
      %v8209 = vrcp.pop %v7757
      %v8210 = vmul.f32 %v7757, %v8209
      %v8211 = vsub.f32 1.0, %v8210
      %v8212 = vmul.f32 %v8209, %v8211
      %v8213 = vadd.f32 %v8209, %v8212
      %vm8214 = vweird.f32 %v7757
      %vm8215 = vweird.f32 %v8209
      %vm8216 = vmor %vm8214, %vm8215
      %v8217 = vsel %vm8216, %v8209, %v8213
      %v8218 = vand.u32 2147483647, %v7757
      %vm8219 = vcmp.eq.f32.partialorder %v8218, 8.507059e+37
      %v8220 = vand.u32 %v7757, 2147483648
      %v8221 = vor.u32 1.1754944e-38, %v8220
      %v8222 = vsel %vm8219, %v8221, %v8217
      %v8223 = vmul.f32 1.0, %v8222
      %v8224 = vrcp.pop %v7758
      %v8225 = vmul.f32 %v7758, %v8224
      %v8226 = vsub.f32 1.0, %v8225
      %v8227 = vmul.f32 %v8224, %v8226
      %v8228 = vadd.f32 %v8224, %v8227
      %vm8229 = vweird.f32 %v7758
      %vm8230 = vweird.f32 %v8224
      %vm8231 = vmor %vm8229, %vm8230
      %v8232 = vsel %vm8231, %v8224, %v8228
      %v8233 = vand.u32 2147483647, %v7758
      %vm8234 = vcmp.eq.f32.partialorder %v8233, 8.507059e+37
      %v8235 = vand.u32 %v7758, 2147483648
      %v8236 = vor.u32 1.1754944e-38, %v8235
      %v8237 = vsel %vm8234, %v8236, %v8232
      %v8238 = vmul.f32 1.0, %v8237
      %v8239 = vrcp.pop %v7759
      %v8240 = vmul.f32 %v7759, %v8239
      %v8241 = vsub.f32 1.0, %v8240
      %v8242 = vmul.f32 %v8239, %v8241
      %v8243 = vadd.f32 %v8239, %v8242
      %vm8244 = vweird.f32 %v7759
      %vm8245 = vweird.f32 %v8239
      %vm8246 = vmor %vm8244, %vm8245
      %v8247 = vsel %vm8246, %v8239, %v8243
      %v8248 = vand.u32 2147483647, %v7759
      %vm8249 = vcmp.eq.f32.partialorder %v8248, 8.507059e+37
      %v8250 = vand.u32 %v7759, 2147483648
      %v8251 = vor.u32 1.1754944e-38, %v8250
      %v8252 = vsel %vm8249, %v8251, %v8247
      %v8253 = vmul.f32 1.0, %v8252
      %v8254 = vrcp.pop %v7760
      %v8255 = vmul.f32 %v7760, %v8254
      %v8256 = vsub.f32 1.0, %v8255
      %v8257 = vmul.f32 %v8254, %v8256
      %v8258 = vadd.f32 %v8254, %v8257
      %vm8259 = vweird.f32 %v7760
      %vm8260 = vweird.f32 %v8254
      %vm8261 = vmor %vm8259, %vm8260
      %v8262 = vsel %vm8261, %v8254, %v8258
      %v8263 = vand.u32 2147483647, %v7760
      %vm8264 = vcmp.eq.f32.partialorder %v8263, 8.507059e+37
      %v8265 = vand.u32 %v7760, 2147483648
      %v8266 = vor.u32 1.1754944e-38, %v8265
      %v8267 = vsel %vm8264, %v8266, %v8262
      %v8268 = vmul.f32 1.0, %v8267
      %v8269 = vrcp.pop %v7761
      %v8270 = vmul.f32 %v7761, %v8269
      %v8271 = vsub.f32 1.0, %v8270
      %v8272 = vmul.f32 %v8269, %v8271
      %v8273 = vadd.f32 %v8269, %v8272
      %vm8274 = vweird.f32 %v7761
      %vm8275 = vweird.f32 %v8269
      %vm8276 = vmor %vm8274, %vm8275
      %v8277 = vsel %vm8276, %v8269, %v8273
      %v8278 = vand.u32 2147483647, %v7761
      %vm8279 = vcmp.eq.f32.partialorder %v8278, 8.507059e+37
      %v8280 = vand.u32 %v7761, 2147483648
      %v8281 = vor.u32 1.1754944e-38, %v8280
      %v8282 = vsel %vm8279, %v8281, %v8277
      %v8283 = vmul.f32 1.0, %v8282
      %v8284 = vrcp.pop %v7762
      %v8285 = vmul.f32 %v7762, %v8284
      %v8286 = vsub.f32 1.0, %v8285
      %v8287 = vmul.f32 %v8284, %v8286
      %v8288 = vadd.f32 %v8284, %v8287
      %vm8289 = vweird.f32 %v7762
      %vm8290 = vweird.f32 %v8284
      %vm8291 = vmor %vm8289, %vm8290
      %v8292 = vsel %vm8291, %v8284, %v8288
      %v8293 = vand.u32 2147483647, %v7762
      %vm8294 = vcmp.eq.f32.partialorder %v8293, 8.507059e+37
      %v8295 = vand.u32 %v7762, 2147483648
      %v8296 = vor.u32 1.1754944e-38, %v8295
      %v8297 = vsel %vm8294, %v8296, %v8292
      %v8298 = vmul.f32 1.0, %v8297
      %v8299 = vrcp.pop %v7763
      %v8300 = vmul.f32 %v7763, %v8299
      %v8301 = vsub.f32 1.0, %v8300
      %v8302 = vmul.f32 %v8299, %v8301
      %v8303 = vadd.f32 %v8299, %v8302
      %vm8304 = vweird.f32 %v7763
      %vm8305 = vweird.f32 %v8299
      %vm8306 = vmor %vm8304, %vm8305
      %v8307 = vsel %vm8306, %v8299, %v8303
      %v8308 = vand.u32 2147483647, %v7763
      %vm8309 = vcmp.eq.f32.partialorder %v8308, 8.507059e+37
      %v8310 = vand.u32 %v7763, 2147483648
      %v8311 = vor.u32 1.1754944e-38, %v8310
      %v8312 = vsel %vm8309, %v8311, %v8307
      %v8313 = vmul.f32 1.0, %v8312
      %v8314 = vrcp.pop %v7764
      %v8315 = vmul.f32 %v7764, %v8314
      %v8316 = vsub.f32 1.0, %v8315
      %v8317 = vmul.f32 %v8314, %v8316
      %v8318 = vadd.f32 %v8314, %v8317
      %vm8319 = vweird.f32 %v7764
      %vm8320 = vweird.f32 %v8314
      %vm8321 = vmor %vm8319, %vm8320
      %v8322 = vsel %vm8321, %v8314, %v8318
      %v8323 = vand.u32 2147483647, %v7764
      %vm8324 = vcmp.eq.f32.partialorder %v8323, 8.507059e+37
      %v8325 = vand.u32 %v7764, 2147483648
      %v8326 = vor.u32 1.1754944e-38, %v8325
      %v8327 = vsel %vm8324, %v8326, %v8322
      %v8328 = vmul.f32 1.0, %v8327
      %v8329 = vrcp.pop %v7765
      %v8330 = vmul.f32 %v7765, %v8329
      %v8331 = vsub.f32 1.0, %v8330
      %v8332 = vmul.f32 %v8329, %v8331
      %v8333 = vadd.f32 %v8329, %v8332
      %vm8334 = vweird.f32 %v7765
      %vm8335 = vweird.f32 %v8329
      %vm8336 = vmor %vm8334, %vm8335
      %v8337 = vsel %vm8336, %v8329, %v8333
      %v8338 = vand.u32 2147483647, %v7765
      %vm8339 = vcmp.eq.f32.partialorder %v8338, 8.507059e+37
      %v8340 = vand.u32 %v7765, 2147483648
      %v8341 = vor.u32 1.1754944e-38, %v8340
      %v8342 = vsel %vm8339, %v8341, %v8337
      %v8343 = vmul.f32 1.0, %v8342
      %v8344 = vrcp.pop %v7766
      %v8345 = vmul.f32 %v7766, %v8344
      %v8346 = vsub.f32 1.0, %v8345
      %v8347 = vmul.f32 %v8344, %v8346
      %v8348 = vadd.f32 %v8344, %v8347
      %vm8349 = vweird.f32 %v7766
      %vm8350 = vweird.f32 %v8344
      %vm8351 = vmor %vm8349, %vm8350
      %v8352 = vsel %vm8351, %v8344, %v8348
      %v8353 = vand.u32 2147483647, %v7766
      %vm8354 = vcmp.eq.f32.partialorder %v8353, 8.507059e+37
      %v8355 = vand.u32 %v7766, 2147483648
      %v8356 = vor.u32 1.1754944e-38, %v8355
      %v8357 = vsel %vm8354, %v8356, %v8352
      %v8358 = vmul.f32 1.0, %v8357
      %v8359 = vrcp.pop %v7767
      %v8360 = vmul.f32 %v7767, %v8359
      %v8361 = vsub.f32 1.0, %v8360
      %v8362 = vmul.f32 %v8359, %v8361
      %v8363 = vadd.f32 %v8359, %v8362
      %vm8364 = vweird.f32 %v7767
      %vm8365 = vweird.f32 %v8359
      %vm8366 = vmor %vm8364, %vm8365
      %v8367 = vsel %vm8366, %v8359, %v8363
      %v8368 = vand.u32 2147483647, %v7767
      %vm8369 = vcmp.eq.f32.partialorder %v8368, 8.507059e+37
      %v8370 = vand.u32 %v7767, 2147483648
      %v8371 = vor.u32 1.1754944e-38, %v8370
      %v8372 = vsel %vm8369, %v8371, %v8367
      %v8373 = vmul.f32 1.0, %v8372
      %v8374 = vrcp.pop %v7768
      %v8375 = vmul.f32 %v7768, %v8374
      %v8376 = vsub.f32 1.0, %v8375
      %v8377 = vmul.f32 %v8374, %v8376
      %v8378 = vadd.f32 %v8374, %v8377
      %vm8379 = vweird.f32 %v7768
      %vm8380 = vweird.f32 %v8374
      %vm8381 = vmor %vm8379, %vm8380
      %v8382 = vsel %vm8381, %v8374, %v8378
      %v8383 = vand.u32 2147483647, %v7768
      %vm8384 = vcmp.eq.f32.partialorder %v8383, 8.507059e+37
      %v8385 = vand.u32 %v7768, 2147483648
      %v8386 = vor.u32 1.1754944e-38, %v8385
      %v8387 = vsel %vm8384, %v8386, %v8382
      %v8388 = vmul.f32 1.0, %v8387
      %v8389 = vrcp.pop %v7769
      %v8390 = vmul.f32 %v7769, %v8389
      %v8391 = vsub.f32 1.0, %v8390
      %v8392 = vmul.f32 %v8389, %v8391
      %v8393 = vadd.f32 %v8389, %v8392
      %vm8394 = vweird.f32 %v7769
      %vm8395 = vweird.f32 %v8389
      %vm8396 = vmor %vm8394, %vm8395
      %v8397 = vsel %vm8396, %v8389, %v8393
      %v8398 = vand.u32 2147483647, %v7769
      %vm8399 = vcmp.eq.f32.partialorder %v8398, 8.507059e+37
      %v8400 = vand.u32 %v7769, 2147483648
      %v8401 = vor.u32 1.1754944e-38, %v8400
      %v8402 = vsel %vm8399, %v8401, %v8397
      %v8403 = vmul.f32 1.0, %v8402
      %v8404 = vrcp.pop %v7770
      %v8405 = vmul.f32 %v7770, %v8404
      %v8406 = vsub.f32 1.0, %v8405
      %v8407 = vmul.f32 %v8404, %v8406
      %v8408 = vadd.f32 %v8404, %v8407
      %vm8409 = vweird.f32 %v7770
      %vm8410 = vweird.f32 %v8404
      %vm8411 = vmor %vm8409, %vm8410
      %v8412 = vsel %vm8411, %v8404, %v8408
      %v8413 = vand.u32 2147483647, %v7770
      %vm8414 = vcmp.eq.f32.partialorder %v8413, 8.507059e+37
      %v8415 = vand.u32 %v7770, 2147483648
      %v8416 = vor.u32 1.1754944e-38, %v8415
      %v8417 = vsel %vm8414, %v8416, %v8412
      %v8418 = vmul.f32 1.0, %v8417
      %v8419 = vrcp.pop %v7771
      %v8420 = vmul.f32 %v7771, %v8419
      %v8421 = vsub.f32 1.0, %v8420
      %v8422 = vmul.f32 %v8419, %v8421
      %v8423 = vadd.f32 %v8419, %v8422
      %vm8424 = vweird.f32 %v7771
      %vm8425 = vweird.f32 %v8419
      %vm8426 = vmor %vm8424, %vm8425
      %v8427 = vsel %vm8426, %v8419, %v8423
      %v8428 = vand.u32 2147483647, %v7771
      %vm8429 = vcmp.eq.f32.partialorder %v8428, 8.507059e+37
      %v8430 = vand.u32 %v7771, 2147483648
      %v8431 = vor.u32 1.1754944e-38, %v8430
      %v8432 = vsel %vm8429, %v8431, %v8427
      %v8433 = vmul.f32 1.0, %v8432
      %v8434 = vrcp.pop %v7772
      %v8435 = vmul.f32 %v7772, %v8434
      %v8436 = vsub.f32 1.0, %v8435
      %v8437 = vmul.f32 %v8434, %v8436
      %v8438 = vadd.f32 %v8434, %v8437
      %vm8439 = vweird.f32 %v7772
      %vm8440 = vweird.f32 %v8434
      %vm8441 = vmor %vm8439, %vm8440
      %v8442 = vsel %vm8441, %v8434, %v8438
      %v8443 = vand.u32 2147483647, %v7772
      %vm8444 = vcmp.eq.f32.partialorder %v8443, 8.507059e+37
      %v8445 = vand.u32 %v7772, 2147483648
      %v8446 = vor.u32 1.1754944e-38, %v8445
      %v8447 = vsel %vm8444, %v8446, %v8442
      %v8448 = vmul.f32 1.0, %v8447
      %v8449 = vrcp.pop %v7773
      %v8450 = vmul.f32 %v7773, %v8449
      %v8451 = vsub.f32 1.0, %v8450
      %v8452 = vmul.f32 %v8449, %v8451
      %v8453 = vadd.f32 %v8449, %v8452
      %vm8454 = vweird.f32 %v7773
      %vm8455 = vweird.f32 %v8449
      %vm8456 = vmor %vm8454, %vm8455
      %v8457 = vsel %vm8456, %v8449, %v8453
      %v8458 = vand.u32 2147483647, %v7773
      %vm8459 = vcmp.eq.f32.partialorder %v8458, 8.507059e+37
      %v8460 = vand.u32 %v7773, 2147483648
      %v8461 = vor.u32 1.1754944e-38, %v8460
      %v8462 = vsel %vm8459, %v8461, %v8457
      %v8463 = vmul.f32 1.0, %v8462
      %v8464 = vrcp.pop %v7774
      %v8465 = vmul.f32 %v7774, %v8464
      %v8466 = vsub.f32 1.0, %v8465
      %v8467 = vmul.f32 %v8464, %v8466
      %v8468 = vadd.f32 %v8464, %v8467
      %vm8469 = vweird.f32 %v7774
      %vm8470 = vweird.f32 %v8464
      %vm8471 = vmor %vm8469, %vm8470
      %v8472 = vsel %vm8471, %v8464, %v8468
      %v8473 = vand.u32 2147483647, %v7774
      %vm8474 = vcmp.eq.f32.partialorder %v8473, 8.507059e+37
      %v8475 = vand.u32 %v7774, 2147483648
      %v8476 = vor.u32 1.1754944e-38, %v8475
      %v8477 = vsel %vm8474, %v8476, %v8472
      %v8478 = vmul.f32 1.0, %v8477
      %v8479 = vrcp.pop %v7775
      %v8480 = vmul.f32 %v7775, %v8479
      %v8481 = vsub.f32 1.0, %v8480
      %v8482 = vmul.f32 %v8479, %v8481
      %v8483 = vadd.f32 %v8479, %v8482
      %vm8484 = vweird.f32 %v7775
      %vm8485 = vweird.f32 %v8479
      %vm8486 = vmor %vm8484, %vm8485
      %v8487 = vsel %vm8486, %v8479, %v8483
      %v8488 = vand.u32 2147483647, %v7775
      %vm8489 = vcmp.eq.f32.partialorder %v8488, 8.507059e+37
      %v8490 = vand.u32 %v7775, 2147483648
      %v8491 = vor.u32 1.1754944e-38, %v8490
      %v8492 = vsel %vm8489, %v8491, %v8487
      %v8493 = vmul.f32 1.0, %v8492
      %v8494 = vrcp.pop %v7776
      %v8495 = vmul.f32 %v7776, %v8494
      %v8496 = vsub.f32 1.0, %v8495
      %v8497 = vmul.f32 %v8494, %v8496
      %v8498 = vadd.f32 %v8494, %v8497
      %vm8499 = vweird.f32 %v7776
      %vm8500 = vweird.f32 %v8494
      %vm8501 = vmor %vm8499, %vm8500
      %v8502 = vsel %vm8501, %v8494, %v8498
      %v8503 = vand.u32 2147483647, %v7776
      %vm8504 = vcmp.eq.f32.partialorder %v8503, 8.507059e+37
      %v8505 = vand.u32 %v7776, 2147483648
      %v8506 = vor.u32 1.1754944e-38, %v8505
      %v8507 = vsel %vm8504, %v8506, %v8502
      %v8508 = vmul.f32 1.0, %v8507
      %v8509 = vrcp.pop %v7777
      %v8510 = vmul.f32 %v7777, %v8509
      %v8511 = vsub.f32 1.0, %v8510
      %v8512 = vmul.f32 %v8509, %v8511
      %v8513 = vadd.f32 %v8509, %v8512
      %vm8514 = vweird.f32 %v7777
      %vm8515 = vweird.f32 %v8509
      %vm8516 = vmor %vm8514, %vm8515
      %v8517 = vsel %vm8516, %v8509, %v8513
      %v8518 = vand.u32 2147483647, %v7777
      %vm8519 = vcmp.eq.f32.partialorder %v8518, 8.507059e+37
      %v8520 = vand.u32 %v7777, 2147483648
      %v8521 = vor.u32 1.1754944e-38, %v8520
      %v8522 = vsel %vm8519, %v8521, %v8517
      %v8523 = vmul.f32 1.0, %v8522
      %v8524 = vrcp.pop %v7778
      %v8525 = vmul.f32 %v7778, %v8524
      %v8526 = vsub.f32 1.0, %v8525
      %v8527 = vmul.f32 %v8524, %v8526
      %v8528 = vadd.f32 %v8524, %v8527
      %vm8529 = vweird.f32 %v7778
      %vm8530 = vweird.f32 %v8524
      %vm8531 = vmor %vm8529, %vm8530
      %v8532 = vsel %vm8531, %v8524, %v8528
      %v8533 = vand.u32 2147483647, %v7778
      %vm8534 = vcmp.eq.f32.partialorder %v8533, 8.507059e+37
      %v8535 = vand.u32 %v7778, 2147483648
      %v8536 = vor.u32 1.1754944e-38, %v8535
      %v8537 = vsel %vm8534, %v8536, %v8532
      %v8538 = vmul.f32 1.0, %v8537
      %v8539 = vrcp.pop %v7779
      %v8540 = vmul.f32 %v7779, %v8539
      %v8541 = vsub.f32 1.0, %v8540
      %v8542 = vmul.f32 %v8539, %v8541
      %v8543 = vadd.f32 %v8539, %v8542
      %vm8544 = vweird.f32 %v7779
      %vm8545 = vweird.f32 %v8539
      %vm8546 = vmor %vm8544, %vm8545
      %v8547 = vsel %vm8546, %v8539, %v8543
      %v8548 = vand.u32 2147483647, %v7779
      %vm8549 = vcmp.eq.f32.partialorder %v8548, 8.507059e+37
      %v8550 = vand.u32 %v7779, 2147483648
      %v8551 = vor.u32 1.1754944e-38, %v8550
      %v8552 = vsel %vm8549, %v8551, %v8547
      %v8553 = vmul.f32 1.0, %v8552
      %v8554 = vrcp.pop %v7780
      %v8555 = vmul.f32 %v7780, %v8554
      %v8556 = vsub.f32 1.0, %v8555
      %v8557 = vmul.f32 %v8554, %v8556
      %v8558 = vadd.f32 %v8554, %v8557
      %vm8559 = vweird.f32 %v7780
      %vm8560 = vweird.f32 %v8554
      %vm8561 = vmor %vm8559, %vm8560
      %v8562 = vsel %vm8561, %v8554, %v8558
      %v8563 = vand.u32 2147483647, %v7780
      %vm8564 = vcmp.eq.f32.partialorder %v8563, 8.507059e+37
      %v8565 = vand.u32 %v7780, 2147483648
      %v8566 = vor.u32 1.1754944e-38, %v8565
      %v8567 = vsel %vm8564, %v8566, %v8562
      %v8568 = vmul.f32 1.0, %v8567
      %v8569 = vrcp.pop %v7781
      %v8570 = vmul.f32 %v7781, %v8569
      %v8571 = vsub.f32 1.0, %v8570
      %v8572 = vmul.f32 %v8569, %v8571
      %v8573 = vadd.f32 %v8569, %v8572
      %vm8574 = vweird.f32 %v7781
      %vm8575 = vweird.f32 %v8569
      %vm8576 = vmor %vm8574, %vm8575
      %v8577 = vsel %vm8576, %v8569, %v8573
      %v8578 = vand.u32 2147483647, %v7781
      %vm8579 = vcmp.eq.f32.partialorder %v8578, 8.507059e+37
      %v8580 = vand.u32 %v7781, 2147483648
      %v8581 = vor.u32 1.1754944e-38, %v8580
      %v8582 = vsel %vm8579, %v8581, %v8577
      %v8583 = vmul.f32 1.0, %v8582
      %v8584 = vrcp.pop %v7782
      %v8585 = vmul.f32 %v7782, %v8584
      %v8586 = vsub.f32 1.0, %v8585
      %v8587 = vmul.f32 %v8584, %v8586
      %v8588 = vadd.f32 %v8584, %v8587
      %vm8589 = vweird.f32 %v7782
      %vm8590 = vweird.f32 %v8584
      %vm8591 = vmor %vm8589, %vm8590
      %v8592 = vsel %vm8591, %v8584, %v8588
      %v8593 = vand.u32 2147483647, %v7782
      %vm8594 = vcmp.eq.f32.partialorder %v8593, 8.507059e+37
      %v8595 = vand.u32 %v7782, 2147483648
      %v8596 = vor.u32 1.1754944e-38, %v8595
      %v8597 = vsel %vm8594, %v8596, %v8592
      %v8598 = vmul.f32 1.0, %v8597
      %v8599 = vrcp.pop %v7783
      %v8600 = vmul.f32 %v7783, %v8599
      %v8601 = vsub.f32 1.0, %v8600
      %v8602 = vmul.f32 %v8599, %v8601
      %v8603 = vadd.f32 %v8599, %v8602
      %vm8604 = vweird.f32 %v7783
      %vm8605 = vweird.f32 %v8599
      %vm8606 = vmor %vm8604, %vm8605
      %v8607 = vsel %vm8606, %v8599, %v8603
      %v8608 = vand.u32 2147483647, %v7783
      %vm8609 = vcmp.eq.f32.partialorder %v8608, 8.507059e+37
      %v8610 = vand.u32 %v7783, 2147483648
      %v8611 = vor.u32 1.1754944e-38, %v8610
      %v8612 = vsel %vm8609, %v8611, %v8607
      %v8613 = vmul.f32 1.0, %v8612
      %v8614 = vrcp.pop %v7784
      %v8615 = vmul.f32 %v7784, %v8614
      %v8616 = vsub.f32 1.0, %v8615
      %v8617 = vmul.f32 %v8614, %v8616
      %v8618 = vadd.f32 %v8614, %v8617
      %vm8619 = vweird.f32 %v7784
      %vm8620 = vweird.f32 %v8614
      %vm8621 = vmor %vm8619, %vm8620
      %v8622 = vsel %vm8621, %v8614, %v8618
      %v8623 = vand.u32 2147483647, %v7784
      %vm8624 = vcmp.eq.f32.partialorder %v8623, 8.507059e+37
      %v8625 = vand.u32 %v7784, 2147483648
      %v8626 = vor.u32 1.1754944e-38, %v8625
      %v8627 = vsel %vm8624, %v8626, %v8622
      %v8628 = vmul.f32 1.0, %v8627
      %v8629 = vrcp.pop %v7785
      %v8630 = vmul.f32 %v7785, %v8629
      %v8631 = vsub.f32 1.0, %v8630
      %v8632 = vmul.f32 %v8629, %v8631
      %v8633 = vadd.f32 %v8629, %v8632
      %vm8634 = vweird.f32 %v7785
      %vm8635 = vweird.f32 %v8629
      %vm8636 = vmor %vm8634, %vm8635
      %v8637 = vsel %vm8636, %v8629, %v8633
      %v8638 = vand.u32 2147483647, %v7785
      %vm8639 = vcmp.eq.f32.partialorder %v8638, 8.507059e+37
      %v8640 = vand.u32 %v7785, 2147483648
      %v8641 = vor.u32 1.1754944e-38, %v8640
      %v8642 = vsel %vm8639, %v8641, %v8637
      %v8643 = vmul.f32 1.0, %v8642
      %v8644 = vrcp.pop %v7786
      %v8645 = vmul.f32 %v7786, %v8644
      %v8646 = vsub.f32 1.0, %v8645
      %v8647 = vmul.f32 %v8644, %v8646
      %v8648 = vadd.f32 %v8644, %v8647
      %vm8649 = vweird.f32 %v7786
      %vm8650 = vweird.f32 %v8644
      %vm8651 = vmor %vm8649, %vm8650
      %v8652 = vsel %vm8651, %v8644, %v8648
      %v8653 = vand.u32 2147483647, %v7786
      %vm8654 = vcmp.eq.f32.partialorder %v8653, 8.507059e+37
      %v8655 = vand.u32 %v7786, 2147483648
      %v8656 = vor.u32 1.1754944e-38, %v8655
      %v8657 = vsel %vm8654, %v8656, %v8652
      %v8658 = vmul.f32 1.0, %v8657
      %v8659 = vrcp.pop %v7787
      %v8660 = vmul.f32 %v7787, %v8659
      %v8661 = vsub.f32 1.0, %v8660
      %v8662 = vmul.f32 %v8659, %v8661
      %v8663 = vadd.f32 %v8659, %v8662
      %vm8664 = vweird.f32 %v7787
      %vm8665 = vweird.f32 %v8659
      %vm8666 = vmor %vm8664, %vm8665
      %v8667 = vsel %vm8666, %v8659, %v8663
      %v8668 = vand.u32 2147483647, %v7787
      %vm8669 = vcmp.eq.f32.partialorder %v8668, 8.507059e+37
      %v8670 = vand.u32 %v7787, 2147483648
      %v8671 = vor.u32 1.1754944e-38, %v8670
      %v8672 = vsel %vm8669, %v8671, %v8667
      %v8673 = vmul.f32 1.0, %v8672
      %v8674 = vrcp.pop %v7788
      %v8675 = vmul.f32 %v7788, %v8674
      %v8676 = vsub.f32 1.0, %v8675
      %v8677 = vmul.f32 %v8674, %v8676
      %v8678 = vadd.f32 %v8674, %v8677
      %vm8679 = vweird.f32 %v7788
      %vm8680 = vweird.f32 %v8674
      %vm8681 = vmor %vm8679, %vm8680
      %v8682 = vsel %vm8681, %v8674, %v8678
      %v8683 = vand.u32 2147483647, %v7788
      %vm8684 = vcmp.eq.f32.partialorder %v8683, 8.507059e+37
      %v8685 = vand.u32 %v7788, 2147483648
      %v8686 = vor.u32 1.1754944e-38, %v8685
      %v8687 = vsel %vm8684, %v8686, %v8682
      %v8688 = vmul.f32 1.0, %v8687
      %v8689 = vrcp.pop %v7789
      %v8690 = vmul.f32 %v7789, %v8689
      %v8691 = vsub.f32 1.0, %v8690
      %v8692 = vmul.f32 %v8689, %v8691
      %v8693 = vadd.f32 %v8689, %v8692
      %vm8694 = vweird.f32 %v7789
      %vm8695 = vweird.f32 %v8689
      %vm8696 = vmor %vm8694, %vm8695
      %v8697 = vsel %vm8696, %v8689, %v8693
      %v8698 = vand.u32 2147483647, %v7789
      %vm8699 = vcmp.eq.f32.partialorder %v8698, 8.507059e+37
      %v8700 = vand.u32 %v7789, 2147483648
      %v8701 = vor.u32 1.1754944e-38, %v8700
      %v8702 = vsel %vm8699, %v8701, %v8697
      %v8703 = vmul.f32 1.0, %v8702
      %v8704 = vrcp.pop %v7790
      %v8705 = vmul.f32 %v7790, %v8704
      %v8706 = vsub.f32 1.0, %v8705
      %v8707 = vmul.f32 %v8704, %v8706
      %v8708 = vadd.f32 %v8704, %v8707
      %vm8709 = vweird.f32 %v7790
      %vm8710 = vweird.f32 %v8704
      %vm8711 = vmor %vm8709, %vm8710
      %v8712 = vsel %vm8711, %v8704, %v8708
      %v8713 = vand.u32 2147483647, %v7790
      %vm8714 = vcmp.eq.f32.partialorder %v8713, 8.507059e+37
      %v8715 = vand.u32 %v7790, 2147483648
      %v8716 = vor.u32 1.1754944e-38, %v8715
      %v8717 = vsel %vm8714, %v8716, %v8712
      %v8718 = vmul.f32 1.0, %v8717
      %v8719 = vrcp.pop %v7791
      %v8720 = vmul.f32 %v7791, %v8719
      %v8721 = vsub.f32 1.0, %v8720
      %v8722 = vmul.f32 %v8719, %v8721
      %v8723 = vadd.f32 %v8719, %v8722
      %vm8724 = vweird.f32 %v7791
      %vm8725 = vweird.f32 %v8719
      %vm8726 = vmor %vm8724, %vm8725
      %v8727 = vsel %vm8726, %v8719, %v8723
      %v8728 = vand.u32 2147483647, %v7791
      %vm8729 = vcmp.eq.f32.partialorder %v8728, 8.507059e+37
      %v8730 = vand.u32 %v7791, 2147483648
      %v8731 = vor.u32 1.1754944e-38, %v8730
      %v8732 = vsel %vm8729, %v8731, %v8727
      %v8733 = vmul.f32 1.0, %v8732
      %v8734 = vrcp.pop %v7792
      %v8735 = vmul.f32 %v7792, %v8734
      %v8736 = vsub.f32 1.0, %v8735
      %v8737 = vmul.f32 %v8734, %v8736
      %v8738 = vadd.f32 %v8734, %v8737
      %vm8739 = vweird.f32 %v7792
      %vm8740 = vweird.f32 %v8734
      %vm8741 = vmor %vm8739, %vm8740
      %v8742 = vsel %vm8741, %v8734, %v8738
      %v8743 = vand.u32 2147483647, %v7792
      %vm8744 = vcmp.eq.f32.partialorder %v8743, 8.507059e+37
      %v8745 = vand.u32 %v7792, 2147483648
      %v8746 = vor.u32 1.1754944e-38, %v8745
      %v8747 = vsel %vm8744, %v8746, %v8742
      %v8748 = vmul.f32 1.0, %v8747
      %v8749 = vrcp.pop %v7793
      %v8750 = vmul.f32 %v7793, %v8749
      %v8751 = vsub.f32 1.0, %v8750
      %v8752 = vmul.f32 %v8749, %v8751
      %v8753 = vadd.f32 %v8749, %v8752
      %vm8754 = vweird.f32 %v7793
      %vm8755 = vweird.f32 %v8749
      %vm8756 = vmor %vm8754, %vm8755
      %v8757 = vsel %vm8756, %v8749, %v8753
      %v8758 = vand.u32 2147483647, %v7793
      %vm8759 = vcmp.eq.f32.partialorder %v8758, 8.507059e+37
      %v8760 = vand.u32 %v7793, 2147483648
      %v8761 = vor.u32 1.1754944e-38, %v8760
      %v8762 = vsel %vm8759, %v8761, %v8757
      %v8763 = vmul.f32 1.0, %v8762
      %v8764 = vrcp.pop %v7794
      %v8765 = vmul.f32 %v7794, %v8764
      %v8766 = vsub.f32 1.0, %v8765
      %v8767 = vmul.f32 %v8764, %v8766
      %v8768 = vadd.f32 %v8764, %v8767
      %vm8769 = vweird.f32 %v7794
      %vm8770 = vweird.f32 %v8764
      %vm8771 = vmor %vm8769, %vm8770
      %v8772 = vsel %vm8771, %v8764, %v8768
      %v8773 = vand.u32 2147483647, %v7794
      %vm8774 = vcmp.eq.f32.partialorder %v8773, 8.507059e+37
      %v8775 = vand.u32 %v7794, 2147483648
      %v8776 = vor.u32 1.1754944e-38, %v8775
      %v8777 = vsel %vm8774, %v8776, %v8772
      %v8778 = vmul.f32 1.0, %v8777
      %v8779 = vrcp.pop %v7795
      %v8780 = vmul.f32 %v7795, %v8779
      %v8781 = vsub.f32 1.0, %v8780
      %v8782 = vmul.f32 %v8779, %v8781
      %v8783 = vadd.f32 %v8779, %v8782
      %vm8784 = vweird.f32 %v7795
      %vm8785 = vweird.f32 %v8779
      %vm8786 = vmor %vm8784, %vm8785
      %v8787 = vsel %vm8786, %v8779, %v8783
      %v8788 = vand.u32 2147483647, %v7795
      %vm8789 = vcmp.eq.f32.partialorder %v8788, 8.507059e+37
      %v8790 = vand.u32 %v7795, 2147483648
      %v8791 = vor.u32 1.1754944e-38, %v8790
      %v8792 = vsel %vm8789, %v8791, %v8787
      %v8793 = vmul.f32 1.0, %v8792
      %v8794 = vrcp.pop %v7796
      %v8795 = vmul.f32 %v7796, %v8794
      %v8796 = vsub.f32 1.0, %v8795
      %v8797 = vmul.f32 %v8794, %v8796
      %v8798 = vadd.f32 %v8794, %v8797
      %vm8799 = vweird.f32 %v7796
      %vm8800 = vweird.f32 %v8794
      %vm8801 = vmor %vm8799, %vm8800
      %v8802 = vsel %vm8801, %v8794, %v8798
      %v8803 = vand.u32 2147483647, %v7796
      %vm8804 = vcmp.eq.f32.partialorder %v8803, 8.507059e+37
      %v8805 = vand.u32 %v7796, 2147483648
      %v8806 = vor.u32 1.1754944e-38, %v8805
      %v8807 = vsel %vm8804, %v8806, %v8802
      %v8808 = vmul.f32 1.0, %v8807
      %v8809 = vrcp.pop %v7797
      %v8810 = vmul.f32 %v7797, %v8809
      %v8811 = vsub.f32 1.0, %v8810
      %v8812 = vmul.f32 %v8809, %v8811
      %v8813 = vadd.f32 %v8809, %v8812
      %vm8814 = vweird.f32 %v7797
      %vm8815 = vweird.f32 %v8809
      %vm8816 = vmor %vm8814, %vm8815
      %v8817 = vsel %vm8816, %v8809, %v8813
      %v8818 = vand.u32 2147483647, %v7797
      %vm8819 = vcmp.eq.f32.partialorder %v8818, 8.507059e+37
      %v8820 = vand.u32 %v7797, 2147483648
      %v8821 = vor.u32 1.1754944e-38, %v8820
      %v8822 = vsel %vm8819, %v8821, %v8817
      %v8823 = vmul.f32 1.0, %v8822
      %v8824 = vrcp.pop %v7798
      %v8825 = vmul.f32 %v7798, %v8824
      %v8826 = vsub.f32 1.0, %v8825
      %v8827 = vmul.f32 %v8824, %v8826
      %v8828 = vadd.f32 %v8824, %v8827
      %vm8829 = vweird.f32 %v7798
      %vm8830 = vweird.f32 %v8824
      %vm8831 = vmor %vm8829, %vm8830
      %v8832 = vsel %vm8831, %v8824, %v8828
      %v8833 = vand.u32 2147483647, %v7798
      %vm8834 = vcmp.eq.f32.partialorder %v8833, 8.507059e+37
      %v8835 = vand.u32 %v7798, 2147483648
      %v8836 = vor.u32 1.1754944e-38, %v8835
      %v8837 = vsel %vm8834, %v8836, %v8832
      %v8838 = vmul.f32 1.0, %v8837
      %v8839 = vrcp.pop %v7799
      %v8840 = vmul.f32 %v7799, %v8839
      %v8841 = vsub.f32 1.0, %v8840
      %v8842 = vmul.f32 %v8839, %v8841
      %v8843 = vadd.f32 %v8839, %v8842
      %vm8844 = vweird.f32 %v7799
      %vm8845 = vweird.f32 %v8839
      %vm8846 = vmor %vm8844, %vm8845
      %v8847 = vsel %vm8846, %v8839, %v8843
      %v8848 = vand.u32 2147483647, %v7799
      %vm8849 = vcmp.eq.f32.partialorder %v8848, 8.507059e+37
      %v8850 = vand.u32 %v7799, 2147483648
      %v8851 = vor.u32 1.1754944e-38, %v8850
      %v8852 = vsel %vm8849, %v8851, %v8847
      %v8853 = vmul.f32 1.0, %v8852
      %v8854 = vrcp.pop %v7800
      %v8855 = vmul.f32 %v7800, %v8854
      %v8856 = vsub.f32 1.0, %v8855
      %v8857 = vmul.f32 %v8854, %v8856
      %v8858 = vadd.f32 %v8854, %v8857
      %vm8859 = vweird.f32 %v7800
      %vm8860 = vweird.f32 %v8854
      %vm8861 = vmor %vm8859, %vm8860
      %v8862 = vsel %vm8861, %v8854, %v8858
      %v8863 = vand.u32 2147483647, %v7800
      %vm8864 = vcmp.eq.f32.partialorder %v8863, 8.507059e+37
      %v8865 = vand.u32 %v7800, 2147483648
      %v8866 = vor.u32 1.1754944e-38, %v8865
      %v8867 = vsel %vm8864, %v8866, %v8862
      %v8868 = vmul.f32 1.0, %v8867
      %v8869 = vrcp.pop %v7801
      %v8870 = vmul.f32 %v7801, %v8869
      %v8871 = vsub.f32 1.0, %v8870
      %v8872 = vmul.f32 %v8869, %v8871
      %v8873 = vadd.f32 %v8869, %v8872
      %vm8874 = vweird.f32 %v7801
      %vm8875 = vweird.f32 %v8869
      %vm8876 = vmor %vm8874, %vm8875
      %v8877 = vsel %vm8876, %v8869, %v8873
      %v8878 = vand.u32 2147483647, %v7801
      %vm8879 = vcmp.eq.f32.partialorder %v8878, 8.507059e+37
      %v8880 = vand.u32 %v7801, 2147483648
      %v8881 = vor.u32 1.1754944e-38, %v8880
      %v8882 = vsel %vm8879, %v8881, %v8877
      %v8883 = vmul.f32 1.0, %v8882
      %v8884 = vrcp.pop %v7802
      %v8885 = vmul.f32 %v7802, %v8884
      %v8886 = vsub.f32 1.0, %v8885
      %v8887 = vmul.f32 %v8884, %v8886
      %v8888 = vadd.f32 %v8884, %v8887
      %vm8889 = vweird.f32 %v7802
      %vm8890 = vweird.f32 %v8884
      %vm8891 = vmor %vm8889, %vm8890
      %v8892 = vsel %vm8891, %v8884, %v8888
      %v8893 = vand.u32 2147483647, %v7802
      %vm8894 = vcmp.eq.f32.partialorder %v8893, 8.507059e+37
      %v8895 = vand.u32 %v7802, 2147483648
      %v8896 = vor.u32 1.1754944e-38, %v8895
      %v8897 = vsel %vm8894, %v8896, %v8892
      %v8898 = vmul.f32 1.0, %v8897
      %v8899 = vrcp.pop %v7803
      %v8900 = vmul.f32 %v7803, %v8899
      %v8901 = vsub.f32 1.0, %v8900
      %v8902 = vmul.f32 %v8899, %v8901
      %v8903 = vadd.f32 %v8899, %v8902
      %vm8904 = vweird.f32 %v7803
      %vm8905 = vweird.f32 %v8899
      %vm8906 = vmor %vm8904, %vm8905
      %v8907 = vsel %vm8906, %v8899, %v8903
      %v8908 = vand.u32 2147483647, %v7803
      %vm8909 = vcmp.eq.f32.partialorder %v8908, 8.507059e+37
      %v8910 = vand.u32 %v7803, 2147483648
      %v8911 = vor.u32 1.1754944e-38, %v8910
      %v8912 = vsel %vm8909, %v8911, %v8907
      %v8913 = vmul.f32 1.0, %v8912
      %v8914 = vmul.f32 %v7505, %v7818
      %v8915 = vmul.f32 %v7023, %v7833
      %v8916 = vmul.f32 %v7025, %v7848
      %v8917 = vmul.f32 %v7027, %v7863
      %v8918 = vmul.f32 %v7029, %v7878
      %v8919 = vmul.f32 %v7031, %v7893
      %v8920 = vmul.f32 %v7033, %v7908
      %v8921 = vmul.f32 %v7035, %v7923
      %v8922 = vmul.f32 %v7037, %v7938
      %v8923 = vmul.f32 %v7039, %v7953
      %v8924 = vmul.f32 %v7041, %v7968
      %v8925 = vmul.f32 %v7043, %v7983
      %v8926 = vmul.f32 %v7045, %v7998
      %v8927 = vmul.f32 %v7047, %v8013
      %v8928 = vmul.f32 %v7049, %v8028
      %v8929 = vmul.f32 %v7051, %v8043
      %v8930 = vmul.f32 %v7053, %v8058
      %v8931 = vmul.f32 %v7055, %v8073
      %v8932 = vmul.f32 %v7057, %v8088
      %v8933 = vmul.f32 %v7059, %v8103
      %v8934 = vmul.f32 %v7061, %v8118
      %v8935 = vmul.f32 %v7063, %v8133
      %v8936 = vmul.f32 %v7065, %v8148
      %v8937 = vmul.f32 %v7067, %v8163
      %v8938 = vmul.f32 %v7506, %v8178
      %v8939 = vmul.f32 %v7228, %v8193
      %v8940 = vmul.f32 %v7230, %v8208
      %v8941 = vmul.f32 %v7232, %v8223
      %v8942 = vmul.f32 %v7234, %v8238
      %v8943 = vmul.f32 %v7236, %v8253
      %v8944 = vmul.f32 %v7238, %v8268
      %v8945 = vmul.f32 %v7240, %v8283
      %v8946 = vmul.f32 %v7242, %v8298
      %v8947 = vmul.f32 %v7244, %v8313
      %v8948 = vmul.f32 %v7246, %v8328
      %v8949 = vmul.f32 %v7248, %v8343
      %v8950 = vmul.f32 %v7250, %v8358
      %v8951 = vmul.f32 %v7252, %v8373
      %v8952 = vmul.f32 %v7254, %v8388
      %v8953 = vmul.f32 %v7256, %v8403
      %v8954 = vmul.f32 %v7258, %v8418
      %v8955 = vmul.f32 %v7260, %v8433
      %v8956 = vmul.f32 %v7262, %v8448
      %v8957 = vmul.f32 %v7264, %v8463
      %v8958 = vmul.f32 %v7266, %v8478
      %v8959 = vmul.f32 %v7268, %v8493
      %v8960 = vmul.f32 %v7270, %v8508
      %v8961 = vmul.f32 %v7272, %v8523
      %v8962 = vmul.f32 %v7274, %v8538
      %v8963 = vmul.f32 %v7507, %v8553
      %v8964 = vmul.f32 %v7433, %v8568
      %v8965 = vmul.f32 %v7435, %v8583
      %v8966 = vmul.f32 %v7437, %v8598
      %v8967 = vmul.f32 %v7439, %v8613
      %v8968 = vmul.f32 %v7441, %v8628
      %v8969 = vmul.f32 %v7443, %v8643
      %v8970 = vmul.f32 %v7445, %v8658
      %v8971 = vmul.f32 %v7447, %v8673
      %v8972 = vmul.f32 %v7449, %v8688
      %v8973 = vmul.f32 %v7451, %v8703
      %v8974 = vmul.f32 %v7453, %v8718
      %v8975 = vmul.f32 %v7455, %v8733
      %v8976 = vmul.f32 %v7457, %v8748
      %v8977 = vmul.f32 %v7459, %v8763
      %v8978 = vmul.f32 %v7461, %v8778
      %v8979 = vmul.f32 %v7463, %v8793
      %v8980 = vmul.f32 %v7465, %v8808
      %v8981 = vmul.f32 %v7467, %v8823
      %v8982 = vmul.f32 %v7469, %v8838
      %v8983 = vmul.f32 %v7471, %v8853
      %v8984 = vmul.f32 %v7473, %v8868
      %v8985 = vmul.f32 %v7475, %v8883
      %v8986 = vmul.f32 %v7477, %v8898
      %v8987 = vmul.f32 %v7479, %v8913
      %v8988 = vld [vmem:[%s4] sm:$0xff]
      %v8989 = vld [vmem:[%s4 + $0x8] sm:$0xff]
      %v8990 = vld [vmem:[%s4 + $0x10] sm:$0xff]
      %v8991 = vld [vmem:[%s4 + $0x18] sm:$0xff]
      %v8992 = vld [vmem:[%s4 + $0x20] sm:$0xff]
      %v8993 = vld [vmem:[%s4 + $0x28] sm:$0xff]
      %v8994 = vld [vmem:[%s5] sm:$0x3f]
      %v8996 = vperm.slane %v8994, 0
      %v8997 = vperm.slane %v8994, 1
      %v8998 = vperm.slane %v8994, 2
      %v8999 = vperm.slane %v8994, 3
      %v9000 = vperm.slane %v8994, 4
      %v9001 = vperm.slane %v8994, 5
      %v9009 = vsel %vm3962, %v8914, 0
      %v9012 = vsel %vm3962, %v8915, 0
      %v9015 = vsel %vm3962, %v8916, 0
      %v9018 = vsel %vm3962, %v8917, 0
      %v9021 = vsel %vm3962, %v8918, 0
      %v9024 = vsel %vm3962, %v8919, 0
      %v9027 = vsel %vm3962, %v8920, 0
      %v9030 = vsel %vm3962, %v8921, 0
      %v9033 = vsel %vm3962, %v8922, 0
      %v9036 = vsel %vm3962, %v8923, 0
      %v9039 = vsel %vm3962, %v8924, 0
      %v9042 = vsel %vm3962, %v8925, 0
      %v9045 = vsel %vm3962, %v8926, 0
      %v9048 = vsel %vm3962, %v8927, 0
      %v9051 = vsel %vm3962, %v8928, 0
      %v9054 = vsel %vm3962, %v8929, 0
      %v9057 = vsel %vm3962, %v8930, 0
      %v9060 = vsel %vm3962, %v8931, 0
      %v9063 = vsel %vm3962, %v8932, 0
      %v9066 = vsel %vm3962, %v8933, 0
      %v9069 = vsel %vm3962, %v8934, 0
      %v9072 = vsel %vm3962, %v8935, 0
      %v9075 = vsel %vm3962, %v8936, 0
      %v9078 = vsel %vm3962, %v8937, 0
      %v9081 = vsel %vm3962, %v8938, 0
      %v9084 = vsel %vm3962, %v8939, 0
      %v9087 = vsel %vm3962, %v8940, 0
      %v9090 = vsel %vm3962, %v8941, 0
      %v9093 = vsel %vm3962, %v8942, 0
      %v9096 = vsel %vm3962, %v8943, 0
      %v9099 = vsel %vm3962, %v8944, 0
      %v9102 = vsel %vm3962, %v8945, 0
      %v9105 = vsel %vm3962, %v8946, 0
      %v9108 = vsel %vm3962, %v8947, 0
      %v9111 = vsel %vm3962, %v8948, 0
      %v9114 = vsel %vm3962, %v8949, 0
      %v9117 = vsel %vm3962, %v8950, 0
      %v9120 = vsel %vm3962, %v8951, 0
      %v9123 = vsel %vm3962, %v8952, 0
      %v9126 = vsel %vm3962, %v8953, 0
      %v9129 = vsel %vm3962, %v8954, 0
      %v9132 = vsel %vm3962, %v8955, 0
      %v9135 = vsel %vm3962, %v8956, 0
      %v9138 = vsel %vm3962, %v8957, 0
      %v9141 = vsel %vm3962, %v8958, 0
      %v9144 = vsel %vm3962, %v8959, 0
      %v9147 = vsel %vm3962, %v8960, 0
      %v9150 = vsel %vm3962, %v8961, 0
      %v9153 = vsel %vm3962, %v8962, 0
      %v9156 = vsel %vm3962, %v8963, 0
      %v9159 = vsel %vm3962, %v8964, 0
      %v9162 = vsel %vm3962, %v8965, 0
      %v9165 = vsel %vm3962, %v8966, 0
      %v9168 = vsel %vm3962, %v8967, 0
      %v9171 = vsel %vm3962, %v8968, 0
      %v9174 = vsel %vm3962, %v8969, 0
      %v9177 = vsel %vm3962, %v8970, 0
      %v9180 = vsel %vm3962, %v8971, 0
      %v9183 = vsel %vm3962, %v8972, 0
      %v9186 = vsel %vm3962, %v8973, 0
      %v9189 = vsel %vm3962, %v8974, 0
      %v9192 = vsel %vm3962, %v8975, 0
      %v9195 = vsel %vm3962, %v8976, 0
      %v9198 = vsel %vm3962, %v8977, 0
      %v9201 = vsel %vm3962, %v8978, 0
      %v9204 = vsel %vm3962, %v8979, 0
      %v9207 = vsel %vm3962, %v8980, 0
      %v9210 = vsel %vm3962, %v8981, 0
      %v9213 = vsel %vm3962, %v8982, 0
      %v9216 = vsel %vm3962, %v8983, 0
      %v9219 = vsel %vm3962, %v8984, 0
      %v9222 = vsel %vm3962, %v8985, 0
      %v9225 = vsel %vm3962, %v8986, 0
      %v9228 = vsel %vm3962, %v8987, 0
      %9230 = vmatpush.msra.mxu0 0.0
      %9231 = vmatpush.msra.mxu0 0.0
      %9232 = vmatpush.msra.mxu0 0.0
      %9233 = vmatpush.msra.mxu0 0.0
      %9234 = vmatpush.msra.mxu0 0.0
      %9235 = vmatpush.msra.mxu0 0.0
      %9236 = vmatpush.msra.mxu0 0.0
      %9237 = vmatpush.msra.mxu0 0.0
      %9238 = vmatpush.msra.mxu0 0.0
      %9239 = vmatpush.msra.mxu0 0.0
      %9240 = vmatpush.msra.mxu0 0.0
      %9241 = vmatpush.msra.mxu0 0.0
      %9242 = vmatpush.msra.mxu0 0.0
      %9243 = vmatpush.msra.mxu0 0.0
      %9244 = vmatpush.msra.mxu0 0.0
      %9245 = vmatpush.msra.mxu0 %v8988
      %9246 = vmatmul.f32.gmra.mxu0 %v9009
      %v9247 = vpop.f32.mrf.mxu0
      %v9248 = vadd.f32 %v8996, %v9247
      %9249 = vmatmul.f32.gmra.mxu0 %v9012
      %v9250 = vpop.f32.mrf.mxu0
      %v9251 = vadd.f32 %v8996, %v9250
      %9252 = vmatmul.f32.gmra.mxu0 %v9015
      %v9253 = vpop.f32.mrf.mxu0
      %v9254 = vadd.f32 %v8996, %v9253
      %9255 = vmatmul.f32.gmra.mxu0 %v9018
      %v9256 = vpop.f32.mrf.mxu0
      %v9257 = vadd.f32 %v8996, %v9256
      %9258 = vmatmul.f32.gmra.mxu0 %v9021
      %v9259 = vpop.f32.mrf.mxu0
      %v9260 = vadd.f32 %v8996, %v9259
      %9261 = vmatmul.f32.gmra.mxu0 %v9024
      %v9262 = vpop.f32.mrf.mxu0
      %v9263 = vadd.f32 %v8996, %v9262
      %9264 = vmatmul.f32.gmra.mxu0 %v9027
      %v9265 = vpop.f32.mrf.mxu0
      %v9266 = vadd.f32 %v8996, %v9265
      %9267 = vmatmul.f32.gmra.mxu0 %v9030
      %v9268 = vpop.f32.mrf.mxu0
      %v9269 = vadd.f32 %v8996, %v9268
      %9270 = vmatmul.f32.gmra.mxu0 %v9033
      %v9271 = vpop.f32.mrf.mxu0
      %v9272 = vadd.f32 %v8996, %v9271
      %9273 = vmatmul.f32.gmra.mxu0 %v9036
      %v9274 = vpop.f32.mrf.mxu0
      %v9275 = vadd.f32 %v8996, %v9274
      %9276 = vmatmul.f32.gmra.mxu0 %v9039
      %v9277 = vpop.f32.mrf.mxu0
      %v9278 = vadd.f32 %v8996, %v9277
      %9279 = vmatmul.f32.gmra.mxu0 %v9042
      %v9280 = vpop.f32.mrf.mxu0
      %v9281 = vadd.f32 %v8996, %v9280
      %9282 = vmatmul.f32.gmra.mxu0 %v9045
      %v9283 = vpop.f32.mrf.mxu0
      %v9284 = vadd.f32 %v8996, %v9283
      %9285 = vmatmul.f32.gmra.mxu0 %v9048
      %v9286 = vpop.f32.mrf.mxu0
      %v9287 = vadd.f32 %v8996, %v9286
      %9288 = vmatmul.f32.gmra.mxu0 %v9051
      %v9289 = vpop.f32.mrf.mxu0
      %v9290 = vadd.f32 %v8996, %v9289
      %9291 = vmatmul.f32.gmra.mxu0 %v9054
      %v9292 = vpop.f32.mrf.mxu0
      %v9293 = vadd.f32 %v8996, %v9292
      %9294 = vmatmul.f32.gmra.mxu0 %v9057
      %v9295 = vpop.f32.mrf.mxu0
      %v9296 = vadd.f32 %v8996, %v9295
      %9297 = vmatmul.f32.gmra.mxu0 %v9060
      %v9298 = vpop.f32.mrf.mxu0
      %v9299 = vadd.f32 %v8996, %v9298
      %9300 = vmatmul.f32.gmra.mxu0 %v9063
      %v9301 = vpop.f32.mrf.mxu0
      %v9302 = vadd.f32 %v8996, %v9301
      %9303 = vmatmul.f32.gmra.mxu0 %v9066
      %v9304 = vpop.f32.mrf.mxu0
      %v9305 = vadd.f32 %v8996, %v9304
      %9306 = vmatmul.f32.gmra.mxu0 %v9069
      %v9307 = vpop.f32.mrf.mxu0
      %v9308 = vadd.f32 %v8996, %v9307
      %9309 = vmatmul.f32.gmra.mxu0 %v9072
      %v9310 = vpop.f32.mrf.mxu0
      %v9311 = vadd.f32 %v8996, %v9310
      %9312 = vmatmul.f32.gmra.mxu0 %v9075
      %v9313 = vpop.f32.mrf.mxu0
      %v9314 = vadd.f32 %v8996, %v9313
      %9315 = vmatmul.f32.gmra.mxu0 %v9078
      %v9316 = vpop.f32.mrf.mxu0
      %v9317 = vadd.f32 %v8996, %v9316
      %9318 = vmatmul.f32.gmra.mxu0 %v9081
      %v9319 = vpop.f32.mrf.mxu0
      %v9320 = vadd.f32 %v8996, %v9319
      %9321 = vmatmul.f32.gmra.mxu0 %v9084
      %v9322 = vpop.f32.mrf.mxu0
      %v9323 = vadd.f32 %v8996, %v9322
      %9324 = vmatmul.f32.gmra.mxu0 %v9087
      %v9325 = vpop.f32.mrf.mxu0
      %v9326 = vadd.f32 %v8996, %v9325
      %9327 = vmatmul.f32.gmra.mxu0 %v9090
      %v9328 = vpop.f32.mrf.mxu0
      %v9329 = vadd.f32 %v8996, %v9328
      %9330 = vmatmul.f32.gmra.mxu0 %v9093
      %v9331 = vpop.f32.mrf.mxu0
      %v9332 = vadd.f32 %v8996, %v9331
      %9333 = vmatmul.f32.gmra.mxu0 %v9096
      %v9334 = vpop.f32.mrf.mxu0
      %v9335 = vadd.f32 %v8996, %v9334
      %9336 = vmatmul.f32.gmra.mxu0 %v9099
      %v9337 = vpop.f32.mrf.mxu0
      %v9338 = vadd.f32 %v8996, %v9337
      %9339 = vmatmul.f32.gmra.mxu0 %v9102
      %v9340 = vpop.f32.mrf.mxu0
      %v9341 = vadd.f32 %v8996, %v9340
      %9342 = vmatmul.f32.gmra.mxu0 %v9105
      %v9343 = vpop.f32.mrf.mxu0
      %v9344 = vadd.f32 %v8996, %v9343
      %9345 = vmatmul.f32.gmra.mxu0 %v9108
      %v9346 = vpop.f32.mrf.mxu0
      %v9347 = vadd.f32 %v8996, %v9346
      %9348 = vmatmul.f32.gmra.mxu0 %v9111
      %v9349 = vpop.f32.mrf.mxu0
      %v9350 = vadd.f32 %v8996, %v9349
      %9351 = vmatmul.f32.gmra.mxu0 %v9114
      %v9352 = vpop.f32.mrf.mxu0
      %v9353 = vadd.f32 %v8996, %v9352
      %9354 = vmatmul.f32.gmra.mxu0 %v9117
      %v9355 = vpop.f32.mrf.mxu0
      %v9356 = vadd.f32 %v8996, %v9355
      %9357 = vmatmul.f32.gmra.mxu0 %v9120
      %v9358 = vpop.f32.mrf.mxu0
      %v9359 = vadd.f32 %v8996, %v9358
      %9360 = vmatmul.f32.gmra.mxu0 %v9123
      %v9361 = vpop.f32.mrf.mxu0
      %v9362 = vadd.f32 %v8996, %v9361
      %9363 = vmatmul.f32.gmra.mxu0 %v9126
      %v9364 = vpop.f32.mrf.mxu0
      %v9365 = vadd.f32 %v8996, %v9364
      %9366 = vmatmul.f32.gmra.mxu0 %v9129
      %v9367 = vpop.f32.mrf.mxu0
      %v9368 = vadd.f32 %v8996, %v9367
      %9369 = vmatmul.f32.gmra.mxu0 %v9132
      %v9370 = vpop.f32.mrf.mxu0
      %v9371 = vadd.f32 %v8996, %v9370
      %9372 = vmatmul.f32.gmra.mxu0 %v9135
      %v9373 = vpop.f32.mrf.mxu0
      %v9374 = vadd.f32 %v8996, %v9373
      %9375 = vmatmul.f32.gmra.mxu0 %v9138
      %v9376 = vpop.f32.mrf.mxu0
      %v9377 = vadd.f32 %v8996, %v9376
      %9378 = vmatmul.f32.gmra.mxu0 %v9141
      %v9379 = vpop.f32.mrf.mxu0
      %v9380 = vadd.f32 %v8996, %v9379
      %9381 = vmatmul.f32.gmra.mxu0 %v9144
      %v9382 = vpop.f32.mrf.mxu0
      %v9383 = vadd.f32 %v8996, %v9382
      %9384 = vmatmul.f32.gmra.mxu0 %v9147
      %v9385 = vpop.f32.mrf.mxu0
      %v9386 = vadd.f32 %v8996, %v9385
      %9387 = vmatmul.f32.gmra.mxu0 %v9150
      %v9388 = vpop.f32.mrf.mxu0
      %v9389 = vadd.f32 %v8996, %v9388
      %9390 = vmatmul.f32.gmra.mxu0 %v9153
      %v9391 = vpop.f32.mrf.mxu0
      %v9392 = vadd.f32 %v8996, %v9391
      %9393 = vmatmul.f32.gmra.mxu0 %v9156
      %v9394 = vpop.f32.mrf.mxu0
      %v9395 = vadd.f32 %v8996, %v9394
      %9396 = vmatmul.f32.gmra.mxu0 %v9159
      %v9397 = vpop.f32.mrf.mxu0
      %v9398 = vadd.f32 %v8996, %v9397
      %9399 = vmatmul.f32.gmra.mxu0 %v9162
      %v9400 = vpop.f32.mrf.mxu0
      %v9401 = vadd.f32 %v8996, %v9400
      %9402 = vmatmul.f32.gmra.mxu0 %v9165
      %v9403 = vpop.f32.mrf.mxu0
      %v9404 = vadd.f32 %v8996, %v9403
      %9405 = vmatmul.f32.gmra.mxu0 %v9168
      %v9406 = vpop.f32.mrf.mxu0
      %v9407 = vadd.f32 %v8996, %v9406
      %9408 = vmatmul.f32.gmra.mxu0 %v9171
      %v9409 = vpop.f32.mrf.mxu0
      %v9410 = vadd.f32 %v8996, %v9409
      %9411 = vmatmul.f32.gmra.mxu0 %v9174
      %v9412 = vpop.f32.mrf.mxu0
      %v9413 = vadd.f32 %v8996, %v9412
      %9414 = vmatmul.f32.gmra.mxu0 %v9177
      %v9415 = vpop.f32.mrf.mxu0
      %v9416 = vadd.f32 %v8996, %v9415
      %9417 = vmatmul.f32.gmra.mxu0 %v9180
      %v9418 = vpop.f32.mrf.mxu0
      %v9419 = vadd.f32 %v8996, %v9418
      %9420 = vmatmul.f32.gmra.mxu0 %v9183
      %v9421 = vpop.f32.mrf.mxu0
      %v9422 = vadd.f32 %v8996, %v9421
      %9423 = vmatmul.f32.gmra.mxu0 %v9186
      %v9424 = vpop.f32.mrf.mxu0
      %v9425 = vadd.f32 %v8996, %v9424
      %9426 = vmatmul.f32.gmra.mxu0 %v9189
      %v9427 = vpop.f32.mrf.mxu0
      %v9428 = vadd.f32 %v8996, %v9427
      %9429 = vmatmul.f32.gmra.mxu0 %v9192
      %v9430 = vpop.f32.mrf.mxu0
      %v9431 = vadd.f32 %v8996, %v9430
      %9432 = vmatmul.f32.gmra.mxu0 %v9195
      %v9433 = vpop.f32.mrf.mxu0
      %v9434 = vadd.f32 %v8996, %v9433
      %9435 = vmatmul.f32.gmra.mxu0 %v9198
      %v9436 = vpop.f32.mrf.mxu0
      %v9437 = vadd.f32 %v8996, %v9436
      %9438 = vmatmul.f32.gmra.mxu0 %v9201
      %v9439 = vpop.f32.mrf.mxu0
      %v9440 = vadd.f32 %v8996, %v9439
      %9441 = vmatmul.f32.gmra.mxu0 %v9204
      %v9442 = vpop.f32.mrf.mxu0
      %v9443 = vadd.f32 %v8996, %v9442
      %9444 = vmatmul.f32.gmra.mxu0 %v9207
      %v9445 = vpop.f32.mrf.mxu0
      %v9446 = vadd.f32 %v8996, %v9445
      %9447 = vmatmul.f32.gmra.mxu0 %v9210
      %v9448 = vpop.f32.mrf.mxu0
      %v9449 = vadd.f32 %v8996, %v9448
      %9450 = vmatmul.f32.gmra.mxu0 %v9213
      %v9451 = vpop.f32.mrf.mxu0
      %v9452 = vadd.f32 %v8996, %v9451
      %9453 = vmatmul.f32.gmra.mxu0 %v9216
      %v9454 = vpop.f32.mrf.mxu0
      %v9455 = vadd.f32 %v8996, %v9454
      %9456 = vmatmul.f32.gmra.mxu0 %v9219
      %v9457 = vpop.f32.mrf.mxu0
      %v9458 = vadd.f32 %v8996, %v9457
      %9459 = vmatmul.f32.gmra.mxu0 %v9222
      %v9460 = vpop.f32.mrf.mxu0
      %v9461 = vadd.f32 %v8996, %v9460
      %9462 = vmatmul.f32.gmra.mxu0 %v9225
      %v9463 = vpop.f32.mrf.mxu0
      %v9464 = vadd.f32 %v8996, %v9463
      %9465 = vmatmul.f32.gmra.mxu0 %v9228
      %v9466 = vpop.f32.mrf.mxu0
      %v9467 = vadd.f32 %v8996, %v9466
      %9468 = vdwg.mxu0
      %9469 = vmatpush.msra.mxu0 0.0
      %9470 = vmatpush.msra.mxu0 0.0
      %9471 = vmatpush.msra.mxu0 0.0
      %9472 = vmatpush.msra.mxu0 0.0
      %9473 = vmatpush.msra.mxu0 0.0
      %9474 = vmatpush.msra.mxu0 0.0
      %9475 = vmatpush.msra.mxu0 0.0
      %9476 = vmatpush.msra.mxu0 0.0
      %9477 = vmatpush.msra.mxu0 0.0
      %9478 = vmatpush.msra.mxu0 0.0
      %9479 = vmatpush.msra.mxu0 0.0
      %9480 = vmatpush.msra.mxu0 0.0
      %9481 = vmatpush.msra.mxu0 0.0
      %9482 = vmatpush.msra.mxu0 0.0
      %9483 = vmatpush.msra.mxu0 0.0
      %9484 = vmatpush.msra.mxu0 %v8989
      %9485 = vmatmul.f32.gmra.mxu0 %v9009
      %v9486 = vpop.f32.mrf.mxu0
      %v9487 = vadd.f32 %v8997, %v9486
      %9488 = vmatmul.f32.gmra.mxu0 %v9012
      %v9489 = vpop.f32.mrf.mxu0
      %v9490 = vadd.f32 %v8997, %v9489
      %9491 = vmatmul.f32.gmra.mxu0 %v9015
      %v9492 = vpop.f32.mrf.mxu0
      %v9493 = vadd.f32 %v8997, %v9492
      %9494 = vmatmul.f32.gmra.mxu0 %v9018
      %v9495 = vpop.f32.mrf.mxu0
      %v9496 = vadd.f32 %v8997, %v9495
      %9497 = vmatmul.f32.gmra.mxu0 %v9021
      %v9498 = vpop.f32.mrf.mxu0
      %v9499 = vadd.f32 %v8997, %v9498
      %9500 = vmatmul.f32.gmra.mxu0 %v9024
      %v9501 = vpop.f32.mrf.mxu0
      %v9502 = vadd.f32 %v8997, %v9501
      %9503 = vmatmul.f32.gmra.mxu0 %v9027
      %v9504 = vpop.f32.mrf.mxu0
      %v9505 = vadd.f32 %v8997, %v9504
      %9506 = vmatmul.f32.gmra.mxu0 %v9030
      %v9507 = vpop.f32.mrf.mxu0
      %v9508 = vadd.f32 %v8997, %v9507
      %9509 = vmatmul.f32.gmra.mxu0 %v9033
      %v9510 = vpop.f32.mrf.mxu0
      %v9511 = vadd.f32 %v8997, %v9510
      %9512 = vmatmul.f32.gmra.mxu0 %v9036
      %v9513 = vpop.f32.mrf.mxu0
      %v9514 = vadd.f32 %v8997, %v9513
      %9515 = vmatmul.f32.gmra.mxu0 %v9039
      %v9516 = vpop.f32.mrf.mxu0
      %v9517 = vadd.f32 %v8997, %v9516
      %9518 = vmatmul.f32.gmra.mxu0 %v9042
      %v9519 = vpop.f32.mrf.mxu0
      %v9520 = vadd.f32 %v8997, %v9519
      %9521 = vmatmul.f32.gmra.mxu0 %v9045
      %v9522 = vpop.f32.mrf.mxu0
      %v9523 = vadd.f32 %v8997, %v9522
      %9524 = vmatmul.f32.gmra.mxu0 %v9048
      %v9525 = vpop.f32.mrf.mxu0
      %v9526 = vadd.f32 %v8997, %v9525
      %9527 = vmatmul.f32.gmra.mxu0 %v9051
      %v9528 = vpop.f32.mrf.mxu0
      %v9529 = vadd.f32 %v8997, %v9528
      %9530 = vmatmul.f32.gmra.mxu0 %v9054
      %v9531 = vpop.f32.mrf.mxu0
      %v9532 = vadd.f32 %v8997, %v9531
      %9533 = vmatmul.f32.gmra.mxu0 %v9057
      %v9534 = vpop.f32.mrf.mxu0
      %v9535 = vadd.f32 %v8997, %v9534
      %9536 = vmatmul.f32.gmra.mxu0 %v9060
      %v9537 = vpop.f32.mrf.mxu0
      %v9538 = vadd.f32 %v8997, %v9537
      %9539 = vmatmul.f32.gmra.mxu0 %v9063
      %v9540 = vpop.f32.mrf.mxu0
      %v9541 = vadd.f32 %v8997, %v9540
      %9542 = vmatmul.f32.gmra.mxu0 %v9066
      %v9543 = vpop.f32.mrf.mxu0
      %v9544 = vadd.f32 %v8997, %v9543
      %9545 = vmatmul.f32.gmra.mxu0 %v9069
      %v9546 = vpop.f32.mrf.mxu0
      %v9547 = vadd.f32 %v8997, %v9546
      %9548 = vmatmul.f32.gmra.mxu0 %v9072
      %v9549 = vpop.f32.mrf.mxu0
      %v9550 = vadd.f32 %v8997, %v9549
      %9551 = vmatmul.f32.gmra.mxu0 %v9075
      %v9552 = vpop.f32.mrf.mxu0
      %v9553 = vadd.f32 %v8997, %v9552
      %9554 = vmatmul.f32.gmra.mxu0 %v9078
      %v9555 = vpop.f32.mrf.mxu0
      %v9556 = vadd.f32 %v8997, %v9555
      %9557 = vmatmul.f32.gmra.mxu0 %v9081
      %v9558 = vpop.f32.mrf.mxu0
      %v9559 = vadd.f32 %v8997, %v9558
      %9560 = vmatmul.f32.gmra.mxu0 %v9084
      %v9561 = vpop.f32.mrf.mxu0
      %v9562 = vadd.f32 %v8997, %v9561
      %9563 = vmatmul.f32.gmra.mxu0 %v9087
      %v9564 = vpop.f32.mrf.mxu0
      %v9565 = vadd.f32 %v8997, %v9564
      %9566 = vmatmul.f32.gmra.mxu0 %v9090
      %v9567 = vpop.f32.mrf.mxu0
      %v9568 = vadd.f32 %v8997, %v9567
      %9569 = vmatmul.f32.gmra.mxu0 %v9093
      %v9570 = vpop.f32.mrf.mxu0
      %v9571 = vadd.f32 %v8997, %v9570
      %9572 = vmatmul.f32.gmra.mxu0 %v9096
      %v9573 = vpop.f32.mrf.mxu0
      %v9574 = vadd.f32 %v8997, %v9573
      %9575 = vmatmul.f32.gmra.mxu0 %v9099
      %v9576 = vpop.f32.mrf.mxu0
      %v9577 = vadd.f32 %v8997, %v9576
      %9578 = vmatmul.f32.gmra.mxu0 %v9102
      %v9579 = vpop.f32.mrf.mxu0
      %v9580 = vadd.f32 %v8997, %v9579
      %9581 = vmatmul.f32.gmra.mxu0 %v9105
      %v9582 = vpop.f32.mrf.mxu0
      %v9583 = vadd.f32 %v8997, %v9582
      %9584 = vmatmul.f32.gmra.mxu0 %v9108
      %v9585 = vpop.f32.mrf.mxu0
      %v9586 = vadd.f32 %v8997, %v9585
      %9587 = vmatmul.f32.gmra.mxu0 %v9111
      %v9588 = vpop.f32.mrf.mxu0
      %v9589 = vadd.f32 %v8997, %v9588
      %9590 = vmatmul.f32.gmra.mxu0 %v9114
      %v9591 = vpop.f32.mrf.mxu0
      %v9592 = vadd.f32 %v8997, %v9591
      %9593 = vmatmul.f32.gmra.mxu0 %v9117
      %v9594 = vpop.f32.mrf.mxu0
      %v9595 = vadd.f32 %v8997, %v9594
      %9596 = vmatmul.f32.gmra.mxu0 %v9120
      %v9597 = vpop.f32.mrf.mxu0
      %v9598 = vadd.f32 %v8997, %v9597
      %9599 = vmatmul.f32.gmra.mxu0 %v9123
      %v9600 = vpop.f32.mrf.mxu0
      %v9601 = vadd.f32 %v8997, %v9600
      %9602 = vmatmul.f32.gmra.mxu0 %v9126
      %v9603 = vpop.f32.mrf.mxu0
      %v9604 = vadd.f32 %v8997, %v9603
      %9605 = vmatmul.f32.gmra.mxu0 %v9129
      %v9606 = vpop.f32.mrf.mxu0
      %v9607 = vadd.f32 %v8997, %v9606
      %9608 = vmatmul.f32.gmra.mxu0 %v9132
      %v9609 = vpop.f32.mrf.mxu0
      %v9610 = vadd.f32 %v8997, %v9609
      %9611 = vmatmul.f32.gmra.mxu0 %v9135
      %v9612 = vpop.f32.mrf.mxu0
      %v9613 = vadd.f32 %v8997, %v9612
      %9614 = vmatmul.f32.gmra.mxu0 %v9138
      %v9615 = vpop.f32.mrf.mxu0
      %v9616 = vadd.f32 %v8997, %v9615
      %9617 = vmatmul.f32.gmra.mxu0 %v9141
      %v9618 = vpop.f32.mrf.mxu0
      %v9619 = vadd.f32 %v8997, %v9618
      %9620 = vmatmul.f32.gmra.mxu0 %v9144
      %v9621 = vpop.f32.mrf.mxu0
      %v9622 = vadd.f32 %v8997, %v9621
      %9623 = vmatmul.f32.gmra.mxu0 %v9147
      %v9624 = vpop.f32.mrf.mxu0
      %v9625 = vadd.f32 %v8997, %v9624
      %9626 = vmatmul.f32.gmra.mxu0 %v9150
      %v9627 = vpop.f32.mrf.mxu0
      %v9628 = vadd.f32 %v8997, %v9627
      %9629 = vmatmul.f32.gmra.mxu0 %v9153
      %v9630 = vpop.f32.mrf.mxu0
      %v9631 = vadd.f32 %v8997, %v9630
      %9632 = vmatmul.f32.gmra.mxu0 %v9156
      %v9633 = vpop.f32.mrf.mxu0
      %v9634 = vadd.f32 %v8997, %v9633
      %9635 = vmatmul.f32.gmra.mxu0 %v9159
      %v9636 = vpop.f32.mrf.mxu0
      %v9637 = vadd.f32 %v8997, %v9636
      %9638 = vmatmul.f32.gmra.mxu0 %v9162
      %v9639 = vpop.f32.mrf.mxu0
      %v9640 = vadd.f32 %v8997, %v9639
      %9641 = vmatmul.f32.gmra.mxu0 %v9165
      %v9642 = vpop.f32.mrf.mxu0
      %v9643 = vadd.f32 %v8997, %v9642
      %9644 = vmatmul.f32.gmra.mxu0 %v9168
      %v9645 = vpop.f32.mrf.mxu0
      %v9646 = vadd.f32 %v8997, %v9645
      %9647 = vmatmul.f32.gmra.mxu0 %v9171
      %v9648 = vpop.f32.mrf.mxu0
      %v9649 = vadd.f32 %v8997, %v9648
      %9650 = vmatmul.f32.gmra.mxu0 %v9174
      %v9651 = vpop.f32.mrf.mxu0
      %v9652 = vadd.f32 %v8997, %v9651
      %9653 = vmatmul.f32.gmra.mxu0 %v9177
      %v9654 = vpop.f32.mrf.mxu0
      %v9655 = vadd.f32 %v8997, %v9654
      %9656 = vmatmul.f32.gmra.mxu0 %v9180
      %v9657 = vpop.f32.mrf.mxu0
      %v9658 = vadd.f32 %v8997, %v9657
      %9659 = vmatmul.f32.gmra.mxu0 %v9183
      %v9660 = vpop.f32.mrf.mxu0
      %v9661 = vadd.f32 %v8997, %v9660
      %9662 = vmatmul.f32.gmra.mxu0 %v9186
      %v9663 = vpop.f32.mrf.mxu0
      %v9664 = vadd.f32 %v8997, %v9663
      %9665 = vmatmul.f32.gmra.mxu0 %v9189
      %v9666 = vpop.f32.mrf.mxu0
      %v9667 = vadd.f32 %v8997, %v9666
      %9668 = vmatmul.f32.gmra.mxu0 %v9192
      %v9669 = vpop.f32.mrf.mxu0
      %v9670 = vadd.f32 %v8997, %v9669
      %9671 = vmatmul.f32.gmra.mxu0 %v9195
      %v9672 = vpop.f32.mrf.mxu0
      %v9673 = vadd.f32 %v8997, %v9672
      %9674 = vmatmul.f32.gmra.mxu0 %v9198
      %v9675 = vpop.f32.mrf.mxu0
      %v9676 = vadd.f32 %v8997, %v9675
      %9677 = vmatmul.f32.gmra.mxu0 %v9201
      %v9678 = vpop.f32.mrf.mxu0
      %v9679 = vadd.f32 %v8997, %v9678
      %9680 = vmatmul.f32.gmra.mxu0 %v9204
      %v9681 = vpop.f32.mrf.mxu0
      %v9682 = vadd.f32 %v8997, %v9681
      %9683 = vmatmul.f32.gmra.mxu0 %v9207
      %v9684 = vpop.f32.mrf.mxu0
      %v9685 = vadd.f32 %v8997, %v9684
      %9686 = vmatmul.f32.gmra.mxu0 %v9210
      %v9687 = vpop.f32.mrf.mxu0
      %v9688 = vadd.f32 %v8997, %v9687
      %9689 = vmatmul.f32.gmra.mxu0 %v9213
      %v9690 = vpop.f32.mrf.mxu0
      %v9691 = vadd.f32 %v8997, %v9690
      %9692 = vmatmul.f32.gmra.mxu0 %v9216
      %v9693 = vpop.f32.mrf.mxu0
      %v9694 = vadd.f32 %v8997, %v9693
      %9695 = vmatmul.f32.gmra.mxu0 %v9219
      %v9696 = vpop.f32.mrf.mxu0
      %v9697 = vadd.f32 %v8997, %v9696
      %9698 = vmatmul.f32.gmra.mxu0 %v9222
      %v9699 = vpop.f32.mrf.mxu0
      %v9700 = vadd.f32 %v8997, %v9699
      %9701 = vmatmul.f32.gmra.mxu0 %v9225
      %v9702 = vpop.f32.mrf.mxu0
      %v9703 = vadd.f32 %v8997, %v9702
      %9704 = vmatmul.f32.gmra.mxu0 %v9228
      %v9705 = vpop.f32.mrf.mxu0
      %v9706 = vadd.f32 %v8997, %v9705
      %9707 = vdwg.mxu0
      %9708 = vmatpush.msra.mxu0 0.0
      %9709 = vmatpush.msra.mxu0 0.0
      %9710 = vmatpush.msra.mxu0 0.0
      %9711 = vmatpush.msra.mxu0 0.0
      %9712 = vmatpush.msra.mxu0 0.0
      %9713 = vmatpush.msra.mxu0 0.0
      %9714 = vmatpush.msra.mxu0 0.0
      %9715 = vmatpush.msra.mxu0 0.0
      %9716 = vmatpush.msra.mxu0 0.0
      %9717 = vmatpush.msra.mxu0 0.0
      %9718 = vmatpush.msra.mxu0 0.0
      %9719 = vmatpush.msra.mxu0 0.0
      %9720 = vmatpush.msra.mxu0 0.0
      %9721 = vmatpush.msra.mxu0 0.0
      %9722 = vmatpush.msra.mxu0 0.0
      %9723 = vmatpush.msra.mxu0 %v8990
      %9724 = vmatmul.f32.gmra.mxu0 %v9009
      %v9725 = vpop.f32.mrf.mxu0
      %v9726 = vadd.f32 %v8998, %v9725
      %9727 = vmatmul.f32.gmra.mxu0 %v9012
      %v9728 = vpop.f32.mrf.mxu0
      %v9729 = vadd.f32 %v8998, %v9728
      %9730 = vmatmul.f32.gmra.mxu0 %v9015
      %v9731 = vpop.f32.mrf.mxu0
      %v9732 = vadd.f32 %v8998, %v9731
      %9733 = vmatmul.f32.gmra.mxu0 %v9018
      %v9734 = vpop.f32.mrf.mxu0
      %v9735 = vadd.f32 %v8998, %v9734
      %9736 = vmatmul.f32.gmra.mxu0 %v9021
      %v9737 = vpop.f32.mrf.mxu0
      %v9738 = vadd.f32 %v8998, %v9737
      %9739 = vmatmul.f32.gmra.mxu0 %v9024
      %v9740 = vpop.f32.mrf.mxu0
      %v9741 = vadd.f32 %v8998, %v9740
      %9742 = vmatmul.f32.gmra.mxu0 %v9027
      %v9743 = vpop.f32.mrf.mxu0
      %v9744 = vadd.f32 %v8998, %v9743
      %9745 = vmatmul.f32.gmra.mxu0 %v9030
      %v9746 = vpop.f32.mrf.mxu0
      %v9747 = vadd.f32 %v8998, %v9746
      %9748 = vmatmul.f32.gmra.mxu0 %v9033
      %v9749 = vpop.f32.mrf.mxu0
      %v9750 = vadd.f32 %v8998, %v9749
      %9751 = vmatmul.f32.gmra.mxu0 %v9036
      %v9752 = vpop.f32.mrf.mxu0
      %v9753 = vadd.f32 %v8998, %v9752
      %9754 = vmatmul.f32.gmra.mxu0 %v9039
      %v9755 = vpop.f32.mrf.mxu0
      %v9756 = vadd.f32 %v8998, %v9755
      %9757 = vmatmul.f32.gmra.mxu0 %v9042
      %v9758 = vpop.f32.mrf.mxu0
      %v9759 = vadd.f32 %v8998, %v9758
      %9760 = vmatmul.f32.gmra.mxu0 %v9045
      %v9761 = vpop.f32.mrf.mxu0
      %v9762 = vadd.f32 %v8998, %v9761
      %9763 = vmatmul.f32.gmra.mxu0 %v9048
      %v9764 = vpop.f32.mrf.mxu0
      %v9765 = vadd.f32 %v8998, %v9764
      %9766 = vmatmul.f32.gmra.mxu0 %v9051
      %v9767 = vpop.f32.mrf.mxu0
      %v9768 = vadd.f32 %v8998, %v9767
      %9769 = vmatmul.f32.gmra.mxu0 %v9054
      %v9770 = vpop.f32.mrf.mxu0
      %v9771 = vadd.f32 %v8998, %v9770
      %9772 = vmatmul.f32.gmra.mxu0 %v9057
      %v9773 = vpop.f32.mrf.mxu0
      %v9774 = vadd.f32 %v8998, %v9773
      %9775 = vmatmul.f32.gmra.mxu0 %v9060
      %v9776 = vpop.f32.mrf.mxu0
      %v9777 = vadd.f32 %v8998, %v9776
      %9778 = vmatmul.f32.gmra.mxu0 %v9063
      %v9779 = vpop.f32.mrf.mxu0
      %v9780 = vadd.f32 %v8998, %v9779
      %9781 = vmatmul.f32.gmra.mxu0 %v9066
      %v9782 = vpop.f32.mrf.mxu0
      %v9783 = vadd.f32 %v8998, %v9782
      %9784 = vmatmul.f32.gmra.mxu0 %v9069
      %v9785 = vpop.f32.mrf.mxu0
      %v9786 = vadd.f32 %v8998, %v9785
      %9787 = vmatmul.f32.gmra.mxu0 %v9072
      %v9788 = vpop.f32.mrf.mxu0
      %v9789 = vadd.f32 %v8998, %v9788
      %9790 = vmatmul.f32.gmra.mxu0 %v9075
      %v9791 = vpop.f32.mrf.mxu0
      %v9792 = vadd.f32 %v8998, %v9791
      %9793 = vmatmul.f32.gmra.mxu0 %v9078
      %v9794 = vpop.f32.mrf.mxu0
      %v9795 = vadd.f32 %v8998, %v9794
      %9796 = vmatmul.f32.gmra.mxu0 %v9081
      %v9797 = vpop.f32.mrf.mxu0
      %v9798 = vadd.f32 %v8998, %v9797
      %9799 = vmatmul.f32.gmra.mxu0 %v9084
      %v9800 = vpop.f32.mrf.mxu0
      %v9801 = vadd.f32 %v8998, %v9800
      %9802 = vmatmul.f32.gmra.mxu0 %v9087
      %v9803 = vpop.f32.mrf.mxu0
      %v9804 = vadd.f32 %v8998, %v9803
      %9805 = vmatmul.f32.gmra.mxu0 %v9090
      %v9806 = vpop.f32.mrf.mxu0
      %v9807 = vadd.f32 %v8998, %v9806
      %9808 = vmatmul.f32.gmra.mxu0 %v9093
      %v9809 = vpop.f32.mrf.mxu0
      %v9810 = vadd.f32 %v8998, %v9809
      %9811 = vmatmul.f32.gmra.mxu0 %v9096
      %v9812 = vpop.f32.mrf.mxu0
      %v9813 = vadd.f32 %v8998, %v9812
      %9814 = vmatmul.f32.gmra.mxu0 %v9099
      %v9815 = vpop.f32.mrf.mxu0
      %v9816 = vadd.f32 %v8998, %v9815
      %9817 = vmatmul.f32.gmra.mxu0 %v9102
      %v9818 = vpop.f32.mrf.mxu0
      %v9819 = vadd.f32 %v8998, %v9818
      %9820 = vmatmul.f32.gmra.mxu0 %v9105
      %v9821 = vpop.f32.mrf.mxu0
      %v9822 = vadd.f32 %v8998, %v9821
      %9823 = vmatmul.f32.gmra.mxu0 %v9108
      %v9824 = vpop.f32.mrf.mxu0
      %v9825 = vadd.f32 %v8998, %v9824
      %9826 = vmatmul.f32.gmra.mxu0 %v9111
      %v9827 = vpop.f32.mrf.mxu0
      %v9828 = vadd.f32 %v8998, %v9827
      %9829 = vmatmul.f32.gmra.mxu0 %v9114
      %v9830 = vpop.f32.mrf.mxu0
      %v9831 = vadd.f32 %v8998, %v9830
      %9832 = vmatmul.f32.gmra.mxu0 %v9117
      %v9833 = vpop.f32.mrf.mxu0
      %v9834 = vadd.f32 %v8998, %v9833
      %9835 = vmatmul.f32.gmra.mxu0 %v9120
      %v9836 = vpop.f32.mrf.mxu0
      %v9837 = vadd.f32 %v8998, %v9836
      %9838 = vmatmul.f32.gmra.mxu0 %v9123
      %v9839 = vpop.f32.mrf.mxu0
      %v9840 = vadd.f32 %v8998, %v9839
      %9841 = vmatmul.f32.gmra.mxu0 %v9126
      %v9842 = vpop.f32.mrf.mxu0
      %v9843 = vadd.f32 %v8998, %v9842
      %9844 = vmatmul.f32.gmra.mxu0 %v9129
      %v9845 = vpop.f32.mrf.mxu0
      %v9846 = vadd.f32 %v8998, %v9845
      %9847 = vmatmul.f32.gmra.mxu0 %v9132
      %v9848 = vpop.f32.mrf.mxu0
      %v9849 = vadd.f32 %v8998, %v9848
      %9850 = vmatmul.f32.gmra.mxu0 %v9135
      %v9851 = vpop.f32.mrf.mxu0
      %v9852 = vadd.f32 %v8998, %v9851
      %9853 = vmatmul.f32.gmra.mxu0 %v9138
      %v9854 = vpop.f32.mrf.mxu0
      %v9855 = vadd.f32 %v8998, %v9854
      %9856 = vmatmul.f32.gmra.mxu0 %v9141
      %v9857 = vpop.f32.mrf.mxu0
      %v9858 = vadd.f32 %v8998, %v9857
      %9859 = vmatmul.f32.gmra.mxu0 %v9144
      %v9860 = vpop.f32.mrf.mxu0
      %v9861 = vadd.f32 %v8998, %v9860
      %9862 = vmatmul.f32.gmra.mxu0 %v9147
      %v9863 = vpop.f32.mrf.mxu0
      %v9864 = vadd.f32 %v8998, %v9863
      %9865 = vmatmul.f32.gmra.mxu0 %v9150
      %v9866 = vpop.f32.mrf.mxu0
      %v9867 = vadd.f32 %v8998, %v9866
      %9868 = vmatmul.f32.gmra.mxu0 %v9153
      %v9869 = vpop.f32.mrf.mxu0
      %v9870 = vadd.f32 %v8998, %v9869
      %9871 = vmatmul.f32.gmra.mxu0 %v9156
      %v9872 = vpop.f32.mrf.mxu0
      %v9873 = vadd.f32 %v8998, %v9872
      %9874 = vmatmul.f32.gmra.mxu0 %v9159
      %v9875 = vpop.f32.mrf.mxu0
      %v9876 = vadd.f32 %v8998, %v9875
      %9877 = vmatmul.f32.gmra.mxu0 %v9162
      %v9878 = vpop.f32.mrf.mxu0
      %v9879 = vadd.f32 %v8998, %v9878
      %9880 = vmatmul.f32.gmra.mxu0 %v9165
      %v9881 = vpop.f32.mrf.mxu0
      %v9882 = vadd.f32 %v8998, %v9881
      %9883 = vmatmul.f32.gmra.mxu0 %v9168
      %v9884 = vpop.f32.mrf.mxu0
      %v9885 = vadd.f32 %v8998, %v9884
      %9886 = vmatmul.f32.gmra.mxu0 %v9171
      %v9887 = vpop.f32.mrf.mxu0
      %v9888 = vadd.f32 %v8998, %v9887
      %9889 = vmatmul.f32.gmra.mxu0 %v9174
      %v9890 = vpop.f32.mrf.mxu0
      %v9891 = vadd.f32 %v8998, %v9890
      %9892 = vmatmul.f32.gmra.mxu0 %v9177
      %v9893 = vpop.f32.mrf.mxu0
      %v9894 = vadd.f32 %v8998, %v9893
      %9895 = vmatmul.f32.gmra.mxu0 %v9180
      %v9896 = vpop.f32.mrf.mxu0
      %v9897 = vadd.f32 %v8998, %v9896
      %9898 = vmatmul.f32.gmra.mxu0 %v9183
      %v9899 = vpop.f32.mrf.mxu0
      %v9900 = vadd.f32 %v8998, %v9899
      %9901 = vmatmul.f32.gmra.mxu0 %v9186
      %v9902 = vpop.f32.mrf.mxu0
      %v9903 = vadd.f32 %v8998, %v9902
      %9904 = vmatmul.f32.gmra.mxu0 %v9189
      %v9905 = vpop.f32.mrf.mxu0
      %v9906 = vadd.f32 %v8998, %v9905
      %9907 = vmatmul.f32.gmra.mxu0 %v9192
      %v9908 = vpop.f32.mrf.mxu0
      %v9909 = vadd.f32 %v8998, %v9908
      %9910 = vmatmul.f32.gmra.mxu0 %v9195
      %v9911 = vpop.f32.mrf.mxu0
      %v9912 = vadd.f32 %v8998, %v9911
      %9913 = vmatmul.f32.gmra.mxu0 %v9198
      %v9914 = vpop.f32.mrf.mxu0
      %v9915 = vadd.f32 %v8998, %v9914
      %9916 = vmatmul.f32.gmra.mxu0 %v9201
      %v9917 = vpop.f32.mrf.mxu0
      %v9918 = vadd.f32 %v8998, %v9917
      %9919 = vmatmul.f32.gmra.mxu0 %v9204
      %v9920 = vpop.f32.mrf.mxu0
      %v9921 = vadd.f32 %v8998, %v9920
      %9922 = vmatmul.f32.gmra.mxu0 %v9207
      %v9923 = vpop.f32.mrf.mxu0
      %v9924 = vadd.f32 %v8998, %v9923
      %9925 = vmatmul.f32.gmra.mxu0 %v9210
      %v9926 = vpop.f32.mrf.mxu0
      %v9927 = vadd.f32 %v8998, %v9926
      %9928 = vmatmul.f32.gmra.mxu0 %v9213
      %v9929 = vpop.f32.mrf.mxu0
      %v9930 = vadd.f32 %v8998, %v9929
      %9931 = vmatmul.f32.gmra.mxu0 %v9216
      %v9932 = vpop.f32.mrf.mxu0
      %v9933 = vadd.f32 %v8998, %v9932
      %9934 = vmatmul.f32.gmra.mxu0 %v9219
      %v9935 = vpop.f32.mrf.mxu0
      %v9936 = vadd.f32 %v8998, %v9935
      %9937 = vmatmul.f32.gmra.mxu0 %v9222
      %v9938 = vpop.f32.mrf.mxu0
      %v9939 = vadd.f32 %v8998, %v9938
      %9940 = vmatmul.f32.gmra.mxu0 %v9225
      %v9941 = vpop.f32.mrf.mxu0
      %v9942 = vadd.f32 %v8998, %v9941
      %9943 = vmatmul.f32.gmra.mxu0 %v9228
      %v9944 = vpop.f32.mrf.mxu0
      %v9945 = vadd.f32 %v8998, %v9944
      %9946 = vdwg.mxu0
      %9947 = vmatpush.msra.mxu0 0.0
      %9948 = vmatpush.msra.mxu0 0.0
      %9949 = vmatpush.msra.mxu0 0.0
      %9950 = vmatpush.msra.mxu0 0.0
      %9951 = vmatpush.msra.mxu0 0.0
      %9952 = vmatpush.msra.mxu0 0.0
      %9953 = vmatpush.msra.mxu0 0.0
      %9954 = vmatpush.msra.mxu0 0.0
      %9955 = vmatpush.msra.mxu0 0.0
      %9956 = vmatpush.msra.mxu0 0.0
      %9957 = vmatpush.msra.mxu0 0.0
      %9958 = vmatpush.msra.mxu0 0.0
      %9959 = vmatpush.msra.mxu0 0.0
      %9960 = vmatpush.msra.mxu0 0.0
      %9961 = vmatpush.msra.mxu0 0.0
      %9962 = vmatpush.msra.mxu0 %v8991
      %9963 = vmatmul.f32.gmra.mxu0 %v9009
      %v9964 = vpop.f32.mrf.mxu0
      %v9965 = vadd.f32 %v8999, %v9964
      %9966 = vmatmul.f32.gmra.mxu0 %v9012
      %v9967 = vpop.f32.mrf.mxu0
      %v9968 = vadd.f32 %v8999, %v9967
      %9969 = vmatmul.f32.gmra.mxu0 %v9015
      %v9970 = vpop.f32.mrf.mxu0
      %v9971 = vadd.f32 %v8999, %v9970
      %9972 = vmatmul.f32.gmra.mxu0 %v9018
      %v9973 = vpop.f32.mrf.mxu0
      %v9974 = vadd.f32 %v8999, %v9973
      %9975 = vmatmul.f32.gmra.mxu0 %v9021
      %v9976 = vpop.f32.mrf.mxu0
      %v9977 = vadd.f32 %v8999, %v9976
      %9978 = vmatmul.f32.gmra.mxu0 %v9024
      %v9979 = vpop.f32.mrf.mxu0
      %v9980 = vadd.f32 %v8999, %v9979
      %9981 = vmatmul.f32.gmra.mxu0 %v9027
      %v9982 = vpop.f32.mrf.mxu0
      %v9983 = vadd.f32 %v8999, %v9982
      %9984 = vmatmul.f32.gmra.mxu0 %v9030
      %v9985 = vpop.f32.mrf.mxu0
      %v9986 = vadd.f32 %v8999, %v9985
      %9987 = vmatmul.f32.gmra.mxu0 %v9033
      %v9988 = vpop.f32.mrf.mxu0
      %v9989 = vadd.f32 %v8999, %v9988
      %9990 = vmatmul.f32.gmra.mxu0 %v9036
      %v9991 = vpop.f32.mrf.mxu0
      %v9992 = vadd.f32 %v8999, %v9991
      %9993 = vmatmul.f32.gmra.mxu0 %v9039
      %v9994 = vpop.f32.mrf.mxu0
      %v9995 = vadd.f32 %v8999, %v9994
      %9996 = vmatmul.f32.gmra.mxu0 %v9042
      %v9997 = vpop.f32.mrf.mxu0
      %v9998 = vadd.f32 %v8999, %v9997
      %9999 = vmatmul.f32.gmra.mxu0 %v9045
      %v10000 = vpop.f32.mrf.mxu0
      %v10001 = vadd.f32 %v8999, %v10000
      %10002 = vmatmul.f32.gmra.mxu0 %v9048
      %v10003 = vpop.f32.mrf.mxu0
      %v10004 = vadd.f32 %v8999, %v10003
      %10005 = vmatmul.f32.gmra.mxu0 %v9051
      %v10006 = vpop.f32.mrf.mxu0
      %v10007 = vadd.f32 %v8999, %v10006
      %10008 = vmatmul.f32.gmra.mxu0 %v9054
      %v10009 = vpop.f32.mrf.mxu0
      %v10010 = vadd.f32 %v8999, %v10009
      %10011 = vmatmul.f32.gmra.mxu0 %v9057
      %v10012 = vpop.f32.mrf.mxu0
      %v10013 = vadd.f32 %v8999, %v10012
      %10014 = vmatmul.f32.gmra.mxu0 %v9060
      %v10015 = vpop.f32.mrf.mxu0
      %v10016 = vadd.f32 %v8999, %v10015
      %10017 = vmatmul.f32.gmra.mxu0 %v9063
      %v10018 = vpop.f32.mrf.mxu0
      %v10019 = vadd.f32 %v8999, %v10018
      %10020 = vmatmul.f32.gmra.mxu0 %v9066
      %v10021 = vpop.f32.mrf.mxu0
      %v10022 = vadd.f32 %v8999, %v10021
      %10023 = vmatmul.f32.gmra.mxu0 %v9069
      %v10024 = vpop.f32.mrf.mxu0
      %v10025 = vadd.f32 %v8999, %v10024
      %10026 = vmatmul.f32.gmra.mxu0 %v9072
      %v10027 = vpop.f32.mrf.mxu0
      %v10028 = vadd.f32 %v8999, %v10027
      %10029 = vmatmul.f32.gmra.mxu0 %v9075
      %v10030 = vpop.f32.mrf.mxu0
      %v10031 = vadd.f32 %v8999, %v10030
      %10032 = vmatmul.f32.gmra.mxu0 %v9078
      %v10033 = vpop.f32.mrf.mxu0
      %v10034 = vadd.f32 %v8999, %v10033
      %10035 = vmatmul.f32.gmra.mxu0 %v9081
      %v10036 = vpop.f32.mrf.mxu0
      %v10037 = vadd.f32 %v8999, %v10036
      %10038 = vmatmul.f32.gmra.mxu0 %v9084
      %v10039 = vpop.f32.mrf.mxu0
      %v10040 = vadd.f32 %v8999, %v10039
      %10041 = vmatmul.f32.gmra.mxu0 %v9087
      %v10042 = vpop.f32.mrf.mxu0
      %v10043 = vadd.f32 %v8999, %v10042
      %10044 = vmatmul.f32.gmra.mxu0 %v9090
      %v10045 = vpop.f32.mrf.mxu0
      %v10046 = vadd.f32 %v8999, %v10045
      %10047 = vmatmul.f32.gmra.mxu0 %v9093
      %v10048 = vpop.f32.mrf.mxu0
      %v10049 = vadd.f32 %v8999, %v10048
      %10050 = vmatmul.f32.gmra.mxu0 %v9096
      %v10051 = vpop.f32.mrf.mxu0
      %v10052 = vadd.f32 %v8999, %v10051
      %10053 = vmatmul.f32.gmra.mxu0 %v9099
      %v10054 = vpop.f32.mrf.mxu0
      %v10055 = vadd.f32 %v8999, %v10054
      %10056 = vmatmul.f32.gmra.mxu0 %v9102
      %v10057 = vpop.f32.mrf.mxu0
      %v10058 = vadd.f32 %v8999, %v10057
      %10059 = vmatmul.f32.gmra.mxu0 %v9105
      %v10060 = vpop.f32.mrf.mxu0
      %v10061 = vadd.f32 %v8999, %v10060
      %10062 = vmatmul.f32.gmra.mxu0 %v9108
      %v10063 = vpop.f32.mrf.mxu0
      %v10064 = vadd.f32 %v8999, %v10063
      %10065 = vmatmul.f32.gmra.mxu0 %v9111
      %v10066 = vpop.f32.mrf.mxu0
      %v10067 = vadd.f32 %v8999, %v10066
      %10068 = vmatmul.f32.gmra.mxu0 %v9114
      %v10069 = vpop.f32.mrf.mxu0
      %v10070 = vadd.f32 %v8999, %v10069
      %10071 = vmatmul.f32.gmra.mxu0 %v9117
      %v10072 = vpop.f32.mrf.mxu0
      %v10073 = vadd.f32 %v8999, %v10072
      %10074 = vmatmul.f32.gmra.mxu0 %v9120
      %v10075 = vpop.f32.mrf.mxu0
      %v10076 = vadd.f32 %v8999, %v10075
      %10077 = vmatmul.f32.gmra.mxu0 %v9123
      %v10078 = vpop.f32.mrf.mxu0
      %v10079 = vadd.f32 %v8999, %v10078
      %10080 = vmatmul.f32.gmra.mxu0 %v9126
      %v10081 = vpop.f32.mrf.mxu0
      %v10082 = vadd.f32 %v8999, %v10081
      %10083 = vmatmul.f32.gmra.mxu0 %v9129
      %v10084 = vpop.f32.mrf.mxu0
      %v10085 = vadd.f32 %v8999, %v10084
      %10086 = vmatmul.f32.gmra.mxu0 %v9132
      %v10087 = vpop.f32.mrf.mxu0
      %v10088 = vadd.f32 %v8999, %v10087
      %10089 = vmatmul.f32.gmra.mxu0 %v9135
      %v10090 = vpop.f32.mrf.mxu0
      %v10091 = vadd.f32 %v8999, %v10090
      %10092 = vmatmul.f32.gmra.mxu0 %v9138
      %v10093 = vpop.f32.mrf.mxu0
      %v10094 = vadd.f32 %v8999, %v10093
      %10095 = vmatmul.f32.gmra.mxu0 %v9141
      %v10096 = vpop.f32.mrf.mxu0
      %v10097 = vadd.f32 %v8999, %v10096
      %10098 = vmatmul.f32.gmra.mxu0 %v9144
      %v10099 = vpop.f32.mrf.mxu0
      %v10100 = vadd.f32 %v8999, %v10099
      %10101 = vmatmul.f32.gmra.mxu0 %v9147
      %v10102 = vpop.f32.mrf.mxu0
      %v10103 = vadd.f32 %v8999, %v10102
      %10104 = vmatmul.f32.gmra.mxu0 %v9150
      %v10105 = vpop.f32.mrf.mxu0
      %v10106 = vadd.f32 %v8999, %v10105
      %10107 = vmatmul.f32.gmra.mxu0 %v9153
      %v10108 = vpop.f32.mrf.mxu0
      %v10109 = vadd.f32 %v8999, %v10108
      %10110 = vmatmul.f32.gmra.mxu0 %v9156
      %v10111 = vpop.f32.mrf.mxu0
      %v10112 = vadd.f32 %v8999, %v10111
      %10113 = vmatmul.f32.gmra.mxu0 %v9159
      %v10114 = vpop.f32.mrf.mxu0
      %v10115 = vadd.f32 %v8999, %v10114
      %10116 = vmatmul.f32.gmra.mxu0 %v9162
      %v10117 = vpop.f32.mrf.mxu0
      %v10118 = vadd.f32 %v8999, %v10117
      %10119 = vmatmul.f32.gmra.mxu0 %v9165
      %v10120 = vpop.f32.mrf.mxu0
      %v10121 = vadd.f32 %v8999, %v10120
      %10122 = vmatmul.f32.gmra.mxu0 %v9168
      %v10123 = vpop.f32.mrf.mxu0
      %v10124 = vadd.f32 %v8999, %v10123
      %10125 = vmatmul.f32.gmra.mxu0 %v9171
      %v10126 = vpop.f32.mrf.mxu0
      %v10127 = vadd.f32 %v8999, %v10126
      %10128 = vmatmul.f32.gmra.mxu0 %v9174
      %v10129 = vpop.f32.mrf.mxu0
      %v10130 = vadd.f32 %v8999, %v10129
      %10131 = vmatmul.f32.gmra.mxu0 %v9177
      %v10132 = vpop.f32.mrf.mxu0
      %v10133 = vadd.f32 %v8999, %v10132
      %10134 = vmatmul.f32.gmra.mxu0 %v9180
      %v10135 = vpop.f32.mrf.mxu0
      %v10136 = vadd.f32 %v8999, %v10135
      %10137 = vmatmul.f32.gmra.mxu0 %v9183
      %v10138 = vpop.f32.mrf.mxu0
      %v10139 = vadd.f32 %v8999, %v10138
      %10140 = vmatmul.f32.gmra.mxu0 %v9186
      %v10141 = vpop.f32.mrf.mxu0
      %v10142 = vadd.f32 %v8999, %v10141
      %10143 = vmatmul.f32.gmra.mxu0 %v9189
      %v10144 = vpop.f32.mrf.mxu0
      %v10145 = vadd.f32 %v8999, %v10144
      %10146 = vmatmul.f32.gmra.mxu0 %v9192
      %v10147 = vpop.f32.mrf.mxu0
      %v10148 = vadd.f32 %v8999, %v10147
      %10149 = vmatmul.f32.gmra.mxu0 %v9195
      %v10150 = vpop.f32.mrf.mxu0
      %v10151 = vadd.f32 %v8999, %v10150
      %10152 = vmatmul.f32.gmra.mxu0 %v9198
      %v10153 = vpop.f32.mrf.mxu0
      %v10154 = vadd.f32 %v8999, %v10153
      %10155 = vmatmul.f32.gmra.mxu0 %v9201
      %v10156 = vpop.f32.mrf.mxu0
      %v10157 = vadd.f32 %v8999, %v10156
      %10158 = vmatmul.f32.gmra.mxu0 %v9204
      %v10159 = vpop.f32.mrf.mxu0
      %v10160 = vadd.f32 %v8999, %v10159
      %10161 = vmatmul.f32.gmra.mxu0 %v9207
      %v10162 = vpop.f32.mrf.mxu0
      %v10163 = vadd.f32 %v8999, %v10162
      %10164 = vmatmul.f32.gmra.mxu0 %v9210
      %v10165 = vpop.f32.mrf.mxu0
      %v10166 = vadd.f32 %v8999, %v10165
      %10167 = vmatmul.f32.gmra.mxu0 %v9213
      %v10168 = vpop.f32.mrf.mxu0
      %v10169 = vadd.f32 %v8999, %v10168
      %10170 = vmatmul.f32.gmra.mxu0 %v9216
      %v10171 = vpop.f32.mrf.mxu0
      %v10172 = vadd.f32 %v8999, %v10171
      %10173 = vmatmul.f32.gmra.mxu0 %v9219
      %v10174 = vpop.f32.mrf.mxu0
      %v10175 = vadd.f32 %v8999, %v10174
      %10176 = vmatmul.f32.gmra.mxu0 %v9222
      %v10177 = vpop.f32.mrf.mxu0
      %v10178 = vadd.f32 %v8999, %v10177
      %10179 = vmatmul.f32.gmra.mxu0 %v9225
      %v10180 = vpop.f32.mrf.mxu0
      %v10181 = vadd.f32 %v8999, %v10180
      %10182 = vmatmul.f32.gmra.mxu0 %v9228
      %v10183 = vpop.f32.mrf.mxu0
      %v10184 = vadd.f32 %v8999, %v10183
      %10185 = vdwg.mxu0
      %10186 = vmatpush.msra.mxu0 0.0
      %10187 = vmatpush.msra.mxu0 0.0
      %10188 = vmatpush.msra.mxu0 0.0
      %10189 = vmatpush.msra.mxu0 0.0
      %10190 = vmatpush.msra.mxu0 0.0
      %10191 = vmatpush.msra.mxu0 0.0
      %10192 = vmatpush.msra.mxu0 0.0
      %10193 = vmatpush.msra.mxu0 0.0
      %10194 = vmatpush.msra.mxu0 0.0
      %10195 = vmatpush.msra.mxu0 0.0
      %10196 = vmatpush.msra.mxu0 0.0
      %10197 = vmatpush.msra.mxu0 0.0
      %10198 = vmatpush.msra.mxu0 0.0
      %10199 = vmatpush.msra.mxu0 0.0
      %10200 = vmatpush.msra.mxu0 0.0
      %10201 = vmatpush.msra.mxu0 %v8992
      %10202 = vmatmul.f32.gmra.mxu0 %v9009
      %v10203 = vpop.f32.mrf.mxu0
      %v10204 = vadd.f32 %v9000, %v10203
      %10205 = vmatmul.f32.gmra.mxu0 %v9012
      %v10206 = vpop.f32.mrf.mxu0
      %v10207 = vadd.f32 %v9000, %v10206
      %10208 = vmatmul.f32.gmra.mxu0 %v9015
      %v10209 = vpop.f32.mrf.mxu0
      %v10210 = vadd.f32 %v9000, %v10209
      %10211 = vmatmul.f32.gmra.mxu0 %v9018
      %v10212 = vpop.f32.mrf.mxu0
      %v10213 = vadd.f32 %v9000, %v10212
      %10214 = vmatmul.f32.gmra.mxu0 %v9021
      %v10215 = vpop.f32.mrf.mxu0
      %v10216 = vadd.f32 %v9000, %v10215
      %10217 = vmatmul.f32.gmra.mxu0 %v9024
      %v10218 = vpop.f32.mrf.mxu0
      %v10219 = vadd.f32 %v9000, %v10218
      %10220 = vmatmul.f32.gmra.mxu0 %v9027
      %v10221 = vpop.f32.mrf.mxu0
      %v10222 = vadd.f32 %v9000, %v10221
      %10223 = vmatmul.f32.gmra.mxu0 %v9030
      %v10224 = vpop.f32.mrf.mxu0
      %v10225 = vadd.f32 %v9000, %v10224
      %10226 = vmatmul.f32.gmra.mxu0 %v9033
      %v10227 = vpop.f32.mrf.mxu0
      %v10228 = vadd.f32 %v9000, %v10227
      %10229 = vmatmul.f32.gmra.mxu0 %v9036
      %v10230 = vpop.f32.mrf.mxu0
      %v10231 = vadd.f32 %v9000, %v10230
      %10232 = vmatmul.f32.gmra.mxu0 %v9039
      %v10233 = vpop.f32.mrf.mxu0
      %v10234 = vadd.f32 %v9000, %v10233
      %10235 = vmatmul.f32.gmra.mxu0 %v9042
      %v10236 = vpop.f32.mrf.mxu0
      %v10237 = vadd.f32 %v9000, %v10236
      %10238 = vmatmul.f32.gmra.mxu0 %v9045
      %v10239 = vpop.f32.mrf.mxu0
      %v10240 = vadd.f32 %v9000, %v10239
      %10241 = vmatmul.f32.gmra.mxu0 %v9048
      %v10242 = vpop.f32.mrf.mxu0
      %v10243 = vadd.f32 %v9000, %v10242
      %10244 = vmatmul.f32.gmra.mxu0 %v9051
      %v10245 = vpop.f32.mrf.mxu0
      %v10246 = vadd.f32 %v9000, %v10245
      %10247 = vmatmul.f32.gmra.mxu0 %v9054
      %v10248 = vpop.f32.mrf.mxu0
      %v10249 = vadd.f32 %v9000, %v10248
      %10250 = vmatmul.f32.gmra.mxu0 %v9057
      %v10251 = vpop.f32.mrf.mxu0
      %v10252 = vadd.f32 %v9000, %v10251
      %10253 = vmatmul.f32.gmra.mxu0 %v9060
      %v10254 = vpop.f32.mrf.mxu0
      %v10255 = vadd.f32 %v9000, %v10254
      %10256 = vmatmul.f32.gmra.mxu0 %v9063
      %v10257 = vpop.f32.mrf.mxu0
      %v10258 = vadd.f32 %v9000, %v10257
      %10259 = vmatmul.f32.gmra.mxu0 %v9066
      %v10260 = vpop.f32.mrf.mxu0
      %v10261 = vadd.f32 %v9000, %v10260
      %10262 = vmatmul.f32.gmra.mxu0 %v9069
      %v10263 = vpop.f32.mrf.mxu0
      %v10264 = vadd.f32 %v9000, %v10263
      %10265 = vmatmul.f32.gmra.mxu0 %v9072
      %v10266 = vpop.f32.mrf.mxu0
      %v10267 = vadd.f32 %v9000, %v10266
      %10268 = vmatmul.f32.gmra.mxu0 %v9075
      %v10269 = vpop.f32.mrf.mxu0
      %v10270 = vadd.f32 %v9000, %v10269
      %10271 = vmatmul.f32.gmra.mxu0 %v9078
      %v10272 = vpop.f32.mrf.mxu0
      %v10273 = vadd.f32 %v9000, %v10272
      %10274 = vmatmul.f32.gmra.mxu0 %v9081
      %v10275 = vpop.f32.mrf.mxu0
      %v10276 = vadd.f32 %v9000, %v10275
      %10277 = vmatmul.f32.gmra.mxu0 %v9084
      %v10278 = vpop.f32.mrf.mxu0
      %v10279 = vadd.f32 %v9000, %v10278
      %10280 = vmatmul.f32.gmra.mxu0 %v9087
      %v10281 = vpop.f32.mrf.mxu0
      %v10282 = vadd.f32 %v9000, %v10281
      %10283 = vmatmul.f32.gmra.mxu0 %v9090
      %v10284 = vpop.f32.mrf.mxu0
      %v10285 = vadd.f32 %v9000, %v10284
      %10286 = vmatmul.f32.gmra.mxu0 %v9093
      %v10287 = vpop.f32.mrf.mxu0
      %v10288 = vadd.f32 %v9000, %v10287
      %10289 = vmatmul.f32.gmra.mxu0 %v9096
      %v10290 = vpop.f32.mrf.mxu0
      %v10291 = vadd.f32 %v9000, %v10290
      %10292 = vmatmul.f32.gmra.mxu0 %v9099
      %v10293 = vpop.f32.mrf.mxu0
      %v10294 = vadd.f32 %v9000, %v10293
      %10295 = vmatmul.f32.gmra.mxu0 %v9102
      %v10296 = vpop.f32.mrf.mxu0
      %v10297 = vadd.f32 %v9000, %v10296
      %10298 = vmatmul.f32.gmra.mxu0 %v9105
      %v10299 = vpop.f32.mrf.mxu0
      %v10300 = vadd.f32 %v9000, %v10299
      %10301 = vmatmul.f32.gmra.mxu0 %v9108
      %v10302 = vpop.f32.mrf.mxu0
      %v10303 = vadd.f32 %v9000, %v10302
      %10304 = vmatmul.f32.gmra.mxu0 %v9111
      %v10305 = vpop.f32.mrf.mxu0
      %v10306 = vadd.f32 %v9000, %v10305
      %10307 = vmatmul.f32.gmra.mxu0 %v9114
      %v10308 = vpop.f32.mrf.mxu0
      %v10309 = vadd.f32 %v9000, %v10308
      %10310 = vmatmul.f32.gmra.mxu0 %v9117
      %v10311 = vpop.f32.mrf.mxu0
      %v10312 = vadd.f32 %v9000, %v10311
      %10313 = vmatmul.f32.gmra.mxu0 %v9120
      %v10314 = vpop.f32.mrf.mxu0
      %v10315 = vadd.f32 %v9000, %v10314
      %10316 = vmatmul.f32.gmra.mxu0 %v9123
      %v10317 = vpop.f32.mrf.mxu0
      %v10318 = vadd.f32 %v9000, %v10317
      %10319 = vmatmul.f32.gmra.mxu0 %v9126
      %v10320 = vpop.f32.mrf.mxu0
      %v10321 = vadd.f32 %v9000, %v10320
      %10322 = vmatmul.f32.gmra.mxu0 %v9129
      %v10323 = vpop.f32.mrf.mxu0
      %v10324 = vadd.f32 %v9000, %v10323
      %10325 = vmatmul.f32.gmra.mxu0 %v9132
      %v10326 = vpop.f32.mrf.mxu0
      %v10327 = vadd.f32 %v9000, %v10326
      %10328 = vmatmul.f32.gmra.mxu0 %v9135
      %v10329 = vpop.f32.mrf.mxu0
      %v10330 = vadd.f32 %v9000, %v10329
      %10331 = vmatmul.f32.gmra.mxu0 %v9138
      %v10332 = vpop.f32.mrf.mxu0
      %v10333 = vadd.f32 %v9000, %v10332
      %10334 = vmatmul.f32.gmra.mxu0 %v9141
      %v10335 = vpop.f32.mrf.mxu0
      %v10336 = vadd.f32 %v9000, %v10335
      %10337 = vmatmul.f32.gmra.mxu0 %v9144
      %v10338 = vpop.f32.mrf.mxu0
      %v10339 = vadd.f32 %v9000, %v10338
      %10340 = vmatmul.f32.gmra.mxu0 %v9147
      %v10341 = vpop.f32.mrf.mxu0
      %v10342 = vadd.f32 %v9000, %v10341
      %10343 = vmatmul.f32.gmra.mxu0 %v9150
      %v10344 = vpop.f32.mrf.mxu0
      %v10345 = vadd.f32 %v9000, %v10344
      %10346 = vmatmul.f32.gmra.mxu0 %v9153
      %v10347 = vpop.f32.mrf.mxu0
      %v10348 = vadd.f32 %v9000, %v10347
      %10349 = vmatmul.f32.gmra.mxu0 %v9156
      %v10350 = vpop.f32.mrf.mxu0
      %v10351 = vadd.f32 %v9000, %v10350
      %10352 = vmatmul.f32.gmra.mxu0 %v9159
      %v10353 = vpop.f32.mrf.mxu0
      %v10354 = vadd.f32 %v9000, %v10353
      %10355 = vmatmul.f32.gmra.mxu0 %v9162
      %v10356 = vpop.f32.mrf.mxu0
      %v10357 = vadd.f32 %v9000, %v10356
      %10358 = vmatmul.f32.gmra.mxu0 %v9165
      %v10359 = vpop.f32.mrf.mxu0
      %v10360 = vadd.f32 %v9000, %v10359
      %10361 = vmatmul.f32.gmra.mxu0 %v9168
      %v10362 = vpop.f32.mrf.mxu0
      %v10363 = vadd.f32 %v9000, %v10362
      %10364 = vmatmul.f32.gmra.mxu0 %v9171
      %v10365 = vpop.f32.mrf.mxu0
      %v10366 = vadd.f32 %v9000, %v10365
      %10367 = vmatmul.f32.gmra.mxu0 %v9174
      %v10368 = vpop.f32.mrf.mxu0
      %v10369 = vadd.f32 %v9000, %v10368
      %10370 = vmatmul.f32.gmra.mxu0 %v9177
      %v10371 = vpop.f32.mrf.mxu0
      %v10372 = vadd.f32 %v9000, %v10371
      %10373 = vmatmul.f32.gmra.mxu0 %v9180
      %v10374 = vpop.f32.mrf.mxu0
      %v10375 = vadd.f32 %v9000, %v10374
      %10376 = vmatmul.f32.gmra.mxu0 %v9183
      %v10377 = vpop.f32.mrf.mxu0
      %v10378 = vadd.f32 %v9000, %v10377
      %10379 = vmatmul.f32.gmra.mxu0 %v9186
      %v10380 = vpop.f32.mrf.mxu0
      %v10381 = vadd.f32 %v9000, %v10380
      %10382 = vmatmul.f32.gmra.mxu0 %v9189
      %v10383 = vpop.f32.mrf.mxu0
      %v10384 = vadd.f32 %v9000, %v10383
      %10385 = vmatmul.f32.gmra.mxu0 %v9192
      %v10386 = vpop.f32.mrf.mxu0
      %v10387 = vadd.f32 %v9000, %v10386
      %10388 = vmatmul.f32.gmra.mxu0 %v9195
      %v10389 = vpop.f32.mrf.mxu0
      %v10390 = vadd.f32 %v9000, %v10389
      %10391 = vmatmul.f32.gmra.mxu0 %v9198
      %v10392 = vpop.f32.mrf.mxu0
      %v10393 = vadd.f32 %v9000, %v10392
      %10394 = vmatmul.f32.gmra.mxu0 %v9201
      %v10395 = vpop.f32.mrf.mxu0
      %v10396 = vadd.f32 %v9000, %v10395
      %10397 = vmatmul.f32.gmra.mxu0 %v9204
      %v10398 = vpop.f32.mrf.mxu0
      %v10399 = vadd.f32 %v9000, %v10398
      %10400 = vmatmul.f32.gmra.mxu0 %v9207
      %v10401 = vpop.f32.mrf.mxu0
      %v10402 = vadd.f32 %v9000, %v10401
      %10403 = vmatmul.f32.gmra.mxu0 %v9210
      %v10404 = vpop.f32.mrf.mxu0
      %v10405 = vadd.f32 %v9000, %v10404
      %10406 = vmatmul.f32.gmra.mxu0 %v9213
      %v10407 = vpop.f32.mrf.mxu0
      %v10408 = vadd.f32 %v9000, %v10407
      %10409 = vmatmul.f32.gmra.mxu0 %v9216
      %v10410 = vpop.f32.mrf.mxu0
      %v10411 = vadd.f32 %v9000, %v10410
      %10412 = vmatmul.f32.gmra.mxu0 %v9219
      %v10413 = vpop.f32.mrf.mxu0
      %v10414 = vadd.f32 %v9000, %v10413
      %10415 = vmatmul.f32.gmra.mxu0 %v9222
      %v10416 = vpop.f32.mrf.mxu0
      %v10417 = vadd.f32 %v9000, %v10416
      %10418 = vmatmul.f32.gmra.mxu0 %v9225
      %v10419 = vpop.f32.mrf.mxu0
      %v10420 = vadd.f32 %v9000, %v10419
      %10421 = vmatmul.f32.gmra.mxu0 %v9228
      %v10422 = vpop.f32.mrf.mxu0
      %v10423 = vadd.f32 %v9000, %v10422
      %10424 = vdwg.mxu0
      %10425 = vmatpush.msra.mxu0 0.0
      %10426 = vmatpush.msra.mxu0 0.0
      %10427 = vmatpush.msra.mxu0 0.0
      %10428 = vmatpush.msra.mxu0 0.0
      %10429 = vmatpush.msra.mxu0 0.0
      %10430 = vmatpush.msra.mxu0 0.0
      %10431 = vmatpush.msra.mxu0 0.0
      %10432 = vmatpush.msra.mxu0 0.0
      %10433 = vmatpush.msra.mxu0 0.0
      %10434 = vmatpush.msra.mxu0 0.0
      %10435 = vmatpush.msra.mxu0 0.0
      %10436 = vmatpush.msra.mxu0 0.0
      %10437 = vmatpush.msra.mxu0 0.0
      %10438 = vmatpush.msra.mxu0 0.0
      %10439 = vmatpush.msra.mxu0 0.0
      %10440 = vmatpush.msra.mxu0 %v8993
      %10441 = vmatmul.f32.gmra.mxu0 %v9009
      %v10442 = vpop.f32.mrf.mxu0
      %v10443 = vadd.f32 %v9001, %v10442
      %10444 = vmatmul.f32.gmra.mxu0 %v9012
      %v10445 = vpop.f32.mrf.mxu0
      %v10446 = vadd.f32 %v9001, %v10445
      %10447 = vmatmul.f32.gmra.mxu0 %v9015
      %v10448 = vpop.f32.mrf.mxu0
      %v10449 = vadd.f32 %v9001, %v10448
      %10450 = vmatmul.f32.gmra.mxu0 %v9018
      %v10451 = vpop.f32.mrf.mxu0
      %v10452 = vadd.f32 %v9001, %v10451
      %10453 = vmatmul.f32.gmra.mxu0 %v9021
      %v10454 = vpop.f32.mrf.mxu0
      %v10455 = vadd.f32 %v9001, %v10454
      %10456 = vmatmul.f32.gmra.mxu0 %v9024
      %v10457 = vpop.f32.mrf.mxu0
      %v10458 = vadd.f32 %v9001, %v10457
      %10459 = vmatmul.f32.gmra.mxu0 %v9027
      %v10460 = vpop.f32.mrf.mxu0
      %v10461 = vadd.f32 %v9001, %v10460
      %10462 = vmatmul.f32.gmra.mxu0 %v9030
      %v10463 = vpop.f32.mrf.mxu0
      %v10464 = vadd.f32 %v9001, %v10463
      %10465 = vmatmul.f32.gmra.mxu0 %v9033
      %v10466 = vpop.f32.mrf.mxu0
      %v10467 = vadd.f32 %v9001, %v10466
      %10468 = vmatmul.f32.gmra.mxu0 %v9036
      %v10469 = vpop.f32.mrf.mxu0
      %v10470 = vadd.f32 %v9001, %v10469
      %10471 = vmatmul.f32.gmra.mxu0 %v9039
      %v10472 = vpop.f32.mrf.mxu0
      %v10473 = vadd.f32 %v9001, %v10472
      %10474 = vmatmul.f32.gmra.mxu0 %v9042
      %v10475 = vpop.f32.mrf.mxu0
      %v10476 = vadd.f32 %v9001, %v10475
      %10477 = vmatmul.f32.gmra.mxu0 %v9045
      %v10478 = vpop.f32.mrf.mxu0
      %v10479 = vadd.f32 %v9001, %v10478
      %10480 = vmatmul.f32.gmra.mxu0 %v9048
      %v10481 = vpop.f32.mrf.mxu0
      %v10482 = vadd.f32 %v9001, %v10481
      %10483 = vmatmul.f32.gmra.mxu0 %v9051
      %v10484 = vpop.f32.mrf.mxu0
      %v10485 = vadd.f32 %v9001, %v10484
      %10486 = vmatmul.f32.gmra.mxu0 %v9054
      %v10487 = vpop.f32.mrf.mxu0
      %v10488 = vadd.f32 %v9001, %v10487
      %10489 = vmatmul.f32.gmra.mxu0 %v9057
      %v10490 = vpop.f32.mrf.mxu0
      %v10491 = vadd.f32 %v9001, %v10490
      %10492 = vmatmul.f32.gmra.mxu0 %v9060
      %v10493 = vpop.f32.mrf.mxu0
      %v10494 = vadd.f32 %v9001, %v10493
      %10495 = vmatmul.f32.gmra.mxu0 %v9063
      %v10496 = vpop.f32.mrf.mxu0
      %v10497 = vadd.f32 %v9001, %v10496
      %10498 = vmatmul.f32.gmra.mxu0 %v9066
      %v10499 = vpop.f32.mrf.mxu0
      %v10500 = vadd.f32 %v9001, %v10499
      %10501 = vmatmul.f32.gmra.mxu0 %v9069
      %v10502 = vpop.f32.mrf.mxu0
      %v10503 = vadd.f32 %v9001, %v10502
      %10504 = vmatmul.f32.gmra.mxu0 %v9072
      %v10505 = vpop.f32.mrf.mxu0
      %v10506 = vadd.f32 %v9001, %v10505
      %10507 = vmatmul.f32.gmra.mxu0 %v9075
      %v10508 = vpop.f32.mrf.mxu0
      %v10509 = vadd.f32 %v9001, %v10508
      %10510 = vmatmul.f32.gmra.mxu0 %v9078
      %v10511 = vpop.f32.mrf.mxu0
      %v10512 = vadd.f32 %v9001, %v10511
      %10513 = vmatmul.f32.gmra.mxu0 %v9081
      %v10514 = vpop.f32.mrf.mxu0
      %v10515 = vadd.f32 %v9001, %v10514
      %10516 = vmatmul.f32.gmra.mxu0 %v9084
      %v10517 = vpop.f32.mrf.mxu0
      %v10518 = vadd.f32 %v9001, %v10517
      %10519 = vmatmul.f32.gmra.mxu0 %v9087
      %v10520 = vpop.f32.mrf.mxu0
      %v10521 = vadd.f32 %v9001, %v10520
      %10522 = vmatmul.f32.gmra.mxu0 %v9090
      %v10523 = vpop.f32.mrf.mxu0
      %v10524 = vadd.f32 %v9001, %v10523
      %10525 = vmatmul.f32.gmra.mxu0 %v9093
      %v10526 = vpop.f32.mrf.mxu0
      %v10527 = vadd.f32 %v9001, %v10526
      %10528 = vmatmul.f32.gmra.mxu0 %v9096
      %v10529 = vpop.f32.mrf.mxu0
      %v10530 = vadd.f32 %v9001, %v10529
      %10531 = vmatmul.f32.gmra.mxu0 %v9099
      %v10532 = vpop.f32.mrf.mxu0
      %v10533 = vadd.f32 %v9001, %v10532
      %10534 = vmatmul.f32.gmra.mxu0 %v9102
      %v10535 = vpop.f32.mrf.mxu0
      %v10536 = vadd.f32 %v9001, %v10535
      %10537 = vmatmul.f32.gmra.mxu0 %v9105
      %v10538 = vpop.f32.mrf.mxu0
      %v10539 = vadd.f32 %v9001, %v10538
      %10540 = vmatmul.f32.gmra.mxu0 %v9108
      %v10541 = vpop.f32.mrf.mxu0
      %v10542 = vadd.f32 %v9001, %v10541
      %10543 = vmatmul.f32.gmra.mxu0 %v9111
      %v10544 = vpop.f32.mrf.mxu0
      %v10545 = vadd.f32 %v9001, %v10544
      %10546 = vmatmul.f32.gmra.mxu0 %v9114
      %v10547 = vpop.f32.mrf.mxu0
      %v10548 = vadd.f32 %v9001, %v10547
      %10549 = vmatmul.f32.gmra.mxu0 %v9117
      %v10550 = vpop.f32.mrf.mxu0
      %v10551 = vadd.f32 %v9001, %v10550
      %10552 = vmatmul.f32.gmra.mxu0 %v9120
      %v10553 = vpop.f32.mrf.mxu0
      %v10554 = vadd.f32 %v9001, %v10553
      %10555 = vmatmul.f32.gmra.mxu0 %v9123
      %v10556 = vpop.f32.mrf.mxu0
      %v10557 = vadd.f32 %v9001, %v10556
      %10558 = vmatmul.f32.gmra.mxu0 %v9126
      %v10559 = vpop.f32.mrf.mxu0
      %v10560 = vadd.f32 %v9001, %v10559
      %10561 = vmatmul.f32.gmra.mxu0 %v9129
      %v10562 = vpop.f32.mrf.mxu0
      %v10563 = vadd.f32 %v9001, %v10562
      %10564 = vmatmul.f32.gmra.mxu0 %v9132
      %v10565 = vpop.f32.mrf.mxu0
      %v10566 = vadd.f32 %v9001, %v10565
      %10567 = vmatmul.f32.gmra.mxu0 %v9135
      %v10568 = vpop.f32.mrf.mxu0
      %v10569 = vadd.f32 %v9001, %v10568
      %10570 = vmatmul.f32.gmra.mxu0 %v9138
      %v10571 = vpop.f32.mrf.mxu0
      %v10572 = vadd.f32 %v9001, %v10571
      %10573 = vmatmul.f32.gmra.mxu0 %v9141
      %v10574 = vpop.f32.mrf.mxu0
      %v10575 = vadd.f32 %v9001, %v10574
      %10576 = vmatmul.f32.gmra.mxu0 %v9144
      %v10577 = vpop.f32.mrf.mxu0
      %v10578 = vadd.f32 %v9001, %v10577
      %10579 = vmatmul.f32.gmra.mxu0 %v9147
      %v10580 = vpop.f32.mrf.mxu0
      %v10581 = vadd.f32 %v9001, %v10580
      %10582 = vmatmul.f32.gmra.mxu0 %v9150
      %v10583 = vpop.f32.mrf.mxu0
      %v10584 = vadd.f32 %v9001, %v10583
      %10585 = vmatmul.f32.gmra.mxu0 %v9153
      %v10586 = vpop.f32.mrf.mxu0
      %v10587 = vadd.f32 %v9001, %v10586
      %10588 = vmatmul.f32.gmra.mxu0 %v9156
      %v10589 = vpop.f32.mrf.mxu0
      %v10590 = vadd.f32 %v9001, %v10589
      %10591 = vmatmul.f32.gmra.mxu0 %v9159
      %v10592 = vpop.f32.mrf.mxu0
      %v10593 = vadd.f32 %v9001, %v10592
      %10594 = vmatmul.f32.gmra.mxu0 %v9162
      %v10595 = vpop.f32.mrf.mxu0
      %v10596 = vadd.f32 %v9001, %v10595
      %10597 = vmatmul.f32.gmra.mxu0 %v9165
      %v10598 = vpop.f32.mrf.mxu0
      %v10599 = vadd.f32 %v9001, %v10598
      %10600 = vmatmul.f32.gmra.mxu0 %v9168
      %v10601 = vpop.f32.mrf.mxu0
      %v10602 = vadd.f32 %v9001, %v10601
      %10603 = vmatmul.f32.gmra.mxu0 %v9171
      %v10604 = vpop.f32.mrf.mxu0
      %v10605 = vadd.f32 %v9001, %v10604
      %10606 = vmatmul.f32.gmra.mxu0 %v9174
      %v10607 = vpop.f32.mrf.mxu0
      %v10608 = vadd.f32 %v9001, %v10607
      %10609 = vmatmul.f32.gmra.mxu0 %v9177
      %v10610 = vpop.f32.mrf.mxu0
      %v10611 = vadd.f32 %v9001, %v10610
      %10612 = vmatmul.f32.gmra.mxu0 %v9180
      %v10613 = vpop.f32.mrf.mxu0
      %v10614 = vadd.f32 %v9001, %v10613
      %10615 = vmatmul.f32.gmra.mxu0 %v9183
      %v10616 = vpop.f32.mrf.mxu0
      %v10617 = vadd.f32 %v9001, %v10616
      %10618 = vmatmul.f32.gmra.mxu0 %v9186
      %v10619 = vpop.f32.mrf.mxu0
      %v10620 = vadd.f32 %v9001, %v10619
      %10621 = vmatmul.f32.gmra.mxu0 %v9189
      %v10622 = vpop.f32.mrf.mxu0
      %v10623 = vadd.f32 %v9001, %v10622
      %10624 = vmatmul.f32.gmra.mxu0 %v9192
      %v10625 = vpop.f32.mrf.mxu0
      %v10626 = vadd.f32 %v9001, %v10625
      %10627 = vmatmul.f32.gmra.mxu0 %v9195
      %v10628 = vpop.f32.mrf.mxu0
      %v10629 = vadd.f32 %v9001, %v10628
      %10630 = vmatmul.f32.gmra.mxu0 %v9198
      %v10631 = vpop.f32.mrf.mxu0
      %v10632 = vadd.f32 %v9001, %v10631
      %10633 = vmatmul.f32.gmra.mxu0 %v9201
      %v10634 = vpop.f32.mrf.mxu0
      %v10635 = vadd.f32 %v9001, %v10634
      %10636 = vmatmul.f32.gmra.mxu0 %v9204
      %v10637 = vpop.f32.mrf.mxu0
      %v10638 = vadd.f32 %v9001, %v10637
      %10639 = vmatmul.f32.gmra.mxu0 %v9207
      %v10640 = vpop.f32.mrf.mxu0
      %v10641 = vadd.f32 %v9001, %v10640
      %10642 = vmatmul.f32.gmra.mxu0 %v9210
      %v10643 = vpop.f32.mrf.mxu0
      %v10644 = vadd.f32 %v9001, %v10643
      %10645 = vmatmul.f32.gmra.mxu0 %v9213
      %v10646 = vpop.f32.mrf.mxu0
      %v10647 = vadd.f32 %v9001, %v10646
      %10648 = vmatmul.f32.gmra.mxu0 %v9216
      %v10649 = vpop.f32.mrf.mxu0
      %v10650 = vadd.f32 %v9001, %v10649
      %10651 = vmatmul.f32.gmra.mxu0 %v9219
      %v10652 = vpop.f32.mrf.mxu0
      %v10653 = vadd.f32 %v9001, %v10652
      %10654 = vmatmul.f32.gmra.mxu0 %v9222
      %v10655 = vpop.f32.mrf.mxu0
      %v10656 = vadd.f32 %v9001, %v10655
      %10657 = vmatmul.f32.gmra.mxu0 %v9225
      %v10658 = vpop.f32.mrf.mxu0
      %v10659 = vadd.f32 %v9001, %v10658
      %10660 = vmatmul.f32.gmra.mxu0 %v9228
      %v10661 = vpop.f32.mrf.mxu0
      %v10662 = vadd.f32 %v9001, %v10661
      %10663 = vdwg.mxu0
      %10664 = vst [vmem:[%s251] sm:$0xff] %v9248
      %10665 = vst [vmem:[%s251 + $0x8] sm:$0xff] %v9487
      %10666 = vst [vmem:[%s251 + $0x10] sm:$0xff] %v9726
      %10667 = vst [vmem:[%s251 + $0x18] sm:$0xff] %v9965
      %10668 = vst [vmem:[%s251 + $0x20] sm:$0xff] %v10204
      %10669 = vst [vmem:[%s251 + $0x28] sm:$0xff] %v10443
      %10670 = vst [vmem:[%s251 + $0x30] sm:$0xff] %v9251
      %10671 = vst [vmem:[%s251 + $0x38] sm:$0xff] %v9490
      %10672 = vst [vmem:[%s251 + $0x40] sm:$0xff] %v9729
      %10673 = vst [vmem:[%s251 + $0x48] sm:$0xff] %v9968
      %10674 = vst [vmem:[%s251 + $0x50] sm:$0xff] %v10207
      %10675 = vst [vmem:[%s251 + $0x58] sm:$0xff] %v10446
      %10676 = vst [vmem:[%s251 + $0x60] sm:$0xff] %v9254
      %10677 = vst [vmem:[%s251 + $0x68] sm:$0xff] %v9493
      %10678 = vst [vmem:[%s251 + $0x70] sm:$0xff] %v9732
      %10679 = vst [vmem:[%s251 + $0x78] sm:$0xff] %v9971
      %10680 = vst [vmem:[%s251 + $0x80] sm:$0xff] %v10210
      %10681 = vst [vmem:[%s251 + $0x88] sm:$0xff] %v10449
      %10682 = vst [vmem:[%s251 + $0x90] sm:$0xff] %v9257
      %10683 = vst [vmem:[%s251 + $0x98] sm:$0xff] %v9496
      %10684 = vst [vmem:[%s251 + $0xa0] sm:$0xff] %v9735
      %10685 = vst [vmem:[%s251 + $0xa8] sm:$0xff] %v9974
      %10686 = vst [vmem:[%s251 + $0xb0] sm:$0xff] %v10213
      %10687 = vst [vmem:[%s251 + $0xb8] sm:$0xff] %v10452
      %10688 = vst [vmem:[%s251 + $0xc0] sm:$0xff] %v9260
      %10689 = vst [vmem:[%s251 + $0xc8] sm:$0xff] %v9499
      %10690 = vst [vmem:[%s251 + $0xd0] sm:$0xff] %v9738
      %10691 = vst [vmem:[%s251 + $0xd8] sm:$0xff] %v9977
      %10692 = vst [vmem:[%s251 + $0xe0] sm:$0xff] %v10216
      %10693 = vst [vmem:[%s251 + $0xe8] sm:$0xff] %v10455
      %10694 = vst [vmem:[%s251 + $0xf0] sm:$0xff] %v9263
      %10695 = vst [vmem:[%s251 + $0xf8] sm:$0xff] %v9502
      %10696 = vst [vmem:[%s251 + $0x100] sm:$0xff] %v9741
      %10697 = vst [vmem:[%s251 + $0x108] sm:$0xff] %v9980
      %10698 = vst [vmem:[%s251 + $0x110] sm:$0xff] %v10219
      %10699 = vst [vmem:[%s251 + $0x118] sm:$0xff] %v10458
      %10700 = vst [vmem:[%s251 + $0x120] sm:$0xff] %v9266
      %10701 = vst [vmem:[%s251 + $0x128] sm:$0xff] %v9505
      %10702 = vst [vmem:[%s251 + $0x130] sm:$0xff] %v9744
      %10703 = vst [vmem:[%s251 + $0x138] sm:$0xff] %v9983
      %10704 = vst [vmem:[%s251 + $0x140] sm:$0xff] %v10222
      %10705 = vst [vmem:[%s251 + $0x148] sm:$0xff] %v10461
      %10706 = vst [vmem:[%s251 + $0x150] sm:$0xff] %v9269
      %10707 = vst [vmem:[%s251 + $0x158] sm:$0xff] %v9508
      %10708 = vst [vmem:[%s251 + $0x160] sm:$0xff] %v9747
      %10709 = vst [vmem:[%s251 + $0x168] sm:$0xff] %v9986
      %10710 = vst [vmem:[%s251 + $0x170] sm:$0xff] %v10225
      %10711 = vst [vmem:[%s251 + $0x178] sm:$0xff] %v10464
      %10712 = vst [vmem:[%s251 + $0x180] sm:$0xff] %v9272
      %10713 = vst [vmem:[%s251 + $0x188] sm:$0xff] %v9511
      %10714 = vst [vmem:[%s251 + $0x190] sm:$0xff] %v9750
      %10715 = vst [vmem:[%s251 + $0x198] sm:$0xff] %v9989
      %10716 = vst [vmem:[%s251 + $0x1a0] sm:$0xff] %v10228
      %10717 = vst [vmem:[%s251 + $0x1a8] sm:$0xff] %v10467
      %10718 = vst [vmem:[%s251 + $0x1b0] sm:$0xff] %v9275
      %10719 = vst [vmem:[%s251 + $0x1b8] sm:$0xff] %v9514
      %10720 = vst [vmem:[%s251 + $0x1c0] sm:$0xff] %v9753
      %10721 = vst [vmem:[%s251 + $0x1c8] sm:$0xff] %v9992
      %10722 = vst [vmem:[%s251 + $0x1d0] sm:$0xff] %v10231
      %10723 = vst [vmem:[%s251 + $0x1d8] sm:$0xff] %v10470
      %10724 = vst [vmem:[%s251 + $0x1e0] sm:$0xff] %v9278
      %10725 = vst [vmem:[%s251 + $0x1e8] sm:$0xff] %v9517
      %10726 = vst [vmem:[%s251 + $0x1f0] sm:$0xff] %v9756
      %10727 = vst [vmem:[%s251 + $0x1f8] sm:$0xff] %v9995
      %10728 = vst [vmem:[%s251 + $0x200] sm:$0xff] %v10234
      %10729 = vst [vmem:[%s251 + $0x208] sm:$0xff] %v10473
      %10730 = vst [vmem:[%s251 + $0x210] sm:$0xff] %v9281
      %10731 = vst [vmem:[%s251 + $0x218] sm:$0xff] %v9520
      %10732 = vst [vmem:[%s251 + $0x220] sm:$0xff] %v9759
      %10733 = vst [vmem:[%s251 + $0x228] sm:$0xff] %v9998
      %10734 = vst [vmem:[%s251 + $0x230] sm:$0xff] %v10237
      %10735 = vst [vmem:[%s251 + $0x238] sm:$0xff] %v10476
      %10736 = vst [vmem:[%s251 + $0x240] sm:$0xff] %v9284
      %10737 = vst [vmem:[%s251 + $0x248] sm:$0xff] %v9523
      %10738 = vst [vmem:[%s251 + $0x250] sm:$0xff] %v9762
      %10739 = vst [vmem:[%s251 + $0x258] sm:$0xff] %v10001
      %10740 = vst [vmem:[%s251 + $0x260] sm:$0xff] %v10240
      %10741 = vst [vmem:[%s251 + $0x268] sm:$0xff] %v10479
      %10742 = vst [vmem:[%s251 + $0x270] sm:$0xff] %v9287
      %10743 = vst [vmem:[%s251 + $0x278] sm:$0xff] %v9526
      %10744 = vst [vmem:[%s251 + $0x280] sm:$0xff] %v9765
      %10745 = vst [vmem:[%s251 + $0x288] sm:$0xff] %v10004
      %10746 = vst [vmem:[%s251 + $0x290] sm:$0xff] %v10243
      %10747 = vst [vmem:[%s251 + $0x298] sm:$0xff] %v10482
      %10748 = vst [vmem:[%s251 + $0x2a0] sm:$0xff] %v9290
      %10749 = vst [vmem:[%s251 + $0x2a8] sm:$0xff] %v9529
      %10750 = vst [vmem:[%s251 + $0x2b0] sm:$0xff] %v9768
      %10751 = vst [vmem:[%s251 + $0x2b8] sm:$0xff] %v10007
      %10752 = vst [vmem:[%s251 + $0x2c0] sm:$0xff] %v10246
      %10753 = vst [vmem:[%s251 + $0x2c8] sm:$0xff] %v10485
      %10754 = vst [vmem:[%s251 + $0x2d0] sm:$0xff] %v9293
      %10755 = vst [vmem:[%s251 + $0x2d8] sm:$0xff] %v9532
      %10756 = vst [vmem:[%s251 + $0x2e0] sm:$0xff] %v9771
      %10757 = vst [vmem:[%s251 + $0x2e8] sm:$0xff] %v10010
      %10758 = vst [vmem:[%s251 + $0x2f0] sm:$0xff] %v10249
      %10759 = vst [vmem:[%s251 + $0x2f8] sm:$0xff] %v10488
      %10760 = vst [vmem:[%s251 + $0x300] sm:$0xff] %v9296
      %10761 = vst [vmem:[%s251 + $0x308] sm:$0xff] %v9535
      %10762 = vst [vmem:[%s251 + $0x310] sm:$0xff] %v9774
      %10763 = vst [vmem:[%s251 + $0x318] sm:$0xff] %v10013
      %10764 = vst [vmem:[%s251 + $0x320] sm:$0xff] %v10252
      %10765 = vst [vmem:[%s251 + $0x328] sm:$0xff] %v10491
      %10766 = vst [vmem:[%s251 + $0x330] sm:$0xff] %v9299
      %10767 = vst [vmem:[%s251 + $0x338] sm:$0xff] %v9538
      %10768 = vst [vmem:[%s251 + $0x340] sm:$0xff] %v9777
      %10769 = vst [vmem:[%s251 + $0x348] sm:$0xff] %v10016
      %10770 = vst [vmem:[%s251 + $0x350] sm:$0xff] %v10255
      %10771 = vst [vmem:[%s251 + $0x358] sm:$0xff] %v10494
      %10772 = vst [vmem:[%s251 + $0x360] sm:$0xff] %v9302
      %10773 = vst [vmem:[%s251 + $0x368] sm:$0xff] %v9541
      %10774 = vst [vmem:[%s251 + $0x370] sm:$0xff] %v9780
      %10775 = vst [vmem:[%s251 + $0x378] sm:$0xff] %v10019
      %10776 = vst [vmem:[%s251 + $0x380] sm:$0xff] %v10258
      %10777 = vst [vmem:[%s251 + $0x388] sm:$0xff] %v10497
      %10778 = vst [vmem:[%s251 + $0x390] sm:$0xff] %v9305
      %10779 = vst [vmem:[%s251 + $0x398] sm:$0xff] %v9544
      %10780 = vst [vmem:[%s251 + $0x3a0] sm:$0xff] %v9783
      %10781 = vst [vmem:[%s251 + $0x3a8] sm:$0xff] %v10022
      %10782 = vst [vmem:[%s251 + $0x3b0] sm:$0xff] %v10261
      %10783 = vst [vmem:[%s251 + $0x3b8] sm:$0xff] %v10500
      %10784 = vst [vmem:[%s251 + $0x3c0] sm:$0xff] %v9308
      %10785 = vst [vmem:[%s251 + $0x3c8] sm:$0xff] %v9547
      %10786 = vst [vmem:[%s251 + $0x3d0] sm:$0xff] %v9786
      %10787 = vst [vmem:[%s251 + $0x3d8] sm:$0xff] %v10025
      %10788 = vst [vmem:[%s251 + $0x3e0] sm:$0xff] %v10264
      %10789 = vst [vmem:[%s251 + $0x3e8] sm:$0xff] %v10503
      %10790 = vst [vmem:[%s251 + $0x3f0] sm:$0xff] %v9311
      %10791 = vst [vmem:[%s251 + $0x3f8] sm:$0xff] %v9550
      %10792 = vst [vmem:[%s251 + $0x400] sm:$0xff] %v9789
      %10793 = vst [vmem:[%s251 + $0x408] sm:$0xff] %v10028
      %10794 = vst [vmem:[%s251 + $0x410] sm:$0xff] %v10267
      %10795 = vst [vmem:[%s251 + $0x418] sm:$0xff] %v10506
      %10796 = vst [vmem:[%s251 + $0x420] sm:$0xff] %v9314
      %10797 = vst [vmem:[%s251 + $0x428] sm:$0xff] %v9553
      %10798 = vst [vmem:[%s251 + $0x430] sm:$0xff] %v9792
      %10799 = vst [vmem:[%s251 + $0x438] sm:$0xff] %v10031
      %10800 = vst [vmem:[%s251 + $0x440] sm:$0xff] %v10270
      %10801 = vst [vmem:[%s251 + $0x448] sm:$0xff] %v10509
      %10802 = vst [vmem:[%s251 + $0x450] sm:$0xff] %v9317
      %10803 = vst [vmem:[%s251 + $0x458] sm:$0xff] %v9556
      %10804 = vst [vmem:[%s251 + $0x460] sm:$0xff] %v9795
      %10805 = vst [vmem:[%s251 + $0x468] sm:$0xff] %v10034
      %10806 = vst [vmem:[%s251 + $0x470] sm:$0xff] %v10273
      %10807 = vst [vmem:[%s251 + $0x478] sm:$0xff] %v10512
      %10808 = vst [vmem:[%s251 + $0x480] sm:$0xff] %v9320
      %10809 = vst [vmem:[%s251 + $0x488] sm:$0xff] %v9559
      %10810 = vst [vmem:[%s251 + $0x490] sm:$0xff] %v9798
      %10811 = vst [vmem:[%s251 + $0x498] sm:$0xff] %v10037
      %10812 = vst [vmem:[%s251 + $0x4a0] sm:$0xff] %v10276
      %10813 = vst [vmem:[%s251 + $0x4a8] sm:$0xff] %v10515
      %10814 = vst [vmem:[%s251 + $0x4b0] sm:$0xff] %v9323
      %10815 = vst [vmem:[%s251 + $0x4b8] sm:$0xff] %v9562
      %10816 = vst [vmem:[%s251 + $0x4c0] sm:$0xff] %v9801
      %10817 = vst [vmem:[%s251 + $0x4c8] sm:$0xff] %v10040
      %10818 = vst [vmem:[%s251 + $0x4d0] sm:$0xff] %v10279
      %10819 = vst [vmem:[%s251 + $0x4d8] sm:$0xff] %v10518
      %10820 = vst [vmem:[%s251 + $0x4e0] sm:$0xff] %v9326
      %10821 = vst [vmem:[%s251 + $0x4e8] sm:$0xff] %v9565
      %10822 = vst [vmem:[%s251 + $0x4f0] sm:$0xff] %v9804
      %10823 = vst [vmem:[%s251 + $0x4f8] sm:$0xff] %v10043
      %10824 = vst [vmem:[%s251 + $0x500] sm:$0xff] %v10282
      %10825 = vst [vmem:[%s251 + $0x508] sm:$0xff] %v10521
      %10826 = vst [vmem:[%s251 + $0x510] sm:$0xff] %v9329
      %10827 = vst [vmem:[%s251 + $0x518] sm:$0xff] %v9568
      %10828 = vst [vmem:[%s251 + $0x520] sm:$0xff] %v9807
      %10829 = vst [vmem:[%s251 + $0x528] sm:$0xff] %v10046
      %10830 = vst [vmem:[%s251 + $0x530] sm:$0xff] %v10285
      %10831 = vst [vmem:[%s251 + $0x538] sm:$0xff] %v10524
      %10832 = vst [vmem:[%s251 + $0x540] sm:$0xff] %v9332
      %10833 = vst [vmem:[%s251 + $0x548] sm:$0xff] %v9571
      %10834 = vst [vmem:[%s251 + $0x550] sm:$0xff] %v9810
      %10835 = vst [vmem:[%s251 + $0x558] sm:$0xff] %v10049
      %10836 = vst [vmem:[%s251 + $0x560] sm:$0xff] %v10288
      %10837 = vst [vmem:[%s251 + $0x568] sm:$0xff] %v10527
      %10838 = vst [vmem:[%s251 + $0x570] sm:$0xff] %v9335
      %10839 = vst [vmem:[%s251 + $0x578] sm:$0xff] %v9574
      %10840 = vst [vmem:[%s251 + $0x580] sm:$0xff] %v9813
      %10841 = vst [vmem:[%s251 + $0x588] sm:$0xff] %v10052
      %10842 = vst [vmem:[%s251 + $0x590] sm:$0xff] %v10291
      %10843 = vst [vmem:[%s251 + $0x598] sm:$0xff] %v10530
      %10844 = vst [vmem:[%s251 + $0x5a0] sm:$0xff] %v9338
      %10845 = vst [vmem:[%s251 + $0x5a8] sm:$0xff] %v9577
      %10846 = vst [vmem:[%s251 + $0x5b0] sm:$0xff] %v9816
      %10847 = vst [vmem:[%s251 + $0x5b8] sm:$0xff] %v10055
      %10848 = vst [vmem:[%s251 + $0x5c0] sm:$0xff] %v10294
      %10849 = vst [vmem:[%s251 + $0x5c8] sm:$0xff] %v10533
      %10850 = vst [vmem:[%s251 + $0x5d0] sm:$0xff] %v9341
      %10851 = vst [vmem:[%s251 + $0x5d8] sm:$0xff] %v9580
      %10852 = vst [vmem:[%s251 + $0x5e0] sm:$0xff] %v9819
      %10853 = vst [vmem:[%s251 + $0x5e8] sm:$0xff] %v10058
      %10854 = vst [vmem:[%s251 + $0x5f0] sm:$0xff] %v10297
      %10855 = vst [vmem:[%s251 + $0x5f8] sm:$0xff] %v10536
      %10856 = vst [vmem:[%s251 + $0x600] sm:$0xff] %v9344
      %10857 = vst [vmem:[%s251 + $0x608] sm:$0xff] %v9583
      %10858 = vst [vmem:[%s251 + $0x610] sm:$0xff] %v9822
      %10859 = vst [vmem:[%s251 + $0x618] sm:$0xff] %v10061
      %10860 = vst [vmem:[%s251 + $0x620] sm:$0xff] %v10300
      %10861 = vst [vmem:[%s251 + $0x628] sm:$0xff] %v10539
      %10862 = vst [vmem:[%s251 + $0x630] sm:$0xff] %v9347
      %10863 = vst [vmem:[%s251 + $0x638] sm:$0xff] %v9586
      %10864 = vst [vmem:[%s251 + $0x640] sm:$0xff] %v9825
      %10865 = vst [vmem:[%s251 + $0x648] sm:$0xff] %v10064
      %10866 = vst [vmem:[%s251 + $0x650] sm:$0xff] %v10303
      %10867 = vst [vmem:[%s251 + $0x658] sm:$0xff] %v10542
      %10868 = vst [vmem:[%s251 + $0x660] sm:$0xff] %v9350
      %10869 = vst [vmem:[%s251 + $0x668] sm:$0xff] %v9589
      %10870 = vst [vmem:[%s251 + $0x670] sm:$0xff] %v9828
      %10871 = vst [vmem:[%s251 + $0x678] sm:$0xff] %v10067
      %10872 = vst [vmem:[%s251 + $0x680] sm:$0xff] %v10306
      %10873 = vst [vmem:[%s251 + $0x688] sm:$0xff] %v10545
      %10874 = vst [vmem:[%s251 + $0x690] sm:$0xff] %v9353
      %10875 = vst [vmem:[%s251 + $0x698] sm:$0xff] %v9592
      %10876 = vst [vmem:[%s251 + $0x6a0] sm:$0xff] %v9831
      %10877 = vst [vmem:[%s251 + $0x6a8] sm:$0xff] %v10070
      %10878 = vst [vmem:[%s251 + $0x6b0] sm:$0xff] %v10309
      %10879 = vst [vmem:[%s251 + $0x6b8] sm:$0xff] %v10548
      %10880 = vst [vmem:[%s251 + $0x6c0] sm:$0xff] %v9356
      %10881 = vst [vmem:[%s251 + $0x6c8] sm:$0xff] %v9595
      %10882 = vst [vmem:[%s251 + $0x6d0] sm:$0xff] %v9834
      %10883 = vst [vmem:[%s251 + $0x6d8] sm:$0xff] %v10073
      %10884 = vst [vmem:[%s251 + $0x6e0] sm:$0xff] %v10312
      %10885 = vst [vmem:[%s251 + $0x6e8] sm:$0xff] %v10551
      %10886 = vst [vmem:[%s251 + $0x6f0] sm:$0xff] %v9359
      %10887 = vst [vmem:[%s251 + $0x6f8] sm:$0xff] %v9598
      %10888 = vst [vmem:[%s251 + $0x700] sm:$0xff] %v9837
      %10889 = vst [vmem:[%s251 + $0x708] sm:$0xff] %v10076
      %10890 = vst [vmem:[%s251 + $0x710] sm:$0xff] %v10315
      %10891 = vst [vmem:[%s251 + $0x718] sm:$0xff] %v10554
      %10892 = vst [vmem:[%s251 + $0x720] sm:$0xff] %v9362
      %10893 = vst [vmem:[%s251 + $0x728] sm:$0xff] %v9601
      %10894 = vst [vmem:[%s251 + $0x730] sm:$0xff] %v9840
      %10895 = vst [vmem:[%s251 + $0x738] sm:$0xff] %v10079
      %10896 = vst [vmem:[%s251 + $0x740] sm:$0xff] %v10318
      %10897 = vst [vmem:[%s251 + $0x748] sm:$0xff] %v10557
      %10898 = vst [vmem:[%s251 + $0x750] sm:$0xff] %v9365
      %10899 = vst [vmem:[%s251 + $0x758] sm:$0xff] %v9604
      %10900 = vst [vmem:[%s251 + $0x760] sm:$0xff] %v9843
      %10901 = vst [vmem:[%s251 + $0x768] sm:$0xff] %v10082
      %10902 = vst [vmem:[%s251 + $0x770] sm:$0xff] %v10321
      %10903 = vst [vmem:[%s251 + $0x778] sm:$0xff] %v10560
      %10904 = vst [vmem:[%s251 + $0x780] sm:$0xff] %v9368
      %10905 = vst [vmem:[%s251 + $0x788] sm:$0xff] %v9607
      %10906 = vst [vmem:[%s251 + $0x790] sm:$0xff] %v9846
      %10907 = vst [vmem:[%s251 + $0x798] sm:$0xff] %v10085
      %10908 = vst [vmem:[%s251 + $0x7a0] sm:$0xff] %v10324
      %10909 = vst [vmem:[%s251 + $0x7a8] sm:$0xff] %v10563
      %10910 = vst [vmem:[%s251 + $0x7b0] sm:$0xff] %v9371
      %10911 = vst [vmem:[%s251 + $0x7b8] sm:$0xff] %v9610
      %10912 = vst [vmem:[%s251 + $0x7c0] sm:$0xff] %v9849
      %10913 = vst [vmem:[%s251 + $0x7c8] sm:$0xff] %v10088
      %10914 = vst [vmem:[%s251 + $0x7d0] sm:$0xff] %v10327
      %10915 = vst [vmem:[%s251 + $0x7d8] sm:$0xff] %v10566
      %10916 = vst [vmem:[%s251 + $0x7e0] sm:$0xff] %v9374
      %10917 = vst [vmem:[%s251 + $0x7e8] sm:$0xff] %v9613
      %10918 = vst [vmem:[%s251 + $0x7f0] sm:$0xff] %v9852
      %10919 = vst [vmem:[%s251 + $0x7f8] sm:$0xff] %v10091
      %10920 = vst [vmem:[%s251 + $0x800] sm:$0xff] %v10330
      %10921 = vst [vmem:[%s251 + $0x808] sm:$0xff] %v10569
      %10922 = vst [vmem:[%s251 + $0x810] sm:$0xff] %v9377
      %10923 = vst [vmem:[%s251 + $0x818] sm:$0xff] %v9616
      %10924 = vst [vmem:[%s251 + $0x820] sm:$0xff] %v9855
      %10925 = vst [vmem:[%s251 + $0x828] sm:$0xff] %v10094
      %10926 = vst [vmem:[%s251 + $0x830] sm:$0xff] %v10333
      %10927 = vst [vmem:[%s251 + $0x838] sm:$0xff] %v10572
      %10928 = vst [vmem:[%s251 + $0x840] sm:$0xff] %v9380
      %10929 = vst [vmem:[%s251 + $0x848] sm:$0xff] %v9619
      %10930 = vst [vmem:[%s251 + $0x850] sm:$0xff] %v9858
      %10931 = vst [vmem:[%s251 + $0x858] sm:$0xff] %v10097
      %10932 = vst [vmem:[%s251 + $0x860] sm:$0xff] %v10336
      %10933 = vst [vmem:[%s251 + $0x868] sm:$0xff] %v10575
      %10934 = vst [vmem:[%s251 + $0x870] sm:$0xff] %v9383
      %10935 = vst [vmem:[%s251 + $0x878] sm:$0xff] %v9622
      %10936 = vst [vmem:[%s251 + $0x880] sm:$0xff] %v9861
      %10937 = vst [vmem:[%s251 + $0x888] sm:$0xff] %v10100
      %10938 = vst [vmem:[%s251 + $0x890] sm:$0xff] %v10339
      %10939 = vst [vmem:[%s251 + $0x898] sm:$0xff] %v10578
      %10940 = vst [vmem:[%s251 + $0x8a0] sm:$0xff] %v9386
      %10941 = vst [vmem:[%s251 + $0x8a8] sm:$0xff] %v9625
      %10942 = vst [vmem:[%s251 + $0x8b0] sm:$0xff] %v9864
      %10943 = vst [vmem:[%s251 + $0x8b8] sm:$0xff] %v10103
      %10944 = vst [vmem:[%s251 + $0x8c0] sm:$0xff] %v10342
      %10945 = vst [vmem:[%s251 + $0x8c8] sm:$0xff] %v10581
      %10946 = vst [vmem:[%s251 + $0x8d0] sm:$0xff] %v9389
      %10947 = vst [vmem:[%s251 + $0x8d8] sm:$0xff] %v9628
      %10948 = vst [vmem:[%s251 + $0x8e0] sm:$0xff] %v9867
      %10949 = vst [vmem:[%s251 + $0x8e8] sm:$0xff] %v10106
      %10950 = vst [vmem:[%s251 + $0x8f0] sm:$0xff] %v10345
      %10951 = vst [vmem:[%s251 + $0x8f8] sm:$0xff] %v10584
      %10952 = vst [vmem:[%s251 + $0x900] sm:$0xff] %v9392
      %10953 = vst [vmem:[%s251 + $0x908] sm:$0xff] %v9631
      %10954 = vst [vmem:[%s251 + $0x910] sm:$0xff] %v9870
      %10955 = vst [vmem:[%s251 + $0x918] sm:$0xff] %v10109
      %10956 = vst [vmem:[%s251 + $0x920] sm:$0xff] %v10348
      %10957 = vst [vmem:[%s251 + $0x928] sm:$0xff] %v10587
      %10958 = vst [vmem:[%s251 + $0x930] sm:$0xff] %v9395
      %10959 = vst [vmem:[%s251 + $0x938] sm:$0xff] %v9634
      %10960 = vst [vmem:[%s251 + $0x940] sm:$0xff] %v9873
      %10961 = vst [vmem:[%s251 + $0x948] sm:$0xff] %v10112
      %10962 = vst [vmem:[%s251 + $0x950] sm:$0xff] %v10351
      %10963 = vst [vmem:[%s251 + $0x958] sm:$0xff] %v10590
      %10964 = vst [vmem:[%s251 + $0x960] sm:$0xff] %v9398
      %10965 = vst [vmem:[%s251 + $0x968] sm:$0xff] %v9637
      %10966 = vst [vmem:[%s251 + $0x970] sm:$0xff] %v9876
      %10967 = vst [vmem:[%s251 + $0x978] sm:$0xff] %v10115
      %10968 = vst [vmem:[%s251 + $0x980] sm:$0xff] %v10354
      %10969 = vst [vmem:[%s251 + $0x988] sm:$0xff] %v10593
      %10970 = vst [vmem:[%s251 + $0x990] sm:$0xff] %v9401
      %10971 = vst [vmem:[%s251 + $0x998] sm:$0xff] %v9640
      %10972 = vst [vmem:[%s251 + $0x9a0] sm:$0xff] %v9879
      %10973 = vst [vmem:[%s251 + $0x9a8] sm:$0xff] %v10118
      %10974 = vst [vmem:[%s251 + $0x9b0] sm:$0xff] %v10357
      %10975 = vst [vmem:[%s251 + $0x9b8] sm:$0xff] %v10596
      %10976 = vst [vmem:[%s251 + $0x9c0] sm:$0xff] %v9404
      %10977 = vst [vmem:[%s251 + $0x9c8] sm:$0xff] %v9643
      %10978 = vst [vmem:[%s251 + $0x9d0] sm:$0xff] %v9882
      %10979 = vst [vmem:[%s251 + $0x9d8] sm:$0xff] %v10121
      %10980 = vst [vmem:[%s251 + $0x9e0] sm:$0xff] %v10360
      %10981 = vst [vmem:[%s251 + $0x9e8] sm:$0xff] %v10599
      %10982 = vst [vmem:[%s251 + $0x9f0] sm:$0xff] %v9407
      %10983 = vst [vmem:[%s251 + $0x9f8] sm:$0xff] %v9646
      %10984 = vst [vmem:[%s251 + $0xa00] sm:$0xff] %v9885
      %10985 = vst [vmem:[%s251 + $0xa08] sm:$0xff] %v10124
      %10986 = vst [vmem:[%s251 + $0xa10] sm:$0xff] %v10363
      %10987 = vst [vmem:[%s251 + $0xa18] sm:$0xff] %v10602
      %10988 = vst [vmem:[%s251 + $0xa20] sm:$0xff] %v9410
      %10989 = vst [vmem:[%s251 + $0xa28] sm:$0xff] %v9649
      %10990 = vst [vmem:[%s251 + $0xa30] sm:$0xff] %v9888
      %10991 = vst [vmem:[%s251 + $0xa38] sm:$0xff] %v10127
      %10992 = vst [vmem:[%s251 + $0xa40] sm:$0xff] %v10366
      %10993 = vst [vmem:[%s251 + $0xa48] sm:$0xff] %v10605
      %10994 = vst [vmem:[%s251 + $0xa50] sm:$0xff] %v9413
      %10995 = vst [vmem:[%s251 + $0xa58] sm:$0xff] %v9652
      %10996 = vst [vmem:[%s251 + $0xa60] sm:$0xff] %v9891
      %10997 = vst [vmem:[%s251 + $0xa68] sm:$0xff] %v10130
      %10998 = vst [vmem:[%s251 + $0xa70] sm:$0xff] %v10369
      %10999 = vst [vmem:[%s251 + $0xa78] sm:$0xff] %v10608
      %11000 = vst [vmem:[%s251 + $0xa80] sm:$0xff] %v9416
      %11001 = vst [vmem:[%s251 + $0xa88] sm:$0xff] %v9655
      %11002 = vst [vmem:[%s251 + $0xa90] sm:$0xff] %v9894
      %11003 = vst [vmem:[%s251 + $0xa98] sm:$0xff] %v10133
      %11004 = vst [vmem:[%s251 + $0xaa0] sm:$0xff] %v10372
      %11005 = vst [vmem:[%s251 + $0xaa8] sm:$0xff] %v10611
      %11006 = vst [vmem:[%s251 + $0xab0] sm:$0xff] %v9419
      %11007 = vst [vmem:[%s251 + $0xab8] sm:$0xff] %v9658
      %11008 = vst [vmem:[%s251 + $0xac0] sm:$0xff] %v9897
      %11009 = vst [vmem:[%s251 + $0xac8] sm:$0xff] %v10136
      %11010 = vst [vmem:[%s251 + $0xad0] sm:$0xff] %v10375
      %11011 = vst [vmem:[%s251 + $0xad8] sm:$0xff] %v10614
      %11012 = vst [vmem:[%s251 + $0xae0] sm:$0xff] %v9422
      %11013 = vst [vmem:[%s251 + $0xae8] sm:$0xff] %v9661
      %11014 = vst [vmem:[%s251 + $0xaf0] sm:$0xff] %v9900
      %11015 = vst [vmem:[%s251 + $0xaf8] sm:$0xff] %v10139
      %11016 = vst [vmem:[%s251 + $0xb00] sm:$0xff] %v10378
      %11017 = vst [vmem:[%s251 + $0xb08] sm:$0xff] %v10617
      %11018 = vst [vmem:[%s251 + $0xb10] sm:$0xff] %v9425
      %11019 = vst [vmem:[%s251 + $0xb18] sm:$0xff] %v9664
      %11020 = vst [vmem:[%s251 + $0xb20] sm:$0xff] %v9903
      %11021 = vst [vmem:[%s251 + $0xb28] sm:$0xff] %v10142
      %11022 = vst [vmem:[%s251 + $0xb30] sm:$0xff] %v10381
      %11023 = vst [vmem:[%s251 + $0xb38] sm:$0xff] %v10620
      %11024 = vst [vmem:[%s251 + $0xb40] sm:$0xff] %v9428
      %11025 = vst [vmem:[%s251 + $0xb48] sm:$0xff] %v9667
      %11026 = vst [vmem:[%s251 + $0xb50] sm:$0xff] %v9906
      %11027 = vst [vmem:[%s251 + $0xb58] sm:$0xff] %v10145
      %11028 = vst [vmem:[%s251 + $0xb60] sm:$0xff] %v10384
      %11029 = vst [vmem:[%s251 + $0xb68] sm:$0xff] %v10623
      %11030 = vst [vmem:[%s251 + $0xb70] sm:$0xff] %v9431
      %11031 = vst [vmem:[%s251 + $0xb78] sm:$0xff] %v9670
      %11032 = vst [vmem:[%s251 + $0xb80] sm:$0xff] %v9909
      %11033 = vst [vmem:[%s251 + $0xb88] sm:$0xff] %v10148
      %11034 = vst [vmem:[%s251 + $0xb90] sm:$0xff] %v10387
      %11035 = vst [vmem:[%s251 + $0xb98] sm:$0xff] %v10626
      %11036 = vst [vmem:[%s251 + $0xba0] sm:$0xff] %v9434
      %11037 = vst [vmem:[%s251 + $0xba8] sm:$0xff] %v9673
      %11038 = vst [vmem:[%s251 + $0xbb0] sm:$0xff] %v9912
      %11039 = vst [vmem:[%s251 + $0xbb8] sm:$0xff] %v10151
      %11040 = vst [vmem:[%s251 + $0xbc0] sm:$0xff] %v10390
      %11041 = vst [vmem:[%s251 + $0xbc8] sm:$0xff] %v10629
      %11042 = vst [vmem:[%s251 + $0xbd0] sm:$0xff] %v9437
      %11043 = vst [vmem:[%s251 + $0xbd8] sm:$0xff] %v9676
      %11044 = vst [vmem:[%s251 + $0xbe0] sm:$0xff] %v9915
      %11045 = vst [vmem:[%s251 + $0xbe8] sm:$0xff] %v10154
      %11046 = vst [vmem:[%s251 + $0xbf0] sm:$0xff] %v10393
      %11047 = vst [vmem:[%s251 + $0xbf8] sm:$0xff] %v10632
      %11048 = vst [vmem:[%s251 + $0xc00] sm:$0xff] %v9440
      %11049 = vst [vmem:[%s251 + $0xc08] sm:$0xff] %v9679
      %11050 = vst [vmem:[%s251 + $0xc10] sm:$0xff] %v9918
      %11051 = vst [vmem:[%s251 + $0xc18] sm:$0xff] %v10157
      %11052 = vst [vmem:[%s251 + $0xc20] sm:$0xff] %v10396
      %11053 = vst [vmem:[%s251 + $0xc28] sm:$0xff] %v10635
      %11054 = vst [vmem:[%s251 + $0xc30] sm:$0xff] %v9443
      %11055 = vst [vmem:[%s251 + $0xc38] sm:$0xff] %v9682
      %11056 = vst [vmem:[%s251 + $0xc40] sm:$0xff] %v9921
      %11057 = vst [vmem:[%s251 + $0xc48] sm:$0xff] %v10160
      %11058 = vst [vmem:[%s251 + $0xc50] sm:$0xff] %v10399
      %11059 = vst [vmem:[%s251 + $0xc58] sm:$0xff] %v10638
      %11060 = vst [vmem:[%s251 + $0xc60] sm:$0xff] %v9446
      %11061 = vst [vmem:[%s251 + $0xc68] sm:$0xff] %v9685
      %11062 = vst [vmem:[%s251 + $0xc70] sm:$0xff] %v9924
      %11063 = vst [vmem:[%s251 + $0xc78] sm:$0xff] %v10163
      %11064 = vst [vmem:[%s251 + $0xc80] sm:$0xff] %v10402
      %11065 = vst [vmem:[%s251 + $0xc88] sm:$0xff] %v10641
      %11066 = vst [vmem:[%s251 + $0xc90] sm:$0xff] %v9449
      %11067 = vst [vmem:[%s251 + $0xc98] sm:$0xff] %v9688
      %11068 = vst [vmem:[%s251 + $0xca0] sm:$0xff] %v9927
      %11069 = vst [vmem:[%s251 + $0xca8] sm:$0xff] %v10166
      %11070 = vst [vmem:[%s251 + $0xcb0] sm:$0xff] %v10405
      %11071 = vst [vmem:[%s251 + $0xcb8] sm:$0xff] %v10644
      %11072 = vst [vmem:[%s251 + $0xcc0] sm:$0xff] %v9452
      %11073 = vst [vmem:[%s251 + $0xcc8] sm:$0xff] %v9691
      %11074 = vst [vmem:[%s251 + $0xcd0] sm:$0xff] %v9930
      %11075 = vst [vmem:[%s251 + $0xcd8] sm:$0xff] %v10169
      %11076 = vst [vmem:[%s251 + $0xce0] sm:$0xff] %v10408
      %11077 = vst [vmem:[%s251 + $0xce8] sm:$0xff] %v10647
      %11078 = vst [vmem:[%s251 + $0xcf0] sm:$0xff] %v9455
      %11079 = vst [vmem:[%s251 + $0xcf8] sm:$0xff] %v9694
      %11080 = vst [vmem:[%s251 + $0xd00] sm:$0xff] %v9933
      %11081 = vst [vmem:[%s251 + $0xd08] sm:$0xff] %v10172
      %11082 = vst [vmem:[%s251 + $0xd10] sm:$0xff] %v10411
      %11083 = vst [vmem:[%s251 + $0xd18] sm:$0xff] %v10650
      %11084 = vst [vmem:[%s251 + $0xd20] sm:$0xff] %v9458
      %11085 = vst [vmem:[%s251 + $0xd28] sm:$0xff] %v9697
      %11086 = vst [vmem:[%s251 + $0xd30] sm:$0xff] %v9936
      %11087 = vst [vmem:[%s251 + $0xd38] sm:$0xff] %v10175
      %11088 = vst [vmem:[%s251 + $0xd40] sm:$0xff] %v10414
      %11089 = vst [vmem:[%s251 + $0xd48] sm:$0xff] %v10653
      %11090 = vst [vmem:[%s251 + $0xd50] sm:$0xff] %v9461
      %11091 = vst [vmem:[%s251 + $0xd58] sm:$0xff] %v9700
      %11092 = vst [vmem:[%s251 + $0xd60] sm:$0xff] %v9939
      %11093 = vst [vmem:[%s251 + $0xd68] sm:$0xff] %v10178
      %11094 = vst [vmem:[%s251 + $0xd70] sm:$0xff] %v10417
      %11095 = vst [vmem:[%s251 + $0xd78] sm:$0xff] %v10656
      %11096 = vst [vmem:[%s251 + $0xd80] sm:$0xff] %v9464
      %11097 = vst [vmem:[%s251 + $0xd88] sm:$0xff] %v9703
      %11098 = vst [vmem:[%s251 + $0xd90] sm:$0xff] %v9942
      %11099 = vst [vmem:[%s251 + $0xd98] sm:$0xff] %v10181
      %11100 = vst [vmem:[%s251 + $0xda0] sm:$0xff] %v10420
      %11101 = vst [vmem:[%s251 + $0xda8] sm:$0xff] %v10659
      %11102 = vst [vmem:[%s251 + $0xdb0] sm:$0x1f] %v9467
      %11103 = vst [vmem:[%s251 + $0xdb8] sm:$0x1f] %v9706
      %11104 = vst [vmem:[%s251 + $0xdc0] sm:$0x1f] %v9945
      %11105 = vst [vmem:[%s251 + $0xdc8] sm:$0x1f] %v10184
      %11106 = vst [vmem:[%s251 + $0xdd0] sm:$0x1f] %v10423
      %11107 = vst [vmem:[%s251 + $0xdd8] sm:$0x1f] %v10662
      %p11108 = scmp.lt.s32.totalorder %s17, 1
      %s11109 = scalar_select %p11108, %s17, 1
      %s11110 = smul.addr %s11109, 444
      %s11111 = smul.addr %s11110, 8
      %s11112 = scalar_lea.vmem %s6, %s11111
      // Predicated region
      $region45: #{convpass_forward.1} parent=43 // pred_check
        %p11113 = pneg %p166
      $region46: #{convpass_forward.1} parent=43 // pred_check_branch
        %11115 = sbr.rel (%p11113) target = $region48
      $region47: #{convpass_forward.1} parent=43 // pred_region
        _
      $region48: #{convpass_forward.1} parent=43 // pred_fallthru
        _
    $region44: #{convpass_forward.1} parent=5 // pred_fallthru
      _
    %p11116 = scmp.le.s32.totalorder 2, %s12
    // Predicated region
    $region49: #{convpass_forward.1} parent=5 // pred_check
      %p11117 = pneg %p11116
    $region50: #{convpass_forward.1} parent=5 // pred_check_branch
      %11119 = sbr.rel (%p11117) target = $region52
    $region51: #{convpass_forward.1} parent=5 // pred_region
      %s11120 = ssub.s32 %s12, 2
      // Predicated region
      $region53: #{convpass_forward.1} parent=51 // pred_check
        %p11121 = pneg %p172
      $region54: #{convpass_forward.1} parent=51 // pred_check_branch
        %11123 = sbr.rel (%p11121) target = $region56
      $region55: #{convpass_forward.1} parent=51 // pred_region
        %p11124 = scmp.lt.s32.totalorder %s18, 1
        %s11125 = scalar_select %p11124, %s18, 1
        %s11126 = smul.addr %s11125, 444
        %s11127 = smul.addr %s11126, 8
        %s11128 = scalar_lea.vmem %s6, %s11127
      $region56: #{convpass_forward.1} parent=51 // pred_fallthru
        _
    $region52: #{convpass_forward.1} parent=5 // pred_fallthru
      _
  $region6: #{convpass_forward.1} parent=0 // loop_footer
    %s16 = sadd.s32 1, %s12
  $region7: #{convpass_forward.1} parent=0 // loop_footer_branch
    %11 = sbr.rel target = $region3
  $region8: #{convpass_forward.1} parent=0 // loop_exit
    _

</llo_original>
